<compile_context>
chip_gen: v7x
topology: tpu7x:2x2x1
jax: 0.10.0
libtpu: 0.0.40
codegen_flags: <defaults>
</compile_context>

<pallas_src>
import jax
import jax.numpy as jnp
from jax import lax
from jax.experimental import pallas as pl
from jax.experimental.pallas import tpu as pltpu

# ----------------------------- configuration --------------------------------
SEQ_LEN = 8        # decoder max_len (T)
ENC_SEQ = 16       # encoder max_len (S)
BATCH = 16         # batch size
HIDDEN = 128       # hidden_size == embedding_size (required for tied weights)
VOCAB = 256
NUM_LAYERS = 2     # dec_num_layers

NEG_INF = -1e30


def _detect_ncores() -> int:
    """One batch slice per TensorCore: 2 on v7x (2 TCs/chip), 1 on v5e/v6e."""
    try:
        kind = jax.devices()[0].device_kind.lower()
    except Exception:
        return 1
    if "v7" in kind:
        return 2
    return 1


NCORES = _detect_ncores()


# ------------------------------ fused kernel ---------------------------------
def decoder_kernel(tok_ref, bias_ref,                       # per-slice VMEM inputs
                   emb_ref, h0_ref, enc_ref,
                   wih_ref, whh_ref, bih_ref, bhh_ref,
                   wc_ref, bc_ref, wo_ref, bo_ref,
                   out_ref, hfin_ref,                       # VMEM outputs
                   x_scr, gi_scr):                          # VMEM scratch
    """Full decoder forward for one batch slice (Bc elements) in a single grid step.

    tok_ref : (1, TB, 1)   int32 tokens, row order t*Bc+b
    bias_ref: (1, TB, SB)  additive attention mask (0 valid / -1e30 invalid)
    emb_ref : (V, H)       embedding table
    h0_ref  : (L, Bc, H)   initial hidden state for this slice
    enc_ref : (S, Bc, H)   encoder outputs for this slice
    wih_ref : (L, H, 3H)   GRU input->gate weights (pre-transposed)
    whh_ref : (L, H, 3H)   GRU hidden->gate weights (pre-transposed)
    bih/bhh : (L, 1, 3H)
    wc_ref  : (2H, H)      attention combine weight (rows = [dec | ctx])
    bc_ref  : (1, H)
    wo_ref  : (H, V)       tied output projection (embedding, pre-transposed)
    bo_ref  : (1, V)
    out_ref : (T, Bc, V)   logits
    hfin_ref: (L, Bc, H)   final hidden state
    x_scr   : (TB, H)  f32 scratch -> current layer input / output sequence
    gi_scr  : (TB, 3H) f32 scratch -> hoisted input-side gate pre-activations
    """
    L, Bc, H = h0_ref.shape
    S = enc_ref.shape[0]
    T, _, V = out_ref.shape
    TB, SB = T * Bc, S * Bc

    # ---- embedding gather as one one-hot MXU matmul (f32, exact row select) ----
    tok = tok_ref[0]                                                  # [TB, 1] int32
    onehot = (lax.broadcasted_iota(jnp.int32, (TB, V), 1) == tok).astype(jnp.float32)
    x_scr[...] = jnp.dot(onehot, emb_ref[...],
                         preferred_element_type=jnp.float32)          # [TB, H]

    # ---- multi-layer GRU ----
    for layer in range(L):              # static unroll over layers (L = 2)
        # input-side gate matmul hoisted out of the time loop, bf16 MXU, f32 acc
        gi_scr[...] = (jnp.dot(x_scr[...].astype(jnp.bfloat16),
                               wih_ref[layer].astype(jnp.bfloat16),
                               preferred_element_type=jnp.float32)
                       + bih_ref[layer])                              # [TB, 3H]
        # hidden-side weights hoisted out of the T loop, kept f32 (recurrence path)
        w_hh = whh_ref[layer]                                         # [H, 3H]
        b_hh = bhh_ref[layer]                                         # [1, 3H]
        h = h0_ref[layer]                                             # [Bc, H] f32
        for t in range(T):              # static unroll; only h is carried
            gi = gi_scr[t * Bc:(t + 1) * Bc, :]                       # [Bc, 3H]
            gh = jnp.dot(h, w_hh, preferred_element_type=jnp.float32) + b_hh
            # PyTorch GRU gate order: r, z, n
            r = jax.nn.sigmoid(gi[:, :H] + gh[:, :H])
            z = jax.nn.sigmoid(gi[:, H:2 * H] + gh[:, H:2 * H])
            n = jnp.tanh(gi[:, 2 * H:] + r * gh[:, 2 * H:])
            h = (1.0 - z) * n + z * h
            x_scr[t * Bc:(t + 1) * Bc, :] = h                         # layer output seq
        hfin_ref[layer] = h.astype(hfin_ref.dtype)

    # ---- masked dot-product attention (flattened batch, precomputed mask bias) ----
    dec_bf = x_scr[...].astype(jnp.bfloat16)                          # [TB, H]
    enc_bf = enc_ref[...].reshape(SB, H).astype(jnp.bfloat16)         # row = s*Bc+b

    scores = lax.dot_general(dec_bf, enc_bf, (((1,), (1,)), ((), ())),
                             preferred_element_type=jnp.float32)      # [TB, SB]
    scores = scores + bias_ref[0]                                     # mask invalid cols

    m = jnp.max(scores, axis=-1, keepdims=True)
    p = jnp.exp(scores - m)
    attn = p * pl.reciprocal(jnp.sum(p, axis=-1, keepdims=True), approx=True)
    context = jnp.dot(attn.astype(jnp.bfloat16), enc_bf,
                      preferred_element_type=jnp.float32)             # [TB, H]

    # combined = tanh(dec @ Wc[:H] + ctx @ Wc[H:] + bc) -> two K=H matmuls, no concat
    wc = wc_ref[...]
    combined = jnp.tanh(
        jnp.dot(dec_bf, wc[:H].astype(jnp.bfloat16),
                preferred_element_type=jnp.float32)
        + jnp.dot(context.astype(jnp.bfloat16), wc[H:].astype(jnp.bfloat16),
                  preferred_element_type=jnp.float32)
        + bc_ref[...])                                                # [TB, H]

    # tied vocab projection: single [TB, H] x [H, V] matmul
    logits = jnp.dot(combined.astype(jnp.bfloat16), wo_ref[...].astype(jnp.bfloat16),
                     preferred_element_type=jnp.float32) + bo_ref[...]
    out_ref[...] = logits.reshape(T, Bc, V).astype(out_ref.dtype)


# ------------------------------ wrapper / call --------------------------------
def rnn_decoder_forward_impl(params, dec_input, dec_hidden, enc_outputs, enc_length):
    """dec_input: [T, B] int32; dec_hidden: [L, B, H]; enc_outputs: [S, B, H];
    enc_length: [B] int32.  Returns (logits [T, B, V], dec_hidden [L, B, H], None)."""
    T, B = dec_input.shape
    L, _, H = dec_hidden.shape
    S = enc_outputs.shape[0]
    V = params["w_out_t"].shape[1]

    ncores = NCORES
    if B % ncores != 0 or (B // ncores) % 8 != 0:
        ncores = 1
    Bc = B // ncores
    TB, SB = T * Bc, S * Bc

    # tokens reordered to row order t*Bc+b per core slice -> [NC, TB, 1]
    tok = (dec_input.reshape(T, ncores, Bc)
           .transpose(1, 0, 2)
           .reshape(ncores, TB, 1).astype(jnp.int32))

    # additive attention-mask bias: 0 where (same batch element AND s < enc_length),
    # NEG_INF elsewhere.  Shape [NC, TB, SB]; row = t*Bc+b, col = s*Bc+b'.
    b_row = jnp.arange(TB, dtype=jnp.int32) % Bc
    b_col = jnp.arange(SB, dtype=jnp.int32) % Bc
    s_col = jnp.arange(SB, dtype=jnp.int32) // Bc
    lens = enc_length.reshape(ncores, Bc)
    len_col = lens[:, b_col]                                          # [NC, SB]
    valid = (b_row[None, :, None] == b_col[None, None, :]) & \
            (s_col[None, None, :] < len_col[:, None, :])
    bias = jnp.where(valid, 0.0, NEG_INF).astype(jnp.float32)         # [NC, TB, SB]

    cost = pl.CostEstimate(
        flops=int(2 * T * B * V * H                     # one-hot gather
                  + 4 * L * T * B * H * 3 * H           # input + hidden gate matmuls
                  + 4 * T * B * SB * H                  # scores + context
                  + 4 * T * B * H * H                   # combine (2 x K=H)
                  + 2 * T * B * H * V),                 # vocab projection
        transcendentals=int(T * B * (L * 3 * H + S + H)),
        bytes_accessed=int(4 * (V * H + T * B + ncores * TB * SB
                                + 2 * L * B * H + S * B * H
                                + 2 * L * H * 3 * H + 2 * L * 3 * H
                                + 2 * H * H + H + H * V + V + T * B * V)))

    grid_spec = pltpu.PrefetchScalarGridSpec(
        num_scalar_prefetch=0,
        grid=(ncores,),
        in_specs=[
            pl.BlockSpec((1, TB, 1), lambda c: (c, 0, 0)),            # tokens (reordered)
            pl.BlockSpec((1, TB, SB), lambda c: (c, 0, 0)),           # attention mask bias
            pl.BlockSpec((V, H), lambda c: (0, 0)),                   # embedding table
            pl.BlockSpec((L, Bc, H), lambda c: (0, c, 0)),            # dec_hidden slice
            pl.BlockSpec((S, Bc, H), lambda c: (0, c, 0)),            # enc_outputs slice
            pl.BlockSpec((L, H, 3 * H), lambda c: (0, 0, 0)),         # w_ih (pre-transposed)
            pl.BlockSpec((L, H, 3 * H), lambda c: (0, 0, 0)),         # w_hh (pre-transposed)
            pl.BlockSpec((L, 1, 3 * H), lambda c: (0, 0, 0)),         # b_ih
            pl.BlockSpec((L, 1, 3 * H), lambda c: (0, 0, 0)),         # b_hh
            pl.BlockSpec((2 * H, H), lambda c: (0, 0)),               # w_c (pre-transposed)
            pl.BlockSpec((1, H), lambda c: (0, 0)),                   # b_c
            pl.BlockSpec((H, V), lambda c: (0, 0)),                   # w_out (tied)
            pl.BlockSpec((1, V), lambda c: (0, 0)),                   # b_out
        ],
        out_specs=[
            pl.BlockSpec((T, Bc, V), lambda c: (0, c, 0)),            # logits [T, B, V]
            pl.BlockSpec((L, Bc, H), lambda c: (0, c, 0)),            # final hidden
        ],
        scratch_shapes=[
            pltpu.VMEM((TB, H), jnp.float32),                         # layer in/out seq
            pltpu.VMEM((TB, 3 * H), jnp.float32),                     # hoisted gate preacts
        ],
    )
    logits, new_hidden = pl.pallas_call(
        decoder_kernel,
        out_shape=(jax.ShapeDtypeStruct((T, B, V), jnp.float32),
                   jax.ShapeDtypeStruct((L, B, H), jnp.float32)),
        grid_spec=grid_spec,
        compiler_params=pltpu.CompilerParams(
            dimension_semantics=("parallel",)),   # batch slices are fully independent
        cost_estimate=cost,
    )(tok, bias,
      params["emb"], dec_hidden, enc_outputs,
      params["w_ih_t"], params["w_hh_t"], params["b_ih"], params["b_hh"],
      params["w_c_t"], params["b_c"], params["w_out_t"], params["b_out"])
    return logits, new_hidden, None


rnn_decoder_forward = jax.jit(rnn_decoder_forward_impl)


# --------------------------- pure-JAX reference -------------------------------
def reference_forward(params, dec_input, dec_hidden, enc_outputs, enc_length):
    T, B = dec_input.shape
    S = enc_outputs.shape[0]
    L, _, H = dec_hidden.shape
    embedded = params["emb"][dec_input]                             # [T, B, H]
    h = dec_hidden
    outs = []
    for t in range(T):
        x = embedded[t]
        new_h = []
        for l in range(L):
            gi = x @ params["w_ih_t"][l] + params["b_ih"][l, 0]
            gh = h[l] @ params["w_hh_t"][l] + params["b_hh"][l, 0]
            r = jax.nn.sigmoid(gi[:, :H] + gh[:, :H])
            z = jax.nn.sigmoid(gi[:, H:2 * H] + gh[:, H:2 * H])
            n = jnp.tanh(gi[:, 2 * H:] + r * gh[:, 2 * H:])
            h_new = (1.0 - z) * n + z * h[l]
            new_h.append(h_new)
            x = h_new
        h = jnp.stack(new_h)
        outs.append(x)
    output = jnp.stack(outs)                                        # [T, B, H]

    scores = jnp.einsum("tbh,sbh->bts", output, enc_outputs)
    mask = jnp.arange(S)[None, None, :] < enc_length[:, None, None]
    scores = jnp.where(mask, scores, NEG_INF)
    attn = jax.nn.softmax(scores, axis=-1)
    context = jnp.einsum("bts,sbh->bth", attn, enc_outputs)
    dec_bth = jnp.transpose(output, (1, 0, 2))
    combined = jnp.tanh(dec_bth @ params["w_c_t"][:H] +
                        context @ params["w_c_t"][H:] + params["b_c"][0])
    logits = combined @ params["w_out_t"] + params["b_out"][0]      # [B, T, V]
    return jnp.transpose(logits, (1, 0, 2)), h


# ------------------------------ parameter init --------------------------------
def make_params(key):
    ks = jax.random.split(key, 10)
    scale = 0.1
    emb = jax.random.normal(ks[0], (VOCAB, HIDDEN), jnp.float32) * scale
    # GRU weights in PyTorch layout W_ih[l]: (3H, in), W_hh[l]: (3H, H);
    # layer-0 input size == HIDDEN because embedding_size == hidden_size.
    w_ih = jax.random.normal(ks[1], (NUM_LAYERS, 3 * HIDDEN, HIDDEN), jnp.float32) * scale
    w_hh = jax.random.normal(ks[2], (NUM_LAYERS, 3 * HIDDEN, HIDDEN), jnp.float32) * scale
    b_ih = jax.random.normal(ks[3], (NUM_LAYERS, 1, 3 * HIDDEN), jnp.float32) * scale
    b_hh = jax.random.normal(ks[4], (NUM_LAYERS, 1, 3 * HIDDEN), jnp.float32) * scale
    # Attention combine Linear(2H -> H)
    w_c = jax.random.normal(ks[5], (HIDDEN, 2 * HIDDEN), jnp.float32) * scale
    b_c = jax.random.normal(ks[6], (1, HIDDEN), jnp.float32) * scale
    # Output projection Linear(H -> V); config.tied -> weight = embedding weight
    b_out = jax.random.normal(ks[7], (1, VOCAB), jnp.float32) * scale
    return {
        "emb": emb,
        "w_ih_t": jnp.transpose(w_ih, (0, 2, 1)),   # (L, H, 3H)
        "w_hh_t": jnp.transpose(w_hh, (0, 2, 1)),   # (L, H, 3H)
        "b_ih": b_ih,
        "b_hh": b_hh,
        "w_c_t": jnp.transpose(w_c, (1, 0)),        # (2H, H)
        "b_c": b_c,
        "w_out_t": jnp.transpose(emb, (1, 0)),      # tied: (H, V)
        "b_out": b_out,
    }


# ----------------------------------- main --------------------------------------
if __name__ == "__main__":
    key = jax.random.PRNGKey(0)
    k_par, k_tok, k_h0, k_enc = jax.random.split(key, 4)

    params = make_params(k_par)
    dec_input = jax.random.randint(k_tok, (SEQ_LEN, BATCH), 0, VOCAB, jnp.int32)
    dec_hidden = jax.random.normal(k_h0, (NUM_LAYERS, BATCH, HIDDEN), jnp.float32) * 0.1
    enc_outputs = jax.random.normal(k_enc, (ENC_SEQ, BATCH, HIDDEN), jnp.float32) * 0.1
    enc_length = jnp.array([16, 12, 7, 16, 4, 9, 14, 5,
                            11, 3, 16, 8, 6, 13, 10, 2], jnp.int32)  # all >= 1 (precondition)

    logits, new_hidden, _ = rnn_decoder_forward(
        params, dec_input, dec_hidden, enc_outputs, enc_length)
    logits = jax.block_until_ready(logits)
    new_hidden = jax.block_until_ready(new_hidden)

    assert logits.shape == (SEQ_LEN, BATCH, VOCAB)
    assert new_hidden.shape == (NUM_LAYERS, BATCH, HIDDEN)

    # sanity check against a pure-JAX f32 reference (loose tol: bf16 MXU operands
    # on the non-recurrent matmuls + approx reciprocal in the softmax)
    ref_logits, ref_hidden = reference_forward(
        params, dec_input, dec_hidden, enc_outputs, enc_length)
    max_diff_logits = float(jnp.max(jnp.abs(logits - ref_logits)))
    max_diff_hidden = float(jnp.max(jnp.abs(new_hidden - ref_hidden)))
    assert max_diff_logits < 5e-2, max_diff_logits
    assert max_diff_hidden < 5e-2, max_diff_hidden

    print("KERNEL_OK")
</pallas_src>

<mosaic_0001>
module attributes {stable_mosaic.version = 11 : i64} {
  func.func @decoder_kernel(%arg0: i32, %arg1: memref<1x128x1xi32, #tpu.memory_space<vmem>>, %arg2: memref<1x128x256xf32, #tpu.memory_space<vmem>>, %arg3: memref<256x128xf32, #tpu.memory_space<vmem>>, %arg4: memref<2x16x128xf32, #tpu.memory_space<vmem>>, %arg5: memref<16x16x128xf32, #tpu.memory_space<vmem>>, %arg6: memref<2x128x384xf32, #tpu.memory_space<vmem>>, %arg7: memref<2x128x384xf32, #tpu.memory_space<vmem>>, %arg8: memref<2x1x384xf32, #tpu.memory_space<vmem>>, %arg9: memref<2x1x384xf32, #tpu.memory_space<vmem>>, %arg10: memref<256x128xf32, #tpu.memory_space<vmem>>, %arg11: memref<1x128xf32, #tpu.memory_space<vmem>>, %arg12: memref<128x256xf32, #tpu.memory_space<vmem>>, %arg13: memref<1x256xf32, #tpu.memory_space<vmem>>, %arg14: memref<8x16x256xf32, #tpu.memory_space<vmem>>, %arg15: memref<2x16x128xf32, #tpu.memory_space<vmem>>, %arg16: memref<128x128xf32, #tpu.memory_space<vmem>>, %arg17: memref<128x384xf32, #tpu.memory_space<vmem>>) attributes {dimension_semantics = [#tpu.dimension_semantics<parallel>], iteration_bounds = array<i64: 1>, scalar_prefetch = 0 : i64, scratch_operands = 2 : i64, tpu.core_type = #tpu.core_type<tc>, window_params = [{transform_indices = @transform_0, window_bounds = array<i64: 1, 128, 1>}, {transform_indices = @transform_1, window_bounds = array<i64: 1, 128, 256>}, {pipeline_mode = #tpu.pipeline_mode<synchronous>, transform_indices = @transform_2, window_bounds = array<i64: 256, 128>}, {transform_indices = @transform_3, window_bounds = array<i64: 2, 16, 128>}, {transform_indices = @transform_4, window_bounds = array<i64: 16, 16, 128>}, {pipeline_mode = #tpu.pipeline_mode<synchronous>, transform_indices = @transform_5, window_bounds = array<i64: 2, 128, 384>}, {pipeline_mode = #tpu.pipeline_mode<synchronous>, transform_indices = @transform_6, window_bounds = array<i64: 2, 128, 384>}, {pipeline_mode = #tpu.pipeline_mode<synchronous>, transform_indices = @transform_7, window_bounds = array<i64: 2, 1, 384>}, {pipeline_mode = #tpu.pipeline_mode<synchronous>, transform_indices = @transform_8, window_bounds = array<i64: 2, 1, 384>}, {pipeline_mode = #tpu.pipeline_mode<synchronous>, transform_indices = @transform_9, window_bounds = array<i64: 256, 128>}, {pipeline_mode = #tpu.pipeline_mode<synchronous>, transform_indices = @transform_10, window_bounds = array<i64: 1, 128>}, {pipeline_mode = #tpu.pipeline_mode<synchronous>, transform_indices = @transform_11, window_bounds = array<i64: 128, 256>}, {pipeline_mode = #tpu.pipeline_mode<synchronous>, transform_indices = @transform_12, window_bounds = array<i64: 1, 256>}, {transform_indices = @transform_13, window_bounds = array<i64: 8, 16, 256>}, {transform_indices = @transform_14, window_bounds = array<i64: 2, 16, 128>}]} {
    %c0 = arith.constant 0 : index
    %c0_0 = arith.constant 0 : index
    %c0_1 = arith.constant 0 : index
    %0 = vector.load %arg1[%c0, %c0_0, %c0_1] : memref<1x128x1xi32, #tpu.memory_space<vmem>>, vector<1x128x1xi32>
    %1 = vector.shape_cast %0 : vector<1x128x1xi32> to vector<128x1xi32>
    %2 = tpu.iota {dimensions = array<i32: 1>} : vector<128x256xi32>
    %3 = vector.broadcast %1 : vector<128x1xi32> to vector<128x256xi32>
    %4 = arith.cmpi eq, %2, %3 : vector<128x256xi32>
    %5 = arith.extui %4 : vector<128x256xi1> to vector<128x256xi32>
    %6 = arith.sitofp %5 : vector<128x256xi32> to vector<128x256xf32>
    %c0_2 = arith.constant 0 : index
    %c0_3 = arith.constant 0 : index
    %7 = vector.load %arg3[%c0_2, %c0_3] : memref<256x128xf32, #tpu.memory_space<vmem>>, vector<256x128xf32>
    %cst = arith.constant dense<0.000000e+00> : vector<128x128xf32>
    %8 = tpu.matmul %6, %7, %cst {dimension_numbers = #tpu.dot_dimension_numbers<[1], [0], [0], [1], [0, 0, 1, 1], [], []>} : vector<128x256xf32>, vector<256x128xf32>, vector<128x128xf32> -> vector<128x128xf32>
    %c0_4 = arith.constant 0 : index
    %c0_5 = arith.constant 0 : index
    %9 = vector.load %arg16[%c0_4, %c0_5] : memref<128x128xf32, #tpu.memory_space<vmem>>, vector<128x128xf32>
    tpu.vector_store %arg16[%c0_4, %c0_5], %8 {strides = array<i32>} : memref<128x128xf32, #tpu.memory_space<vmem>>, vector<128x128xf32>,
    %c0_6 = arith.constant 0 : index
    %c0_7 = arith.constant 0 : index
    %10 = vector.load %arg16[%c0_6, %c0_7] : memref<128x128xf32, #tpu.memory_space<vmem>>, vector<128x128xf32>
    %11 = arith.truncf %10 : vector<128x128xf32> to vector<128x128xbf16>
    %c0_8 = arith.constant 0 : index
    %c0_9 = arith.constant 0 : index
    %c0_10 = arith.constant 0 : index
    %12 = vector.load %arg6[%c0_8, %c0_9, %c0_10] : memref<2x128x384xf32, #tpu.memory_space<vmem>>, vector<1x128x384xf32>
    %13 = vector.shape_cast %12 : vector<1x128x384xf32> to vector<128x384xf32>
    %14 = arith.truncf %13 : vector<128x384xf32> to vector<128x384xbf16>
    %cst_11 = arith.constant dense<0.000000e+00> : vector<128x384xf32>
    %15 = tpu.matmul %11, %14, %cst_11 {dimension_numbers = #tpu.dot_dimension_numbers<[1], [0], [0], [1], [0, 0, 1, 1], [], []>} : vector<128x128xbf16>, vector<128x384xbf16>, vector<128x384xf32> -> vector<128x384xf32>
    %c0_12 = arith.constant 0 : index
    %c0_13 = arith.constant 0 : index
    %c0_14 = arith.constant 0 : index
    %16 = vector.load %arg8[%c0_12, %c0_13, %c0_14] : memref<2x1x384xf32, #tpu.memory_space<vmem>>, vector<1x1x384xf32>
    %17 = vector.shape_cast %16 : vector<1x1x384xf32> to vector<1x384xf32>
    %18 = vector.broadcast %17 : vector<1x384xf32> to vector<128x384xf32>
    %19 = arith.addf %15, %18 : vector<128x384xf32>
    %c0_15 = arith.constant 0 : index
    %c0_16 = arith.constant 0 : index
    %20 = vector.load %arg17[%c0_15, %c0_16] : memref<128x384xf32, #tpu.memory_space<vmem>>, vector<128x384xf32>
    tpu.vector_store %arg17[%c0_15, %c0_16], %19 {strides = array<i32>} : memref<128x384xf32, #tpu.memory_space<vmem>>, vector<128x384xf32>,
    %c0_17 = arith.constant 0 : index
    %c0_18 = arith.constant 0 : index
    %c0_19 = arith.constant 0 : index
    %21 = vector.load %arg7[%c0_17, %c0_18, %c0_19] : memref<2x128x384xf32, #tpu.memory_space<vmem>>, vector<1x128x384xf32>
    %22 = vector.shape_cast %21 : vector<1x128x384xf32> to vector<128x384xf32>
    %c0_20 = arith.constant 0 : index
    %c0_21 = arith.constant 0 : index
    %c0_22 = arith.constant 0 : index
    %23 = vector.load %arg9[%c0_20, %c0_21, %c0_22] : memref<2x1x384xf32, #tpu.memory_space<vmem>>, vector<1x1x384xf32>
    %24 = vector.shape_cast %23 : vector<1x1x384xf32> to vector<1x384xf32>
    %c0_23 = arith.constant 0 : index
    %c0_24 = arith.constant 0 : index
    %c0_25 = arith.constant 0 : index
    %25 = vector.load %arg4[%c0_23, %c0_24, %c0_25] : memref<2x16x128xf32, #tpu.memory_space<vmem>>, vector<1x16x128xf32>
    %26 = vector.shape_cast %25 : vector<1x16x128xf32> to vector<16x128xf32>
    %c0_26 = arith.constant 0 : index
    %c0_27 = arith.constant 0 : index
    %27 = vector.load %arg17[%c0_26, %c0_27] : memref<128x384xf32, #tpu.memory_space<vmem>>, vector<16x384xf32>
    %cst_28 = arith.constant dense<0.000000e+00> : vector<16x384xf32>
    %28 = tpu.matmul %26, %22, %cst_28 {dimension_numbers = #tpu.dot_dimension_numbers<[1], [0], [0], [1], [0, 0, 1, 1], [], []>} : vector<16x128xf32>, vector<128x384xf32>, vector<16x384xf32> -> vector<16x384xf32>
    %29 = vector.broadcast %24 : vector<1x384xf32> to vector<16x384xf32>
    %30 = arith.addf %28, %29 : vector<16x384xf32>
    %31 = vector.extract_strided_slice %27 {offsets = [0, 0], sizes = [16, 128], strides = [1, 1]} : vector<16x384xf32> to vector<16x128xf32>
    %32 = vector.extract_strided_slice %30 {offsets = [0, 0], sizes = [16, 128], strides = [1, 1]} : vector<16x384xf32> to vector<16x128xf32>
    %33 = arith.addf %31, %32 : vector<16x128xf32>
    %34 = arith.negf %33 : vector<16x128xf32>
    %35 = math.exp %34 : vector<16x128xf32>
    %cst_29 = arith.constant 1.000000e+00 : f32
    %36 = vector.broadcast %cst_29 : f32 to vector<16x128xf32>
    %37 = arith.addf %36, %35 : vector<16x128xf32>
    %38 = arith.divf %36, %37 : vector<16x128xf32>
    %39 = vector.extract_strided_slice %27 {offsets = [0, 128], sizes = [16, 128], strides = [1, 1]} : vector<16x384xf32> to vector<16x128xf32>
    %40 = vector.extract_strided_slice %30 {offsets = [0, 128], sizes = [16, 128], strides = [1, 1]} : vector<16x384xf32> to vector<16x128xf32>
    %41 = arith.addf %39, %40 : vector<16x128xf32>
    %42 = arith.negf %41 : vector<16x128xf32>
    %43 = math.exp %42 : vector<16x128xf32>
    %cst_30 = arith.constant 1.000000e+00 : f32
    %44 = vector.broadcast %cst_30 : f32 to vector<16x128xf32>
    %45 = arith.addf %44, %43 : vector<16x128xf32>
    %46 = arith.divf %44, %45 : vector<16x128xf32>
    %47 = vector.extract_strided_slice %27 {offsets = [0, 256], sizes = [16, 128], strides = [1, 1]} : vector<16x384xf32> to vector<16x128xf32>
    %48 = vector.extract_strided_slice %30 {offsets = [0, 256], sizes = [16, 128], strides = [1, 1]} : vector<16x384xf32> to vector<16x128xf32>
    %49 = arith.mulf %38, %48 : vector<16x128xf32>
    %50 = arith.addf %47, %49 : vector<16x128xf32>
    %51 = math.tanh %50 : vector<16x128xf32>
    %cst_31 = arith.constant 1.000000e+00 : f32
    %52 = vector.broadcast %cst_31 : f32 to vector<16x128xf32>
    %53 = arith.subf %52, %46 : vector<16x128xf32>
    %54 = arith.mulf %53, %51 : vector<16x128xf32>
    %55 = arith.mulf %46, %26 : vector<16x128xf32>
    %56 = arith.addf %54, %55 : vector<16x128xf32>
    %c0_32 = arith.constant 0 : index
    %c0_33 = arith.constant 0 : index
    %57 = vector.load %arg16[%c0_32, %c0_33] : memref<128x128xf32, #tpu.memory_space<vmem>>, vector<16x128xf32>
    tpu.vector_store %arg16[%c0_32, %c0_33], %56 {strides = array<i32>} : memref<128x128xf32, #tpu.memory_space<vmem>>, vector<16x128xf32>,
    %c16 = arith.constant 16 : index
    %c0_34 = arith.constant 0 : index
    %58 = vector.load %arg17[%c16, %c0_34] : memref<128x384xf32, #tpu.memory_space<vmem>>, vector<16x384xf32>
    %cst_35 = arith.constant dense<0.000000e+00> : vector<16x384xf32>
    %59 = tpu.matmul %56, %22, %cst_35 {dimension_numbers = #tpu.dot_dimension_numbers<[1], [0], [0], [1], [0, 0, 1, 1], [], []>} : vector<16x128xf32>, vector<128x384xf32>, vector<16x384xf32> -> vector<16x384xf32>
    %60 = vector.broadcast %24 : vector<1x384xf32> to vector<16x384xf32>
    %61 = arith.addf %59, %60 : vector<16x384xf32>
    %62 = vector.extract_strided_slice %58 {offsets = [0, 0], sizes = [16, 128], strides = [1, 1]} : vector<16x384xf32> to vector<16x128xf32>
    %63 = vector.extract_strided_slice %61 {offsets = [0, 0], sizes = [16, 128], strides = [1, 1]} : vector<16x384xf32> to vector<16x128xf32>
    %64 = arith.addf %62, %63 : vector<16x128xf32>
    %65 = arith.negf %64 : vector<16x128xf32>
    %66 = math.exp %65 : vector<16x128xf32>
    %cst_36 = arith.constant 1.000000e+00 : f32
    %67 = vector.broadcast %cst_36 : f32 to vector<16x128xf32>
    %68 = arith.addf %67, %66 : vector<16x128xf32>
    %69 = arith.divf %67, %68 : vector<16x128xf32>
    %70 = vector.extract_strided_slice %58 {offsets = [0, 128], sizes = [16, 128], strides = [1, 1]} : vector<16x384xf32> to vector<16x128xf32>
    %71 = vector.extract_strided_slice %61 {offsets = [0, 128], sizes = [16, 128], strides = [1, 1]} : vector<16x384xf32> to vector<16x128xf32>
    %72 = arith.addf %70, %71 : vector<16x128xf32>
    %73 = arith.negf %72 : vector<16x128xf32>
    %74 = math.exp %73 : vector<16x128xf32>
    %cst_37 = arith.constant 1.000000e+00 : f32
    %75 = vector.broadcast %cst_37 : f32 to vector<16x128xf32>
    %76 = arith.addf %75, %74 : vector<16x128xf32>
    %77 = arith.divf %75, %76 : vector<16x128xf32>
    %78 = vector.extract_strided_slice %58 {offsets = [0, 256], sizes = [16, 128], strides = [1, 1]} : vector<16x384xf32> to vector<16x128xf32>
    %79 = vector.extract_strided_slice %61 {offsets = [0, 256], sizes = [16, 128], strides = [1, 1]} : vector<16x384xf32> to vector<16x128xf32>
    %80 = arith.mulf %69, %79 : vector<16x128xf32>
    %81 = arith.addf %78, %80 : vector<16x128xf32>
    %82 = math.tanh %81 : vector<16x128xf32>
    %cst_38 = arith.constant 1.000000e+00 : f32
    %83 = vector.broadcast %cst_38 : f32 to vector<16x128xf32>
    %84 = arith.subf %83, %77 : vector<16x128xf32>
    %85 = arith.mulf %84, %82 : vector<16x128xf32>
    %86 = arith.mulf %77, %56 : vector<16x128xf32>
    %87 = arith.addf %85, %86 : vector<16x128xf32>
    %c16_39 = arith.constant 16 : index
    %c0_40 = arith.constant 0 : index
    %88 = vector.load %arg16[%c16_39, %c0_40] : memref<128x128xf32, #tpu.memory_space<vmem>>, vector<16x128xf32>
    tpu.vector_store %arg16[%c16_39, %c0_40], %87 {strides = array<i32>} : memref<128x128xf32, #tpu.memory_space<vmem>>, vector<16x128xf32>,
    %c32 = arith.constant 32 : index
    %c0_41 = arith.constant 0 : index
    %89 = vector.load %arg17[%c32, %c0_41] : memref<128x384xf32, #tpu.memory_space<vmem>>, vector<16x384xf32>
    %cst_42 = arith.constant dense<0.000000e+00> : vector<16x384xf32>
    %90 = tpu.matmul %87, %22, %cst_42 {dimension_numbers = #tpu.dot_dimension_numbers<[1], [0], [0], [1], [0, 0, 1, 1], [], []>} : vector<16x128xf32>, vector<128x384xf32>, vector<16x384xf32> -> vector<16x384xf32>
    %91 = vector.broadcast %24 : vector<1x384xf32> to vector<16x384xf32>
    %92 = arith.addf %90, %91 : vector<16x384xf32>
    %93 = vector.extract_strided_slice %89 {offsets = [0, 0], sizes = [16, 128], strides = [1, 1]} : vector<16x384xf32> to vector<16x128xf32>
    %94 = vector.extract_strided_slice %92 {offsets = [0, 0], sizes = [16, 128], strides = [1, 1]} : vector<16x384xf32> to vector<16x128xf32>
    %95 = arith.addf %93, %94 : vector<16x128xf32>
    %96 = arith.negf %95 : vector<16x128xf32>
    %97 = math.exp %96 : vector<16x128xf32>
    %cst_43 = arith.constant 1.000000e+00 : f32
    %98 = vector.broadcast %cst_43 : f32 to vector<16x128xf32>
    %99 = arith.addf %98, %97 : vector<16x128xf32>
    %100 = arith.divf %98, %99 : vector<16x128xf32>
    %101 = vector.extract_strided_slice %89 {offsets = [0, 128], sizes = [16, 128], strides = [1, 1]} : vector<16x384xf32> to vector<16x128xf32>
    %102 = vector.extract_strided_slice %92 {offsets = [0, 128], sizes = [16, 128], strides = [1, 1]} : vector<16x384xf32> to vector<16x128xf32>
    %103 = arith.addf %101, %102 : vector<16x128xf32>
    %104 = arith.negf %103 : vector<16x128xf32>
    %105 = math.exp %104 : vector<16x128xf32>
    %cst_44 = arith.constant 1.000000e+00 : f32
    %106 = vector.broadcast %cst_44 : f32 to vector<16x128xf32>
    %107 = arith.addf %106, %105 : vector<16x128xf32>
    %108 = arith.divf %106, %107 : vector<16x128xf32>
    %109 = vector.extract_strided_slice %89 {offsets = [0, 256], sizes = [16, 128], strides = [1, 1]} : vector<16x384xf32> to vector<16x128xf32>
    %110 = vector.extract_strided_slice %92 {offsets = [0, 256], sizes = [16, 128], strides = [1, 1]} : vector<16x384xf32> to vector<16x128xf32>
    %111 = arith.mulf %100, %110 : vector<16x128xf32>
    %112 = arith.addf %109, %111 : vector<16x128xf32>
    %113 = math.tanh %112 : vector<16x128xf32>
    %cst_45 = arith.constant 1.000000e+00 : f32
    %114 = vector.broadcast %cst_45 : f32 to vector<16x128xf32>
    %115 = arith.subf %114, %108 : vector<16x128xf32>
    %116 = arith.mulf %115, %113 : vector<16x128xf32>
    %117 = arith.mulf %108, %87 : vector<16x128xf32>
    %118 = arith.addf %116, %117 : vector<16x128xf32>
    %c32_46 = arith.constant 32 : index
    %c0_47 = arith.constant 0 : index
    %119 = vector.load %arg16[%c32_46, %c0_47] : memref<128x128xf32, #tpu.memory_space<vmem>>, vector<16x128xf32>
    tpu.vector_store %arg16[%c32_46, %c0_47], %118 {strides = array<i32>} : memref<128x128xf32, #tpu.memory_space<vmem>>, vector<16x128xf32>,
    %c48 = arith.constant 48 : index
    %c0_48 = arith.constant 0 : index
    %120 = vector.load %arg17[%c48, %c0_48] : memref<128x384xf32, #tpu.memory_space<vmem>>, vector<16x384xf32>
    %cst_49 = arith.constant dense<0.000000e+00> : vector<16x384xf32>
    %121 = tpu.matmul %118, %22, %cst_49 {dimension_numbers = #tpu.dot_dimension_numbers<[1], [0], [0], [1], [0, 0, 1, 1], [], []>} : vector<16x128xf32>, vector<128x384xf32>, vector<16x384xf32> -> vector<16x384xf32>
    %122 = vector.broadcast %24 : vector<1x384xf32> to vector<16x384xf32>
    %123 = arith.addf %121, %122 : vector<16x384xf32>
    %124 = vector.extract_strided_slice %120 {offsets = [0, 0], sizes = [16, 128], strides = [1, 1]} : vector<16x384xf32> to vector<16x128xf32>
    %125 = vector.extract_strided_slice %123 {offsets = [0, 0], sizes = [16, 128], strides = [1, 1]} : vector<16x384xf32> to vector<16x128xf32>
    %126 = arith.addf %124, %125 : vector<16x128xf32>
    %127 = arith.negf %126 : vector<16x128xf32>
    %128 = math.exp %127 : vector<16x128xf32>
    %cst_50 = arith.constant 1.000000e+00 : f32
    %129 = vector.broadcast %cst_50 : f32 to vector<16x128xf32>
    %130 = arith.addf %129, %128 : vector<16x128xf32>
    %131 = arith.divf %129, %130 : vector<16x128xf32>
    %132 = vector.extract_strided_slice %120 {offsets = [0, 128], sizes = [16, 128], strides = [1, 1]} : vector<16x384xf32> to vector<16x128xf32>
    %133 = vector.extract_strided_slice %123 {offsets = [0, 128], sizes = [16, 128], strides = [1, 1]} : vector<16x384xf32> to vector<16x128xf32>
    %134 = arith.addf %132, %133 : vector<16x128xf32>
    %135 = arith.negf %134 : vector<16x128xf32>
    %136 = math.exp %135 : vector<16x128xf32>
    %cst_51 = arith.constant 1.000000e+00 : f32
    %137 = vector.broadcast %cst_51 : f32 to vector<16x128xf32>
    %138 = arith.addf %137, %136 : vector<16x128xf32>
    %139 = arith.divf %137, %138 : vector<16x128xf32>
    %140 = vector.extract_strided_slice %120 {offsets = [0, 256], sizes = [16, 128], strides = [1, 1]} : vector<16x384xf32> to vector<16x128xf32>
    %141 = vector.extract_strided_slice %123 {offsets = [0, 256], sizes = [16, 128], strides = [1, 1]} : vector<16x384xf32> to vector<16x128xf32>
    %142 = arith.mulf %131, %141 : vector<16x128xf32>
    %143 = arith.addf %140, %142 : vector<16x128xf32>
    %144 = math.tanh %143 : vector<16x128xf32>
    %cst_52 = arith.constant 1.000000e+00 : f32
    %145 = vector.broadcast %cst_52 : f32 to vector<16x128xf32>
    %146 = arith.subf %145, %139 : vector<16x128xf32>
    %147 = arith.mulf %146, %144 : vector<16x128xf32>
    %148 = arith.mulf %139, %118 : vector<16x128xf32>
    %149 = arith.addf %147, %148 : vector<16x128xf32>
    %c48_53 = arith.constant 48 : index
    %c0_54 = arith.constant 0 : index
    %150 = vector.load %arg16[%c48_53, %c0_54] : memref<128x128xf32, #tpu.memory_space<vmem>>, vector<16x128xf32>
    tpu.vector_store %arg16[%c48_53, %c0_54], %149 {strides = array<i32>} : memref<128x128xf32, #tpu.memory_space<vmem>>, vector<16x128xf32>,
    %c64 = arith.constant 64 : index
    %c0_55 = arith.constant 0 : index
    %151 = vector.load %arg17[%c64, %c0_55] : memref<128x384xf32, #tpu.memory_space<vmem>>, vector<16x384xf32>
    %cst_56 = arith.constant dense<0.000000e+00> : vector<16x384xf32>
    %152 = tpu.matmul %149, %22, %cst_56 {dimension_numbers = #tpu.dot_dimension_numbers<[1], [0], [0], [1], [0, 0, 1, 1], [], []>} : vector<16x128xf32>, vector<128x384xf32>, vector<16x384xf32> -> vector<16x384xf32>
    %153 = vector.broadcast %24 : vector<1x384xf32> to vector<16x384xf32>
    %154 = arith.addf %152, %153 : vector<16x384xf32>
    %155 = vector.extract_strided_slice %151 {offsets = [0, 0], sizes = [16, 128], strides = [1, 1]} : vector<16x384xf32> to vector<16x128xf32>
    %156 = vector.extract_strided_slice %154 {offsets = [0, 0], sizes = [16, 128], strides = [1, 1]} : vector<16x384xf32> to vector<16x128xf32>
    %157 = arith.addf %155, %156 : vector<16x128xf32>
    %158 = arith.negf %157 : vector<16x128xf32>
    %159 = math.exp %158 : vector<16x128xf32>
    %cst_57 = arith.constant 1.000000e+00 : f32
    %160 = vector.broadcast %cst_57 : f32 to vector<16x128xf32>
    %161 = arith.addf %160, %159 : vector<16x128xf32>
    %162 = arith.divf %160, %161 : vector<16x128xf32>
    %163 = vector.extract_strided_slice %151 {offsets = [0, 128], sizes = [16, 128], strides = [1, 1]} : vector<16x384xf32> to vector<16x128xf32>
    %164 = vector.extract_strided_slice %154 {offsets = [0, 128], sizes = [16, 128], strides = [1, 1]} : vector<16x384xf32> to vector<16x128xf32>
    %165 = arith.addf %163, %164 : vector<16x128xf32>
    %166 = arith.negf %165 : vector<16x128xf32>
    %167 = math.exp %166 : vector<16x128xf32>
    %cst_58 = arith.constant 1.000000e+00 : f32
    %168 = vector.broadcast %cst_58 : f32 to vector<16x128xf32>
    %169 = arith.addf %168, %167 : vector<16x128xf32>
    %170 = arith.divf %168, %169 : vector<16x128xf32>
    %171 = vector.extract_strided_slice %151 {offsets = [0, 256], sizes = [16, 128], strides = [1, 1]} : vector<16x384xf32> to vector<16x128xf32>
    %172 = vector.extract_strided_slice %154 {offsets = [0, 256], sizes = [16, 128], strides = [1, 1]} : vector<16x384xf32> to vector<16x128xf32>
    %173 = arith.mulf %162, %172 : vector<16x128xf32>
    %174 = arith.addf %171, %173 : vector<16x128xf32>
    %175 = math.tanh %174 : vector<16x128xf32>
    %cst_59 = arith.constant 1.000000e+00 : f32
    %176 = vector.broadcast %cst_59 : f32 to vector<16x128xf32>
    %177 = arith.subf %176, %170 : vector<16x128xf32>
    %178 = arith.mulf %177, %175 : vector<16x128xf32>
    %179 = arith.mulf %170, %149 : vector<16x128xf32>
    %180 = arith.addf %178, %179 : vector<16x128xf32>
    %c64_60 = arith.constant 64 : index
    %c0_61 = arith.constant 0 : index
    %181 = vector.load %arg16[%c64_60, %c0_61] : memref<128x128xf32, #tpu.memory_space<vmem>>, vector<16x128xf32>
    tpu.vector_store %arg16[%c64_60, %c0_61], %180 {strides = array<i32>} : memref<128x128xf32, #tpu.memory_space<vmem>>, vector<16x128xf32>,
    %c80 = arith.constant 80 : index
    %c0_62 = arith.constant 0 : index
    %182 = vector.load %arg17[%c80, %c0_62] : memref<128x384xf32, #tpu.memory_space<vmem>>, vector<16x384xf32>
    %cst_63 = arith.constant dense<0.000000e+00> : vector<16x384xf32>
    %183 = tpu.matmul %180, %22, %cst_63 {dimension_numbers = #tpu.dot_dimension_numbers<[1], [0], [0], [1], [0, 0, 1, 1], [], []>} : vector<16x128xf32>, vector<128x384xf32>, vector<16x384xf32> -> vector<16x384xf32>
    %184 = vector.broadcast %24 : vector<1x384xf32> to vector<16x384xf32>
    %185 = arith.addf %183, %184 : vector<16x384xf32>
    %186 = vector.extract_strided_slice %182 {offsets = [0, 0], sizes = [16, 128], strides = [1, 1]} : vector<16x384xf32> to vector<16x128xf32>
    %187 = vector.extract_strided_slice %185 {offsets = [0, 0], sizes = [16, 128], strides = [1, 1]} : vector<16x384xf32> to vector<16x128xf32>
    %188 = arith.addf %186, %187 : vector<16x128xf32>
    %189 = arith.negf %188 : vector<16x128xf32>
    %190 = math.exp %189 : vector<16x128xf32>
    %cst_64 = arith.constant 1.000000e+00 : f32
    %191 = vector.broadcast %cst_64 : f32 to vector<16x128xf32>
    %192 = arith.addf %191, %190 : vector<16x128xf32>
    %193 = arith.divf %191, %192 : vector<16x128xf32>
    %194 = vector.extract_strided_slice %182 {offsets = [0, 128], sizes = [16, 128], strides = [1, 1]} : vector<16x384xf32> to vector<16x128xf32>
    %195 = vector.extract_strided_slice %185 {offsets = [0, 128], sizes = [16, 128], strides = [1, 1]} : vector<16x384xf32> to vector<16x128xf32>
    %196 = arith.addf %194, %195 : vector<16x128xf32>
    %197 = arith.negf %196 : vector<16x128xf32>
    %198 = math.exp %197 : vector<16x128xf32>
    %cst_65 = arith.constant 1.000000e+00 : f32
    %199 = vector.broadcast %cst_65 : f32 to vector<16x128xf32>
    %200 = arith.addf %199, %198 : vector<16x128xf32>
    %201 = arith.divf %199, %200 : vector<16x128xf32>
    %202 = vector.extract_strided_slice %182 {offsets = [0, 256], sizes = [16, 128], strides = [1, 1]} : vector<16x384xf32> to vector<16x128xf32>
    %203 = vector.extract_strided_slice %185 {offsets = [0, 256], sizes = [16, 128], strides = [1, 1]} : vector<16x384xf32> to vector<16x128xf32>
    %204 = arith.mulf %193, %203 : vector<16x128xf32>
    %205 = arith.addf %202, %204 : vector<16x128xf32>
    %206 = math.tanh %205 : vector<16x128xf32>
    %cst_66 = arith.constant 1.000000e+00 : f32
    %207 = vector.broadcast %cst_66 : f32 to vector<16x128xf32>
    %208 = arith.subf %207, %201 : vector<16x128xf32>
    %209 = arith.mulf %208, %206 : vector<16x128xf32>
    %210 = arith.mulf %201, %180 : vector<16x128xf32>
    %211 = arith.addf %209, %210 : vector<16x128xf32>
    %c80_67 = arith.constant 80 : index
    %c0_68 = arith.constant 0 : index
    %212 = vector.load %arg16[%c80_67, %c0_68] : memref<128x128xf32, #tpu.memory_space<vmem>>, vector<16x128xf32>
    tpu.vector_store %arg16[%c80_67, %c0_68], %211 {strides = array<i32>} : memref<128x128xf32, #tpu.memory_space<vmem>>, vector<16x128xf32>,
    %c96 = arith.constant 96 : index
    %c0_69 = arith.constant 0 : index
    %213 = vector.load %arg17[%c96, %c0_69] : memref<128x384xf32, #tpu.memory_space<vmem>>, vector<16x384xf32>
    %cst_70 = arith.constant dense<0.000000e+00> : vector<16x384xf32>
    %214 = tpu.matmul %211, %22, %cst_70 {dimension_numbers = #tpu.dot_dimension_numbers<[1], [0], [0], [1], [0, 0, 1, 1], [], []>} : vector<16x128xf32>, vector<128x384xf32>, vector<16x384xf32> -> vector<16x384xf32>
    %215 = vector.broadcast %24 : vector<1x384xf32> to vector<16x384xf32>
    %216 = arith.addf %214, %215 : vector<16x384xf32>
    %217 = vector.extract_strided_slice %213 {offsets = [0, 0], sizes = [16, 128], strides = [1, 1]} : vector<16x384xf32> to vector<16x128xf32>
    %218 = vector.extract_strided_slice %216 {offsets = [0, 0], sizes = [16, 128], strides = [1, 1]} : vector<16x384xf32> to vector<16x128xf32>
    %219 = arith.addf %217, %218 : vector<16x128xf32>
    %220 = arith.negf %219 : vector<16x128xf32>
    %221 = math.exp %220 : vector<16x128xf32>
    %cst_71 = arith.constant 1.000000e+00 : f32
    %222 = vector.broadcast %cst_71 : f32 to vector<16x128xf32>
    %223 = arith.addf %222, %221 : vector<16x128xf32>
    %224 = arith.divf %222, %223 : vector<16x128xf32>
    %225 = vector.extract_strided_slice %213 {offsets = [0, 128], sizes = [16, 128], strides = [1, 1]} : vector<16x384xf32> to vector<16x128xf32>
    %226 = vector.extract_strided_slice %216 {offsets = [0, 128], sizes = [16, 128], strides = [1, 1]} : vector<16x384xf32> to vector<16x128xf32>
    %227 = arith.addf %225, %226 : vector<16x128xf32>
    %228 = arith.negf %227 : vector<16x128xf32>
    %229 = math.exp %228 : vector<16x128xf32>
    %cst_72 = arith.constant 1.000000e+00 : f32
    %230 = vector.broadcast %cst_72 : f32 to vector<16x128xf32>
    %231 = arith.addf %230, %229 : vector<16x128xf32>
    %232 = arith.divf %230, %231 : vector<16x128xf32>
    %233 = vector.extract_strided_slice %213 {offsets = [0, 256], sizes = [16, 128], strides = [1, 1]} : vector<16x384xf32> to vector<16x128xf32>
    %234 = vector.extract_strided_slice %216 {offsets = [0, 256], sizes = [16, 128], strides = [1, 1]} : vector<16x384xf32> to vector<16x128xf32>
    %235 = arith.mulf %224, %234 : vector<16x128xf32>
    %236 = arith.addf %233, %235 : vector<16x128xf32>
    %237 = math.tanh %236 : vector<16x128xf32>
    %cst_73 = arith.constant 1.000000e+00 : f32
    %238 = vector.broadcast %cst_73 : f32 to vector<16x128xf32>
    %239 = arith.subf %238, %232 : vector<16x128xf32>
    %240 = arith.mulf %239, %237 : vector<16x128xf32>
    %241 = arith.mulf %232, %211 : vector<16x128xf32>
    %242 = arith.addf %240, %241 : vector<16x128xf32>
    %c96_74 = arith.constant 96 : index
    %c0_75 = arith.constant 0 : index
    %243 = vector.load %arg16[%c96_74, %c0_75] : memref<128x128xf32, #tpu.memory_space<vmem>>, vector<16x128xf32>
    tpu.vector_store %arg16[%c96_74, %c0_75], %242 {strides = array<i32>} : memref<128x128xf32, #tpu.memory_space<vmem>>, vector<16x128xf32>,
    %c112 = arith.constant 112 : index
    %c0_76 = arith.constant 0 : index
    %244 = vector.load %arg17[%c112, %c0_76] : memref<128x384xf32, #tpu.memory_space<vmem>>, vector<16x384xf32>
    %cst_77 = arith.constant dense<0.000000e+00> : vector<16x384xf32>
    %245 = tpu.matmul %242, %22, %cst_77 {dimension_numbers = #tpu.dot_dimension_numbers<[1], [0], [0], [1], [0, 0, 1, 1], [], []>} : vector<16x128xf32>, vector<128x384xf32>, vector<16x384xf32> -> vector<16x384xf32>
    %246 = vector.broadcast %24 : vector<1x384xf32> to vector<16x384xf32>
    %247 = arith.addf %245, %246 : vector<16x384xf32>
    %248 = vector.extract_strided_slice %244 {offsets = [0, 0], sizes = [16, 128], strides = [1, 1]} : vector<16x384xf32> to vector<16x128xf32>
    %249 = vector.extract_strided_slice %247 {offsets = [0, 0], sizes = [16, 128], strides = [1, 1]} : vector<16x384xf32> to vector<16x128xf32>
    %250 = arith.addf %248, %249 : vector<16x128xf32>
    %251 = arith.negf %250 : vector<16x128xf32>
    %252 = math.exp %251 : vector<16x128xf32>
    %cst_78 = arith.constant 1.000000e+00 : f32
    %253 = vector.broadcast %cst_78 : f32 to vector<16x128xf32>
    %254 = arith.addf %253, %252 : vector<16x128xf32>
    %255 = arith.divf %253, %254 : vector<16x128xf32>
    %256 = vector.extract_strided_slice %244 {offsets = [0, 128], sizes = [16, 128], strides = [1, 1]} : vector<16x384xf32> to vector<16x128xf32>
    %257 = vector.extract_strided_slice %247 {offsets = [0, 128], sizes = [16, 128], strides = [1, 1]} : vector<16x384xf32> to vector<16x128xf32>
    %258 = arith.addf %256, %257 : vector<16x128xf32>
    %259 = arith.negf %258 : vector<16x128xf32>
    %260 = math.exp %259 : vector<16x128xf32>
    %cst_79 = arith.constant 1.000000e+00 : f32
    %261 = vector.broadcast %cst_79 : f32 to vector<16x128xf32>
    %262 = arith.addf %261, %260 : vector<16x128xf32>
    %263 = arith.divf %261, %262 : vector<16x128xf32>
    %264 = vector.extract_strided_slice %244 {offsets = [0, 256], sizes = [16, 128], strides = [1, 1]} : vector<16x384xf32> to vector<16x128xf32>
    %265 = vector.extract_strided_slice %247 {offsets = [0, 256], sizes = [16, 128], strides = [1, 1]} : vector<16x384xf32> to vector<16x128xf32>
    %266 = arith.mulf %255, %265 : vector<16x128xf32>
    %267 = arith.addf %264, %266 : vector<16x128xf32>
    %268 = math.tanh %267 : vector<16x128xf32>
    %cst_80 = arith.constant 1.000000e+00 : f32
    %269 = vector.broadcast %cst_80 : f32 to vector<16x128xf32>
    %270 = arith.subf %269, %263 : vector<16x128xf32>
    %271 = arith.mulf %270, %268 : vector<16x128xf32>
    %272 = arith.mulf %263, %242 : vector<16x128xf32>
    %273 = arith.addf %271, %272 : vector<16x128xf32>
    %c112_81 = arith.constant 112 : index
    %c0_82 = arith.constant 0 : index
    %274 = vector.load %arg16[%c112_81, %c0_82] : memref<128x128xf32, #tpu.memory_space<vmem>>, vector<16x128xf32>
    tpu.vector_store %arg16[%c112_81, %c0_82], %273 {strides = array<i32>} : memref<128x128xf32, #tpu.memory_space<vmem>>, vector<16x128xf32>,
    %c0_83 = arith.constant 0 : index
    %c0_84 = arith.constant 0 : index
    %c0_85 = arith.constant 0 : index
    %275 = vector.load %arg15[%c0_83, %c0_84, %c0_85] : memref<2x16x128xf32, #tpu.memory_space<vmem>>, vector<1x16x128xf32>
    %276 = vector.shape_cast %275 : vector<1x16x128xf32> to vector<16x128xf32>
    %277 = vector.shape_cast %273 : vector<16x128xf32> to vector<1x16x128xf32>
    tpu.vector_store %arg15[%c0_83, %c0_84, %c0_85], %277 {strides = array<i32>} : memref<2x16x128xf32, #tpu.memory_space<vmem>>, vector<1x16x128xf32>,
    %c0_86 = arith.constant 0 : index
    %c0_87 = arith.constant 0 : index
    %278 = vector.load %arg16[%c0_86, %c0_87] : memref<128x128xf32, #tpu.memory_space<vmem>>, vector<128x128xf32>
    %279 = arith.truncf %278 : vector<128x128xf32> to vector<128x128xbf16>
    %c1 = arith.constant 1 : index
    %c0_88 = arith.constant 0 : index
    %c0_89 = arith.constant 0 : index
    %280 = vector.load %arg6[%c1, %c0_88, %c0_89] : memref<2x128x384xf32, #tpu.memory_space<vmem>>, vector<1x128x384xf32>
    %281 = vector.shape_cast %280 : vector<1x128x384xf32> to vector<128x384xf32>
    %282 = arith.truncf %281 : vector<128x384xf32> to vector<128x384xbf16>
    %cst_90 = arith.constant dense<0.000000e+00> : vector<128x384xf32>
    %283 = tpu.matmul %279, %282, %cst_90 {dimension_numbers = #tpu.dot_dimension_numbers<[1], [0], [0], [1], [0, 0, 1, 1], [], []>} : vector<128x128xbf16>, vector<128x384xbf16>, vector<128x384xf32> -> vector<128x384xf32>
    %c1_91 = arith.constant 1 : index
    %c0_92 = arith.constant 0 : index
    %c0_93 = arith.constant 0 : index
    %284 = vector.load %arg8[%c1_91, %c0_92, %c0_93] : memref<2x1x384xf32, #tpu.memory_space<vmem>>, vector<1x1x384xf32>
    %285 = vector.shape_cast %284 : vector<1x1x384xf32> to vector<1x384xf32>
    %286 = vector.broadcast %285 : vector<1x384xf32> to vector<128x384xf32>
    %287 = arith.addf %283, %286 : vector<128x384xf32>
    %c0_94 = arith.constant 0 : index
    %c0_95 = arith.constant 0 : index
    %288 = vector.load %arg17[%c0_94, %c0_95] : memref<128x384xf32, #tpu.memory_space<vmem>>, vector<128x384xf32>
    tpu.vector_store %arg17[%c0_94, %c0_95], %287 {strides = array<i32>} : memref<128x384xf32, #tpu.memory_space<vmem>>, vector<128x384xf32>,
    %c1_96 = arith.constant 1 : index
    %c0_97 = arith.constant 0 : index
    %c0_98 = arith.constant 0 : index
    %289 = vector.load %arg7[%c1_96, %c0_97, %c0_98] : memref<2x128x384xf32, #tpu.memory_space<vmem>>, vector<1x128x384xf32>
    %290 = vector.shape_cast %289 : vector<1x128x384xf32> to vector<128x384xf32>
    %c1_99 = arith.constant 1 : index
    %c0_100 = arith.constant 0 : index
    %c0_101 = arith.constant 0 : index
    %291 = vector.load %arg9[%c1_99, %c0_100, %c0_101] : memref<2x1x384xf32, #tpu.memory_space<vmem>>, vector<1x1x384xf32>
    %292 = vector.shape_cast %291 : vector<1x1x384xf32> to vector<1x384xf32>
    %c1_102 = arith.constant 1 : index
    %c0_103 = arith.constant 0 : index
    %c0_104 = arith.constant 0 : index
    %293 = vector.load %arg4[%c1_102, %c0_103, %c0_104] : memref<2x16x128xf32, #tpu.memory_space<vmem>>, vector<1x16x128xf32>
    %294 = vector.shape_cast %293 : vector<1x16x128xf32> to vector<16x128xf32>
    %c0_105 = arith.constant 0 : index
    %c0_106 = arith.constant 0 : index
    %295 = vector.load %arg17[%c0_105, %c0_106] : memref<128x384xf32, #tpu.memory_space<vmem>>, vector<16x384xf32>
    %cst_107 = arith.constant dense<0.000000e+00> : vector<16x384xf32>
    %296 = tpu.matmul %294, %290, %cst_107 {dimension_numbers = #tpu.dot_dimension_numbers<[1], [0], [0], [1], [0, 0, 1, 1], [], []>} : vector<16x128xf32>, vector<128x384xf32>, vector<16x384xf32> -> vector<16x384xf32>
    %297 = vector.broadcast %292 : vector<1x384xf32> to vector<16x384xf32>
    %298 = arith.addf %296, %297 : vector<16x384xf32>
    %299 = vector.extract_strided_slice %295 {offsets = [0, 0], sizes = [16, 128], strides = [1, 1]} : vector<16x384xf32> to vector<16x128xf32>
    %300 = vector.extract_strided_slice %298 {offsets = [0, 0], sizes = [16, 128], strides = [1, 1]} : vector<16x384xf32> to vector<16x128xf32>
    %301 = arith.addf %299, %300 : vector<16x128xf32>
    %302 = arith.negf %301 : vector<16x128xf32>
    %303 = math.exp %302 : vector<16x128xf32>
    %cst_108 = arith.constant 1.000000e+00 : f32
    %304 = vector.broadcast %cst_108 : f32 to vector<16x128xf32>
    %305 = arith.addf %304, %303 : vector<16x128xf32>
    %306 = arith.divf %304, %305 : vector<16x128xf32>
    %307 = vector.extract_strided_slice %295 {offsets = [0, 128], sizes = [16, 128], strides = [1, 1]} : vector<16x384xf32> to vector<16x128xf32>
    %308 = vector.extract_strided_slice %298 {offsets = [0, 128], sizes = [16, 128], strides = [1, 1]} : vector<16x384xf32> to vector<16x128xf32>
    %309 = arith.addf %307, %308 : vector<16x128xf32>
    %310 = arith.negf %309 : vector<16x128xf32>
    %311 = math.exp %310 : vector<16x128xf32>
    %cst_109 = arith.constant 1.000000e+00 : f32
    %312 = vector.broadcast %cst_109 : f32 to vector<16x128xf32>
    %313 = arith.addf %312, %311 : vector<16x128xf32>
    %314 = arith.divf %312, %313 : vector<16x128xf32>
    %315 = vector.extract_strided_slice %295 {offsets = [0, 256], sizes = [16, 128], strides = [1, 1]} : vector<16x384xf32> to vector<16x128xf32>
    %316 = vector.extract_strided_slice %298 {offsets = [0, 256], sizes = [16, 128], strides = [1, 1]} : vector<16x384xf32> to vector<16x128xf32>
    %317 = arith.mulf %306, %316 : vector<16x128xf32>
    %318 = arith.addf %315, %317 : vector<16x128xf32>
    %319 = math.tanh %318 : vector<16x128xf32>
    %cst_110 = arith.constant 1.000000e+00 : f32
    %320 = vector.broadcast %cst_110 : f32 to vector<16x128xf32>
    %321 = arith.subf %320, %314 : vector<16x128xf32>
    %322 = arith.mulf %321, %319 : vector<16x128xf32>
    %323 = arith.mulf %314, %294 : vector<16x128xf32>
    %324 = arith.addf %322, %323 : vector<16x128xf32>
    %c0_111 = arith.constant 0 : index
    %c0_112 = arith.constant 0 : index
    %325 = vector.load %arg16[%c0_111, %c0_112] : memref<128x128xf32, #tpu.memory_space<vmem>>, vector<16x128xf32>
    tpu.vector_store %arg16[%c0_111, %c0_112], %324 {strides = array<i32>} : memref<128x128xf32, #tpu.memory_space<vmem>>, vector<16x128xf32>,
    %c16_113 = arith.constant 16 : index
    %c0_114 = arith.constant 0 : index
    %326 = vector.load %arg17[%c16_113, %c0_114] : memref<128x384xf32, #tpu.memory_space<vmem>>, vector<16x384xf32>
    %cst_115 = arith.constant dense<0.000000e+00> : vector<16x384xf32>
    %327 = tpu.matmul %324, %290, %cst_115 {dimension_numbers = #tpu.dot_dimension_numbers<[1], [0], [0], [1], [0, 0, 1, 1], [], []>} : vector<16x128xf32>, vector<128x384xf32>, vector<16x384xf32> -> vector<16x384xf32>
    %328 = vector.broadcast %292 : vector<1x384xf32> to vector<16x384xf32>
    %329 = arith.addf %327, %328 : vector<16x384xf32>
    %330 = vector.extract_strided_slice %326 {offsets = [0, 0], sizes = [16, 128], strides = [1, 1]} : vector<16x384xf32> to vector<16x128xf32>
    %331 = vector.extract_strided_slice %329 {offsets = [0, 0], sizes = [16, 128], strides = [1, 1]} : vector<16x384xf32> to vector<16x128xf32>
    %332 = arith.addf %330, %331 : vector<16x128xf32>
    %333 = arith.negf %332 : vector<16x128xf32>
    %334 = math.exp %333 : vector<16x128xf32>
    %cst_116 = arith.constant 1.000000e+00 : f32
    %335 = vector.broadcast %cst_116 : f32 to vector<16x128xf32>
    %336 = arith.addf %335, %334 : vector<16x128xf32>
    %337 = arith.divf %335, %336 : vector<16x128xf32>
    %338 = vector.extract_strided_slice %326 {offsets = [0, 128], sizes = [16, 128], strides = [1, 1]} : vector<16x384xf32> to vector<16x128xf32>
    %339 = vector.extract_strided_slice %329 {offsets = [0, 128], sizes = [16, 128], strides = [1, 1]} : vector<16x384xf32> to vector<16x128xf32>
    %340 = arith.addf %338, %339 : vector<16x128xf32>
    %341 = arith.negf %340 : vector<16x128xf32>
    %342 = math.exp %341 : vector<16x128xf32>
    %cst_117 = arith.constant 1.000000e+00 : f32
    %343 = vector.broadcast %cst_117 : f32 to vector<16x128xf32>
    %344 = arith.addf %343, %342 : vector<16x128xf32>
    %345 = arith.divf %343, %344 : vector<16x128xf32>
    %346 = vector.extract_strided_slice %326 {offsets = [0, 256], sizes = [16, 128], strides = [1, 1]} : vector<16x384xf32> to vector<16x128xf32>
    %347 = vector.extract_strided_slice %329 {offsets = [0, 256], sizes = [16, 128], strides = [1, 1]} : vector<16x384xf32> to vector<16x128xf32>
    %348 = arith.mulf %337, %347 : vector<16x128xf32>
    %349 = arith.addf %346, %348 : vector<16x128xf32>
    %350 = math.tanh %349 : vector<16x128xf32>
    %cst_118 = arith.constant 1.000000e+00 : f32
    %351 = vector.broadcast %cst_118 : f32 to vector<16x128xf32>
    %352 = arith.subf %351, %345 : vector<16x128xf32>
    %353 = arith.mulf %352, %350 : vector<16x128xf32>
    %354 = arith.mulf %345, %324 : vector<16x128xf32>
    %355 = arith.addf %353, %354 : vector<16x128xf32>
    %c16_119 = arith.constant 16 : index
    %c0_120 = arith.constant 0 : index
    %356 = vector.load %arg16[%c16_119, %c0_120] : memref<128x128xf32, #tpu.memory_space<vmem>>, vector<16x128xf32>
    tpu.vector_store %arg16[%c16_119, %c0_120], %355 {strides = array<i32>} : memref<128x128xf32, #tpu.memory_space<vmem>>, vector<16x128xf32>,
    %c32_121 = arith.constant 32 : index
    %c0_122 = arith.constant 0 : index
    %357 = vector.load %arg17[%c32_121, %c0_122] : memref<128x384xf32, #tpu.memory_space<vmem>>, vector<16x384xf32>
    %cst_123 = arith.constant dense<0.000000e+00> : vector<16x384xf32>
    %358 = tpu.matmul %355, %290, %cst_123 {dimension_numbers = #tpu.dot_dimension_numbers<[1], [0], [0], [1], [0, 0, 1, 1], [], []>} : vector<16x128xf32>, vector<128x384xf32>, vector<16x384xf32> -> vector<16x384xf32>
    %359 = vector.broadcast %292 : vector<1x384xf32> to vector<16x384xf32>
    %360 = arith.addf %358, %359 : vector<16x384xf32>
    %361 = vector.extract_strided_slice %357 {offsets = [0, 0], sizes = [16, 128], strides = [1, 1]} : vector<16x384xf32> to vector<16x128xf32>
    %362 = vector.extract_strided_slice %360 {offsets = [0, 0], sizes = [16, 128], strides = [1, 1]} : vector<16x384xf32> to vector<16x128xf32>
    %363 = arith.addf %361, %362 : vector<16x128xf32>
    %364 = arith.negf %363 : vector<16x128xf32>
    %365 = math.exp %364 : vector<16x128xf32>
    %cst_124 = arith.constant 1.000000e+00 : f32
    %366 = vector.broadcast %cst_124 : f32 to vector<16x128xf32>
    %367 = arith.addf %366, %365 : vector<16x128xf32>
    %368 = arith.divf %366, %367 : vector<16x128xf32>
    %369 = vector.extract_strided_slice %357 {offsets = [0, 128], sizes = [16, 128], strides = [1, 1]} : vector<16x384xf32> to vector<16x128xf32>
    %370 = vector.extract_strided_slice %360 {offsets = [0, 128], sizes = [16, 128], strides = [1, 1]} : vector<16x384xf32> to vector<16x128xf32>
    %371 = arith.addf %369, %370 : vector<16x128xf32>
    %372 = arith.negf %371 : vector<16x128xf32>
    %373 = math.exp %372 : vector<16x128xf32>
    %cst_125 = arith.constant 1.000000e+00 : f32
    %374 = vector.broadcast %cst_125 : f32 to vector<16x128xf32>
    %375 = arith.addf %374, %373 : vector<16x128xf32>
    %376 = arith.divf %374, %375 : vector<16x128xf32>
    %377 = vector.extract_strided_slice %357 {offsets = [0, 256], sizes = [16, 128], strides = [1, 1]} : vector<16x384xf32> to vector<16x128xf32>
    %378 = vector.extract_strided_slice %360 {offsets = [0, 256], sizes = [16, 128], strides = [1, 1]} : vector<16x384xf32> to vector<16x128xf32>
    %379 = arith.mulf %368, %378 : vector<16x128xf32>
    %380 = arith.addf %377, %379 : vector<16x128xf32>
    %381 = math.tanh %380 : vector<16x128xf32>
    %cst_126 = arith.constant 1.000000e+00 : f32
    %382 = vector.broadcast %cst_126 : f32 to vector<16x128xf32>
    %383 = arith.subf %382, %376 : vector<16x128xf32>
    %384 = arith.mulf %383, %381 : vector<16x128xf32>
    %385 = arith.mulf %376, %355 : vector<16x128xf32>
    %386 = arith.addf %384, %385 : vector<16x128xf32>
    %c32_127 = arith.constant 32 : index
    %c0_128 = arith.constant 0 : index
    %387 = vector.load %arg16[%c32_127, %c0_128] : memref<128x128xf32, #tpu.memory_space<vmem>>, vector<16x128xf32>
    tpu.vector_store %arg16[%c32_127, %c0_128], %386 {strides = array<i32>} : memref<128x128xf32, #tpu.memory_space<vmem>>, vector<16x128xf32>,
    %c48_129 = arith.constant 48 : index
    %c0_130 = arith.constant 0 : index
    %388 = vector.load %arg17[%c48_129, %c0_130] : memref<128x384xf32, #tpu.memory_space<vmem>>, vector<16x384xf32>
    %cst_131 = arith.constant dense<0.000000e+00> : vector<16x384xf32>
    %389 = tpu.matmul %386, %290, %cst_131 {dimension_numbers = #tpu.dot_dimension_numbers<[1], [0], [0], [1], [0, 0, 1, 1], [], []>} : vector<16x128xf32>, vector<128x384xf32>, vector<16x384xf32> -> vector<16x384xf32>
    %390 = vector.broadcast %292 : vector<1x384xf32> to vector<16x384xf32>
    %391 = arith.addf %389, %390 : vector<16x384xf32>
    %392 = vector.extract_strided_slice %388 {offsets = [0, 0], sizes = [16, 128], strides = [1, 1]} : vector<16x384xf32> to vector<16x128xf32>
    %393 = vector.extract_strided_slice %391 {offsets = [0, 0], sizes = [16, 128], strides = [1, 1]} : vector<16x384xf32> to vector<16x128xf32>
    %394 = arith.addf %392, %393 : vector<16x128xf32>
    %395 = arith.negf %394 : vector<16x128xf32>
    %396 = math.exp %395 : vector<16x128xf32>
    %cst_132 = arith.constant 1.000000e+00 : f32
    %397 = vector.broadcast %cst_132 : f32 to vector<16x128xf32>
    %398 = arith.addf %397, %396 : vector<16x128xf32>
    %399 = arith.divf %397, %398 : vector<16x128xf32>
    %400 = vector.extract_strided_slice %388 {offsets = [0, 128], sizes = [16, 128], strides = [1, 1]} : vector<16x384xf32> to vector<16x128xf32>
    %401 = vector.extract_strided_slice %391 {offsets = [0, 128], sizes = [16, 128], strides = [1, 1]} : vector<16x384xf32> to vector<16x128xf32>
    %402 = arith.addf %400, %401 : vector<16x128xf32>
    %403 = arith.negf %402 : vector<16x128xf32>
    %404 = math.exp %403 : vector<16x128xf32>
    %cst_133 = arith.constant 1.000000e+00 : f32
    %405 = vector.broadcast %cst_133 : f32 to vector<16x128xf32>
    %406 = arith.addf %405, %404 : vector<16x128xf32>
    %407 = arith.divf %405, %406 : vector<16x128xf32>
    %408 = vector.extract_strided_slice %388 {offsets = [0, 256], sizes = [16, 128], strides = [1, 1]} : vector<16x384xf32> to vector<16x128xf32>
    %409 = vector.extract_strided_slice %391 {offsets = [0, 256], sizes = [16, 128], strides = [1, 1]} : vector<16x384xf32> to vector<16x128xf32>
    %410 = arith.mulf %399, %409 : vector<16x128xf32>
    %411 = arith.addf %408, %410 : vector<16x128xf32>
    %412 = math.tanh %411 : vector<16x128xf32>
    %cst_134 = arith.constant 1.000000e+00 : f32
    %413 = vector.broadcast %cst_134 : f32 to vector<16x128xf32>
    %414 = arith.subf %413, %407 : vector<16x128xf32>
    %415 = arith.mulf %414, %412 : vector<16x128xf32>
    %416 = arith.mulf %407, %386 : vector<16x128xf32>
    %417 = arith.addf %415, %416 : vector<16x128xf32>
    %c48_135 = arith.constant 48 : index
    %c0_136 = arith.constant 0 : index
    %418 = vector.load %arg16[%c48_135, %c0_136] : memref<128x128xf32, #tpu.memory_space<vmem>>, vector<16x128xf32>
    tpu.vector_store %arg16[%c48_135, %c0_136], %417 {strides = array<i32>} : memref<128x128xf32, #tpu.memory_space<vmem>>, vector<16x128xf32>,
    %c64_137 = arith.constant 64 : index
    %c0_138 = arith.constant 0 : index
    %419 = vector.load %arg17[%c64_137, %c0_138] : memref<128x384xf32, #tpu.memory_space<vmem>>, vector<16x384xf32>
    %cst_139 = arith.constant dense<0.000000e+00> : vector<16x384xf32>
    %420 = tpu.matmul %417, %290, %cst_139 {dimension_numbers = #tpu.dot_dimension_numbers<[1], [0], [0], [1], [0, 0, 1, 1], [], []>} : vector<16x128xf32>, vector<128x384xf32>, vector<16x384xf32> -> vector<16x384xf32>
    %421 = vector.broadcast %292 : vector<1x384xf32> to vector<16x384xf32>
    %422 = arith.addf %420, %421 : vector<16x384xf32>
    %423 = vector.extract_strided_slice %419 {offsets = [0, 0], sizes = [16, 128], strides = [1, 1]} : vector<16x384xf32> to vector<16x128xf32>
    %424 = vector.extract_strided_slice %422 {offsets = [0, 0], sizes = [16, 128], strides = [1, 1]} : vector<16x384xf32> to vector<16x128xf32>
    %425 = arith.addf %423, %424 : vector<16x128xf32>
    %426 = arith.negf %425 : vector<16x128xf32>
    %427 = math.exp %426 : vector<16x128xf32>
    %cst_140 = arith.constant 1.000000e+00 : f32
    %428 = vector.broadcast %cst_140 : f32 to vector<16x128xf32>
    %429 = arith.addf %428, %427 : vector<16x128xf32>
    %430 = arith.divf %428, %429 : vector<16x128xf32>
    %431 = vector.extract_strided_slice %419 {offsets = [0, 128], sizes = [16, 128], strides = [1, 1]} : vector<16x384xf32> to vector<16x128xf32>
    %432 = vector.extract_strided_slice %422 {offsets = [0, 128], sizes = [16, 128], strides = [1, 1]} : vector<16x384xf32> to vector<16x128xf32>
    %433 = arith.addf %431, %432 : vector<16x128xf32>
    %434 = arith.negf %433 : vector<16x128xf32>
    %435 = math.exp %434 : vector<16x128xf32>
    %cst_141 = arith.constant 1.000000e+00 : f32
    %436 = vector.broadcast %cst_141 : f32 to vector<16x128xf32>
    %437 = arith.addf %436, %435 : vector<16x128xf32>
    %438 = arith.divf %436, %437 : vector<16x128xf32>
    %439 = vector.extract_strided_slice %419 {offsets = [0, 256], sizes = [16, 128], strides = [1, 1]} : vector<16x384xf32> to vector<16x128xf32>
    %440 = vector.extract_strided_slice %422 {offsets = [0, 256], sizes = [16, 128], strides = [1, 1]} : vector<16x384xf32> to vector<16x128xf32>
    %441 = arith.mulf %430, %440 : vector<16x128xf32>
    %442 = arith.addf %439, %441 : vector<16x128xf32>
    %443 = math.tanh %442 : vector<16x128xf32>
    %cst_142 = arith.constant 1.000000e+00 : f32
    %444 = vector.broadcast %cst_142 : f32 to vector<16x128xf32>
    %445 = arith.subf %444, %438 : vector<16x128xf32>
    %446 = arith.mulf %445, %443 : vector<16x128xf32>
    %447 = arith.mulf %438, %417 : vector<16x128xf32>
    %448 = arith.addf %446, %447 : vector<16x128xf32>
    %c64_143 = arith.constant 64 : index
    %c0_144 = arith.constant 0 : index
    %449 = vector.load %arg16[%c64_143, %c0_144] : memref<128x128xf32, #tpu.memory_space<vmem>>, vector<16x128xf32>
    tpu.vector_store %arg16[%c64_143, %c0_144], %448 {strides = array<i32>} : memref<128x128xf32, #tpu.memory_space<vmem>>, vector<16x128xf32>,
    %c80_145 = arith.constant 80 : index
    %c0_146 = arith.constant 0 : index
    %450 = vector.load %arg17[%c80_145, %c0_146] : memref<128x384xf32, #tpu.memory_space<vmem>>, vector<16x384xf32>
    %cst_147 = arith.constant dense<0.000000e+00> : vector<16x384xf32>
    %451 = tpu.matmul %448, %290, %cst_147 {dimension_numbers = #tpu.dot_dimension_numbers<[1], [0], [0], [1], [0, 0, 1, 1], [], []>} : vector<16x128xf32>, vector<128x384xf32>, vector<16x384xf32> -> vector<16x384xf32>
    %452 = vector.broadcast %292 : vector<1x384xf32> to vector<16x384xf32>
    %453 = arith.addf %451, %452 : vector<16x384xf32>
    %454 = vector.extract_strided_slice %450 {offsets = [0, 0], sizes = [16, 128], strides = [1, 1]} : vector<16x384xf32> to vector<16x128xf32>
    %455 = vector.extract_strided_slice %453 {offsets = [0, 0], sizes = [16, 128], strides = [1, 1]} : vector<16x384xf32> to vector<16x128xf32>
    %456 = arith.addf %454, %455 : vector<16x128xf32>
    %457 = arith.negf %456 : vector<16x128xf32>
    %458 = math.exp %457 : vector<16x128xf32>
    %cst_148 = arith.constant 1.000000e+00 : f32
    %459 = vector.broadcast %cst_148 : f32 to vector<16x128xf32>
    %460 = arith.addf %459, %458 : vector<16x128xf32>
    %461 = arith.divf %459, %460 : vector<16x128xf32>
    %462 = vector.extract_strided_slice %450 {offsets = [0, 128], sizes = [16, 128], strides = [1, 1]} : vector<16x384xf32> to vector<16x128xf32>
    %463 = vector.extract_strided_slice %453 {offsets = [0, 128], sizes = [16, 128], strides = [1, 1]} : vector<16x384xf32> to vector<16x128xf32>
    %464 = arith.addf %462, %463 : vector<16x128xf32>
    %465 = arith.negf %464 : vector<16x128xf32>
    %466 = math.exp %465 : vector<16x128xf32>
    %cst_149 = arith.constant 1.000000e+00 : f32
    %467 = vector.broadcast %cst_149 : f32 to vector<16x128xf32>
    %468 = arith.addf %467, %466 : vector<16x128xf32>
    %469 = arith.divf %467, %468 : vector<16x128xf32>
    %470 = vector.extract_strided_slice %450 {offsets = [0, 256], sizes = [16, 128], strides = [1, 1]} : vector<16x384xf32> to vector<16x128xf32>
    %471 = vector.extract_strided_slice %453 {offsets = [0, 256], sizes = [16, 128], strides = [1, 1]} : vector<16x384xf32> to vector<16x128xf32>
    %472 = arith.mulf %461, %471 : vector<16x128xf32>
    %473 = arith.addf %470, %472 : vector<16x128xf32>
    %474 = math.tanh %473 : vector<16x128xf32>
    %cst_150 = arith.constant 1.000000e+00 : f32
    %475 = vector.broadcast %cst_150 : f32 to vector<16x128xf32>
    %476 = arith.subf %475, %469 : vector<16x128xf32>
    %477 = arith.mulf %476, %474 : vector<16x128xf32>
    %478 = arith.mulf %469, %448 : vector<16x128xf32>
    %479 = arith.addf %477, %478 : vector<16x128xf32>
    %c80_151 = arith.constant 80 : index
    %c0_152 = arith.constant 0 : index
    %480 = vector.load %arg16[%c80_151, %c0_152] : memref<128x128xf32, #tpu.memory_space<vmem>>, vector<16x128xf32>
    tpu.vector_store %arg16[%c80_151, %c0_152], %479 {strides = array<i32>} : memref<128x128xf32, #tpu.memory_space<vmem>>, vector<16x128xf32>,
    %c96_153 = arith.constant 96 : index
    %c0_154 = arith.constant 0 : index
    %481 = vector.load %arg17[%c96_153, %c0_154] : memref<128x384xf32, #tpu.memory_space<vmem>>, vector<16x384xf32>
    %cst_155 = arith.constant dense<0.000000e+00> : vector<16x384xf32>
    %482 = tpu.matmul %479, %290, %cst_155 {dimension_numbers = #tpu.dot_dimension_numbers<[1], [0], [0], [1], [0, 0, 1, 1], [], []>} : vector<16x128xf32>, vector<128x384xf32>, vector<16x384xf32> -> vector<16x384xf32>
    %483 = vector.broadcast %292 : vector<1x384xf32> to vector<16x384xf32>
    %484 = arith.addf %482, %483 : vector<16x384xf32>
    %485 = vector.extract_strided_slice %481 {offsets = [0, 0], sizes = [16, 128], strides = [1, 1]} : vector<16x384xf32> to vector<16x128xf32>
    %486 = vector.extract_strided_slice %484 {offsets = [0, 0], sizes = [16, 128], strides = [1, 1]} : vector<16x384xf32> to vector<16x128xf32>
    %487 = arith.addf %485, %486 : vector<16x128xf32>
    %488 = arith.negf %487 : vector<16x128xf32>
    %489 = math.exp %488 : vector<16x128xf32>
    %cst_156 = arith.constant 1.000000e+00 : f32
    %490 = vector.broadcast %cst_156 : f32 to vector<16x128xf32>
    %491 = arith.addf %490, %489 : vector<16x128xf32>
    %492 = arith.divf %490, %491 : vector<16x128xf32>
    %493 = vector.extract_strided_slice %481 {offsets = [0, 128], sizes = [16, 128], strides = [1, 1]} : vector<16x384xf32> to vector<16x128xf32>
    %494 = vector.extract_strided_slice %484 {offsets = [0, 128], sizes = [16, 128], strides = [1, 1]} : vector<16x384xf32> to vector<16x128xf32>
    %495 = arith.addf %493, %494 : vector<16x128xf32>
    %496 = arith.negf %495 : vector<16x128xf32>
    %497 = math.exp %496 : vector<16x128xf32>
    %cst_157 = arith.constant 1.000000e+00 : f32
    %498 = vector.broadcast %cst_157 : f32 to vector<16x128xf32>
    %499 = arith.addf %498, %497 : vector<16x128xf32>
    %500 = arith.divf %498, %499 : vector<16x128xf32>
    %501 = vector.extract_strided_slice %481 {offsets = [0, 256], sizes = [16, 128], strides = [1, 1]} : vector<16x384xf32> to vector<16x128xf32>
    %502 = vector.extract_strided_slice %484 {offsets = [0, 256], sizes = [16, 128], strides = [1, 1]} : vector<16x384xf32> to vector<16x128xf32>
    %503 = arith.mulf %492, %502 : vector<16x128xf32>
    %504 = arith.addf %501, %503 : vector<16x128xf32>
    %505 = math.tanh %504 : vector<16x128xf32>
    %cst_158 = arith.constant 1.000000e+00 : f32
    %506 = vector.broadcast %cst_158 : f32 to vector<16x128xf32>
    %507 = arith.subf %506, %500 : vector<16x128xf32>
    %508 = arith.mulf %507, %505 : vector<16x128xf32>
    %509 = arith.mulf %500, %479 : vector<16x128xf32>
    %510 = arith.addf %508, %509 : vector<16x128xf32>
    %c96_159 = arith.constant 96 : index
    %c0_160 = arith.constant 0 : index
    %511 = vector.load %arg16[%c96_159, %c0_160] : memref<128x128xf32, #tpu.memory_space<vmem>>, vector<16x128xf32>
    tpu.vector_store %arg16[%c96_159, %c0_160], %510 {strides = array<i32>} : memref<128x128xf32, #tpu.memory_space<vmem>>, vector<16x128xf32>,
    %c112_161 = arith.constant 112 : index
    %c0_162 = arith.constant 0 : index
    %512 = vector.load %arg17[%c112_161, %c0_162] : memref<128x384xf32, #tpu.memory_space<vmem>>, vector<16x384xf32>
    %cst_163 = arith.constant dense<0.000000e+00> : vector<16x384xf32>
    %513 = tpu.matmul %510, %290, %cst_163 {dimension_numbers = #tpu.dot_dimension_numbers<[1], [0], [0], [1], [0, 0, 1, 1], [], []>} : vector<16x128xf32>, vector<128x384xf32>, vector<16x384xf32> -> vector<16x384xf32>
    %514 = vector.broadcast %292 : vector<1x384xf32> to vector<16x384xf32>
    %515 = arith.addf %513, %514 : vector<16x384xf32>
    %516 = vector.extract_strided_slice %512 {offsets = [0, 0], sizes = [16, 128], strides = [1, 1]} : vector<16x384xf32> to vector<16x128xf32>
    %517 = vector.extract_strided_slice %515 {offsets = [0, 0], sizes = [16, 128], strides = [1, 1]} : vector<16x384xf32> to vector<16x128xf32>
    %518 = arith.addf %516, %517 : vector<16x128xf32>
    %519 = arith.negf %518 : vector<16x128xf32>
    %520 = math.exp %519 : vector<16x128xf32>
    %cst_164 = arith.constant 1.000000e+00 : f32
    %521 = vector.broadcast %cst_164 : f32 to vector<16x128xf32>
    %522 = arith.addf %521, %520 : vector<16x128xf32>
    %523 = arith.divf %521, %522 : vector<16x128xf32>
    %524 = vector.extract_strided_slice %512 {offsets = [0, 128], sizes = [16, 128], strides = [1, 1]} : vector<16x384xf32> to vector<16x128xf32>
    %525 = vector.extract_strided_slice %515 {offsets = [0, 128], sizes = [16, 128], strides = [1, 1]} : vector<16x384xf32> to vector<16x128xf32>
    %526 = arith.addf %524, %525 : vector<16x128xf32>
    %527 = arith.negf %526 : vector<16x128xf32>
    %528 = math.exp %527 : vector<16x128xf32>
    %cst_165 = arith.constant 1.000000e+00 : f32
    %529 = vector.broadcast %cst_165 : f32 to vector<16x128xf32>
    %530 = arith.addf %529, %528 : vector<16x128xf32>
    %531 = arith.divf %529, %530 : vector<16x128xf32>
    %532 = vector.extract_strided_slice %512 {offsets = [0, 256], sizes = [16, 128], strides = [1, 1]} : vector<16x384xf32> to vector<16x128xf32>
    %533 = vector.extract_strided_slice %515 {offsets = [0, 256], sizes = [16, 128], strides = [1, 1]} : vector<16x384xf32> to vector<16x128xf32>
    %534 = arith.mulf %523, %533 : vector<16x128xf32>
    %535 = arith.addf %532, %534 : vector<16x128xf32>
    %536 = math.tanh %535 : vector<16x128xf32>
    %cst_166 = arith.constant 1.000000e+00 : f32
    %537 = vector.broadcast %cst_166 : f32 to vector<16x128xf32>
    %538 = arith.subf %537, %531 : vector<16x128xf32>
    %539 = arith.mulf %538, %536 : vector<16x128xf32>
    %540 = arith.mulf %531, %510 : vector<16x128xf32>
    %541 = arith.addf %539, %540 : vector<16x128xf32>
    %c112_167 = arith.constant 112 : index
    %c0_168 = arith.constant 0 : index
    %542 = vector.load %arg16[%c112_167, %c0_168] : memref<128x128xf32, #tpu.memory_space<vmem>>, vector<16x128xf32>
    tpu.vector_store %arg16[%c112_167, %c0_168], %541 {strides = array<i32>} : memref<128x128xf32, #tpu.memory_space<vmem>>, vector<16x128xf32>,
    %c1_169 = arith.constant 1 : index
    %c0_170 = arith.constant 0 : index
    %c0_171 = arith.constant 0 : index
    %543 = vector.load %arg15[%c1_169, %c0_170, %c0_171] : memref<2x16x128xf32, #tpu.memory_space<vmem>>, vector<1x16x128xf32>
    %544 = vector.shape_cast %543 : vector<1x16x128xf32> to vector<16x128xf32>
    %545 = vector.shape_cast %541 : vector<16x128xf32> to vector<1x16x128xf32>
    tpu.vector_store %arg15[%c1_169, %c0_170, %c0_171], %545 {strides = array<i32>} : memref<2x16x128xf32, #tpu.memory_space<vmem>>, vector<1x16x128xf32>,
    %c0_172 = arith.constant 0 : index
    %c0_173 = arith.constant 0 : index
    %546 = vector.load %arg16[%c0_172, %c0_173] : memref<128x128xf32, #tpu.memory_space<vmem>>, vector<128x128xf32>
    %547 = arith.truncf %546 : vector<128x128xf32> to vector<128x128xbf16>
    %c0_174 = arith.constant 0 : index
    %c0_175 = arith.constant 0 : index
    %c0_176 = arith.constant 0 : index
    %548 = vector.load %arg5[%c0_174, %c0_175, %c0_176] : memref<16x16x128xf32, #tpu.memory_space<vmem>>, vector<16x16x128xf32>
    %549 = vector.shape_cast %548 : vector<16x16x128xf32> to vector<256x128xf32>
    %550 = arith.truncf %549 : vector<256x128xf32> to vector<256x128xbf16>
    %cst_177 = arith.constant dense<0.000000e+00> : vector<128x256xf32>
    %551 = tpu.matmul %547, %550, %cst_177 {dimension_numbers = #tpu.dot_dimension_numbers<[1], [1], [0], [0], [0, 0, 1, 0], [], []>} : vector<128x128xbf16>, vector<256x128xbf16>, vector<128x256xf32> -> vector<128x256xf32>
    %c0_178 = arith.constant 0 : index
    %c0_179 = arith.constant 0 : index
    %c0_180 = arith.constant 0 : index
    %552 = vector.load %arg2[%c0_178, %c0_179, %c0_180] : memref<1x128x256xf32, #tpu.memory_space<vmem>>, vector<1x128x256xf32>
    %553 = vector.shape_cast %552 : vector<1x128x256xf32> to vector<128x256xf32>
    %554 = arith.addf %551, %553 : vector<128x256xf32>
    %cst_181 = arith.constant dense<0xFF800000> : vector<128xf32>
    %555 = vector.multi_reduction <maximumf>, %554, %cst_181 [1] : vector<128x256xf32> to vector<128xf32>
    %556 = vector.shape_cast %555 : vector<128xf32> to vector<128x1xf32>
    %557 = vector.broadcast %556 : vector<128x1xf32> to vector<128x256xf32>
    %558 = arith.subf %554, %557 : vector<128x256xf32>
    %559 = math.exp %558 : vector<128x256xf32>
    %cst_182 = arith.constant dense<0.000000e+00> : vector<128xf32>
    %560 = vector.multi_reduction <add>, %559, %cst_182 [1] : vector<128x256xf32> to vector<128xf32>
    %561 = vector.shape_cast %560 : vector<128xf32> to vector<128x1xf32>
    %562 = tpu.reciprocal %561 {approx = true} : vector<128x1xf32> -> vector<128x1xf32>
    %563 = vector.broadcast %562 : vector<128x1xf32> to vector<128x256xf32>
    %564 = arith.mulf %559, %563 : vector<128x256xf32>
    %565 = arith.truncf %564 : vector<128x256xf32> to vector<128x256xbf16>
    %cst_183 = arith.constant dense<0.000000e+00> : vector<128x128xf32>
    %566 = tpu.matmul %565, %550, %cst_183 {dimension_numbers = #tpu.dot_dimension_numbers<[1], [0], [0], [1], [0, 0, 1, 1], [], []>} : vector<128x256xbf16>, vector<256x128xbf16>, vector<128x128xf32> -> vector<128x128xf32>
    %c0_184 = arith.constant 0 : index
    %c0_185 = arith.constant 0 : index
    %567 = vector.load %arg10[%c0_184, %c0_185] : memref<256x128xf32, #tpu.memory_space<vmem>>, vector<256x128xf32>
    %568 = vector.extract_strided_slice %567 {offsets = [0, 0], sizes = [128, 128], strides = [1, 1]} : vector<256x128xf32> to vector<128x128xf32>
    %569 = arith.truncf %568 : vector<128x128xf32> to vector<128x128xbf16>
    %cst_186 = arith.constant dense<0.000000e+00> : vector<128x128xf32>
    %570 = tpu.matmul %547, %569, %cst_186 {dimension_numbers = #tpu.dot_dimension_numbers<[1], [0], [0], [1], [0, 0, 1, 1], [], []>} : vector<128x128xbf16>, vector<128x128xbf16>, vector<128x128xf32> -> vector<128x128xf32>
    %571 = arith.truncf %566 : vector<128x128xf32> to vector<128x128xbf16>
    %572 = vector.extract_strided_slice %567 {offsets = [128, 0], sizes = [128, 128], strides = [1, 1]} : vector<256x128xf32> to vector<128x128xf32>
    %573 = arith.truncf %572 : vector<128x128xf32> to vector<128x128xbf16>
    %cst_187 = arith.constant dense<0.000000e+00> : vector<128x128xf32>
    %574 = tpu.matmul %571, %573, %cst_187 {dimension_numbers = #tpu.dot_dimension_numbers<[1], [0], [0], [1], [0, 0, 1, 1], [], []>} : vector<128x128xbf16>, vector<128x128xbf16>, vector<128x128xf32> -> vector<128x128xf32>
    %575 = arith.addf %570, %574 : vector<128x128xf32>
    %c0_188 = arith.constant 0 : index
    %c0_189 = arith.constant 0 : index
    %576 = vector.load %arg11[%c0_188, %c0_189] : memref<1x128xf32, #tpu.memory_space<vmem>>, vector<1x128xf32>
    %577 = vector.broadcast %576 : vector<1x128xf32> to vector<128x128xf32>
    %578 = arith.addf %575, %577 : vector<128x128xf32>
    %579 = math.tanh %578 : vector<128x128xf32>
    %580 = arith.truncf %579 : vector<128x128xf32> to vector<128x128xbf16>
    %c0_190 = arith.constant 0 : index
    %c0_191 = arith.constant 0 : index
    %581 = vector.load %arg12[%c0_190, %c0_191] : memref<128x256xf32, #tpu.memory_space<vmem>>, vector<128x256xf32>
    %582 = arith.truncf %581 : vector<128x256xf32> to vector<128x256xbf16>
    %cst_192 = arith.constant dense<0.000000e+00> : vector<128x256xf32>
    %583 = tpu.matmul %580, %582, %cst_192 {dimension_numbers = #tpu.dot_dimension_numbers<[1], [0], [0], [1], [0, 0, 1, 1], [], []>} : vector<128x128xbf16>, vector<128x256xbf16>, vector<128x256xf32> -> vector<128x256xf32>
    %c0_193 = arith.constant 0 : index
    %c0_194 = arith.constant 0 : index
    %584 = vector.load %arg13[%c0_193, %c0_194] : memref<1x256xf32, #tpu.memory_space<vmem>>, vector<1x256xf32>
    %585 = vector.broadcast %584 : vector<1x256xf32> to vector<128x256xf32>
    %586 = arith.addf %583, %585 : vector<128x256xf32>
    %587 = vector.shape_cast %586 : vector<128x256xf32> to vector<8x16x256xf32>
    %c0_195 = arith.constant 0 : index
    %c0_196 = arith.constant 0 : index
    %c0_197 = arith.constant 0 : index
    %588 = vector.load %arg14[%c0_195, %c0_196, %c0_197] : memref<8x16x256xf32, #tpu.memory_space<vmem>>, vector<8x16x256xf32>
    tpu.vector_store %arg14[%c0_195, %c0_196, %c0_197], %587 {strides = array<i32>} : memref<8x16x256xf32, #tpu.memory_space<vmem>>, vector<8x16x256xf32>,
    return
  }
  func.func @transform_0(%arg0: i32) -> (i32, i32, i32) {
    %c0_i32 = arith.constant 0 : i32
    %c0_i32_0 = arith.constant 0 : i32
    %c0_i32_1 = arith.constant 0 : i32
    return %arg0, %c0_i32, %c0_i32_0 : i32, i32, i32
  }
  func.func @transform_1(%arg0: i32) -> (i32, i32, i32) {
    %c0_i32 = arith.constant 0 : i32
    %c0_i32_0 = arith.constant 0 : i32
    %c0_i32_1 = arith.constant 0 : i32
    return %arg0, %c0_i32, %c0_i32_0 : i32, i32, i32
  }
  func.func @transform_2(%arg0: i32) -> (i32, i32) {
    %c0_i32 = arith.constant 0 : i32
    %c0_i32_0 = arith.constant 0 : i32
    %c0_i32_1 = arith.constant 0 : i32
    return %c0_i32, %c0_i32_0 : i32, i32
  }
  func.func @transform_3(%arg0: i32) -> (i32, i32, i32) {
    %c0_i32 = arith.constant 0 : i32
    %c0_i32_0 = arith.constant 0 : i32
    %c0_i32_1 = arith.constant 0 : i32
    return %c0_i32, %arg0, %c0_i32_0 : i32, i32, i32
  }
  func.func @transform_4(%arg0: i32) -> (i32, i32, i32) {
    %c0_i32 = arith.constant 0 : i32
    %c0_i32_0 = arith.constant 0 : i32
    %c0_i32_1 = arith.constant 0 : i32
    return %c0_i32, %arg0, %c0_i32_0 : i32, i32, i32
  }
  func.func @transform_5(%arg0: i32) -> (i32, i32, i32) {
    %c0_i32 = arith.constant 0 : i32
    %c0_i32_0 = arith.constant 0 : i32
    %c0_i32_1 = arith.constant 0 : i32
    %c0_i32_2 = arith.constant 0 : i32
    return %c0_i32, %c0_i32_0, %c0_i32_1 : i32, i32, i32
  }
  func.func @transform_6(%arg0: i32) -> (i32, i32, i32) {
    %c0_i32 = arith.constant 0 : i32
    %c0_i32_0 = arith.constant 0 : i32
    %c0_i32_1 = arith.constant 0 : i32
    %c0_i32_2 = arith.constant 0 : i32
    return %c0_i32, %c0_i32_0, %c0_i32_1 : i32, i32, i32
  }
  func.func @transform_7(%arg0: i32) -> (i32, i32, i32) {
    %c0_i32 = arith.constant 0 : i32
    %c0_i32_0 = arith.constant 0 : i32
    %c0_i32_1 = arith.constant 0 : i32
    %c0_i32_2 = arith.constant 0 : i32
    return %c0_i32, %c0_i32_0, %c0_i32_1 : i32, i32, i32
  }
  func.func @transform_8(%arg0: i32) -> (i32, i32, i32) {
    %c0_i32 = arith.constant 0 : i32
    %c0_i32_0 = arith.constant 0 : i32
    %c0_i32_1 = arith.constant 0 : i32
    %c0_i32_2 = arith.constant 0 : i32
    return %c0_i32, %c0_i32_0, %c0_i32_1 : i32, i32, i32
  }
  func.func @transform_9(%arg0: i32) -> (i32, i32) {
    %c0_i32 = arith.constant 0 : i32
    %c0_i32_0 = arith.constant 0 : i32
    %c0_i32_1 = arith.constant 0 : i32
    return %c0_i32, %c0_i32_0 : i32, i32
  }
  func.func @transform_10(%arg0: i32) -> (i32, i32) {
    %c0_i32 = arith.constant 0 : i32
    %c0_i32_0 = arith.constant 0 : i32
    %c0_i32_1 = arith.constant 0 : i32
    return %c0_i32, %c0_i32_0 : i32, i32
  }
  func.func @transform_11(%arg0: i32) -> (i32, i32) {
    %c0_i32 = arith.constant 0 : i32
    %c0_i32_0 = arith.constant 0 : i32
    %c0_i32_1 = arith.constant 0 : i32
    return %c0_i32, %c0_i32_0 : i32, i32
  }
  func.func @transform_12(%arg0: i32) -> (i32, i32) {
    %c0_i32 = arith.constant 0 : i32
    %c0_i32_0 = arith.constant 0 : i32
    %c0_i32_1 = arith.constant 0 : i32
    return %c0_i32, %c0_i32_0 : i32, i32
  }
  func.func @transform_13(%arg0: i32) -> (i32, i32, i32) {
    %c0_i32 = arith.constant 0 : i32
    %c0_i32_0 = arith.constant 0 : i32
    %c0_i32_1 = arith.constant 0 : i32
    return %c0_i32, %arg0, %c0_i32_0 : i32, i32, i32
  }
  func.func @transform_14(%arg0: i32) -> (i32, i32, i32) {
    %c0_i32 = arith.constant 0 : i32
    %c0_i32_0 = arith.constant 0 : i32
    %c0_i32_1 = arith.constant 0 : i32
    return %c0_i32, %arg0, %c0_i32_0 : i32, i32, i32
  }
}

</mosaic_0001>

<llo_original>
// kernel: rnn_decoder_forward_impl.1
$region0: #{rnn_decoder_forward_impl.1}
  #allocation0 [shape = 'u32[]', space=smem, size = 0x4, offset = 0x4, fixed_abs, tag = 'smem constant byte address 0x4 - core index']
  #allocation1 [shape = 'u32[144,128]{1,0:T(1,128)}', space=vmem, size = 0x12000, scoped, tag = 'internal scratch']
  #allocation2 [shape = 'f32[128,128]{1,0:T(8,128)}', space=vmem, size = 0x10000, scoped, tag = 'scratch operand']
  #allocation3 [shape = 'f32[128,384]{1,0:T(8,128)}', space=vmem, size = 0x30000, scoped, tag = 'scratch operand']
  %s0 = inlined_call_operand.vmem [shape: s32[1,128,1], index: 0, kind: input, shape index: {}]
  %s1 = inlined_call_operand.vmem [shape: f32[1,128,256], index: 1, kind: input, shape index: {}]
  %s2 = inlined_call_operand.vmem [shape: f32[256,128], index: 2, kind: input, shape index: {}]
  %s3 = inlined_call_operand.vmem [shape: f32[2,16,128], index: 3, kind: input, shape index: {}]
  %s4 = inlined_call_operand.vmem [shape: f32[16,16,128], index: 4, kind: input, shape index: {}]
  %s5 = inlined_call_operand.hbm [shape: f32[2,128,384], index: 5, kind: input, shape index: {}]
  %s6 = inlined_call_operand.hbm [shape: f32[2,128,384], index: 6, kind: input, shape index: {}]
  %s7 = inlined_call_operand.vmem [shape: f32[2,1,384], index: 7, kind: input, shape index: {}]
  %s8 = inlined_call_operand.vmem [shape: f32[2,1,384], index: 8, kind: input, shape index: {}]
  %s9 = inlined_call_operand.hbm [shape: f32[256,128], index: 9, kind: input, shape index: {}]
  %s10 = inlined_call_operand.vmem [shape: f32[1,128], index: 10, kind: input, shape index: {}]
  %s11 = inlined_call_operand.hbm [shape: f32[128,256], index: 11, kind: input, shape index: {}]
  %s12 = inlined_call_operand.vmem [shape: f32[1,256], index: 12, kind: input, shape index: {}]
  %s13 = inlined_call_operand.hbm [shape: f32[8,16,256], index: 13, kind: output, shape index: {0}]
  %s14 = inlined_call_operand.hbm [shape: f32[2,16,128], index: 14, kind: output, shape index: {1}]
  %15 = xla_tuple %s13, %s14
  %s16 = sld [smem:[#allocation0]]
  $region86: #{rnn_decoder_forward_impl.1} parent=0
    _
  %s18 = ssub.s32 1, %s16
  %s19 = scalar_select 0, %s18, %s16
  $region1: #{rnn_decoder_forward_impl.1} parent=0
    #allocation4 [shape = 'u8[393216]{0}', space=vmem, size = 0x60000, scoped, tag = 'input window, operand 5, single buffered']
    #allocation5 [shape = 's32[1]{0}', space=sflag, size = 0x4, scoped, tag = 'scoped memory for rnn_decoder_forward_impl.1']
    #allocation6 [shape = 's32[1]{0}', space=sflag, size = 0x4, scoped, tag = 'scoped memory for rnn_decoder_forward_impl.1']
    #allocation7 [shape = 'u8[393216]{0}', space=vmem, size = 0x60000, scoped, tag = 'input window, operand 6, single buffered']
    #allocation8 [shape = 's32[1]{0}', space=sflag, size = 0x4, scoped, tag = 'scoped memory for rnn_decoder_forward_impl.1']
    #allocation9 [shape = 'u8[131072]{0}', space=vmem, size = 0x20000, scoped, tag = 'input window, operand 9, single buffered']
    #allocation10 [shape = 'u8[131072]{0}', space=vmem, size = 0x20000, scoped, tag = 'input window, operand 11, single buffered']
    #allocation11 [shape = 's32[1]{0}', space=sflag, size = 0x4, scoped, tag = 'scoped memory for rnn_decoder_forward_impl.1']
    #allocation12 [shape = 'u8[131072]{0}', space=vmem, size = 0x20000, scoped, tag = 'output window, operand 0, single buffered']
    #allocation13 [shape = 'u8[16384]{0}', space=vmem, size = 0x4000, scoped, tag = 'output window, operand 1, single buffered']
    #allocation14 [shape = 's32[1]{0}', space=sflag, size = 0x4, scoped, tag = 'scoped memory for rnn_decoder_forward_impl.1']
    %20 = vsyncpa [#allocation5], 0
    %21 = vsyncpa [#allocation8], 0
    %22 = vsyncpa [#allocation11], 0
    %23 = vsyncpa [#allocation6], 0
    %24 = vsyncpa [#allocation14], 0
    // Predicated region
    $region2: #{rnn_decoder_forward_impl.1} parent=1 // pred_check
      _
    $region3: #{rnn_decoder_forward_impl.1} parent=1 // pred_check_branch
      %26 = sbr.rel (0) target = $region5
    $region4: #{rnn_decoder_forward_impl.1} parent=1 // pred_region
      _
    $region5: #{rnn_decoder_forward_impl.1} parent=1 // pred_fallthru
      _
    // Predicated region
    $region6: #{rnn_decoder_forward_impl.1} parent=1 // pred_check
      _
    $region7: #{rnn_decoder_forward_impl.1} parent=1 // pred_check_branch
      %28 = sbr.rel (0) target = $region9
    $region8: #{rnn_decoder_forward_impl.1} parent=1 // pred_region
      _
    $region9: #{rnn_decoder_forward_impl.1} parent=1 // pred_fallthru
      _
    // Predicated region
    $region10: #{rnn_decoder_forward_impl.1} parent=1 // pred_check
      _
    $region11: #{rnn_decoder_forward_impl.1} parent=1 // pred_check_branch
      %30 = sbr.rel (0) target = $region13
    $region12: #{rnn_decoder_forward_impl.1} parent=1 // pred_region
      _
    $region13: #{rnn_decoder_forward_impl.1} parent=1 // pred_fallthru
      _
    // Predicated region
    $region14: #{rnn_decoder_forward_impl.1} parent=1 // pred_check
      _
    $region15: #{rnn_decoder_forward_impl.1} parent=1 // pred_check_branch
      %32 = sbr.rel (0) target = $region17
    $region16: #{rnn_decoder_forward_impl.1} parent=1 // pred_region
      _
    $region17: #{rnn_decoder_forward_impl.1} parent=1 // pred_fallthru
      _
    // Predicated region
    $region18: #{rnn_decoder_forward_impl.1} parent=1 // pred_check
      _
    $region19: #{rnn_decoder_forward_impl.1} parent=1 // pred_check_branch
      %34 = sbr.rel (0) target = $region21
    $region20: #{rnn_decoder_forward_impl.1} parent=1 // pred_region
      _
    $region21: #{rnn_decoder_forward_impl.1} parent=1 // pred_fallthru
      _
    // Predicated region
    $region22: #{rnn_decoder_forward_impl.1} parent=1 // pred_check
      _
    $region23: #{rnn_decoder_forward_impl.1} parent=1 // pred_check_branch
      %36 = sbr.rel (0) target = $region25
    $region24: #{rnn_decoder_forward_impl.1} parent=1 // pred_region
      %s38 = ssub.s32 12288, 12288
      %39 = vsyncadd [#allocation5], %s38
      %s40 = sshll.u32 [#allocation4], 4
      %s41 = int_to_ptr.vmem [resolvable:$true] %s40
      %46 = dma.hbm_to_vmem [thread:$0]  %s5, 12288, %s41, [#allocation5], 384, 384, 24
    $region25: #{rnn_decoder_forward_impl.1} parent=1 // pred_fallthru
      _
    // Predicated region
    $region26: #{rnn_decoder_forward_impl.1} parent=1 // pred_check
      _
    $region27: #{rnn_decoder_forward_impl.1} parent=1 // pred_check_branch
      %48 = sbr.rel (0) target = $region29
    $region28: #{rnn_decoder_forward_impl.1} parent=1 // pred_region
      %s50 = ssub.s32 12288, 12288
      %51 = vsyncadd [#allocation8], %s50
      %s52 = sshll.u32 [#allocation7], 4
      %s53 = int_to_ptr.vmem [resolvable:$true] %s52
      %58 = dma.hbm_to_vmem [thread:$0]  %s6, 12288, %s53, [#allocation8], 384, 384, 24
    $region29: #{rnn_decoder_forward_impl.1} parent=1 // pred_fallthru
      _
    // Predicated region
    $region30: #{rnn_decoder_forward_impl.1} parent=1 // pred_check
      _
    $region31: #{rnn_decoder_forward_impl.1} parent=1 // pred_check_branch
      %60 = sbr.rel (0) target = $region33
    $region32: #{rnn_decoder_forward_impl.1} parent=1 // pred_region
      _
    $region33: #{rnn_decoder_forward_impl.1} parent=1 // pred_fallthru
      _
    // Predicated region
    $region34: #{rnn_decoder_forward_impl.1} parent=1 // pred_check
      _
    $region35: #{rnn_decoder_forward_impl.1} parent=1 // pred_check_branch
      %62 = sbr.rel (0) target = $region37
    $region36: #{rnn_decoder_forward_impl.1} parent=1 // pred_region
      _
    $region37: #{rnn_decoder_forward_impl.1} parent=1 // pred_fallthru
      _
    // Predicated region
    $region38: #{rnn_decoder_forward_impl.1} parent=1 // pred_check
      _
    $region39: #{rnn_decoder_forward_impl.1} parent=1 // pred_check_branch
      %64 = sbr.rel (0) target = $region41
    $region40: #{rnn_decoder_forward_impl.1} parent=1 // pred_region
      %s66 = ssub.s32 4096, 4096
      %67 = vsyncadd [#allocation8], %s66
      %s68 = sshll.u32 [#allocation9], 4
      %s69 = int_to_ptr.vmem [resolvable:$true] %s68
      %74 = dma.hbm_to_vmem [thread:$0]  %s9, 4096, %s69, [#allocation8], 128, 128, 8
    $region41: #{rnn_decoder_forward_impl.1} parent=1 // pred_fallthru
      _
    // Predicated region
    $region42: #{rnn_decoder_forward_impl.1} parent=1 // pred_check
      _
    $region43: #{rnn_decoder_forward_impl.1} parent=1 // pred_check_branch
      %76 = sbr.rel (0) target = $region45
    $region44: #{rnn_decoder_forward_impl.1} parent=1 // pred_region
      _
    $region45: #{rnn_decoder_forward_impl.1} parent=1 // pred_fallthru
      _
    // Predicated region
    $region46: #{rnn_decoder_forward_impl.1} parent=1 // pred_check
      _
    $region47: #{rnn_decoder_forward_impl.1} parent=1 // pred_check_branch
      %78 = sbr.rel (0) target = $region49
    $region48: #{rnn_decoder_forward_impl.1} parent=1 // pred_region
      %s80 = ssub.s32 4096, 4096
      %81 = vsyncadd [#allocation11], %s80
      %s82 = sshll.u32 [#allocation10], 4
      %s83 = int_to_ptr.vmem [resolvable:$true] %s82
      %88 = dma.hbm_to_vmem [thread:$0]  %s11, 4096, %s83, [#allocation11], 256, 256, 16
    $region49: #{rnn_decoder_forward_impl.1} parent=1 // pred_fallthru
      _
    // Predicated region
    $region50: #{rnn_decoder_forward_impl.1} parent=1 // pred_check
      _
    $region51: #{rnn_decoder_forward_impl.1} parent=1 // pred_check_branch
      %90 = sbr.rel (0) target = $region53
    $region52: #{rnn_decoder_forward_impl.1} parent=1 // pred_region
      _
    $region53: #{rnn_decoder_forward_impl.1} parent=1 // pred_fallthru
      _
    // Predicated region
    $region54: #{rnn_decoder_forward_impl.1} parent=1 // pred_check
      _
    $region55: #{rnn_decoder_forward_impl.1} parent=1 // pred_check_branch
      %92 = sbr.rel (0) target = $region57
    $region56: #{rnn_decoder_forward_impl.1} parent=1 // pred_region
      %93 = dma.done [#allocation5], 12288
    $region57: #{rnn_decoder_forward_impl.1} parent=1 // pred_fallthru
      _
    // Predicated region
    $region58: #{rnn_decoder_forward_impl.1} parent=1 // pred_check
      _
    $region59: #{rnn_decoder_forward_impl.1} parent=1 // pred_check_branch
      %95 = sbr.rel (0) target = $region61
    $region60: #{rnn_decoder_forward_impl.1} parent=1 // pred_region
      %96 = dma.done [#allocation8], 12288
    $region61: #{rnn_decoder_forward_impl.1} parent=1 // pred_fallthru
      _
    // Predicated region
    $region62: #{rnn_decoder_forward_impl.1} parent=1 // pred_check
      _
    $region63: #{rnn_decoder_forward_impl.1} parent=1 // pred_check_branch
      %98 = sbr.rel (0) target = $region65
    $region64: #{rnn_decoder_forward_impl.1} parent=1 // pred_region
      %99 = dma.done [#allocation8], 4096
    $region65: #{rnn_decoder_forward_impl.1} parent=1 // pred_fallthru
      _
    // Predicated region
    $region66: #{rnn_decoder_forward_impl.1} parent=1 // pred_check
      _
    $region67: #{rnn_decoder_forward_impl.1} parent=1 // pred_check_branch
      %101 = sbr.rel (0) target = $region69
    $region68: #{rnn_decoder_forward_impl.1} parent=1 // pred_region
      %102 = dma.done [#allocation11], 4096
    $region69: #{rnn_decoder_forward_impl.1} parent=1 // pred_fallthru
      _
    %v104 = vld [vmem:[%s0] sm:$0xff]
    %v105 = vld [vmem:[%s0 + $0x8] sm:$0xff]
    %v106 = vld [vmem:[%s0 + $0x10] sm:$0xff]
    %v107 = vld [vmem:[%s0 + $0x18] sm:$0xff]
    %v108 = vld [vmem:[%s0 + $0x20] sm:$0xff]
    %v109 = vld [vmem:[%s0 + $0x28] sm:$0xff]
    %v110 = vld [vmem:[%s0 + $0x30] sm:$0xff]
    %v111 = vld [vmem:[%s0 + $0x38] sm:$0xff]
    %v112 = vld [vmem:[%s0 + $0x40] sm:$0xff]
    %v113 = vld [vmem:[%s0 + $0x48] sm:$0xff]
    %v114 = vld [vmem:[%s0 + $0x50] sm:$0xff]
    %v115 = vld [vmem:[%s0 + $0x58] sm:$0xff]
    %v116 = vld [vmem:[%s0 + $0x60] sm:$0xff]
    %v117 = vld [vmem:[%s0 + $0x68] sm:$0xff]
    %v118 = vld [vmem:[%s0 + $0x70] sm:$0xff]
    %v119 = vld [vmem:[%s0 + $0x78] sm:$0xff]
    %v120 = vlaneseq
    %v121 = vand.u32 %v120, 127
    %v122 = vadd.s32 %v121, 128
    %123 = vset.pattern.permute.xlu0 0
    %124 = vperm.xlu0 %123, %v104
    %v125 = vpop.permute.xlu0 %124
    %126 = vset.pattern.permute.xlu0 0
    %127 = vperm.xlu0 %126, %v105
    %v128 = vpop.permute.xlu0 %127
    %129 = vset.pattern.permute.xlu0 0
    %130 = vperm.xlu0 %129, %v106
    %v131 = vpop.permute.xlu0 %130
    %132 = vset.pattern.permute.xlu0 0
    %133 = vperm.xlu0 %132, %v107
    %v134 = vpop.permute.xlu0 %133
    %135 = vset.pattern.permute.xlu0 0
    %136 = vperm.xlu0 %135, %v108
    %v137 = vpop.permute.xlu0 %136
    %138 = vset.pattern.permute.xlu0 0
    %139 = vperm.xlu0 %138, %v109
    %v140 = vpop.permute.xlu0 %139
    %141 = vset.pattern.permute.xlu0 0
    %142 = vperm.xlu0 %141, %v110
    %v143 = vpop.permute.xlu0 %142
    %144 = vset.pattern.permute.xlu0 0
    %145 = vperm.xlu0 %144, %v111
    %v146 = vpop.permute.xlu0 %145
    %147 = vset.pattern.permute.xlu0 0
    %148 = vperm.xlu0 %147, %v112
    %v149 = vpop.permute.xlu0 %148
    %150 = vset.pattern.permute.xlu0 0
    %151 = vperm.xlu0 %150, %v113
    %v152 = vpop.permute.xlu0 %151
    %153 = vset.pattern.permute.xlu0 0
    %154 = vperm.xlu0 %153, %v114
    %v155 = vpop.permute.xlu0 %154
    %156 = vset.pattern.permute.xlu0 0
    %157 = vperm.xlu0 %156, %v115
    %v158 = vpop.permute.xlu0 %157
    %159 = vset.pattern.permute.xlu0 0
    %160 = vperm.xlu0 %159, %v116
    %v161 = vpop.permute.xlu0 %160
    %162 = vset.pattern.permute.xlu0 0
    %163 = vperm.xlu0 %162, %v117
    %v164 = vpop.permute.xlu0 %163
    %165 = vset.pattern.permute.xlu0 0
    %166 = vperm.xlu0 %165, %v118
    %v167 = vpop.permute.xlu0 %166
    %168 = vset.pattern.permute.xlu0 0
    %169 = vperm.xlu0 %168, %v119
    %v170 = vpop.permute.xlu0 %169
    %vm171 = vcmp.eq.s32.totalorder %v121, %v125
    %vm172 = vcmp.eq.s32.totalorder %v122, %v125
    %vm173 = vcmp.eq.s32.totalorder %v121, %v128
    %vm174 = vcmp.eq.s32.totalorder %v122, %v128
    %vm175 = vcmp.eq.s32.totalorder %v121, %v131
    %vm176 = vcmp.eq.s32.totalorder %v122, %v131
    %vm177 = vcmp.eq.s32.totalorder %v121, %v134
    %vm178 = vcmp.eq.s32.totalorder %v122, %v134
    %vm179 = vcmp.eq.s32.totalorder %v121, %v137
    %vm180 = vcmp.eq.s32.totalorder %v122, %v137
    %vm181 = vcmp.eq.s32.totalorder %v121, %v140
    %vm182 = vcmp.eq.s32.totalorder %v122, %v140
    %vm183 = vcmp.eq.s32.totalorder %v121, %v143
    %vm184 = vcmp.eq.s32.totalorder %v122, %v143
    %vm185 = vcmp.eq.s32.totalorder %v121, %v146
    %vm186 = vcmp.eq.s32.totalorder %v122, %v146
    %vm187 = vcmp.eq.s32.totalorder %v121, %v149
    %vm188 = vcmp.eq.s32.totalorder %v122, %v149
    %vm189 = vcmp.eq.s32.totalorder %v121, %v152
    %vm190 = vcmp.eq.s32.totalorder %v122, %v152
    %vm191 = vcmp.eq.s32.totalorder %v121, %v155
    %vm192 = vcmp.eq.s32.totalorder %v122, %v155
    %vm193 = vcmp.eq.s32.totalorder %v121, %v158
    %vm194 = vcmp.eq.s32.totalorder %v122, %v158
    %vm195 = vcmp.eq.s32.totalorder %v121, %v161
    %vm196 = vcmp.eq.s32.totalorder %v122, %v161
    %vm197 = vcmp.eq.s32.totalorder %v121, %v164
    %vm198 = vcmp.eq.s32.totalorder %v122, %v164
    %vm199 = vcmp.eq.s32.totalorder %v121, %v167
    %vm200 = vcmp.eq.s32.totalorder %v122, %v167
    %vm201 = vcmp.eq.s32.totalorder %v121, %v170
    %vm202 = vcmp.eq.s32.totalorder %v122, %v170
    %v203 = vsel %vm171, 1, 0
    %v204 = vsel %vm172, 1, 0
    %v205 = vsel %vm173, 1, 0
    %v206 = vsel %vm174, 1, 0
    %v207 = vsel %vm175, 1, 0
    %v208 = vsel %vm176, 1, 0
    %v209 = vsel %vm177, 1, 0
    %v210 = vsel %vm178, 1, 0
    %v211 = vsel %vm179, 1, 0
    %v212 = vsel %vm180, 1, 0
    %v213 = vsel %vm181, 1, 0
    %v214 = vsel %vm182, 1, 0
    %v215 = vsel %vm183, 1, 0
    %v216 = vsel %vm184, 1, 0
    %v217 = vsel %vm185, 1, 0
    %v218 = vsel %vm186, 1, 0
    %v219 = vsel %vm187, 1, 0
    %v220 = vsel %vm188, 1, 0
    %v221 = vsel %vm189, 1, 0
    %v222 = vsel %vm190, 1, 0
    %v223 = vsel %vm191, 1, 0
    %v224 = vsel %vm192, 1, 0
    %v225 = vsel %vm193, 1, 0
    %v226 = vsel %vm194, 1, 0
    %v227 = vsel %vm195, 1, 0
    %v228 = vsel %vm196, 1, 0
    %v229 = vsel %vm197, 1, 0
    %v230 = vsel %vm198, 1, 0
    %v231 = vsel %vm199, 1, 0
    %v232 = vsel %vm200, 1, 0
    %v233 = vsel %vm201, 1, 0
    %v234 = vsel %vm202, 1, 0
    %v235 = vcvt.s32.f32 %v203
    %v236 = vcvt.s32.f32 %v204
    %v237 = vcvt.s32.f32 %v205
    %v238 = vcvt.s32.f32 %v206
    %v239 = vcvt.s32.f32 %v207
    %v240 = vcvt.s32.f32 %v208
    %v241 = vcvt.s32.f32 %v209
    %v242 = vcvt.s32.f32 %v210
    %v243 = vcvt.s32.f32 %v211
    %v244 = vcvt.s32.f32 %v212
    %v245 = vcvt.s32.f32 %v213
    %v246 = vcvt.s32.f32 %v214
    %v247 = vcvt.s32.f32 %v215
    %v248 = vcvt.s32.f32 %v216
    %v249 = vcvt.s32.f32 %v217
    %v250 = vcvt.s32.f32 %v218
    %v251 = vcvt.s32.f32 %v219
    %v252 = vcvt.s32.f32 %v220
    %v253 = vcvt.s32.f32 %v221
    %v254 = vcvt.s32.f32 %v222
    %v255 = vcvt.s32.f32 %v223
    %v256 = vcvt.s32.f32 %v224
    %v257 = vcvt.s32.f32 %v225
    %v258 = vcvt.s32.f32 %v226
    %v259 = vcvt.s32.f32 %v227
    %v260 = vcvt.s32.f32 %v228
    %v261 = vcvt.s32.f32 %v229
    %v262 = vcvt.s32.f32 %v230
    %v263 = vcvt.s32.f32 %v231
    %v264 = vcvt.s32.f32 %v232
    %v265 = vcvt.s32.f32 %v233
    %v266 = vcvt.s32.f32 %v234
    %v267 = vld [vmem:[%s2] sm:$0xff]
    %v268 = vld [vmem:[%s2 + $0x8] sm:$0xff]
    %v269 = vld [vmem:[%s2 + $0x10] sm:$0xff]
    %v270 = vld [vmem:[%s2 + $0x18] sm:$0xff]
    %v271 = vld [vmem:[%s2 + $0x20] sm:$0xff]
    %v272 = vld [vmem:[%s2 + $0x28] sm:$0xff]
    %v273 = vld [vmem:[%s2 + $0x30] sm:$0xff]
    %v274 = vld [vmem:[%s2 + $0x38] sm:$0xff]
    %v275 = vld [vmem:[%s2 + $0x40] sm:$0xff]
    %v276 = vld [vmem:[%s2 + $0x48] sm:$0xff]
    %v277 = vld [vmem:[%s2 + $0x50] sm:$0xff]
    %v278 = vld [vmem:[%s2 + $0x58] sm:$0xff]
    %v279 = vld [vmem:[%s2 + $0x60] sm:$0xff]
    %v280 = vld [vmem:[%s2 + $0x68] sm:$0xff]
    %v281 = vld [vmem:[%s2 + $0x70] sm:$0xff]
    %v282 = vld [vmem:[%s2 + $0x78] sm:$0xff]
    %v283 = vld [vmem:[%s2 + $0x80] sm:$0xff]
    %v284 = vld [vmem:[%s2 + $0x88] sm:$0xff]
    %v285 = vld [vmem:[%s2 + $0x90] sm:$0xff]
    %v286 = vld [vmem:[%s2 + $0x98] sm:$0xff]
    %v287 = vld [vmem:[%s2 + $0xa0] sm:$0xff]
    %v288 = vld [vmem:[%s2 + $0xa8] sm:$0xff]
    %v289 = vld [vmem:[%s2 + $0xb0] sm:$0xff]
    %v290 = vld [vmem:[%s2 + $0xb8] sm:$0xff]
    %v291 = vld [vmem:[%s2 + $0xc0] sm:$0xff]
    %v292 = vld [vmem:[%s2 + $0xc8] sm:$0xff]
    %v293 = vld [vmem:[%s2 + $0xd0] sm:$0xff]
    %v294 = vld [vmem:[%s2 + $0xd8] sm:$0xff]
    %v295 = vld [vmem:[%s2 + $0xe0] sm:$0xff]
    %v296 = vld [vmem:[%s2 + $0xe8] sm:$0xff]
    %v297 = vld [vmem:[%s2 + $0xf0] sm:$0xff]
    %v298 = vld [vmem:[%s2 + $0xf8] sm:$0xff]
    %299 = vmatprep.subr.mxu0 0.0
    %300 = vmatpush1.msra.mxu0 %v267
    %301 = vmatprep.subr.mxu0 0.0
    %302 = vmatpush1.msra.mxu0 %v268
    %303 = vmatprep.subr.mxu0 0.0
    %304 = vmatpush1.msra.mxu0 %v269
    %305 = vmatprep.subr.mxu0 0.0
    %306 = vmatpush1.msra.mxu0 %v270
    %307 = vmatprep.subr.mxu0 0.0
    %308 = vmatpush1.msra.mxu0 %v271
    %309 = vmatprep.subr.mxu0 0.0
    %310 = vmatpush1.msra.mxu0 %v272
    %311 = vmatprep.subr.mxu0 0.0
    %312 = vmatpush1.msra.mxu0 %v273
    %313 = vmatprep.subr.mxu0 0.0
    %314 = vmatpush1.msra.mxu0 %v274
    %315 = vmatprep.subr.mxu0 0.0
    %316 = vmatpush1.msra.mxu0 %v275
    %317 = vmatprep.subr.mxu0 0.0
    %318 = vmatpush1.msra.mxu0 %v276
    %319 = vmatprep.subr.mxu0 0.0
    %320 = vmatpush1.msra.mxu0 %v277
    %321 = vmatprep.subr.mxu0 0.0
    %322 = vmatpush1.msra.mxu0 %v278
    %323 = vmatprep.subr.mxu0 0.0
    %324 = vmatpush1.msra.mxu0 %v279
    %325 = vmatprep.subr.mxu0 0.0
    %326 = vmatpush1.msra.mxu0 %v280
    %327 = vmatprep.subr.mxu0 0.0
    %328 = vmatpush1.msra.mxu0 %v281
    %329 = vmatprep.subr.mxu0 0.0
    %330 = vmatpush1.msra.mxu0 %v282
    %331 = vmatprep.subr.mxu0 0.0
    %332 = vmatpush1.msra.mxu0 %v283
    %333 = vmatprep.subr.mxu0 0.0
    %334 = vmatpush1.msra.mxu0 %v284
    %335 = vmatprep.subr.mxu0 0.0
    %336 = vmatpush1.msra.mxu0 %v285
    %337 = vmatprep.subr.mxu0 0.0
    %338 = vmatpush1.msra.mxu0 %v286
    %339 = vmatprep.subr.mxu0 0.0
    %340 = vmatpush1.msra.mxu0 %v287
    %341 = vmatprep.subr.mxu0 0.0
    %342 = vmatpush1.msra.mxu0 %v288
    %343 = vmatprep.subr.mxu0 0.0
    %344 = vmatpush1.msra.mxu0 %v289
    %345 = vmatprep.subr.mxu0 0.0
    %346 = vmatpush1.msra.mxu0 %v290
    %347 = vmatprep.subr.mxu0 0.0
    %348 = vmatpush1.msra.mxu0 %v291
    %349 = vmatprep.subr.mxu0 0.0
    %350 = vmatpush1.msra.mxu0 %v292
    %351 = vmatprep.subr.mxu0 0.0
    %352 = vmatpush1.msra.mxu0 %v293
    %353 = vmatprep.subr.mxu0 0.0
    %354 = vmatpush1.msra.mxu0 %v294
    %355 = vmatprep.subr.mxu0 0.0
    %356 = vmatpush1.msra.mxu0 %v295
    %357 = vmatprep.subr.mxu0 0.0
    %358 = vmatpush1.msra.mxu0 %v296
    %359 = vmatprep.subr.mxu0 0.0
    %360 = vmatpush1.msra.mxu0 %v297
    %361 = vmatprep.subr.mxu0 0.0
    %362 = vmatpush1.msra.mxu0 %v298
    %363 = vmatprep.mubr.f32.mxu0 %v236
    %364 = vmatmul.mubr.f32.gmra.mrb[0].mxu0 %v235
    %v365 = vpop.f32.mrb[0].mxu0
    %v366 = vadd.f32 0.0, %v365
    %v367 = vpop.f32.mrb[0].mxu0
    %368 = vmatprep.mubr.f32.mxu0 %v238
    %369 = vmatmul.mubr.f32.gmra.mrb[0].mxu0 %v237
    %v370 = vpop.f32.mrb[0].mxu0
    %v371 = vadd.f32 0.0, %v370
    %v372 = vpop.f32.mrb[0].mxu0
    %373 = vmatprep.mubr.f32.mxu0 %v240
    %374 = vmatmul.mubr.f32.gmra.mrb[0].mxu0 %v239
    %v375 = vpop.f32.mrb[0].mxu0
    %v376 = vadd.f32 0.0, %v375
    %v377 = vpop.f32.mrb[0].mxu0
    %378 = vmatprep.mubr.f32.mxu0 %v242
    %379 = vmatmul.mubr.f32.gmra.mrb[0].mxu0 %v241
    %v380 = vpop.f32.mrb[0].mxu0
    %v381 = vadd.f32 0.0, %v380
    %v382 = vpop.f32.mrb[0].mxu0
    %383 = vmatprep.mubr.f32.mxu0 %v244
    %384 = vmatmul.mubr.f32.gmra.mrb[0].mxu0 %v243
    %v385 = vpop.f32.mrb[0].mxu0
    %v386 = vadd.f32 0.0, %v385
    %v387 = vpop.f32.mrb[0].mxu0
    %388 = vmatprep.mubr.f32.mxu0 %v246
    %389 = vmatmul.mubr.f32.gmra.mrb[0].mxu0 %v245
    %v390 = vpop.f32.mrb[0].mxu0
    %v391 = vadd.f32 0.0, %v390
    %v392 = vpop.f32.mrb[0].mxu0
    %393 = vmatprep.mubr.f32.mxu0 %v248
    %394 = vmatmul.mubr.f32.gmra.mrb[0].mxu0 %v247
    %v395 = vpop.f32.mrb[0].mxu0
    %v396 = vadd.f32 0.0, %v395
    %v397 = vpop.f32.mrb[0].mxu0
    %398 = vmatprep.mubr.f32.mxu0 %v250
    %399 = vmatmul.mubr.f32.gmra.mrb[0].mxu0 %v249
    %v400 = vpop.f32.mrb[0].mxu0
    %v401 = vadd.f32 0.0, %v400
    %v402 = vpop.f32.mrb[0].mxu0
    %403 = vmatprep.mubr.f32.mxu0 %v252
    %404 = vmatmul.mubr.f32.gmra.mrb[0].mxu0 %v251
    %v405 = vpop.f32.mrb[0].mxu0
    %v406 = vadd.f32 0.0, %v405
    %v407 = vpop.f32.mrb[0].mxu0
    %408 = vmatprep.mubr.f32.mxu0 %v254
    %409 = vmatmul.mubr.f32.gmra.mrb[0].mxu0 %v253
    %v410 = vpop.f32.mrb[0].mxu0
    %v411 = vadd.f32 0.0, %v410
    %v412 = vpop.f32.mrb[0].mxu0
    %413 = vmatprep.mubr.f32.mxu0 %v256
    %414 = vmatmul.mubr.f32.gmra.mrb[0].mxu0 %v255
    %v415 = vpop.f32.mrb[0].mxu0
    %v416 = vadd.f32 0.0, %v415
    %v417 = vpop.f32.mrb[0].mxu0
    %418 = vmatprep.mubr.f32.mxu0 %v258
    %419 = vmatmul.mubr.f32.gmra.mrb[0].mxu0 %v257
    %v420 = vpop.f32.mrb[0].mxu0
    %v421 = vadd.f32 0.0, %v420
    %v422 = vpop.f32.mrb[0].mxu0
    %423 = vmatprep.mubr.f32.mxu0 %v260
    %424 = vmatmul.mubr.f32.gmra.mrb[0].mxu0 %v259
    %v425 = vpop.f32.mrb[0].mxu0
    %v426 = vadd.f32 0.0, %v425
    %v427 = vpop.f32.mrb[0].mxu0
    %428 = vmatprep.mubr.f32.mxu0 %v262
    %429 = vmatmul.mubr.f32.gmra.mrb[0].mxu0 %v261
    %v430 = vpop.f32.mrb[0].mxu0
    %v431 = vadd.f32 0.0, %v430
    %v432 = vpop.f32.mrb[0].mxu0
    %433 = vmatprep.mubr.f32.mxu0 %v264
    %434 = vmatmul.mubr.f32.gmra.mrb[0].mxu0 %v263
    %v435 = vpop.f32.mrb[0].mxu0
    %v436 = vadd.f32 0.0, %v435
    %v437 = vpop.f32.mrb[0].mxu0
    %438 = vmatprep.mubr.f32.mxu0 %v266
    %439 = vmatmul.mubr.f32.gmra.mrb[0].mxu0 %v265
    %v440 = vpop.f32.mrb[0].mxu0
    %v441 = vadd.f32 0.0, %v440
    %v442 = vpop.f32.mrb[0].mxu0
    %443 = vdwg.mxu0
    %444 = vst [vmem:[#allocation2] sm:$0xff] %v366
    %445 = vst [vmem:[#allocation2 + $0x8] sm:$0xff] %v371
    %446 = vst [vmem:[#allocation2 + $0x10] sm:$0xff] %v376
    %447 = vst [vmem:[#allocation2 + $0x18] sm:$0xff] %v381
    %448 = vst [vmem:[#allocation2 + $0x20] sm:$0xff] %v386
    %449 = vst [vmem:[#allocation2 + $0x28] sm:$0xff] %v391
    %450 = vst [vmem:[#allocation2 + $0x30] sm:$0xff] %v396
    %451 = vst [vmem:[#allocation2 + $0x38] sm:$0xff] %v401
    %452 = vst [vmem:[#allocation2 + $0x40] sm:$0xff] %v406
    %453 = vst [vmem:[#allocation2 + $0x48] sm:$0xff] %v411
    %454 = vst [vmem:[#allocation2 + $0x50] sm:$0xff] %v416
    %455 = vst [vmem:[#allocation2 + $0x58] sm:$0xff] %v421
    %456 = vst [vmem:[#allocation2 + $0x60] sm:$0xff] %v426
    %457 = vst [vmem:[#allocation2 + $0x68] sm:$0xff] %v431
    %458 = vst [vmem:[#allocation2 + $0x70] sm:$0xff] %v436
    %459 = vst [vmem:[#allocation2 + $0x78] sm:$0xff] %v441
    %v460 = vld [vmem:[#allocation2] sm:$0xff]
    %v461 = vld [vmem:[#allocation2 + $0x8] sm:$0xff]
    %v462 = vld [vmem:[#allocation2 + $0x10] sm:$0xff]
    %v463 = vld [vmem:[#allocation2 + $0x18] sm:$0xff]
    %v464 = vld [vmem:[#allocation2 + $0x20] sm:$0xff]
    %v465 = vld [vmem:[#allocation2 + $0x28] sm:$0xff]
    %v466 = vld [vmem:[#allocation2 + $0x30] sm:$0xff]
    %v467 = vld [vmem:[#allocation2 + $0x38] sm:$0xff]
    %v468 = vld [vmem:[#allocation2 + $0x40] sm:$0xff]
    %v469 = vld [vmem:[#allocation2 + $0x48] sm:$0xff]
    %v470 = vld [vmem:[#allocation2 + $0x50] sm:$0xff]
    %v471 = vld [vmem:[#allocation2 + $0x58] sm:$0xff]
    %v472 = vld [vmem:[#allocation2 + $0x60] sm:$0xff]
    %v473 = vld [vmem:[#allocation2 + $0x68] sm:$0xff]
    %v474 = vld [vmem:[#allocation2 + $0x70] sm:$0xff]
    %v475 = vld [vmem:[#allocation2 + $0x78] sm:$0xff]
    %v476 = vpack.c.bf16 %v461, %v460
    %v477 = vpack.c.bf16 %v463, %v462
    %v478 = vpack.c.bf16 %v465, %v464
    %v479 = vpack.c.bf16 %v467, %v466
    %v480 = vpack.c.bf16 %v469, %v468
    %v481 = vpack.c.bf16 %v471, %v470
    %v482 = vpack.c.bf16 %v473, %v472
    %v483 = vpack.c.bf16 %v475, %v474
    %v484 = vld [vmem:[#allocation4] sm:$0xff]
    %v485 = vld [vmem:[#allocation4 + $0x8] sm:$0xff]
    %v486 = vld [vmem:[#allocation4 + $0x10] sm:$0xff]
    %v487 = vld [vmem:[#allocation4 + $0x18] sm:$0xff]
    %v488 = vld [vmem:[#allocation4 + $0x20] sm:$0xff]
    %v489 = vld [vmem:[#allocation4 + $0x28] sm:$0xff]
    %v490 = vld [vmem:[#allocation4 + $0x30] sm:$0xff]
    %v491 = vld [vmem:[#allocation4 + $0x38] sm:$0xff]
    %v492 = vld [vmem:[#allocation4 + $0x40] sm:$0xff]
    %v493 = vld [vmem:[#allocation4 + $0x48] sm:$0xff]
    %v494 = vld [vmem:[#allocation4 + $0x50] sm:$0xff]
    %v495 = vld [vmem:[#allocation4 + $0x58] sm:$0xff]
    %v496 = vld [vmem:[#allocation4 + $0x60] sm:$0xff]
    %v497 = vld [vmem:[#allocation4 + $0x68] sm:$0xff]
    %v498 = vld [vmem:[#allocation4 + $0x70] sm:$0xff]
    %v499 = vld [vmem:[#allocation4 + $0x78] sm:$0xff]
    %v500 = vld [vmem:[#allocation4 + $0x80] sm:$0xff]
    %v501 = vld [vmem:[#allocation4 + $0x88] sm:$0xff]
    %v502 = vld [vmem:[#allocation4 + $0x90] sm:$0xff]
    %v503 = vld [vmem:[#allocation4 + $0x98] sm:$0xff]
    %v504 = vld [vmem:[#allocation4 + $0xa0] sm:$0xff]
    %v505 = vld [vmem:[#allocation4 + $0xa8] sm:$0xff]
    %v506 = vld [vmem:[#allocation4 + $0xb0] sm:$0xff]
    %v507 = vld [vmem:[#allocation4 + $0xb8] sm:$0xff]
    %v508 = vld [vmem:[#allocation4 + $0xc0] sm:$0xff]
    %v509 = vld [vmem:[#allocation4 + $0xc8] sm:$0xff]
    %v510 = vld [vmem:[#allocation4 + $0xd0] sm:$0xff]
    %v511 = vld [vmem:[#allocation4 + $0xd8] sm:$0xff]
    %v512 = vld [vmem:[#allocation4 + $0xe0] sm:$0xff]
    %v513 = vld [vmem:[#allocation4 + $0xe8] sm:$0xff]
    %v514 = vld [vmem:[#allocation4 + $0xf0] sm:$0xff]
    %v515 = vld [vmem:[#allocation4 + $0xf8] sm:$0xff]
    %v516 = vld [vmem:[#allocation4 + $0x100] sm:$0xff]
    %v517 = vld [vmem:[#allocation4 + $0x108] sm:$0xff]
    %v518 = vld [vmem:[#allocation4 + $0x110] sm:$0xff]
    %v519 = vld [vmem:[#allocation4 + $0x118] sm:$0xff]
    %v520 = vld [vmem:[#allocation4 + $0x120] sm:$0xff]
    %v521 = vld [vmem:[#allocation4 + $0x128] sm:$0xff]
    %v522 = vld [vmem:[#allocation4 + $0x130] sm:$0xff]
    %v523 = vld [vmem:[#allocation4 + $0x138] sm:$0xff]
    %v524 = vld [vmem:[#allocation4 + $0x140] sm:$0xff]
    %v525 = vld [vmem:[#allocation4 + $0x148] sm:$0xff]
    %v526 = vld [vmem:[#allocation4 + $0x150] sm:$0xff]
    %v527 = vld [vmem:[#allocation4 + $0x158] sm:$0xff]
    %v528 = vld [vmem:[#allocation4 + $0x160] sm:$0xff]
    %v529 = vld [vmem:[#allocation4 + $0x168] sm:$0xff]
    %v530 = vld [vmem:[#allocation4 + $0x170] sm:$0xff]
    %v531 = vld [vmem:[#allocation4 + $0x178] sm:$0xff]
    %v532 = vpack.c.bf16 %v487, %v484
    %v533 = vpack.c.bf16 %v488, %v485
    %v534 = vpack.c.bf16 %v489, %v486
    %v535 = vpack.c.bf16 %v493, %v490
    %v536 = vpack.c.bf16 %v494, %v491
    %v537 = vpack.c.bf16 %v495, %v492
    %v538 = vpack.c.bf16 %v499, %v496
    %v539 = vpack.c.bf16 %v500, %v497
    %v540 = vpack.c.bf16 %v501, %v498
    %v541 = vpack.c.bf16 %v505, %v502
    %v542 = vpack.c.bf16 %v506, %v503
    %v543 = vpack.c.bf16 %v507, %v504
    %v544 = vpack.c.bf16 %v511, %v508
    %v545 = vpack.c.bf16 %v512, %v509
    %v546 = vpack.c.bf16 %v513, %v510
    %v547 = vpack.c.bf16 %v517, %v514
    %v548 = vpack.c.bf16 %v518, %v515
    %v549 = vpack.c.bf16 %v519, %v516
    %v550 = vpack.c.bf16 %v523, %v520
    %v551 = vpack.c.bf16 %v524, %v521
    %v552 = vpack.c.bf16 %v525, %v522
    %v553 = vpack.c.bf16 %v529, %v526
    %v554 = vpack.c.bf16 %v530, %v527
    %v555 = vpack.c.bf16 %v531, %v528
    %v556 = vld [vmem:[%s7] sm:$0x7]
    %v558 = vlaneseq
    %v559 = vshrl.u32 %v558, 7
    %v560 = vsub.s32 0, %v559
    %v561 = vrot.slane %v556, %v560
    %v562 = vlaneseq
    %v563 = vshrl.u32 %v562, 7
    %v564 = vsub.s32 1, %v563
    %v565 = vrot.slane %v556, %v564
    %v566 = vlaneseq
    %v567 = vshrl.u32 %v566, 7
    %v568 = vsub.s32 2, %v567
    %v569 = vrot.slane %v556, %v568
    %573 = vmatprep.subr.bf16.mxu0 %v533
    %574 = vmatpush1.bf16.msra.mxu0 %v532
    %575 = vmatprep.subr.bf16.mxu0 %v536
    %576 = vmatpush1.bf16.msra.mxu0 %v535
    %577 = vmatprep.subr.bf16.mxu0 %v539
    %578 = vmatpush1.bf16.msra.mxu0 %v538
    %579 = vmatprep.subr.bf16.mxu0 %v542
    %580 = vmatpush1.bf16.msra.mxu0 %v541
    %581 = vmatprep.subr.bf16.mxu0 %v545
    %582 = vmatpush1.bf16.msra.mxu0 %v544
    %583 = vmatprep.subr.bf16.mxu0 %v548
    %584 = vmatpush1.bf16.msra.mxu0 %v547
    %585 = vmatprep.subr.bf16.mxu0 %v551
    %586 = vmatpush1.bf16.msra.mxu0 %v550
    %587 = vmatprep.subr.bf16.mxu0 %v554
    %588 = vmatpush1.bf16.msra.mxu0 %v553
    %589 = vmatprep.subr.bf16.mxu0 0
    %590 = vmatpush1.bf16.msra.mxu0 0
    %591 = vmatprep.subr.bf16.mxu0 0
    %592 = vmatpush1.bf16.msra.mxu0 0
    %593 = vmatprep.subr.bf16.mxu0 0
    %594 = vmatpush1.bf16.msra.mxu0 0
    %595 = vmatprep.subr.bf16.mxu0 0
    %596 = vmatpush1.bf16.msra.mxu0 0
    %597 = vmatprep.subr.bf16.mxu0 0
    %598 = vmatpush1.bf16.msra.mxu0 0
    %599 = vmatprep.subr.bf16.mxu0 0
    %600 = vmatpush1.bf16.msra.mxu0 0
    %601 = vmatprep.subr.bf16.mxu0 0
    %602 = vmatpush1.bf16.msra.mxu0 0
    %603 = vmatprep.subr.bf16.mxu0 0
    %604 = vmatpush1.bf16.msra.mxu0 0
    %605 = vmatprep.mubr.bf16.mxu0 0
    %606 = vmatmul.mubr.bf16.gmra.mrb[0].mxu0 %v476
    %v607 = vpop.f32.mrb[0].mxu0
    %v608 = vadd.f32 %v561, %v607
    %v609 = vpop.f32.mrb[0].mxu0
    %v610 = vadd.f32 %v565, %v609
    %v611 = vpop.f32.mrb[0].mxu0
    %v612 = vadd.f32 %v561, %v611
    %v613 = vpop.f32.mrb[0].mxu0
    %v614 = vadd.f32 %v565, %v613
    %615 = vmatprep.mubr.bf16.mxu0 0
    %616 = vmatmul.mubr.bf16.gmra.mrb[0].mxu0 %v477
    %v617 = vpop.f32.mrb[0].mxu0
    %v618 = vadd.f32 %v561, %v617
    %v619 = vpop.f32.mrb[0].mxu0
    %v620 = vadd.f32 %v565, %v619
    %v621 = vpop.f32.mrb[0].mxu0
    %v622 = vadd.f32 %v561, %v621
    %v623 = vpop.f32.mrb[0].mxu0
    %v624 = vadd.f32 %v565, %v623
    %625 = vmatprep.mubr.bf16.mxu0 0
    %626 = vmatmul.mubr.bf16.gmra.mrb[0].mxu0 %v478
    %v627 = vpop.f32.mrb[0].mxu0
    %v628 = vadd.f32 %v561, %v627
    %v629 = vpop.f32.mrb[0].mxu0
    %v630 = vadd.f32 %v565, %v629
    %v631 = vpop.f32.mrb[0].mxu0
    %v632 = vadd.f32 %v561, %v631
    %v633 = vpop.f32.mrb[0].mxu0
    %v634 = vadd.f32 %v565, %v633
    %635 = vmatprep.mubr.bf16.mxu0 0
    %636 = vmatmul.mubr.bf16.gmra.mrb[0].mxu0 %v479
    %v637 = vpop.f32.mrb[0].mxu0
    %v638 = vadd.f32 %v561, %v637
    %v639 = vpop.f32.mrb[0].mxu0
    %v640 = vadd.f32 %v565, %v639
    %v641 = vpop.f32.mrb[0].mxu0
    %v642 = vadd.f32 %v561, %v641
    %v643 = vpop.f32.mrb[0].mxu0
    %v644 = vadd.f32 %v565, %v643
    %645 = vmatprep.mubr.bf16.mxu0 0
    %646 = vmatmul.mubr.bf16.gmra.mrb[0].mxu0 %v480
    %v647 = vpop.f32.mrb[0].mxu0
    %v648 = vadd.f32 %v561, %v647
    %v649 = vpop.f32.mrb[0].mxu0
    %v650 = vadd.f32 %v565, %v649
    %v651 = vpop.f32.mrb[0].mxu0
    %v652 = vadd.f32 %v561, %v651
    %v653 = vpop.f32.mrb[0].mxu0
    %v654 = vadd.f32 %v565, %v653
    %655 = vmatprep.mubr.bf16.mxu0 0
    %656 = vmatmul.mubr.bf16.gmra.mrb[0].mxu0 %v481
    %v657 = vpop.f32.mrb[0].mxu0
    %v658 = vadd.f32 %v561, %v657
    %v659 = vpop.f32.mrb[0].mxu0
    %v660 = vadd.f32 %v565, %v659
    %v661 = vpop.f32.mrb[0].mxu0
    %v662 = vadd.f32 %v561, %v661
    %v663 = vpop.f32.mrb[0].mxu0
    %v664 = vadd.f32 %v565, %v663
    %665 = vmatprep.mubr.bf16.mxu0 0
    %666 = vmatmul.mubr.bf16.gmra.mrb[0].mxu0 %v482
    %v667 = vpop.f32.mrb[0].mxu0
    %v668 = vadd.f32 %v561, %v667
    %v669 = vpop.f32.mrb[0].mxu0
    %v670 = vadd.f32 %v565, %v669
    %v671 = vpop.f32.mrb[0].mxu0
    %v672 = vadd.f32 %v561, %v671
    %v673 = vpop.f32.mrb[0].mxu0
    %v674 = vadd.f32 %v565, %v673
    %675 = vmatprep.mubr.bf16.mxu0 0
    %676 = vmatmul.mubr.bf16.gmra.mrb[0].mxu0 %v483
    %v677 = vpop.f32.mrb[0].mxu0
    %v678 = vadd.f32 %v561, %v677
    %v679 = vpop.f32.mrb[0].mxu0
    %v680 = vadd.f32 %v565, %v679
    %v681 = vpop.f32.mrb[0].mxu0
    %v682 = vadd.f32 %v561, %v681
    %v683 = vpop.f32.mrb[0].mxu0
    %v684 = vadd.f32 %v565, %v683
    %685 = vdwg.mxu0
    %686 = vmatprep.subr.bf16.mxu0 0
    %687 = vmatpush1.bf16.msra.mxu0 %v534
    %688 = vmatprep.subr.bf16.mxu0 0
    %689 = vmatpush1.bf16.msra.mxu0 %v537
    %690 = vmatprep.subr.bf16.mxu0 0
    %691 = vmatpush1.bf16.msra.mxu0 %v540
    %692 = vmatprep.subr.bf16.mxu0 0
    %693 = vmatpush1.bf16.msra.mxu0 %v543
    %694 = vmatprep.subr.bf16.mxu0 0
    %695 = vmatpush1.bf16.msra.mxu0 %v546
    %696 = vmatprep.subr.bf16.mxu0 0
    %697 = vmatpush1.bf16.msra.mxu0 %v549
    %698 = vmatprep.subr.bf16.mxu0 0
    %699 = vmatpush1.bf16.msra.mxu0 %v552
    %700 = vmatprep.subr.bf16.mxu0 0
    %701 = vmatpush1.bf16.msra.mxu0 %v555
    %702 = vmatprep.subr.bf16.mxu0 0
    %703 = vmatpush1.bf16.msra.mxu0 0
    %704 = vmatprep.subr.bf16.mxu0 0
    %705 = vmatpush1.bf16.msra.mxu0 0
    %706 = vmatprep.subr.bf16.mxu0 0
    %707 = vmatpush1.bf16.msra.mxu0 0
    %708 = vmatprep.subr.bf16.mxu0 0
    %709 = vmatpush1.bf16.msra.mxu0 0
    %710 = vmatprep.subr.bf16.mxu0 0
    %711 = vmatpush1.bf16.msra.mxu0 0
    %712 = vmatprep.subr.bf16.mxu0 0
    %713 = vmatpush1.bf16.msra.mxu0 0
    %714 = vmatprep.subr.bf16.mxu0 0
    %715 = vmatpush1.bf16.msra.mxu0 0
    %716 = vmatprep.subr.bf16.mxu0 0
    %717 = vmatpush1.bf16.msra.mxu0 0
    %718 = vmatprep.mubr.bf16.mxu0 0
    %719 = vmatmul.mubr.bf16.gmra.mrb[0].mxu0 %v476
    %v720 = vpop.f32.mrb[0].mxu0
    %v721 = vadd.f32 %v569, %v720
    %v722 = vpop.f32.mrb[0].mxu0
    %v723 = vpop.f32.mrb[0].mxu0
    %v724 = vadd.f32 %v569, %v723
    %v725 = vpop.f32.mrb[0].mxu0
    %726 = vmatprep.mubr.bf16.mxu0 0
    %727 = vmatmul.mubr.bf16.gmra.mrb[0].mxu0 %v477
    %v728 = vpop.f32.mrb[0].mxu0
    %v729 = vadd.f32 %v569, %v728
    %v730 = vpop.f32.mrb[0].mxu0
    %v731 = vpop.f32.mrb[0].mxu0
    %v732 = vadd.f32 %v569, %v731
    %v733 = vpop.f32.mrb[0].mxu0
    %734 = vmatprep.mubr.bf16.mxu0 0
    %735 = vmatmul.mubr.bf16.gmra.mrb[0].mxu0 %v478
    %v736 = vpop.f32.mrb[0].mxu0
    %v737 = vadd.f32 %v569, %v736
    %v738 = vpop.f32.mrb[0].mxu0
    %v739 = vpop.f32.mrb[0].mxu0
    %v740 = vadd.f32 %v569, %v739
    %v741 = vpop.f32.mrb[0].mxu0
    %742 = vmatprep.mubr.bf16.mxu0 0
    %743 = vmatmul.mubr.bf16.gmra.mrb[0].mxu0 %v479
    %v744 = vpop.f32.mrb[0].mxu0
    %v745 = vadd.f32 %v569, %v744
    %v746 = vpop.f32.mrb[0].mxu0
    %v747 = vpop.f32.mrb[0].mxu0
    %v748 = vadd.f32 %v569, %v747
    %v749 = vpop.f32.mrb[0].mxu0
    %750 = vmatprep.mubr.bf16.mxu0 0
    %751 = vmatmul.mubr.bf16.gmra.mrb[0].mxu0 %v480
    %v752 = vpop.f32.mrb[0].mxu0
    %v753 = vadd.f32 %v569, %v752
    %v754 = vpop.f32.mrb[0].mxu0
    %v755 = vpop.f32.mrb[0].mxu0
    %v756 = vadd.f32 %v569, %v755
    %v757 = vpop.f32.mrb[0].mxu0
    %758 = vmatprep.mubr.bf16.mxu0 0
    %759 = vmatmul.mubr.bf16.gmra.mrb[0].mxu0 %v481
    %v760 = vpop.f32.mrb[0].mxu0
    %v761 = vadd.f32 %v569, %v760
    %v762 = vpop.f32.mrb[0].mxu0
    %v763 = vpop.f32.mrb[0].mxu0
    %v764 = vadd.f32 %v569, %v763
    %v765 = vpop.f32.mrb[0].mxu0
    %766 = vmatprep.mubr.bf16.mxu0 0
    %767 = vmatmul.mubr.bf16.gmra.mrb[0].mxu0 %v482
    %v768 = vpop.f32.mrb[0].mxu0
    %v769 = vadd.f32 %v569, %v768
    %v770 = vpop.f32.mrb[0].mxu0
    %v771 = vpop.f32.mrb[0].mxu0
    %v772 = vadd.f32 %v569, %v771
    %v773 = vpop.f32.mrb[0].mxu0
    %774 = vmatprep.mubr.bf16.mxu0 0
    %775 = vmatmul.mubr.bf16.gmra.mrb[0].mxu0 %v483
    %v776 = vpop.f32.mrb[0].mxu0
    %v777 = vadd.f32 %v569, %v776
    %v778 = vpop.f32.mrb[0].mxu0
    %v779 = vpop.f32.mrb[0].mxu0
    %v780 = vadd.f32 %v569, %v779
    %v781 = vpop.f32.mrb[0].mxu0
    %782 = vdwg.mxu0
    %783 = vst [vmem:[#allocation3] sm:$0xff] %v608
    %784 = vst [vmem:[#allocation3 + $0x8] sm:$0xff] %v610
    %785 = vst [vmem:[#allocation3 + $0x10] sm:$0xff] %v721
    %786 = vst [vmem:[#allocation3 + $0x18] sm:$0xff] %v612
    %787 = vst [vmem:[#allocation3 + $0x20] sm:$0xff] %v614
    %788 = vst [vmem:[#allocation3 + $0x28] sm:$0xff] %v724
    %789 = vst [vmem:[#allocation3 + $0x30] sm:$0xff] %v618
    %790 = vst [vmem:[#allocation3 + $0x38] sm:$0xff] %v620
    %791 = vst [vmem:[#allocation3 + $0x40] sm:$0xff] %v729
    %792 = vst [vmem:[#allocation3 + $0x48] sm:$0xff] %v622
    %793 = vst [vmem:[#allocation3 + $0x50] sm:$0xff] %v624
    %794 = vst [vmem:[#allocation3 + $0x58] sm:$0xff] %v732
    %795 = vst [vmem:[#allocation3 + $0x60] sm:$0xff] %v628
    %796 = vst [vmem:[#allocation3 + $0x68] sm:$0xff] %v630
    %797 = vst [vmem:[#allocation3 + $0x70] sm:$0xff] %v737
    %798 = vst [vmem:[#allocation3 + $0x78] sm:$0xff] %v632
    %799 = vst [vmem:[#allocation3 + $0x80] sm:$0xff] %v634
    %800 = vst [vmem:[#allocation3 + $0x88] sm:$0xff] %v740
    %801 = vst [vmem:[#allocation3 + $0x90] sm:$0xff] %v638
    %802 = vst [vmem:[#allocation3 + $0x98] sm:$0xff] %v640
    %803 = vst [vmem:[#allocation3 + $0xa0] sm:$0xff] %v745
    %804 = vst [vmem:[#allocation3 + $0xa8] sm:$0xff] %v642
    %805 = vst [vmem:[#allocation3 + $0xb0] sm:$0xff] %v644
    %806 = vst [vmem:[#allocation3 + $0xb8] sm:$0xff] %v748
    %807 = vst [vmem:[#allocation3 + $0xc0] sm:$0xff] %v648
    %808 = vst [vmem:[#allocation3 + $0xc8] sm:$0xff] %v650
    %809 = vst [vmem:[#allocation3 + $0xd0] sm:$0xff] %v753
    %810 = vst [vmem:[#allocation3 + $0xd8] sm:$0xff] %v652
    %811 = vst [vmem:[#allocation3 + $0xe0] sm:$0xff] %v654
    %812 = vst [vmem:[#allocation3 + $0xe8] sm:$0xff] %v756
    %813 = vst [vmem:[#allocation3 + $0xf0] sm:$0xff] %v658
    %814 = vst [vmem:[#allocation3 + $0xf8] sm:$0xff] %v660
    %815 = vst [vmem:[#allocation3 + $0x100] sm:$0xff] %v761
    %816 = vst [vmem:[#allocation3 + $0x108] sm:$0xff] %v662
    %817 = vst [vmem:[#allocation3 + $0x110] sm:$0xff] %v664
    %818 = vst [vmem:[#allocation3 + $0x118] sm:$0xff] %v764
    %819 = vst [vmem:[#allocation3 + $0x120] sm:$0xff] %v668
    %820 = vst [vmem:[#allocation3 + $0x128] sm:$0xff] %v670
    %821 = vst [vmem:[#allocation3 + $0x130] sm:$0xff] %v769
    %822 = vst [vmem:[#allocation3 + $0x138] sm:$0xff] %v672
    %823 = vst [vmem:[#allocation3 + $0x140] sm:$0xff] %v674
    %824 = vst [vmem:[#allocation3 + $0x148] sm:$0xff] %v772
    %825 = vst [vmem:[#allocation3 + $0x150] sm:$0xff] %v678
    %826 = vst [vmem:[#allocation3 + $0x158] sm:$0xff] %v680
    %827 = vst [vmem:[#allocation3 + $0x160] sm:$0xff] %v777
    %828 = vst [vmem:[#allocation3 + $0x168] sm:$0xff] %v682
    %829 = vst [vmem:[#allocation3 + $0x170] sm:$0xff] %v684
    %830 = vst [vmem:[#allocation3 + $0x178] sm:$0xff] %v780
    %v831 = vld [vmem:[#allocation7] sm:$0xff]
    %v832 = vld [vmem:[#allocation7 + $0x8] sm:$0xff]
    %v833 = vld [vmem:[#allocation7 + $0x10] sm:$0xff]
    %v834 = vld [vmem:[#allocation7 + $0x18] sm:$0xff]
    %v835 = vld [vmem:[#allocation7 + $0x20] sm:$0xff]
    %v836 = vld [vmem:[#allocation7 + $0x28] sm:$0xff]
    %v837 = vld [vmem:[#allocation7 + $0x30] sm:$0xff]
    %v838 = vld [vmem:[#allocation7 + $0x38] sm:$0xff]
    %v839 = vld [vmem:[#allocation7 + $0x40] sm:$0xff]
    %v840 = vld [vmem:[#allocation7 + $0x48] sm:$0xff]
    %v841 = vld [vmem:[#allocation7 + $0x50] sm:$0xff]
    %v842 = vld [vmem:[#allocation7 + $0x58] sm:$0xff]
    %v843 = vld [vmem:[#allocation7 + $0x60] sm:$0xff]
    %v844 = vld [vmem:[#allocation7 + $0x68] sm:$0xff]
    %v845 = vld [vmem:[#allocation7 + $0x70] sm:$0xff]
    %v846 = vld [vmem:[#allocation7 + $0x78] sm:$0xff]
    %v847 = vld [vmem:[#allocation7 + $0x80] sm:$0xff]
    %v848 = vld [vmem:[#allocation7 + $0x88] sm:$0xff]
    %v849 = vld [vmem:[#allocation7 + $0x90] sm:$0xff]
    %v850 = vld [vmem:[#allocation7 + $0x98] sm:$0xff]
    %v851 = vld [vmem:[#allocation7 + $0xa0] sm:$0xff]
    %v852 = vld [vmem:[#allocation7 + $0xa8] sm:$0xff]
    %v853 = vld [vmem:[#allocation7 + $0xb0] sm:$0xff]
    %v854 = vld [vmem:[#allocation7 + $0xb8] sm:$0xff]
    %v855 = vld [vmem:[#allocation7 + $0xc0] sm:$0xff]
    %v856 = vld [vmem:[#allocation7 + $0xc8] sm:$0xff]
    %v857 = vld [vmem:[#allocation7 + $0xd0] sm:$0xff]
    %v858 = vld [vmem:[#allocation7 + $0xd8] sm:$0xff]
    %v859 = vld [vmem:[#allocation7 + $0xe0] sm:$0xff]
    %v860 = vld [vmem:[#allocation7 + $0xe8] sm:$0xff]
    %v861 = vld [vmem:[#allocation7 + $0xf0] sm:$0xff]
    %v862 = vld [vmem:[#allocation7 + $0xf8] sm:$0xff]
    %v863 = vld [vmem:[#allocation7 + $0x100] sm:$0xff]
    %v864 = vld [vmem:[#allocation7 + $0x108] sm:$0xff]
    %v865 = vld [vmem:[#allocation7 + $0x110] sm:$0xff]
    %v866 = vld [vmem:[#allocation7 + $0x118] sm:$0xff]
    %v867 = vld [vmem:[#allocation7 + $0x120] sm:$0xff]
    %v868 = vld [vmem:[#allocation7 + $0x128] sm:$0xff]
    %v869 = vld [vmem:[#allocation7 + $0x130] sm:$0xff]
    %v870 = vld [vmem:[#allocation7 + $0x138] sm:$0xff]
    %v871 = vld [vmem:[#allocation7 + $0x140] sm:$0xff]
    %v872 = vld [vmem:[#allocation7 + $0x148] sm:$0xff]
    %v873 = vld [vmem:[#allocation7 + $0x150] sm:$0xff]
    %v874 = vld [vmem:[#allocation7 + $0x158] sm:$0xff]
    %v875 = vld [vmem:[#allocation7 + $0x160] sm:$0xff]
    %v876 = vld [vmem:[#allocation7 + $0x168] sm:$0xff]
    %v877 = vld [vmem:[#allocation7 + $0x170] sm:$0xff]
    %v878 = vld [vmem:[#allocation7 + $0x178] sm:$0xff]
    %v879 = vld [vmem:[%s8] sm:$0x7]
    %v880 = vld [vmem:[%s3] sm:$0xff]
    %v881 = vld [vmem:[%s3 + $0x8] sm:$0xff]
    %v882 = vld [vmem:[#allocation3] sm:$0xff]
    %v883 = vld [vmem:[#allocation3 + $0x8] sm:$0xff]
    %v884 = vld [vmem:[#allocation3 + $0x10] sm:$0xff]
    %v885 = vld [vmem:[#allocation3 + $0x18] sm:$0xff]
    %v886 = vld [vmem:[#allocation3 + $0x20] sm:$0xff]
    %v887 = vld [vmem:[#allocation3 + $0x28] sm:$0xff]
    %v889 = vlaneseq
    %v890 = vshrl.u32 %v889, 7
    %v891 = vsub.s32 0, %v890
    %v892 = vrot.slane %v879, %v891
    %v893 = vlaneseq
    %v894 = vshrl.u32 %v893, 7
    %v895 = vsub.s32 1, %v894
    %v896 = vrot.slane %v879, %v895
    %v897 = vlaneseq
    %v898 = vshrl.u32 %v897, 7
    %v899 = vsub.s32 2, %v898
    %v900 = vrot.slane %v879, %v899
    %904 = vmatprep.subr.mxu0 %v832
    %905 = vmatpush1.msra.mxu0 %v831
    %906 = vmatprep.subr.mxu0 %v835
    %907 = vmatpush1.msra.mxu0 %v834
    %908 = vmatprep.subr.mxu0 %v838
    %909 = vmatpush1.msra.mxu0 %v837
    %910 = vmatprep.subr.mxu0 %v841
    %911 = vmatpush1.msra.mxu0 %v840
    %912 = vmatprep.subr.mxu0 %v844
    %913 = vmatpush1.msra.mxu0 %v843
    %914 = vmatprep.subr.mxu0 %v847
    %915 = vmatpush1.msra.mxu0 %v846
    %916 = vmatprep.subr.mxu0 %v850
    %917 = vmatpush1.msra.mxu0 %v849
    %918 = vmatprep.subr.mxu0 %v853
    %919 = vmatpush1.msra.mxu0 %v852
    %920 = vmatprep.subr.mxu0 %v856
    %921 = vmatpush1.msra.mxu0 %v855
    %922 = vmatprep.subr.mxu0 %v859
    %923 = vmatpush1.msra.mxu0 %v858
    %924 = vmatprep.subr.mxu0 %v862
    %925 = vmatpush1.msra.mxu0 %v861
    %926 = vmatprep.subr.mxu0 %v865
    %927 = vmatpush1.msra.mxu0 %v864
    %928 = vmatprep.subr.mxu0 %v868
    %929 = vmatpush1.msra.mxu0 %v867
    %930 = vmatprep.subr.mxu0 %v871
    %931 = vmatpush1.msra.mxu0 %v870
    %932 = vmatprep.subr.mxu0 %v874
    %933 = vmatpush1.msra.mxu0 %v873
    %934 = vmatprep.subr.mxu0 %v877
    %935 = vmatpush1.msra.mxu0 %v876
    %936 = vmatprep.subr.mxu0 0.0
    %937 = vmatpush1.msra.mxu0 0.0
    %938 = vmatprep.subr.mxu0 0.0
    %939 = vmatpush1.msra.mxu0 0.0
    %940 = vmatprep.subr.mxu0 0.0
    %941 = vmatpush1.msra.mxu0 0.0
    %942 = vmatprep.subr.mxu0 0.0
    %943 = vmatpush1.msra.mxu0 0.0
    %944 = vmatprep.subr.mxu0 0.0
    %945 = vmatpush1.msra.mxu0 0.0
    %946 = vmatprep.subr.mxu0 0.0
    %947 = vmatpush1.msra.mxu0 0.0
    %948 = vmatprep.subr.mxu0 0.0
    %949 = vmatpush1.msra.mxu0 0.0
    %950 = vmatprep.subr.mxu0 0.0
    %951 = vmatpush1.msra.mxu0 0.0
    %952 = vmatprep.subr.mxu0 0.0
    %953 = vmatpush1.msra.mxu0 0.0
    %954 = vmatprep.subr.mxu0 0.0
    %955 = vmatpush1.msra.mxu0 0.0
    %956 = vmatprep.subr.mxu0 0.0
    %957 = vmatpush1.msra.mxu0 0.0
    %958 = vmatprep.subr.mxu0 0.0
    %959 = vmatpush1.msra.mxu0 0.0
    %960 = vmatprep.subr.mxu0 0.0
    %961 = vmatpush1.msra.mxu0 0.0
    %962 = vmatprep.subr.mxu0 0.0
    %963 = vmatpush1.msra.mxu0 0.0
    %964 = vmatprep.subr.mxu0 0.0
    %965 = vmatpush1.msra.mxu0 0.0
    %966 = vmatprep.subr.mxu0 0.0
    %967 = vmatpush1.msra.mxu0 0.0
    %968 = vmatprep.mubr.f32.mxu0 0.0
    %969 = vmatmul.mubr.f32.gmra.mrb[0].mxu0 %v880
    %v970 = vpop.f32.mrb[0].mxu0
    %v971 = vadd.f32 %v892, %v970
    %v972 = vpop.f32.mrb[0].mxu0
    %v973 = vadd.f32 %v896, %v972
    %974 = vmatprep.mubr.f32.mxu0 0.0
    %975 = vmatmul.mubr.f32.gmra.mrb[0].mxu0 %v881
    %v976 = vpop.f32.mrb[0].mxu0
    %v977 = vadd.f32 %v892, %v976
    %v978 = vpop.f32.mrb[0].mxu0
    %v979 = vadd.f32 %v896, %v978
    %980 = vdwg.mxu0
    %981 = vmatprep.subr.mxu0 0.0
    %982 = vmatpush1.msra.mxu0 %v833
    %983 = vmatprep.subr.mxu0 0.0
    %984 = vmatpush1.msra.mxu0 %v836
    %985 = vmatprep.subr.mxu0 0.0
    %986 = vmatpush1.msra.mxu0 %v839
    %987 = vmatprep.subr.mxu0 0.0
    %988 = vmatpush1.msra.mxu0 %v842
    %989 = vmatprep.subr.mxu0 0.0
    %990 = vmatpush1.msra.mxu0 %v845
    %991 = vmatprep.subr.mxu0 0.0
    %992 = vmatpush1.msra.mxu0 %v848
    %993 = vmatprep.subr.mxu0 0.0
    %994 = vmatpush1.msra.mxu0 %v851
    %995 = vmatprep.subr.mxu0 0.0
    %996 = vmatpush1.msra.mxu0 %v854
    %997 = vmatprep.subr.mxu0 0.0
    %998 = vmatpush1.msra.mxu0 %v857
    %999 = vmatprep.subr.mxu0 0.0
    %1000 = vmatpush1.msra.mxu0 %v860
    %1001 = vmatprep.subr.mxu0 0.0
    %1002 = vmatpush1.msra.mxu0 %v863
    %1003 = vmatprep.subr.mxu0 0.0
    %1004 = vmatpush1.msra.mxu0 %v866
    %1005 = vmatprep.subr.mxu0 0.0
    %1006 = vmatpush1.msra.mxu0 %v869
    %1007 = vmatprep.subr.mxu0 0.0
    %1008 = vmatpush1.msra.mxu0 %v872
    %1009 = vmatprep.subr.mxu0 0.0
    %1010 = vmatpush1.msra.mxu0 %v875
    %1011 = vmatprep.subr.mxu0 0.0
    %1012 = vmatpush1.msra.mxu0 %v878
    %1013 = vmatprep.subr.mxu0 0.0
    %1014 = vmatpush1.msra.mxu0 0.0
    %1015 = vmatprep.subr.mxu0 0.0
    %1016 = vmatpush1.msra.mxu0 0.0
    %1017 = vmatprep.subr.mxu0 0.0
    %1018 = vmatpush1.msra.mxu0 0.0
    %1019 = vmatprep.subr.mxu0 0.0
    %1020 = vmatpush1.msra.mxu0 0.0
    %1021 = vmatprep.subr.mxu0 0.0
    %1022 = vmatpush1.msra.mxu0 0.0
    %1023 = vmatprep.subr.mxu0 0.0
    %1024 = vmatpush1.msra.mxu0 0.0
    %1025 = vmatprep.subr.mxu0 0.0
    %1026 = vmatpush1.msra.mxu0 0.0
    %1027 = vmatprep.subr.mxu0 0.0
    %1028 = vmatpush1.msra.mxu0 0.0
    %1029 = vmatprep.subr.mxu0 0.0
    %1030 = vmatpush1.msra.mxu0 0.0
    %1031 = vmatprep.subr.mxu0 0.0
    %1032 = vmatpush1.msra.mxu0 0.0
    %1033 = vmatprep.subr.mxu0 0.0
    %1034 = vmatpush1.msra.mxu0 0.0
    %1035 = vmatprep.subr.mxu0 0.0
    %1036 = vmatpush1.msra.mxu0 0.0
    %1037 = vmatprep.subr.mxu0 0.0
    %1038 = vmatpush1.msra.mxu0 0.0
    %1039 = vmatprep.subr.mxu0 0.0
    %1040 = vmatpush1.msra.mxu0 0.0
    %1041 = vmatprep.subr.mxu0 0.0
    %1042 = vmatpush1.msra.mxu0 0.0
    %1043 = vmatprep.subr.mxu0 0.0
    %1044 = vmatpush1.msra.mxu0 0.0
    %1045 = vmatprep.mubr.f32.mxu0 0.0
    %1046 = vmatmul.mubr.f32.gmra.mrb[0].mxu0 %v880
    %v1047 = vpop.f32.mrb[0].mxu0
    %v1048 = vadd.f32 %v900, %v1047
    %v1049 = vpop.f32.mrb[0].mxu0
    %1050 = vmatprep.mubr.f32.mxu0 0.0
    %1051 = vmatmul.mubr.f32.gmra.mrb[0].mxu0 %v881
    %v1052 = vpop.f32.mrb[0].mxu0
    %v1053 = vadd.f32 %v900, %v1052
    %v1054 = vpop.f32.mrb[0].mxu0
    %1055 = vdwg.mxu0
    %v1056 = vadd.f32 %v882, %v971
    %v1057 = vadd.f32 %v885, %v977
    %v1058 = vxor.u32 %v1056, 2147483648
    %v1059 = vxor.u32 %v1057, 2147483648
    %v1060 = vmul.f32 %v1058, 1.442695
    %v1061 = vpow.pop %v1060
    %v1062 = vmul.f32 %v1059, 1.442695
    %v1063 = vpow.pop %v1062
    %v1064 = vadd.f32 %v1061, 1.0
    %v1065 = vadd.f32 %v1063, 1.0
    %v1066 = vrcp.pop %v1064
    %v1067 = vmul.f32 1.0, %v1066
    %v1068 = vrcp.pop %v1065
    %v1069 = vmul.f32 1.0, %v1068
    %v1070 = vadd.f32 %v883, %v973
    %v1071 = vadd.f32 %v886, %v979
    %v1072 = vxor.u32 %v1070, 2147483648
    %v1073 = vxor.u32 %v1071, 2147483648
    %v1074 = vmul.f32 %v1072, 1.442695
    %v1075 = vpow.pop %v1074
    %v1076 = vmul.f32 %v1073, 1.442695
    %v1077 = vpow.pop %v1076
    %v1078 = vadd.f32 %v1075, 1.0
    %v1079 = vadd.f32 %v1077, 1.0
    %v1080 = vrcp.pop %v1078
    %v1081 = vmul.f32 1.0, %v1080
    %v1082 = vrcp.pop %v1079
    %v1083 = vmul.f32 1.0, %v1082
    %v1084 = vmul.f32 %v1067, %v1048
    %v1085 = vmul.f32 %v1069, %v1053
    %v1086 = vadd.f32 %v884, %v1084
    %v1087 = vadd.f32 %v887, %v1085
    %v1088 = vtanh.pop %v1086
    %v1089 = vtanh.pop %v1087
    %v1090 = vsub.f32 1.0, %v1081
    %v1091 = vsub.f32 1.0, %v1083
    %v1092 = vmul.f32 %v1090, %v1088
    %v1093 = vmul.f32 %v1091, %v1089
    %v1094 = vmul.f32 %v1081, %v880
    %v1095 = vmul.f32 %v1083, %v881
    %v1096 = vadd.f32 %v1092, %v1094
    %v1097 = vadd.f32 %v1093, %v1095
    %1098 = vst [vmem:[#allocation2] sm:$0xff] %v1096
    %1099 = vst [vmem:[#allocation2 + $0x8] sm:$0xff] %v1097
    %v1100 = vld [vmem:[#allocation3 + $0x30] sm:$0xff]
    %v1101 = vld [vmem:[#allocation3 + $0x38] sm:$0xff]
    %v1102 = vld [vmem:[#allocation3 + $0x40] sm:$0xff]
    %v1103 = vld [vmem:[#allocation3 + $0x48] sm:$0xff]
    %v1104 = vld [vmem:[#allocation3 + $0x50] sm:$0xff]
    %v1105 = vld [vmem:[#allocation3 + $0x58] sm:$0xff]
    %1106 = vmatprep.subr.mxu0 %v832
    %1107 = vmatpush1.msra.mxu0 %v831
    %1108 = vmatprep.subr.mxu0 %v835
    %1109 = vmatpush1.msra.mxu0 %v834
    %1110 = vmatprep.subr.mxu0 %v838
    %1111 = vmatpush1.msra.mxu0 %v837
    %1112 = vmatprep.subr.mxu0 %v841
    %1113 = vmatpush1.msra.mxu0 %v840
    %1114 = vmatprep.subr.mxu0 %v844
    %1115 = vmatpush1.msra.mxu0 %v843
    %1116 = vmatprep.subr.mxu0 %v847
    %1117 = vmatpush1.msra.mxu0 %v846
    %1118 = vmatprep.subr.mxu0 %v850
    %1119 = vmatpush1.msra.mxu0 %v849
    %1120 = vmatprep.subr.mxu0 %v853
    %1121 = vmatpush1.msra.mxu0 %v852
    %1122 = vmatprep.subr.mxu0 %v856
    %1123 = vmatpush1.msra.mxu0 %v855
    %1124 = vmatprep.subr.mxu0 %v859
    %1125 = vmatpush1.msra.mxu0 %v858
    %1126 = vmatprep.subr.mxu0 %v862
    %1127 = vmatpush1.msra.mxu0 %v861
    %1128 = vmatprep.subr.mxu0 %v865
    %1129 = vmatpush1.msra.mxu0 %v864
    %1130 = vmatprep.subr.mxu0 %v868
    %1131 = vmatpush1.msra.mxu0 %v867
    %1132 = vmatprep.subr.mxu0 %v871
    %1133 = vmatpush1.msra.mxu0 %v870
    %1134 = vmatprep.subr.mxu0 %v874
    %1135 = vmatpush1.msra.mxu0 %v873
    %1136 = vmatprep.subr.mxu0 %v877
    %1137 = vmatpush1.msra.mxu0 %v876
    %1138 = vmatprep.subr.mxu0 0.0
    %1139 = vmatpush1.msra.mxu0 0.0
    %1140 = vmatprep.subr.mxu0 0.0
    %1141 = vmatpush1.msra.mxu0 0.0
    %1142 = vmatprep.subr.mxu0 0.0
    %1143 = vmatpush1.msra.mxu0 0.0
    %1144 = vmatprep.subr.mxu0 0.0
    %1145 = vmatpush1.msra.mxu0 0.0
    %1146 = vmatprep.subr.mxu0 0.0
    %1147 = vmatpush1.msra.mxu0 0.0
    %1148 = vmatprep.subr.mxu0 0.0
    %1149 = vmatpush1.msra.mxu0 0.0
    %1150 = vmatprep.subr.mxu0 0.0
    %1151 = vmatpush1.msra.mxu0 0.0
    %1152 = vmatprep.subr.mxu0 0.0
    %1153 = vmatpush1.msra.mxu0 0.0
    %1154 = vmatprep.subr.mxu0 0.0
    %1155 = vmatpush1.msra.mxu0 0.0
    %1156 = vmatprep.subr.mxu0 0.0
    %1157 = vmatpush1.msra.mxu0 0.0
    %1158 = vmatprep.subr.mxu0 0.0
    %1159 = vmatpush1.msra.mxu0 0.0
    %1160 = vmatprep.subr.mxu0 0.0
    %1161 = vmatpush1.msra.mxu0 0.0
    %1162 = vmatprep.subr.mxu0 0.0
    %1163 = vmatpush1.msra.mxu0 0.0
    %1164 = vmatprep.subr.mxu0 0.0
    %1165 = vmatpush1.msra.mxu0 0.0
    %1166 = vmatprep.subr.mxu0 0.0
    %1167 = vmatpush1.msra.mxu0 0.0
    %1168 = vmatprep.subr.mxu0 0.0
    %1169 = vmatpush1.msra.mxu0 0.0
    %1170 = vmatprep.mubr.f32.mxu0 0.0
    %1171 = vmatmul.mubr.f32.gmra.mrb[0].mxu0 %v1096
    %v1172 = vpop.f32.mrb[0].mxu0
    %v1173 = vadd.f32 %v892, %v1172
    %v1174 = vpop.f32.mrb[0].mxu0
    %v1175 = vadd.f32 %v896, %v1174
    %1176 = vmatprep.mubr.f32.mxu0 0.0
    %1177 = vmatmul.mubr.f32.gmra.mrb[0].mxu0 %v1097
    %v1178 = vpop.f32.mrb[0].mxu0
    %v1179 = vadd.f32 %v892, %v1178
    %v1180 = vpop.f32.mrb[0].mxu0
    %v1181 = vadd.f32 %v896, %v1180
    %1182 = vdwg.mxu0
    %1183 = vmatprep.subr.mxu0 0.0
    %1184 = vmatpush1.msra.mxu0 %v833
    %1185 = vmatprep.subr.mxu0 0.0
    %1186 = vmatpush1.msra.mxu0 %v836
    %1187 = vmatprep.subr.mxu0 0.0
    %1188 = vmatpush1.msra.mxu0 %v839
    %1189 = vmatprep.subr.mxu0 0.0
    %1190 = vmatpush1.msra.mxu0 %v842
    %1191 = vmatprep.subr.mxu0 0.0
    %1192 = vmatpush1.msra.mxu0 %v845
    %1193 = vmatprep.subr.mxu0 0.0
    %1194 = vmatpush1.msra.mxu0 %v848
    %1195 = vmatprep.subr.mxu0 0.0
    %1196 = vmatpush1.msra.mxu0 %v851
    %1197 = vmatprep.subr.mxu0 0.0
    %1198 = vmatpush1.msra.mxu0 %v854
    %1199 = vmatprep.subr.mxu0 0.0
    %1200 = vmatpush1.msra.mxu0 %v857
    %1201 = vmatprep.subr.mxu0 0.0
    %1202 = vmatpush1.msra.mxu0 %v860
    %1203 = vmatprep.subr.mxu0 0.0
    %1204 = vmatpush1.msra.mxu0 %v863
    %1205 = vmatprep.subr.mxu0 0.0
    %1206 = vmatpush1.msra.mxu0 %v866
    %1207 = vmatprep.subr.mxu0 0.0
    %1208 = vmatpush1.msra.mxu0 %v869
    %1209 = vmatprep.subr.mxu0 0.0
    %1210 = vmatpush1.msra.mxu0 %v872
    %1211 = vmatprep.subr.mxu0 0.0
    %1212 = vmatpush1.msra.mxu0 %v875
    %1213 = vmatprep.subr.mxu0 0.0
    %1214 = vmatpush1.msra.mxu0 %v878
    %1215 = vmatprep.subr.mxu0 0.0
    %1216 = vmatpush1.msra.mxu0 0.0
    %1217 = vmatprep.subr.mxu0 0.0
    %1218 = vmatpush1.msra.mxu0 0.0
    %1219 = vmatprep.subr.mxu0 0.0
    %1220 = vmatpush1.msra.mxu0 0.0
    %1221 = vmatprep.subr.mxu0 0.0
    %1222 = vmatpush1.msra.mxu0 0.0
    %1223 = vmatprep.subr.mxu0 0.0
    %1224 = vmatpush1.msra.mxu0 0.0
    %1225 = vmatprep.subr.mxu0 0.0
    %1226 = vmatpush1.msra.mxu0 0.0
    %1227 = vmatprep.subr.mxu0 0.0
    %1228 = vmatpush1.msra.mxu0 0.0
    %1229 = vmatprep.subr.mxu0 0.0
    %1230 = vmatpush1.msra.mxu0 0.0
    %1231 = vmatprep.subr.mxu0 0.0
    %1232 = vmatpush1.msra.mxu0 0.0
    %1233 = vmatprep.subr.mxu0 0.0
    %1234 = vmatpush1.msra.mxu0 0.0
    %1235 = vmatprep.subr.mxu0 0.0
    %1236 = vmatpush1.msra.mxu0 0.0
    %1237 = vmatprep.subr.mxu0 0.0
    %1238 = vmatpush1.msra.mxu0 0.0
    %1239 = vmatprep.subr.mxu0 0.0
    %1240 = vmatpush1.msra.mxu0 0.0
    %1241 = vmatprep.subr.mxu0 0.0
    %1242 = vmatpush1.msra.mxu0 0.0
    %1243 = vmatprep.subr.mxu0 0.0
    %1244 = vmatpush1.msra.mxu0 0.0
    %1245 = vmatprep.subr.mxu0 0.0
    %1246 = vmatpush1.msra.mxu0 0.0
    %1247 = vmatprep.mubr.f32.mxu0 0.0
    %1248 = vmatmul.mubr.f32.gmra.mrb[0].mxu0 %v1096
    %v1249 = vpop.f32.mrb[0].mxu0
    %v1250 = vadd.f32 %v900, %v1249
    %v1251 = vpop.f32.mrb[0].mxu0
    %1252 = vmatprep.mubr.f32.mxu0 0.0
    %1253 = vmatmul.mubr.f32.gmra.mrb[0].mxu0 %v1097
    %v1254 = vpop.f32.mrb[0].mxu0
    %v1255 = vadd.f32 %v900, %v1254
    %v1256 = vpop.f32.mrb[0].mxu0
    %1257 = vdwg.mxu0
    %v1258 = vadd.f32 %v1100, %v1173
    %v1259 = vadd.f32 %v1103, %v1179
    %v1260 = vxor.u32 %v1258, 2147483648
    %v1261 = vxor.u32 %v1259, 2147483648
    %v1262 = vmul.f32 %v1260, 1.442695
    %v1263 = vpow.pop %v1262
    %v1264 = vmul.f32 %v1261, 1.442695
    %v1265 = vpow.pop %v1264
    %v1266 = vadd.f32 %v1263, 1.0
    %v1267 = vadd.f32 %v1265, 1.0
    %v1268 = vrcp.pop %v1266
    %v1269 = vmul.f32 1.0, %v1268
    %v1270 = vrcp.pop %v1267
    %v1271 = vmul.f32 1.0, %v1270
    %v1272 = vadd.f32 %v1101, %v1175
    %v1273 = vadd.f32 %v1104, %v1181
    %v1274 = vxor.u32 %v1272, 2147483648
    %v1275 = vxor.u32 %v1273, 2147483648
    %v1276 = vmul.f32 %v1274, 1.442695
    %v1277 = vpow.pop %v1276
    %v1278 = vmul.f32 %v1275, 1.442695
    %v1279 = vpow.pop %v1278
    %v1280 = vadd.f32 %v1277, 1.0
    %v1281 = vadd.f32 %v1279, 1.0
    %v1282 = vrcp.pop %v1280
    %v1283 = vmul.f32 1.0, %v1282
    %v1284 = vrcp.pop %v1281
    %v1285 = vmul.f32 1.0, %v1284
    %v1286 = vmul.f32 %v1269, %v1250
    %v1287 = vmul.f32 %v1271, %v1255
    %v1288 = vadd.f32 %v1102, %v1286
    %v1289 = vadd.f32 %v1105, %v1287
    %v1290 = vtanh.pop %v1288
    %v1291 = vtanh.pop %v1289
    %v1292 = vsub.f32 1.0, %v1283
    %v1293 = vsub.f32 1.0, %v1285
    %v1294 = vmul.f32 %v1292, %v1290
    %v1295 = vmul.f32 %v1293, %v1291
    %v1296 = vmul.f32 %v1283, %v1096
    %v1297 = vmul.f32 %v1285, %v1097
    %v1298 = vadd.f32 %v1294, %v1296
    %v1299 = vadd.f32 %v1295, %v1297
    %1300 = vst [vmem:[#allocation2 + $0x10] sm:$0xff] %v1298
    %1301 = vst [vmem:[#allocation2 + $0x18] sm:$0xff] %v1299
    %v1302 = vld [vmem:[#allocation3 + $0x60] sm:$0xff]
    %v1303 = vld [vmem:[#allocation3 + $0x68] sm:$0xff]
    %v1304 = vld [vmem:[#allocation3 + $0x70] sm:$0xff]
    %v1305 = vld [vmem:[#allocation3 + $0x78] sm:$0xff]
    %v1306 = vld [vmem:[#allocation3 + $0x80] sm:$0xff]
    %v1307 = vld [vmem:[#allocation3 + $0x88] sm:$0xff]
    %1308 = vmatprep.subr.mxu0 %v832
    %1309 = vmatpush1.msra.mxu0 %v831
    %1310 = vmatprep.subr.mxu0 %v835
    %1311 = vmatpush1.msra.mxu0 %v834
    %1312 = vmatprep.subr.mxu0 %v838
    %1313 = vmatpush1.msra.mxu0 %v837
    %1314 = vmatprep.subr.mxu0 %v841
    %1315 = vmatpush1.msra.mxu0 %v840
    %1316 = vmatprep.subr.mxu0 %v844
    %1317 = vmatpush1.msra.mxu0 %v843
    %1318 = vmatprep.subr.mxu0 %v847
    %1319 = vmatpush1.msra.mxu0 %v846
    %1320 = vmatprep.subr.mxu0 %v850
    %1321 = vmatpush1.msra.mxu0 %v849
    %1322 = vmatprep.subr.mxu0 %v853
    %1323 = vmatpush1.msra.mxu0 %v852
    %1324 = vmatprep.subr.mxu0 %v856
    %1325 = vmatpush1.msra.mxu0 %v855
    %1326 = vmatprep.subr.mxu0 %v859
    %1327 = vmatpush1.msra.mxu0 %v858
    %1328 = vmatprep.subr.mxu0 %v862
    %1329 = vmatpush1.msra.mxu0 %v861
    %1330 = vmatprep.subr.mxu0 %v865
    %1331 = vmatpush1.msra.mxu0 %v864
    %1332 = vmatprep.subr.mxu0 %v868
    %1333 = vmatpush1.msra.mxu0 %v867
    %1334 = vmatprep.subr.mxu0 %v871
    %1335 = vmatpush1.msra.mxu0 %v870
    %1336 = vmatprep.subr.mxu0 %v874
    %1337 = vmatpush1.msra.mxu0 %v873
    %1338 = vmatprep.subr.mxu0 %v877
    %1339 = vmatpush1.msra.mxu0 %v876
    %1340 = vmatprep.subr.mxu0 0.0
    %1341 = vmatpush1.msra.mxu0 0.0
    %1342 = vmatprep.subr.mxu0 0.0
    %1343 = vmatpush1.msra.mxu0 0.0
    %1344 = vmatprep.subr.mxu0 0.0
    %1345 = vmatpush1.msra.mxu0 0.0
    %1346 = vmatprep.subr.mxu0 0.0
    %1347 = vmatpush1.msra.mxu0 0.0
    %1348 = vmatprep.subr.mxu0 0.0
    %1349 = vmatpush1.msra.mxu0 0.0
    %1350 = vmatprep.subr.mxu0 0.0
    %1351 = vmatpush1.msra.mxu0 0.0
    %1352 = vmatprep.subr.mxu0 0.0
    %1353 = vmatpush1.msra.mxu0 0.0
    %1354 = vmatprep.subr.mxu0 0.0
    %1355 = vmatpush1.msra.mxu0 0.0
    %1356 = vmatprep.subr.mxu0 0.0
    %1357 = vmatpush1.msra.mxu0 0.0
    %1358 = vmatprep.subr.mxu0 0.0
    %1359 = vmatpush1.msra.mxu0 0.0
    %1360 = vmatprep.subr.mxu0 0.0
    %1361 = vmatpush1.msra.mxu0 0.0
    %1362 = vmatprep.subr.mxu0 0.0
    %1363 = vmatpush1.msra.mxu0 0.0
    %1364 = vmatprep.subr.mxu0 0.0
    %1365 = vmatpush1.msra.mxu0 0.0
    %1366 = vmatprep.subr.mxu0 0.0
    %1367 = vmatpush1.msra.mxu0 0.0
    %1368 = vmatprep.subr.mxu0 0.0
    %1369 = vmatpush1.msra.mxu0 0.0
    %1370 = vmatprep.subr.mxu0 0.0
    %1371 = vmatpush1.msra.mxu0 0.0
    %1372 = vmatprep.mubr.f32.mxu0 0.0
    %1373 = vmatmul.mubr.f32.gmra.mrb[0].mxu0 %v1298
    %v1374 = vpop.f32.mrb[0].mxu0
    %v1375 = vadd.f32 %v892, %v1374
    %v1376 = vpop.f32.mrb[0].mxu0
    %v1377 = vadd.f32 %v896, %v1376
    %1378 = vmatprep.mubr.f32.mxu0 0.0
    %1379 = vmatmul.mubr.f32.gmra.mrb[0].mxu0 %v1299
    %v1380 = vpop.f32.mrb[0].mxu0
    %v1381 = vadd.f32 %v892, %v1380
    %v1382 = vpop.f32.mrb[0].mxu0
    %v1383 = vadd.f32 %v896, %v1382
    %1384 = vdwg.mxu0
    %1385 = vmatprep.subr.mxu0 0.0
    %1386 = vmatpush1.msra.mxu0 %v833
    %1387 = vmatprep.subr.mxu0 0.0
    %1388 = vmatpush1.msra.mxu0 %v836
    %1389 = vmatprep.subr.mxu0 0.0
    %1390 = vmatpush1.msra.mxu0 %v839
    %1391 = vmatprep.subr.mxu0 0.0
    %1392 = vmatpush1.msra.mxu0 %v842
    %1393 = vmatprep.subr.mxu0 0.0
    %1394 = vmatpush1.msra.mxu0 %v845
    %1395 = vmatprep.subr.mxu0 0.0
    %1396 = vmatpush1.msra.mxu0 %v848
    %1397 = vmatprep.subr.mxu0 0.0
    %1398 = vmatpush1.msra.mxu0 %v851
    %1399 = vmatprep.subr.mxu0 0.0
    %1400 = vmatpush1.msra.mxu0 %v854
    %1401 = vmatprep.subr.mxu0 0.0
    %1402 = vmatpush1.msra.mxu0 %v857
    %1403 = vmatprep.subr.mxu0 0.0
    %1404 = vmatpush1.msra.mxu0 %v860
    %1405 = vmatprep.subr.mxu0 0.0
    %1406 = vmatpush1.msra.mxu0 %v863
    %1407 = vmatprep.subr.mxu0 0.0
    %1408 = vmatpush1.msra.mxu0 %v866
    %1409 = vmatprep.subr.mxu0 0.0
    %1410 = vmatpush1.msra.mxu0 %v869
    %1411 = vmatprep.subr.mxu0 0.0
    %1412 = vmatpush1.msra.mxu0 %v872
    %1413 = vmatprep.subr.mxu0 0.0
    %1414 = vmatpush1.msra.mxu0 %v875
    %1415 = vmatprep.subr.mxu0 0.0
    %1416 = vmatpush1.msra.mxu0 %v878
    %1417 = vmatprep.subr.mxu0 0.0
    %1418 = vmatpush1.msra.mxu0 0.0
    %1419 = vmatprep.subr.mxu0 0.0
    %1420 = vmatpush1.msra.mxu0 0.0
    %1421 = vmatprep.subr.mxu0 0.0
    %1422 = vmatpush1.msra.mxu0 0.0
    %1423 = vmatprep.subr.mxu0 0.0
    %1424 = vmatpush1.msra.mxu0 0.0
    %1425 = vmatprep.subr.mxu0 0.0
    %1426 = vmatpush1.msra.mxu0 0.0
    %1427 = vmatprep.subr.mxu0 0.0
    %1428 = vmatpush1.msra.mxu0 0.0
    %1429 = vmatprep.subr.mxu0 0.0
    %1430 = vmatpush1.msra.mxu0 0.0
    %1431 = vmatprep.subr.mxu0 0.0
    %1432 = vmatpush1.msra.mxu0 0.0
    %1433 = vmatprep.subr.mxu0 0.0
    %1434 = vmatpush1.msra.mxu0 0.0
    %1435 = vmatprep.subr.mxu0 0.0
    %1436 = vmatpush1.msra.mxu0 0.0
    %1437 = vmatprep.subr.mxu0 0.0
    %1438 = vmatpush1.msra.mxu0 0.0
    %1439 = vmatprep.subr.mxu0 0.0
    %1440 = vmatpush1.msra.mxu0 0.0
    %1441 = vmatprep.subr.mxu0 0.0
    %1442 = vmatpush1.msra.mxu0 0.0
    %1443 = vmatprep.subr.mxu0 0.0
    %1444 = vmatpush1.msra.mxu0 0.0
    %1445 = vmatprep.subr.mxu0 0.0
    %1446 = vmatpush1.msra.mxu0 0.0
    %1447 = vmatprep.subr.mxu0 0.0
    %1448 = vmatpush1.msra.mxu0 0.0
    %1449 = vmatprep.mubr.f32.mxu0 0.0
    %1450 = vmatmul.mubr.f32.gmra.mrb[0].mxu0 %v1298
    %v1451 = vpop.f32.mrb[0].mxu0
    %v1452 = vadd.f32 %v900, %v1451
    %v1453 = vpop.f32.mrb[0].mxu0
    %1454 = vmatprep.mubr.f32.mxu0 0.0
    %1455 = vmatmul.mubr.f32.gmra.mrb[0].mxu0 %v1299
    %v1456 = vpop.f32.mrb[0].mxu0
    %v1457 = vadd.f32 %v900, %v1456
    %v1458 = vpop.f32.mrb[0].mxu0
    %1459 = vdwg.mxu0
    %v1460 = vadd.f32 %v1302, %v1375
    %v1461 = vadd.f32 %v1305, %v1381
    %v1462 = vxor.u32 %v1460, 2147483648
    %v1463 = vxor.u32 %v1461, 2147483648
    %v1464 = vmul.f32 %v1462, 1.442695
    %v1465 = vpow.pop %v1464
    %v1466 = vmul.f32 %v1463, 1.442695
    %v1467 = vpow.pop %v1466
    %v1468 = vadd.f32 %v1465, 1.0
    %v1469 = vadd.f32 %v1467, 1.0
    %v1470 = vrcp.pop %v1468
    %v1471 = vmul.f32 1.0, %v1470
    %v1472 = vrcp.pop %v1469
    %v1473 = vmul.f32 1.0, %v1472
    %v1474 = vadd.f32 %v1303, %v1377
    %v1475 = vadd.f32 %v1306, %v1383
    %v1476 = vxor.u32 %v1474, 2147483648
    %v1477 = vxor.u32 %v1475, 2147483648
    %v1478 = vmul.f32 %v1476, 1.442695
    %v1479 = vpow.pop %v1478
    %v1480 = vmul.f32 %v1477, 1.442695
    %v1481 = vpow.pop %v1480
    %v1482 = vadd.f32 %v1479, 1.0
    %v1483 = vadd.f32 %v1481, 1.0
    %v1484 = vrcp.pop %v1482
    %v1485 = vmul.f32 1.0, %v1484
    %v1486 = vrcp.pop %v1483
    %v1487 = vmul.f32 1.0, %v1486
    %v1488 = vmul.f32 %v1471, %v1452
    %v1489 = vmul.f32 %v1473, %v1457
    %v1490 = vadd.f32 %v1304, %v1488
    %v1491 = vadd.f32 %v1307, %v1489
    %v1492 = vtanh.pop %v1490
    %v1493 = vtanh.pop %v1491
    %v1494 = vsub.f32 1.0, %v1485
    %v1495 = vsub.f32 1.0, %v1487
    %v1496 = vmul.f32 %v1494, %v1492
    %v1497 = vmul.f32 %v1495, %v1493
    %v1498 = vmul.f32 %v1485, %v1298
    %v1499 = vmul.f32 %v1487, %v1299
    %v1500 = vadd.f32 %v1496, %v1498
    %v1501 = vadd.f32 %v1497, %v1499
    %1502 = vst [vmem:[#allocation2 + $0x20] sm:$0xff] %v1500
    %1503 = vst [vmem:[#allocation2 + $0x28] sm:$0xff] %v1501
    %v1504 = vld [vmem:[#allocation3 + $0x90] sm:$0xff]
    %v1505 = vld [vmem:[#allocation3 + $0x98] sm:$0xff]
    %v1506 = vld [vmem:[#allocation3 + $0xa0] sm:$0xff]
    %v1507 = vld [vmem:[#allocation3 + $0xa8] sm:$0xff]
    %v1508 = vld [vmem:[#allocation3 + $0xb0] sm:$0xff]
    %v1509 = vld [vmem:[#allocation3 + $0xb8] sm:$0xff]
    %1510 = vmatprep.subr.mxu0 %v832
    %1511 = vmatpush1.msra.mxu0 %v831
    %1512 = vmatprep.subr.mxu0 %v835
    %1513 = vmatpush1.msra.mxu0 %v834
    %1514 = vmatprep.subr.mxu0 %v838
    %1515 = vmatpush1.msra.mxu0 %v837
    %1516 = vmatprep.subr.mxu0 %v841
    %1517 = vmatpush1.msra.mxu0 %v840
    %1518 = vmatprep.subr.mxu0 %v844
    %1519 = vmatpush1.msra.mxu0 %v843
    %1520 = vmatprep.subr.mxu0 %v847
    %1521 = vmatpush1.msra.mxu0 %v846
    %1522 = vmatprep.subr.mxu0 %v850
    %1523 = vmatpush1.msra.mxu0 %v849
    %1524 = vmatprep.subr.mxu0 %v853
    %1525 = vmatpush1.msra.mxu0 %v852
    %1526 = vmatprep.subr.mxu0 %v856
    %1527 = vmatpush1.msra.mxu0 %v855
    %1528 = vmatprep.subr.mxu0 %v859
    %1529 = vmatpush1.msra.mxu0 %v858
    %1530 = vmatprep.subr.mxu0 %v862
    %1531 = vmatpush1.msra.mxu0 %v861
    %1532 = vmatprep.subr.mxu0 %v865
    %1533 = vmatpush1.msra.mxu0 %v864
    %1534 = vmatprep.subr.mxu0 %v868
    %1535 = vmatpush1.msra.mxu0 %v867
    %1536 = vmatprep.subr.mxu0 %v871
    %1537 = vmatpush1.msra.mxu0 %v870
    %1538 = vmatprep.subr.mxu0 %v874
    %1539 = vmatpush1.msra.mxu0 %v873
    %1540 = vmatprep.subr.mxu0 %v877
    %1541 = vmatpush1.msra.mxu0 %v876
    %1542 = vmatprep.subr.mxu0 0.0
    %1543 = vmatpush1.msra.mxu0 0.0
    %1544 = vmatprep.subr.mxu0 0.0
    %1545 = vmatpush1.msra.mxu0 0.0
    %1546 = vmatprep.subr.mxu0 0.0
    %1547 = vmatpush1.msra.mxu0 0.0
    %1548 = vmatprep.subr.mxu0 0.0
    %1549 = vmatpush1.msra.mxu0 0.0
    %1550 = vmatprep.subr.mxu0 0.0
    %1551 = vmatpush1.msra.mxu0 0.0
    %1552 = vmatprep.subr.mxu0 0.0
    %1553 = vmatpush1.msra.mxu0 0.0
    %1554 = vmatprep.subr.mxu0 0.0
    %1555 = vmatpush1.msra.mxu0 0.0
    %1556 = vmatprep.subr.mxu0 0.0
    %1557 = vmatpush1.msra.mxu0 0.0
    %1558 = vmatprep.subr.mxu0 0.0
    %1559 = vmatpush1.msra.mxu0 0.0
    %1560 = vmatprep.subr.mxu0 0.0
    %1561 = vmatpush1.msra.mxu0 0.0
    %1562 = vmatprep.subr.mxu0 0.0
    %1563 = vmatpush1.msra.mxu0 0.0
    %1564 = vmatprep.subr.mxu0 0.0
    %1565 = vmatpush1.msra.mxu0 0.0
    %1566 = vmatprep.subr.mxu0 0.0
    %1567 = vmatpush1.msra.mxu0 0.0
    %1568 = vmatprep.subr.mxu0 0.0
    %1569 = vmatpush1.msra.mxu0 0.0
    %1570 = vmatprep.subr.mxu0 0.0
    %1571 = vmatpush1.msra.mxu0 0.0
    %1572 = vmatprep.subr.mxu0 0.0
    %1573 = vmatpush1.msra.mxu0 0.0
    %1574 = vmatprep.mubr.f32.mxu0 0.0
    %1575 = vmatmul.mubr.f32.gmra.mrb[0].mxu0 %v1500
    %v1576 = vpop.f32.mrb[0].mxu0
    %v1577 = vadd.f32 %v892, %v1576
    %v1578 = vpop.f32.mrb[0].mxu0
    %v1579 = vadd.f32 %v896, %v1578
    %1580 = vmatprep.mubr.f32.mxu0 0.0
    %1581 = vmatmul.mubr.f32.gmra.mrb[0].mxu0 %v1501
    %v1582 = vpop.f32.mrb[0].mxu0
    %v1583 = vadd.f32 %v892, %v1582
    %v1584 = vpop.f32.mrb[0].mxu0
    %v1585 = vadd.f32 %v896, %v1584
    %1586 = vdwg.mxu0
    %1587 = vmatprep.subr.mxu0 0.0
    %1588 = vmatpush1.msra.mxu0 %v833
    %1589 = vmatprep.subr.mxu0 0.0
    %1590 = vmatpush1.msra.mxu0 %v836
    %1591 = vmatprep.subr.mxu0 0.0
    %1592 = vmatpush1.msra.mxu0 %v839
    %1593 = vmatprep.subr.mxu0 0.0
    %1594 = vmatpush1.msra.mxu0 %v842
    %1595 = vmatprep.subr.mxu0 0.0
    %1596 = vmatpush1.msra.mxu0 %v845
    %1597 = vmatprep.subr.mxu0 0.0
    %1598 = vmatpush1.msra.mxu0 %v848
    %1599 = vmatprep.subr.mxu0 0.0
    %1600 = vmatpush1.msra.mxu0 %v851
    %1601 = vmatprep.subr.mxu0 0.0
    %1602 = vmatpush1.msra.mxu0 %v854
    %1603 = vmatprep.subr.mxu0 0.0
    %1604 = vmatpush1.msra.mxu0 %v857
    %1605 = vmatprep.subr.mxu0 0.0
    %1606 = vmatpush1.msra.mxu0 %v860
    %1607 = vmatprep.subr.mxu0 0.0
    %1608 = vmatpush1.msra.mxu0 %v863
    %1609 = vmatprep.subr.mxu0 0.0
    %1610 = vmatpush1.msra.mxu0 %v866
    %1611 = vmatprep.subr.mxu0 0.0
    %1612 = vmatpush1.msra.mxu0 %v869
    %1613 = vmatprep.subr.mxu0 0.0
    %1614 = vmatpush1.msra.mxu0 %v872
    %1615 = vmatprep.subr.mxu0 0.0
    %1616 = vmatpush1.msra.mxu0 %v875
    %1617 = vmatprep.subr.mxu0 0.0
    %1618 = vmatpush1.msra.mxu0 %v878
    %1619 = vmatprep.subr.mxu0 0.0
    %1620 = vmatpush1.msra.mxu0 0.0
    %1621 = vmatprep.subr.mxu0 0.0
    %1622 = vmatpush1.msra.mxu0 0.0
    %1623 = vmatprep.subr.mxu0 0.0
    %1624 = vmatpush1.msra.mxu0 0.0
    %1625 = vmatprep.subr.mxu0 0.0
    %1626 = vmatpush1.msra.mxu0 0.0
    %1627 = vmatprep.subr.mxu0 0.0
    %1628 = vmatpush1.msra.mxu0 0.0
    %1629 = vmatprep.subr.mxu0 0.0
    %1630 = vmatpush1.msra.mxu0 0.0
    %1631 = vmatprep.subr.mxu0 0.0
    %1632 = vmatpush1.msra.mxu0 0.0
    %1633 = vmatprep.subr.mxu0 0.0
    %1634 = vmatpush1.msra.mxu0 0.0
    %1635 = vmatprep.subr.mxu0 0.0
    %1636 = vmatpush1.msra.mxu0 0.0
    %1637 = vmatprep.subr.mxu0 0.0
    %1638 = vmatpush1.msra.mxu0 0.0
    %1639 = vmatprep.subr.mxu0 0.0
    %1640 = vmatpush1.msra.mxu0 0.0
    %1641 = vmatprep.subr.mxu0 0.0
    %1642 = vmatpush1.msra.mxu0 0.0
    %1643 = vmatprep.subr.mxu0 0.0
    %1644 = vmatpush1.msra.mxu0 0.0
    %1645 = vmatprep.subr.mxu0 0.0
    %1646 = vmatpush1.msra.mxu0 0.0
    %1647 = vmatprep.subr.mxu0 0.0
    %1648 = vmatpush1.msra.mxu0 0.0
    %1649 = vmatprep.subr.mxu0 0.0
    %1650 = vmatpush1.msra.mxu0 0.0
    %1651 = vmatprep.mubr.f32.mxu0 0.0
    %1652 = vmatmul.mubr.f32.gmra.mrb[0].mxu0 %v1500
    %v1653 = vpop.f32.mrb[0].mxu0
    %v1654 = vadd.f32 %v900, %v1653
    %v1655 = vpop.f32.mrb[0].mxu0
    %1656 = vmatprep.mubr.f32.mxu0 0.0
    %1657 = vmatmul.mubr.f32.gmra.mrb[0].mxu0 %v1501
    %v1658 = vpop.f32.mrb[0].mxu0
    %v1659 = vadd.f32 %v900, %v1658
    %v1660 = vpop.f32.mrb[0].mxu0
    %1661 = vdwg.mxu0
    %v1662 = vadd.f32 %v1504, %v1577
    %v1663 = vadd.f32 %v1507, %v1583
    %v1664 = vxor.u32 %v1662, 2147483648
    %v1665 = vxor.u32 %v1663, 2147483648
    %v1666 = vmul.f32 %v1664, 1.442695
    %v1667 = vpow.pop %v1666
    %v1668 = vmul.f32 %v1665, 1.442695
    %v1669 = vpow.pop %v1668
    %v1670 = vadd.f32 %v1667, 1.0
    %v1671 = vadd.f32 %v1669, 1.0
    %v1672 = vrcp.pop %v1670
    %v1673 = vmul.f32 1.0, %v1672
    %v1674 = vrcp.pop %v1671
    %v1675 = vmul.f32 1.0, %v1674
    %v1676 = vadd.f32 %v1505, %v1579
    %v1677 = vadd.f32 %v1508, %v1585
    %v1678 = vxor.u32 %v1676, 2147483648
    %v1679 = vxor.u32 %v1677, 2147483648
    %v1680 = vmul.f32 %v1678, 1.442695
    %v1681 = vpow.pop %v1680
    %v1682 = vmul.f32 %v1679, 1.442695
    %v1683 = vpow.pop %v1682
    %v1684 = vadd.f32 %v1681, 1.0
    %v1685 = vadd.f32 %v1683, 1.0
    %v1686 = vrcp.pop %v1684
    %v1687 = vmul.f32 1.0, %v1686
    %v1688 = vrcp.pop %v1685
    %v1689 = vmul.f32 1.0, %v1688
    %v1690 = vmul.f32 %v1673, %v1654
    %v1691 = vmul.f32 %v1675, %v1659
    %v1692 = vadd.f32 %v1506, %v1690
    %v1693 = vadd.f32 %v1509, %v1691
    %v1694 = vtanh.pop %v1692
    %v1695 = vtanh.pop %v1693
    %v1696 = vsub.f32 1.0, %v1687
    %v1697 = vsub.f32 1.0, %v1689
    %v1698 = vmul.f32 %v1696, %v1694
    %v1699 = vmul.f32 %v1697, %v1695
    %v1700 = vmul.f32 %v1687, %v1500
    %v1701 = vmul.f32 %v1689, %v1501
    %v1702 = vadd.f32 %v1698, %v1700
    %v1703 = vadd.f32 %v1699, %v1701
    %1704 = vst [vmem:[#allocation2 + $0x30] sm:$0xff] %v1702
    %1705 = vst [vmem:[#allocation2 + $0x38] sm:$0xff] %v1703
    %v1706 = vld [vmem:[#allocation3 + $0xc0] sm:$0xff]
    %v1707 = vld [vmem:[#allocation3 + $0xc8] sm:$0xff]
    %v1708 = vld [vmem:[#allocation3 + $0xd0] sm:$0xff]
    %v1709 = vld [vmem:[#allocation3 + $0xd8] sm:$0xff]
    %v1710 = vld [vmem:[#allocation3 + $0xe0] sm:$0xff]
    %v1711 = vld [vmem:[#allocation3 + $0xe8] sm:$0xff]
    %1712 = vmatprep.subr.mxu0 %v832
    %1713 = vmatpush1.msra.mxu0 %v831
    %1714 = vmatprep.subr.mxu0 %v835
    %1715 = vmatpush1.msra.mxu0 %v834
    %1716 = vmatprep.subr.mxu0 %v838
    %1717 = vmatpush1.msra.mxu0 %v837
    %1718 = vmatprep.subr.mxu0 %v841
    %1719 = vmatpush1.msra.mxu0 %v840
    %1720 = vmatprep.subr.mxu0 %v844
    %1721 = vmatpush1.msra.mxu0 %v843
    %1722 = vmatprep.subr.mxu0 %v847
    %1723 = vmatpush1.msra.mxu0 %v846
    %1724 = vmatprep.subr.mxu0 %v850
    %1725 = vmatpush1.msra.mxu0 %v849
    %1726 = vmatprep.subr.mxu0 %v853
    %1727 = vmatpush1.msra.mxu0 %v852
    %1728 = vmatprep.subr.mxu0 %v856
    %1729 = vmatpush1.msra.mxu0 %v855
    %1730 = vmatprep.subr.mxu0 %v859
    %1731 = vmatpush1.msra.mxu0 %v858
    %1732 = vmatprep.subr.mxu0 %v862
    %1733 = vmatpush1.msra.mxu0 %v861
    %1734 = vmatprep.subr.mxu0 %v865
    %1735 = vmatpush1.msra.mxu0 %v864
    %1736 = vmatprep.subr.mxu0 %v868
    %1737 = vmatpush1.msra.mxu0 %v867
    %1738 = vmatprep.subr.mxu0 %v871
    %1739 = vmatpush1.msra.mxu0 %v870
    %1740 = vmatprep.subr.mxu0 %v874
    %1741 = vmatpush1.msra.mxu0 %v873
    %1742 = vmatprep.subr.mxu0 %v877
    %1743 = vmatpush1.msra.mxu0 %v876
    %1744 = vmatprep.subr.mxu0 0.0
    %1745 = vmatpush1.msra.mxu0 0.0
    %1746 = vmatprep.subr.mxu0 0.0
    %1747 = vmatpush1.msra.mxu0 0.0
    %1748 = vmatprep.subr.mxu0 0.0
    %1749 = vmatpush1.msra.mxu0 0.0
    %1750 = vmatprep.subr.mxu0 0.0
    %1751 = vmatpush1.msra.mxu0 0.0
    %1752 = vmatprep.subr.mxu0 0.0
    %1753 = vmatpush1.msra.mxu0 0.0
    %1754 = vmatprep.subr.mxu0 0.0
    %1755 = vmatpush1.msra.mxu0 0.0
    %1756 = vmatprep.subr.mxu0 0.0
    %1757 = vmatpush1.msra.mxu0 0.0
    %1758 = vmatprep.subr.mxu0 0.0
    %1759 = vmatpush1.msra.mxu0 0.0
    %1760 = vmatprep.subr.mxu0 0.0
    %1761 = vmatpush1.msra.mxu0 0.0
    %1762 = vmatprep.subr.mxu0 0.0
    %1763 = vmatpush1.msra.mxu0 0.0
    %1764 = vmatprep.subr.mxu0 0.0
    %1765 = vmatpush1.msra.mxu0 0.0
    %1766 = vmatprep.subr.mxu0 0.0
    %1767 = vmatpush1.msra.mxu0 0.0
    %1768 = vmatprep.subr.mxu0 0.0
    %1769 = vmatpush1.msra.mxu0 0.0
    %1770 = vmatprep.subr.mxu0 0.0
    %1771 = vmatpush1.msra.mxu0 0.0
    %1772 = vmatprep.subr.mxu0 0.0
    %1773 = vmatpush1.msra.mxu0 0.0
    %1774 = vmatprep.subr.mxu0 0.0
    %1775 = vmatpush1.msra.mxu0 0.0
    %1776 = vmatprep.mubr.f32.mxu0 0.0
    %1777 = vmatmul.mubr.f32.gmra.mrb[0].mxu0 %v1702
    %v1778 = vpop.f32.mrb[0].mxu0
    %v1779 = vadd.f32 %v892, %v1778
    %v1780 = vpop.f32.mrb[0].mxu0
    %v1781 = vadd.f32 %v896, %v1780
    %1782 = vmatprep.mubr.f32.mxu0 0.0
    %1783 = vmatmul.mubr.f32.gmra.mrb[0].mxu0 %v1703
    %v1784 = vpop.f32.mrb[0].mxu0
    %v1785 = vadd.f32 %v892, %v1784
    %v1786 = vpop.f32.mrb[0].mxu0
    %v1787 = vadd.f32 %v896, %v1786
    %1788 = vdwg.mxu0
    %1789 = vmatprep.subr.mxu0 0.0
    %1790 = vmatpush1.msra.mxu0 %v833
    %1791 = vmatprep.subr.mxu0 0.0
    %1792 = vmatpush1.msra.mxu0 %v836
    %1793 = vmatprep.subr.mxu0 0.0
    %1794 = vmatpush1.msra.mxu0 %v839
    %1795 = vmatprep.subr.mxu0 0.0
    %1796 = vmatpush1.msra.mxu0 %v842
    %1797 = vmatprep.subr.mxu0 0.0
    %1798 = vmatpush1.msra.mxu0 %v845
    %1799 = vmatprep.subr.mxu0 0.0
    %1800 = vmatpush1.msra.mxu0 %v848
    %1801 = vmatprep.subr.mxu0 0.0
    %1802 = vmatpush1.msra.mxu0 %v851
    %1803 = vmatprep.subr.mxu0 0.0
    %1804 = vmatpush1.msra.mxu0 %v854
    %1805 = vmatprep.subr.mxu0 0.0
    %1806 = vmatpush1.msra.mxu0 %v857
    %1807 = vmatprep.subr.mxu0 0.0
    %1808 = vmatpush1.msra.mxu0 %v860
    %1809 = vmatprep.subr.mxu0 0.0
    %1810 = vmatpush1.msra.mxu0 %v863
    %1811 = vmatprep.subr.mxu0 0.0
    %1812 = vmatpush1.msra.mxu0 %v866
    %1813 = vmatprep.subr.mxu0 0.0
    %1814 = vmatpush1.msra.mxu0 %v869
    %1815 = vmatprep.subr.mxu0 0.0
    %1816 = vmatpush1.msra.mxu0 %v872
    %1817 = vmatprep.subr.mxu0 0.0
    %1818 = vmatpush1.msra.mxu0 %v875
    %1819 = vmatprep.subr.mxu0 0.0
    %1820 = vmatpush1.msra.mxu0 %v878
    %1821 = vmatprep.subr.mxu0 0.0
    %1822 = vmatpush1.msra.mxu0 0.0
    %1823 = vmatprep.subr.mxu0 0.0
    %1824 = vmatpush1.msra.mxu0 0.0
    %1825 = vmatprep.subr.mxu0 0.0
    %1826 = vmatpush1.msra.mxu0 0.0
    %1827 = vmatprep.subr.mxu0 0.0
    %1828 = vmatpush1.msra.mxu0 0.0
    %1829 = vmatprep.subr.mxu0 0.0
    %1830 = vmatpush1.msra.mxu0 0.0
    %1831 = vmatprep.subr.mxu0 0.0
    %1832 = vmatpush1.msra.mxu0 0.0
    %1833 = vmatprep.subr.mxu0 0.0
    %1834 = vmatpush1.msra.mxu0 0.0
    %1835 = vmatprep.subr.mxu0 0.0
    %1836 = vmatpush1.msra.mxu0 0.0
    %1837 = vmatprep.subr.mxu0 0.0
    %1838 = vmatpush1.msra.mxu0 0.0
    %1839 = vmatprep.subr.mxu0 0.0
    %1840 = vmatpush1.msra.mxu0 0.0
    %1841 = vmatprep.subr.mxu0 0.0
    %1842 = vmatpush1.msra.mxu0 0.0
    %1843 = vmatprep.subr.mxu0 0.0
    %1844 = vmatpush1.msra.mxu0 0.0
    %1845 = vmatprep.subr.mxu0 0.0
    %1846 = vmatpush1.msra.mxu0 0.0
    %1847 = vmatprep.subr.mxu0 0.0
    %1848 = vmatpush1.msra.mxu0 0.0
    %1849 = vmatprep.subr.mxu0 0.0
    %1850 = vmatpush1.msra.mxu0 0.0
    %1851 = vmatprep.subr.mxu0 0.0
    %1852 = vmatpush1.msra.mxu0 0.0
    %1853 = vmatprep.mubr.f32.mxu0 0.0
    %1854 = vmatmul.mubr.f32.gmra.mrb[0].mxu0 %v1702
    %v1855 = vpop.f32.mrb[0].mxu0
    %v1856 = vadd.f32 %v900, %v1855
    %v1857 = vpop.f32.mrb[0].mxu0
    %1858 = vmatprep.mubr.f32.mxu0 0.0
    %1859 = vmatmul.mubr.f32.gmra.mrb[0].mxu0 %v1703
    %v1860 = vpop.f32.mrb[0].mxu0
    %v1861 = vadd.f32 %v900, %v1860
    %v1862 = vpop.f32.mrb[0].mxu0
    %1863 = vdwg.mxu0
    %v1864 = vadd.f32 %v1706, %v1779
    %v1865 = vadd.f32 %v1709, %v1785
    %v1866 = vxor.u32 %v1864, 2147483648
    %v1867 = vxor.u32 %v1865, 2147483648
    %v1868 = vmul.f32 %v1866, 1.442695
    %v1869 = vpow.pop %v1868
    %v1870 = vmul.f32 %v1867, 1.442695
    %v1871 = vpow.pop %v1870
    %v1872 = vadd.f32 %v1869, 1.0
    %v1873 = vadd.f32 %v1871, 1.0
    %v1874 = vrcp.pop %v1872
    %v1875 = vmul.f32 1.0, %v1874
    %v1876 = vrcp.pop %v1873
    %v1877 = vmul.f32 1.0, %v1876
    %v1878 = vadd.f32 %v1707, %v1781
    %v1879 = vadd.f32 %v1710, %v1787
    %v1880 = vxor.u32 %v1878, 2147483648
    %v1881 = vxor.u32 %v1879, 2147483648
    %v1882 = vmul.f32 %v1880, 1.442695
    %v1883 = vpow.pop %v1882
    %v1884 = vmul.f32 %v1881, 1.442695
    %v1885 = vpow.pop %v1884
    %v1886 = vadd.f32 %v1883, 1.0
    %v1887 = vadd.f32 %v1885, 1.0
    %v1888 = vrcp.pop %v1886
    %v1889 = vmul.f32 1.0, %v1888
    %v1890 = vrcp.pop %v1887
    %v1891 = vmul.f32 1.0, %v1890
    %v1892 = vmul.f32 %v1875, %v1856
    %v1893 = vmul.f32 %v1877, %v1861
    %v1894 = vadd.f32 %v1708, %v1892
    %v1895 = vadd.f32 %v1711, %v1893
    %v1896 = vtanh.pop %v1894
    %v1897 = vtanh.pop %v1895
    %v1898 = vsub.f32 1.0, %v1889
    %v1899 = vsub.f32 1.0, %v1891
    %v1900 = vmul.f32 %v1898, %v1896
    %v1901 = vmul.f32 %v1899, %v1897
    %v1902 = vmul.f32 %v1889, %v1702
    %v1903 = vmul.f32 %v1891, %v1703
    %v1904 = vadd.f32 %v1900, %v1902
    %v1905 = vadd.f32 %v1901, %v1903
    %1906 = vst [vmem:[#allocation2 + $0x40] sm:$0xff] %v1904
    %1907 = vst [vmem:[#allocation2 + $0x48] sm:$0xff] %v1905
    %v1908 = vld [vmem:[#allocation3 + $0xf0] sm:$0xff]
    %v1909 = vld [vmem:[#allocation3 + $0xf8] sm:$0xff]
    %v1910 = vld [vmem:[#allocation3 + $0x100] sm:$0xff]
    %v1911 = vld [vmem:[#allocation3 + $0x108] sm:$0xff]
    %v1912 = vld [vmem:[#allocation3 + $0x110] sm:$0xff]
    %v1913 = vld [vmem:[#allocation3 + $0x118] sm:$0xff]
    %1914 = vmatprep.subr.mxu0 %v832
    %1915 = vmatpush1.msra.mxu0 %v831
    %1916 = vmatprep.subr.mxu0 %v835
    %1917 = vmatpush1.msra.mxu0 %v834
    %1918 = vmatprep.subr.mxu0 %v838
    %1919 = vmatpush1.msra.mxu0 %v837
    %1920 = vmatprep.subr.mxu0 %v841
    %1921 = vmatpush1.msra.mxu0 %v840
    %1922 = vmatprep.subr.mxu0 %v844
    %1923 = vmatpush1.msra.mxu0 %v843
    %1924 = vmatprep.subr.mxu0 %v847
    %1925 = vmatpush1.msra.mxu0 %v846
    %1926 = vmatprep.subr.mxu0 %v850
    %1927 = vmatpush1.msra.mxu0 %v849
    %1928 = vmatprep.subr.mxu0 %v853
    %1929 = vmatpush1.msra.mxu0 %v852
    %1930 = vmatprep.subr.mxu0 %v856
    %1931 = vmatpush1.msra.mxu0 %v855
    %1932 = vmatprep.subr.mxu0 %v859
    %1933 = vmatpush1.msra.mxu0 %v858
    %1934 = vmatprep.subr.mxu0 %v862
    %1935 = vmatpush1.msra.mxu0 %v861
    %1936 = vmatprep.subr.mxu0 %v865
    %1937 = vmatpush1.msra.mxu0 %v864
    %1938 = vmatprep.subr.mxu0 %v868
    %1939 = vmatpush1.msra.mxu0 %v867
    %1940 = vmatprep.subr.mxu0 %v871
    %1941 = vmatpush1.msra.mxu0 %v870
    %1942 = vmatprep.subr.mxu0 %v874
    %1943 = vmatpush1.msra.mxu0 %v873
    %1944 = vmatprep.subr.mxu0 %v877
    %1945 = vmatpush1.msra.mxu0 %v876
    %1946 = vmatprep.subr.mxu0 0.0
    %1947 = vmatpush1.msra.mxu0 0.0
    %1948 = vmatprep.subr.mxu0 0.0
    %1949 = vmatpush1.msra.mxu0 0.0
    %1950 = vmatprep.subr.mxu0 0.0
    %1951 = vmatpush1.msra.mxu0 0.0
    %1952 = vmatprep.subr.mxu0 0.0
    %1953 = vmatpush1.msra.mxu0 0.0
    %1954 = vmatprep.subr.mxu0 0.0
    %1955 = vmatpush1.msra.mxu0 0.0
    %1956 = vmatprep.subr.mxu0 0.0
    %1957 = vmatpush1.msra.mxu0 0.0
    %1958 = vmatprep.subr.mxu0 0.0
    %1959 = vmatpush1.msra.mxu0 0.0
    %1960 = vmatprep.subr.mxu0 0.0
    %1961 = vmatpush1.msra.mxu0 0.0
    %1962 = vmatprep.subr.mxu0 0.0
    %1963 = vmatpush1.msra.mxu0 0.0
    %1964 = vmatprep.subr.mxu0 0.0
    %1965 = vmatpush1.msra.mxu0 0.0
    %1966 = vmatprep.subr.mxu0 0.0
    %1967 = vmatpush1.msra.mxu0 0.0
    %1968 = vmatprep.subr.mxu0 0.0
    %1969 = vmatpush1.msra.mxu0 0.0
    %1970 = vmatprep.subr.mxu0 0.0
    %1971 = vmatpush1.msra.mxu0 0.0
    %1972 = vmatprep.subr.mxu0 0.0
    %1973 = vmatpush1.msra.mxu0 0.0
    %1974 = vmatprep.subr.mxu0 0.0
    %1975 = vmatpush1.msra.mxu0 0.0
    %1976 = vmatprep.subr.mxu0 0.0
    %1977 = vmatpush1.msra.mxu0 0.0
    %1978 = vmatprep.mubr.f32.mxu0 0.0
    %1979 = vmatmul.mubr.f32.gmra.mrb[0].mxu0 %v1904
    %v1980 = vpop.f32.mrb[0].mxu0
    %v1981 = vadd.f32 %v892, %v1980
    %v1982 = vpop.f32.mrb[0].mxu0
    %v1983 = vadd.f32 %v896, %v1982
    %1984 = vmatprep.mubr.f32.mxu0 0.0
    %1985 = vmatmul.mubr.f32.gmra.mrb[0].mxu0 %v1905
    %v1986 = vpop.f32.mrb[0].mxu0
    %v1987 = vadd.f32 %v892, %v1986
    %v1988 = vpop.f32.mrb[0].mxu0
    %v1989 = vadd.f32 %v896, %v1988
    %1990 = vdwg.mxu0
    %1991 = vmatprep.subr.mxu0 0.0
    %1992 = vmatpush1.msra.mxu0 %v833
    %1993 = vmatprep.subr.mxu0 0.0
    %1994 = vmatpush1.msra.mxu0 %v836
    %1995 = vmatprep.subr.mxu0 0.0
    %1996 = vmatpush1.msra.mxu0 %v839
    %1997 = vmatprep.subr.mxu0 0.0
    %1998 = vmatpush1.msra.mxu0 %v842
    %1999 = vmatprep.subr.mxu0 0.0
    %2000 = vmatpush1.msra.mxu0 %v845
    %2001 = vmatprep.subr.mxu0 0.0
    %2002 = vmatpush1.msra.mxu0 %v848
    %2003 = vmatprep.subr.mxu0 0.0
    %2004 = vmatpush1.msra.mxu0 %v851
    %2005 = vmatprep.subr.mxu0 0.0
    %2006 = vmatpush1.msra.mxu0 %v854
    %2007 = vmatprep.subr.mxu0 0.0
    %2008 = vmatpush1.msra.mxu0 %v857
    %2009 = vmatprep.subr.mxu0 0.0
    %2010 = vmatpush1.msra.mxu0 %v860
    %2011 = vmatprep.subr.mxu0 0.0
    %2012 = vmatpush1.msra.mxu0 %v863
    %2013 = vmatprep.subr.mxu0 0.0
    %2014 = vmatpush1.msra.mxu0 %v866
    %2015 = vmatprep.subr.mxu0 0.0
    %2016 = vmatpush1.msra.mxu0 %v869
    %2017 = vmatprep.subr.mxu0 0.0
    %2018 = vmatpush1.msra.mxu0 %v872
    %2019 = vmatprep.subr.mxu0 0.0
    %2020 = vmatpush1.msra.mxu0 %v875
    %2021 = vmatprep.subr.mxu0 0.0
    %2022 = vmatpush1.msra.mxu0 %v878
    %2023 = vmatprep.subr.mxu0 0.0
    %2024 = vmatpush1.msra.mxu0 0.0
    %2025 = vmatprep.subr.mxu0 0.0
    %2026 = vmatpush1.msra.mxu0 0.0
    %2027 = vmatprep.subr.mxu0 0.0
    %2028 = vmatpush1.msra.mxu0 0.0
    %2029 = vmatprep.subr.mxu0 0.0
    %2030 = vmatpush1.msra.mxu0 0.0
    %2031 = vmatprep.subr.mxu0 0.0
    %2032 = vmatpush1.msra.mxu0 0.0
    %2033 = vmatprep.subr.mxu0 0.0
    %2034 = vmatpush1.msra.mxu0 0.0
    %2035 = vmatprep.subr.mxu0 0.0
    %2036 = vmatpush1.msra.mxu0 0.0
    %2037 = vmatprep.subr.mxu0 0.0
    %2038 = vmatpush1.msra.mxu0 0.0
    %2039 = vmatprep.subr.mxu0 0.0
    %2040 = vmatpush1.msra.mxu0 0.0
    %2041 = vmatprep.subr.mxu0 0.0
    %2042 = vmatpush1.msra.mxu0 0.0
    %2043 = vmatprep.subr.mxu0 0.0
    %2044 = vmatpush1.msra.mxu0 0.0
    %2045 = vmatprep.subr.mxu0 0.0
    %2046 = vmatpush1.msra.mxu0 0.0
    %2047 = vmatprep.subr.mxu0 0.0
    %2048 = vmatpush1.msra.mxu0 0.0
    %2049 = vmatprep.subr.mxu0 0.0
    %2050 = vmatpush1.msra.mxu0 0.0
    %2051 = vmatprep.subr.mxu0 0.0
    %2052 = vmatpush1.msra.mxu0 0.0
    %2053 = vmatprep.subr.mxu0 0.0
    %2054 = vmatpush1.msra.mxu0 0.0
    %2055 = vmatprep.mubr.f32.mxu0 0.0
    %2056 = vmatmul.mubr.f32.gmra.mrb[0].mxu0 %v1904
    %v2057 = vpop.f32.mrb[0].mxu0
    %v2058 = vadd.f32 %v900, %v2057
    %v2059 = vpop.f32.mrb[0].mxu0
    %2060 = vmatprep.mubr.f32.mxu0 0.0
    %2061 = vmatmul.mubr.f32.gmra.mrb[0].mxu0 %v1905
    %v2062 = vpop.f32.mrb[0].mxu0
    %v2063 = vadd.f32 %v900, %v2062
    %v2064 = vpop.f32.mrb[0].mxu0
    %2065 = vdwg.mxu0
    %v2066 = vadd.f32 %v1908, %v1981
    %v2067 = vadd.f32 %v1911, %v1987
    %v2068 = vxor.u32 %v2066, 2147483648
    %v2069 = vxor.u32 %v2067, 2147483648
    %v2070 = vmul.f32 %v2068, 1.442695
    %v2071 = vpow.pop %v2070
    %v2072 = vmul.f32 %v2069, 1.442695
    %v2073 = vpow.pop %v2072
    %v2074 = vadd.f32 %v2071, 1.0
    %v2075 = vadd.f32 %v2073, 1.0
    %v2076 = vrcp.pop %v2074
    %v2077 = vmul.f32 1.0, %v2076
    %v2078 = vrcp.pop %v2075
    %v2079 = vmul.f32 1.0, %v2078
    %v2080 = vadd.f32 %v1909, %v1983
    %v2081 = vadd.f32 %v1912, %v1989
    %v2082 = vxor.u32 %v2080, 2147483648
    %v2083 = vxor.u32 %v2081, 2147483648
    %v2084 = vmul.f32 %v2082, 1.442695
    %v2085 = vpow.pop %v2084
    %v2086 = vmul.f32 %v2083, 1.442695
    %v2087 = vpow.pop %v2086
    %v2088 = vadd.f32 %v2085, 1.0
    %v2089 = vadd.f32 %v2087, 1.0
    %v2090 = vrcp.pop %v2088
    %v2091 = vmul.f32 1.0, %v2090
    %v2092 = vrcp.pop %v2089
    %v2093 = vmul.f32 1.0, %v2092
    %v2094 = vmul.f32 %v2077, %v2058
    %v2095 = vmul.f32 %v2079, %v2063
    %v2096 = vadd.f32 %v1910, %v2094
    %v2097 = vadd.f32 %v1913, %v2095
    %v2098 = vtanh.pop %v2096
    %v2099 = vtanh.pop %v2097
    %v2100 = vsub.f32 1.0, %v2091
    %v2101 = vsub.f32 1.0, %v2093
    %v2102 = vmul.f32 %v2100, %v2098
    %v2103 = vmul.f32 %v2101, %v2099
    %v2104 = vmul.f32 %v2091, %v1904
    %v2105 = vmul.f32 %v2093, %v1905
    %v2106 = vadd.f32 %v2102, %v2104
    %v2107 = vadd.f32 %v2103, %v2105
    %2108 = vst [vmem:[#allocation2 + $0x50] sm:$0xff] %v2106
    %2109 = vst [vmem:[#allocation2 + $0x58] sm:$0xff] %v2107
    %v2110 = vld [vmem:[#allocation3 + $0x120] sm:$0xff]
    %v2111 = vld [vmem:[#allocation3 + $0x128] sm:$0xff]
    %v2112 = vld [vmem:[#allocation3 + $0x130] sm:$0xff]
    %v2113 = vld [vmem:[#allocation3 + $0x138] sm:$0xff]
    %v2114 = vld [vmem:[#allocation3 + $0x140] sm:$0xff]
    %v2115 = vld [vmem:[#allocation3 + $0x148] sm:$0xff]
    %2116 = vmatprep.subr.mxu0 %v832
    %2117 = vmatpush1.msra.mxu0 %v831
    %2118 = vmatprep.subr.mxu0 %v835
    %2119 = vmatpush1.msra.mxu0 %v834
    %2120 = vmatprep.subr.mxu0 %v838
    %2121 = vmatpush1.msra.mxu0 %v837
    %2122 = vmatprep.subr.mxu0 %v841
    %2123 = vmatpush1.msra.mxu0 %v840
    %2124 = vmatprep.subr.mxu0 %v844
    %2125 = vmatpush1.msra.mxu0 %v843
    %2126 = vmatprep.subr.mxu0 %v847
    %2127 = vmatpush1.msra.mxu0 %v846
    %2128 = vmatprep.subr.mxu0 %v850
    %2129 = vmatpush1.msra.mxu0 %v849
    %2130 = vmatprep.subr.mxu0 %v853
    %2131 = vmatpush1.msra.mxu0 %v852
    %2132 = vmatprep.subr.mxu0 %v856
    %2133 = vmatpush1.msra.mxu0 %v855
    %2134 = vmatprep.subr.mxu0 %v859
    %2135 = vmatpush1.msra.mxu0 %v858
    %2136 = vmatprep.subr.mxu0 %v862
    %2137 = vmatpush1.msra.mxu0 %v861
    %2138 = vmatprep.subr.mxu0 %v865
    %2139 = vmatpush1.msra.mxu0 %v864
    %2140 = vmatprep.subr.mxu0 %v868
    %2141 = vmatpush1.msra.mxu0 %v867
    %2142 = vmatprep.subr.mxu0 %v871
    %2143 = vmatpush1.msra.mxu0 %v870
    %2144 = vmatprep.subr.mxu0 %v874
    %2145 = vmatpush1.msra.mxu0 %v873
    %2146 = vmatprep.subr.mxu0 %v877
    %2147 = vmatpush1.msra.mxu0 %v876
    %2148 = vmatprep.subr.mxu0 0.0
    %2149 = vmatpush1.msra.mxu0 0.0
    %2150 = vmatprep.subr.mxu0 0.0
    %2151 = vmatpush1.msra.mxu0 0.0
    %2152 = vmatprep.subr.mxu0 0.0
    %2153 = vmatpush1.msra.mxu0 0.0
    %2154 = vmatprep.subr.mxu0 0.0
    %2155 = vmatpush1.msra.mxu0 0.0
    %2156 = vmatprep.subr.mxu0 0.0
    %2157 = vmatpush1.msra.mxu0 0.0
    %2158 = vmatprep.subr.mxu0 0.0
    %2159 = vmatpush1.msra.mxu0 0.0
    %2160 = vmatprep.subr.mxu0 0.0
    %2161 = vmatpush1.msra.mxu0 0.0
    %2162 = vmatprep.subr.mxu0 0.0
    %2163 = vmatpush1.msra.mxu0 0.0
    %2164 = vmatprep.subr.mxu0 0.0
    %2165 = vmatpush1.msra.mxu0 0.0
    %2166 = vmatprep.subr.mxu0 0.0
    %2167 = vmatpush1.msra.mxu0 0.0
    %2168 = vmatprep.subr.mxu0 0.0
    %2169 = vmatpush1.msra.mxu0 0.0
    %2170 = vmatprep.subr.mxu0 0.0
    %2171 = vmatpush1.msra.mxu0 0.0
    %2172 = vmatprep.subr.mxu0 0.0
    %2173 = vmatpush1.msra.mxu0 0.0
    %2174 = vmatprep.subr.mxu0 0.0
    %2175 = vmatpush1.msra.mxu0 0.0
    %2176 = vmatprep.subr.mxu0 0.0
    %2177 = vmatpush1.msra.mxu0 0.0
    %2178 = vmatprep.subr.mxu0 0.0
    %2179 = vmatpush1.msra.mxu0 0.0
    %2180 = vmatprep.mubr.f32.mxu0 0.0
    %2181 = vmatmul.mubr.f32.gmra.mrb[0].mxu0 %v2106
    %v2182 = vpop.f32.mrb[0].mxu0
    %v2183 = vadd.f32 %v892, %v2182
    %v2184 = vpop.f32.mrb[0].mxu0
    %v2185 = vadd.f32 %v896, %v2184
    %2186 = vmatprep.mubr.f32.mxu0 0.0
    %2187 = vmatmul.mubr.f32.gmra.mrb[0].mxu0 %v2107
    %v2188 = vpop.f32.mrb[0].mxu0
    %v2189 = vadd.f32 %v892, %v2188
    %v2190 = vpop.f32.mrb[0].mxu0
    %v2191 = vadd.f32 %v896, %v2190
    %2192 = vdwg.mxu0
    %2193 = vmatprep.subr.mxu0 0.0
    %2194 = vmatpush1.msra.mxu0 %v833
    %2195 = vmatprep.subr.mxu0 0.0
    %2196 = vmatpush1.msra.mxu0 %v836
    %2197 = vmatprep.subr.mxu0 0.0
    %2198 = vmatpush1.msra.mxu0 %v839
    %2199 = vmatprep.subr.mxu0 0.0
    %2200 = vmatpush1.msra.mxu0 %v842
    %2201 = vmatprep.subr.mxu0 0.0
    %2202 = vmatpush1.msra.mxu0 %v845
    %2203 = vmatprep.subr.mxu0 0.0
    %2204 = vmatpush1.msra.mxu0 %v848
    %2205 = vmatprep.subr.mxu0 0.0
    %2206 = vmatpush1.msra.mxu0 %v851
    %2207 = vmatprep.subr.mxu0 0.0
    %2208 = vmatpush1.msra.mxu0 %v854
    %2209 = vmatprep.subr.mxu0 0.0
    %2210 = vmatpush1.msra.mxu0 %v857
    %2211 = vmatprep.subr.mxu0 0.0
    %2212 = vmatpush1.msra.mxu0 %v860
    %2213 = vmatprep.subr.mxu0 0.0
    %2214 = vmatpush1.msra.mxu0 %v863
    %2215 = vmatprep.subr.mxu0 0.0
    %2216 = vmatpush1.msra.mxu0 %v866
    %2217 = vmatprep.subr.mxu0 0.0
    %2218 = vmatpush1.msra.mxu0 %v869
    %2219 = vmatprep.subr.mxu0 0.0
    %2220 = vmatpush1.msra.mxu0 %v872
    %2221 = vmatprep.subr.mxu0 0.0
    %2222 = vmatpush1.msra.mxu0 %v875
    %2223 = vmatprep.subr.mxu0 0.0
    %2224 = vmatpush1.msra.mxu0 %v878
    %2225 = vmatprep.subr.mxu0 0.0
    %2226 = vmatpush1.msra.mxu0 0.0
    %2227 = vmatprep.subr.mxu0 0.0
    %2228 = vmatpush1.msra.mxu0 0.0
    %2229 = vmatprep.subr.mxu0 0.0
    %2230 = vmatpush1.msra.mxu0 0.0
    %2231 = vmatprep.subr.mxu0 0.0
    %2232 = vmatpush1.msra.mxu0 0.0
    %2233 = vmatprep.subr.mxu0 0.0
    %2234 = vmatpush1.msra.mxu0 0.0
    %2235 = vmatprep.subr.mxu0 0.0
    %2236 = vmatpush1.msra.mxu0 0.0
    %2237 = vmatprep.subr.mxu0 0.0
    %2238 = vmatpush1.msra.mxu0 0.0
    %2239 = vmatprep.subr.mxu0 0.0
    %2240 = vmatpush1.msra.mxu0 0.0
    %2241 = vmatprep.subr.mxu0 0.0
    %2242 = vmatpush1.msra.mxu0 0.0
    %2243 = vmatprep.subr.mxu0 0.0
    %2244 = vmatpush1.msra.mxu0 0.0
    %2245 = vmatprep.subr.mxu0 0.0
    %2246 = vmatpush1.msra.mxu0 0.0
    %2247 = vmatprep.subr.mxu0 0.0
    %2248 = vmatpush1.msra.mxu0 0.0
    %2249 = vmatprep.subr.mxu0 0.0
    %2250 = vmatpush1.msra.mxu0 0.0
    %2251 = vmatprep.subr.mxu0 0.0
    %2252 = vmatpush1.msra.mxu0 0.0
    %2253 = vmatprep.subr.mxu0 0.0
    %2254 = vmatpush1.msra.mxu0 0.0
    %2255 = vmatprep.subr.mxu0 0.0
    %2256 = vmatpush1.msra.mxu0 0.0
    %2257 = vmatprep.mubr.f32.mxu0 0.0
    %2258 = vmatmul.mubr.f32.gmra.mrb[0].mxu0 %v2106
    %v2259 = vpop.f32.mrb[0].mxu0
    %v2260 = vadd.f32 %v900, %v2259
    %v2261 = vpop.f32.mrb[0].mxu0
    %2262 = vmatprep.mubr.f32.mxu0 0.0
    %2263 = vmatmul.mubr.f32.gmra.mrb[0].mxu0 %v2107
    %v2264 = vpop.f32.mrb[0].mxu0
    %v2265 = vadd.f32 %v900, %v2264
    %v2266 = vpop.f32.mrb[0].mxu0
    %2267 = vdwg.mxu0
    %v2268 = vadd.f32 %v2110, %v2183
    %v2269 = vadd.f32 %v2113, %v2189
    %v2270 = vxor.u32 %v2268, 2147483648
    %v2271 = vxor.u32 %v2269, 2147483648
    %v2272 = vmul.f32 %v2270, 1.442695
    %v2273 = vpow.pop %v2272
    %v2274 = vmul.f32 %v2271, 1.442695
    %v2275 = vpow.pop %v2274
    %v2276 = vadd.f32 %v2273, 1.0
    %v2277 = vadd.f32 %v2275, 1.0
    %v2278 = vrcp.pop %v2276
    %v2279 = vmul.f32 1.0, %v2278
    %v2280 = vrcp.pop %v2277
    %v2281 = vmul.f32 1.0, %v2280
    %v2282 = vadd.f32 %v2111, %v2185
    %v2283 = vadd.f32 %v2114, %v2191
    %v2284 = vxor.u32 %v2282, 2147483648
    %v2285 = vxor.u32 %v2283, 2147483648
    %v2286 = vmul.f32 %v2284, 1.442695
    %v2287 = vpow.pop %v2286
    %v2288 = vmul.f32 %v2285, 1.442695
    %v2289 = vpow.pop %v2288
    %v2290 = vadd.f32 %v2287, 1.0
    %v2291 = vadd.f32 %v2289, 1.0
    %v2292 = vrcp.pop %v2290
    %v2293 = vmul.f32 1.0, %v2292
    %v2294 = vrcp.pop %v2291
    %v2295 = vmul.f32 1.0, %v2294
    %v2296 = vmul.f32 %v2279, %v2260
    %v2297 = vmul.f32 %v2281, %v2265
    %v2298 = vadd.f32 %v2112, %v2296
    %v2299 = vadd.f32 %v2115, %v2297
    %v2300 = vtanh.pop %v2298
    %v2301 = vtanh.pop %v2299
    %v2302 = vsub.f32 1.0, %v2293
    %v2303 = vsub.f32 1.0, %v2295
    %v2304 = vmul.f32 %v2302, %v2300
    %v2305 = vmul.f32 %v2303, %v2301
    %v2306 = vmul.f32 %v2293, %v2106
    %v2307 = vmul.f32 %v2295, %v2107
    %v2308 = vadd.f32 %v2304, %v2306
    %v2309 = vadd.f32 %v2305, %v2307
    %2310 = vst [vmem:[#allocation2 + $0x60] sm:$0xff] %v2308
    %2311 = vst [vmem:[#allocation2 + $0x68] sm:$0xff] %v2309
    %v2312 = vld [vmem:[#allocation3 + $0x150] sm:$0xff]
    %v2313 = vld [vmem:[#allocation3 + $0x158] sm:$0xff]
    %v2314 = vld [vmem:[#allocation3 + $0x160] sm:$0xff]
    %v2315 = vld [vmem:[#allocation3 + $0x168] sm:$0xff]
    %v2316 = vld [vmem:[#allocation3 + $0x170] sm:$0xff]
    %v2317 = vld [vmem:[#allocation3 + $0x178] sm:$0xff]
    %2318 = vmatprep.subr.mxu0 %v832
    %2319 = vmatpush1.msra.mxu0 %v831
    %2320 = vmatprep.subr.mxu0 %v835
    %2321 = vmatpush1.msra.mxu0 %v834
    %2322 = vmatprep.subr.mxu0 %v838
    %2323 = vmatpush1.msra.mxu0 %v837
    %2324 = vmatprep.subr.mxu0 %v841
    %2325 = vmatpush1.msra.mxu0 %v840
    %2326 = vmatprep.subr.mxu0 %v844
    %2327 = vmatpush1.msra.mxu0 %v843
    %2328 = vmatprep.subr.mxu0 %v847
    %2329 = vmatpush1.msra.mxu0 %v846
    %2330 = vmatprep.subr.mxu0 %v850
    %2331 = vmatpush1.msra.mxu0 %v849
    %2332 = vmatprep.subr.mxu0 %v853
    %2333 = vmatpush1.msra.mxu0 %v852
    %2334 = vmatprep.subr.mxu0 %v856
    %2335 = vmatpush1.msra.mxu0 %v855
    %2336 = vmatprep.subr.mxu0 %v859
    %2337 = vmatpush1.msra.mxu0 %v858
    %2338 = vmatprep.subr.mxu0 %v862
    %2339 = vmatpush1.msra.mxu0 %v861
    %2340 = vmatprep.subr.mxu0 %v865
    %2341 = vmatpush1.msra.mxu0 %v864
    %2342 = vmatprep.subr.mxu0 %v868
    %2343 = vmatpush1.msra.mxu0 %v867
    %2344 = vmatprep.subr.mxu0 %v871
    %2345 = vmatpush1.msra.mxu0 %v870
    %2346 = vmatprep.subr.mxu0 %v874
    %2347 = vmatpush1.msra.mxu0 %v873
    %2348 = vmatprep.subr.mxu0 %v877
    %2349 = vmatpush1.msra.mxu0 %v876
    %2350 = vmatprep.subr.mxu0 0.0
    %2351 = vmatpush1.msra.mxu0 0.0
    %2352 = vmatprep.subr.mxu0 0.0
    %2353 = vmatpush1.msra.mxu0 0.0
    %2354 = vmatprep.subr.mxu0 0.0
    %2355 = vmatpush1.msra.mxu0 0.0
    %2356 = vmatprep.subr.mxu0 0.0
    %2357 = vmatpush1.msra.mxu0 0.0
    %2358 = vmatprep.subr.mxu0 0.0
    %2359 = vmatpush1.msra.mxu0 0.0
    %2360 = vmatprep.subr.mxu0 0.0
    %2361 = vmatpush1.msra.mxu0 0.0
    %2362 = vmatprep.subr.mxu0 0.0
    %2363 = vmatpush1.msra.mxu0 0.0
    %2364 = vmatprep.subr.mxu0 0.0
    %2365 = vmatpush1.msra.mxu0 0.0
    %2366 = vmatprep.subr.mxu0 0.0
    %2367 = vmatpush1.msra.mxu0 0.0
    %2368 = vmatprep.subr.mxu0 0.0
    %2369 = vmatpush1.msra.mxu0 0.0
    %2370 = vmatprep.subr.mxu0 0.0
    %2371 = vmatpush1.msra.mxu0 0.0
    %2372 = vmatprep.subr.mxu0 0.0
    %2373 = vmatpush1.msra.mxu0 0.0
    %2374 = vmatprep.subr.mxu0 0.0
    %2375 = vmatpush1.msra.mxu0 0.0
    %2376 = vmatprep.subr.mxu0 0.0
    %2377 = vmatpush1.msra.mxu0 0.0
    %2378 = vmatprep.subr.mxu0 0.0
    %2379 = vmatpush1.msra.mxu0 0.0
    %2380 = vmatprep.subr.mxu0 0.0
    %2381 = vmatpush1.msra.mxu0 0.0
    %2382 = vmatprep.mubr.f32.mxu0 0.0
    %2383 = vmatmul.mubr.f32.gmra.mrb[0].mxu0 %v2308
    %v2384 = vpop.f32.mrb[0].mxu0
    %v2385 = vadd.f32 %v892, %v2384
    %v2386 = vpop.f32.mrb[0].mxu0
    %v2387 = vadd.f32 %v896, %v2386
    %2388 = vmatprep.mubr.f32.mxu0 0.0
    %2389 = vmatmul.mubr.f32.gmra.mrb[0].mxu0 %v2309
    %v2390 = vpop.f32.mrb[0].mxu0
    %v2391 = vadd.f32 %v892, %v2390
    %v2392 = vpop.f32.mrb[0].mxu0
    %v2393 = vadd.f32 %v896, %v2392
    %2394 = vdwg.mxu0
    %2395 = vmatprep.subr.mxu0 0.0
    %2396 = vmatpush1.msra.mxu0 %v833
    %2397 = vmatprep.subr.mxu0 0.0
    %2398 = vmatpush1.msra.mxu0 %v836
    %2399 = vmatprep.subr.mxu0 0.0
    %2400 = vmatpush1.msra.mxu0 %v839
    %2401 = vmatprep.subr.mxu0 0.0
    %2402 = vmatpush1.msra.mxu0 %v842
    %2403 = vmatprep.subr.mxu0 0.0
    %2404 = vmatpush1.msra.mxu0 %v845
    %2405 = vmatprep.subr.mxu0 0.0
    %2406 = vmatpush1.msra.mxu0 %v848
    %2407 = vmatprep.subr.mxu0 0.0
    %2408 = vmatpush1.msra.mxu0 %v851
    %2409 = vmatprep.subr.mxu0 0.0
    %2410 = vmatpush1.msra.mxu0 %v854
    %2411 = vmatprep.subr.mxu0 0.0
    %2412 = vmatpush1.msra.mxu0 %v857
    %2413 = vmatprep.subr.mxu0 0.0
    %2414 = vmatpush1.msra.mxu0 %v860
    %2415 = vmatprep.subr.mxu0 0.0
    %2416 = vmatpush1.msra.mxu0 %v863
    %2417 = vmatprep.subr.mxu0 0.0
    %2418 = vmatpush1.msra.mxu0 %v866
    %2419 = vmatprep.subr.mxu0 0.0
    %2420 = vmatpush1.msra.mxu0 %v869
    %2421 = vmatprep.subr.mxu0 0.0
    %2422 = vmatpush1.msra.mxu0 %v872
    %2423 = vmatprep.subr.mxu0 0.0
    %2424 = vmatpush1.msra.mxu0 %v875
    %2425 = vmatprep.subr.mxu0 0.0
    %2426 = vmatpush1.msra.mxu0 %v878
    %2427 = vmatprep.subr.mxu0 0.0
    %2428 = vmatpush1.msra.mxu0 0.0
    %2429 = vmatprep.subr.mxu0 0.0
    %2430 = vmatpush1.msra.mxu0 0.0
    %2431 = vmatprep.subr.mxu0 0.0
    %2432 = vmatpush1.msra.mxu0 0.0
    %2433 = vmatprep.subr.mxu0 0.0
    %2434 = vmatpush1.msra.mxu0 0.0
    %2435 = vmatprep.subr.mxu0 0.0
    %2436 = vmatpush1.msra.mxu0 0.0
    %2437 = vmatprep.subr.mxu0 0.0
    %2438 = vmatpush1.msra.mxu0 0.0
    %2439 = vmatprep.subr.mxu0 0.0
    %2440 = vmatpush1.msra.mxu0 0.0
    %2441 = vmatprep.subr.mxu0 0.0
    %2442 = vmatpush1.msra.mxu0 0.0
    %2443 = vmatprep.subr.mxu0 0.0
    %2444 = vmatpush1.msra.mxu0 0.0
    %2445 = vmatprep.subr.mxu0 0.0
    %2446 = vmatpush1.msra.mxu0 0.0
    %2447 = vmatprep.subr.mxu0 0.0
    %2448 = vmatpush1.msra.mxu0 0.0
    %2449 = vmatprep.subr.mxu0 0.0
    %2450 = vmatpush1.msra.mxu0 0.0
    %2451 = vmatprep.subr.mxu0 0.0
    %2452 = vmatpush1.msra.mxu0 0.0
    %2453 = vmatprep.subr.mxu0 0.0
    %2454 = vmatpush1.msra.mxu0 0.0
    %2455 = vmatprep.subr.mxu0 0.0
    %2456 = vmatpush1.msra.mxu0 0.0
    %2457 = vmatprep.subr.mxu0 0.0
    %2458 = vmatpush1.msra.mxu0 0.0
    %2459 = vmatprep.mubr.f32.mxu0 0.0
    %2460 = vmatmul.mubr.f32.gmra.mrb[0].mxu0 %v2308
    %v2461 = vpop.f32.mrb[0].mxu0
    %v2462 = vadd.f32 %v900, %v2461
    %v2463 = vpop.f32.mrb[0].mxu0
    %2464 = vmatprep.mubr.f32.mxu0 0.0
    %2465 = vmatmul.mubr.f32.gmra.mrb[0].mxu0 %v2309
    %v2466 = vpop.f32.mrb[0].mxu0
    %v2467 = vadd.f32 %v900, %v2466
    %v2468 = vpop.f32.mrb[0].mxu0
    %2469 = vdwg.mxu0
    %v2470 = vadd.f32 %v2312, %v2385
    %v2471 = vadd.f32 %v2315, %v2391
    %v2472 = vxor.u32 %v2470, 2147483648
    %v2473 = vxor.u32 %v2471, 2147483648
    %v2474 = vmul.f32 %v2472, 1.442695
    %v2475 = vpow.pop %v2474
    %v2476 = vmul.f32 %v2473, 1.442695
    %v2477 = vpow.pop %v2476
    %v2478 = vadd.f32 %v2475, 1.0
    %v2479 = vadd.f32 %v2477, 1.0
    %v2480 = vrcp.pop %v2478
    %v2481 = vmul.f32 1.0, %v2480
    %v2482 = vrcp.pop %v2479
    %v2483 = vmul.f32 1.0, %v2482
    %v2484 = vadd.f32 %v2313, %v2387
    %v2485 = vadd.f32 %v2316, %v2393
    %v2486 = vxor.u32 %v2484, 2147483648
    %v2487 = vxor.u32 %v2485, 2147483648
    %v2488 = vmul.f32 %v2486, 1.442695
    %v2489 = vpow.pop %v2488
    %v2490 = vmul.f32 %v2487, 1.442695
    %v2491 = vpow.pop %v2490
    %v2492 = vadd.f32 %v2489, 1.0
    %v2493 = vadd.f32 %v2491, 1.0
    %v2494 = vrcp.pop %v2492
    %v2495 = vmul.f32 1.0, %v2494
    %v2496 = vrcp.pop %v2493
    %v2497 = vmul.f32 1.0, %v2496
    %v2498 = vmul.f32 %v2481, %v2462
    %v2499 = vmul.f32 %v2483, %v2467
    %v2500 = vadd.f32 %v2314, %v2498
    %v2501 = vadd.f32 %v2317, %v2499
    %v2502 = vtanh.pop %v2500
    %v2503 = vtanh.pop %v2501
    %v2504 = vsub.f32 1.0, %v2495
    %v2505 = vsub.f32 1.0, %v2497
    %v2506 = vmul.f32 %v2504, %v2502
    %v2507 = vmul.f32 %v2505, %v2503
    %v2508 = vmul.f32 %v2495, %v2308
    %v2509 = vmul.f32 %v2497, %v2309
    %v2510 = vadd.f32 %v2506, %v2508
    %v2511 = vadd.f32 %v2507, %v2509
    %2512 = vst [vmem:[#allocation2 + $0x70] sm:$0xff] %v2510
    %2513 = vst [vmem:[#allocation2 + $0x78] sm:$0xff] %v2511
    %2514 = vst [vmem:[#allocation13] sm:$0xff] %v2510
    %2515 = vst [vmem:[#allocation13 + $0x8] sm:$0xff] %v2511
    %v2516 = vld [vmem:[#allocation2] sm:$0xff]
    %v2517 = vld [vmem:[#allocation2 + $0x8] sm:$0xff]
    %v2518 = vld [vmem:[#allocation2 + $0x10] sm:$0xff]
    %v2519 = vld [vmem:[#allocation2 + $0x18] sm:$0xff]
    %v2520 = vld [vmem:[#allocation2 + $0x20] sm:$0xff]
    %v2521 = vld [vmem:[#allocation2 + $0x28] sm:$0xff]
    %v2522 = vld [vmem:[#allocation2 + $0x30] sm:$0xff]
    %v2523 = vld [vmem:[#allocation2 + $0x38] sm:$0xff]
    %v2524 = vld [vmem:[#allocation2 + $0x40] sm:$0xff]
    %v2525 = vld [vmem:[#allocation2 + $0x48] sm:$0xff]
    %v2526 = vld [vmem:[#allocation2 + $0x50] sm:$0xff]
    %v2527 = vld [vmem:[#allocation2 + $0x58] sm:$0xff]
    %v2528 = vld [vmem:[#allocation2 + $0x60] sm:$0xff]
    %v2529 = vld [vmem:[#allocation2 + $0x68] sm:$0xff]
    %v2530 = vld [vmem:[#allocation2 + $0x70] sm:$0xff]
    %v2531 = vld [vmem:[#allocation2 + $0x78] sm:$0xff]
    %v2532 = vpack.c.bf16 %v2517, %v2516
    %v2533 = vpack.c.bf16 %v2519, %v2518
    %v2534 = vpack.c.bf16 %v2521, %v2520
    %v2535 = vpack.c.bf16 %v2523, %v2522
    %v2536 = vpack.c.bf16 %v2525, %v2524
    %v2537 = vpack.c.bf16 %v2527, %v2526
    %v2538 = vpack.c.bf16 %v2529, %v2528
    %v2539 = vpack.c.bf16 %v2531, %v2530
    %s2540 = scalar_lea.vmem [#allocation4], 384
    %v2541 = vld [vmem:[%s2540] sm:$0xff]
    %v2542 = vld [vmem:[%s2540 + $0x8] sm:$0xff]
    %v2543 = vld [vmem:[%s2540 + $0x10] sm:$0xff]
    %v2544 = vld [vmem:[%s2540 + $0x18] sm:$0xff]
    %v2545 = vld [vmem:[%s2540 + $0x20] sm:$0xff]
    %v2546 = vld [vmem:[%s2540 + $0x28] sm:$0xff]
    %v2547 = vld [vmem:[%s2540 + $0x30] sm:$0xff]
    %v2548 = vld [vmem:[%s2540 + $0x38] sm:$0xff]
    %v2549 = vld [vmem:[%s2540 + $0x40] sm:$0xff]
    %v2550 = vld [vmem:[%s2540 + $0x48] sm:$0xff]
    %v2551 = vld [vmem:[%s2540 + $0x50] sm:$0xff]
    %v2552 = vld [vmem:[%s2540 + $0x58] sm:$0xff]
    %v2553 = vld [vmem:[%s2540 + $0x60] sm:$0xff]
    %v2554 = vld [vmem:[%s2540 + $0x68] sm:$0xff]
    %v2555 = vld [vmem:[%s2540 + $0x70] sm:$0xff]
    %v2556 = vld [vmem:[%s2540 + $0x78] sm:$0xff]
    %v2557 = vld [vmem:[%s2540 + $0x80] sm:$0xff]
    %v2558 = vld [vmem:[%s2540 + $0x88] sm:$0xff]
    %v2559 = vld [vmem:[%s2540 + $0x90] sm:$0xff]
    %v2560 = vld [vmem:[%s2540 + $0x98] sm:$0xff]
    %v2561 = vld [vmem:[%s2540 + $0xa0] sm:$0xff]
    %v2562 = vld [vmem:[%s2540 + $0xa8] sm:$0xff]
    %v2563 = vld [vmem:[%s2540 + $0xb0] sm:$0xff]
    %v2564 = vld [vmem:[%s2540 + $0xb8] sm:$0xff]
    %v2565 = vld [vmem:[%s2540 + $0xc0] sm:$0xff]
    %v2566 = vld [vmem:[%s2540 + $0xc8] sm:$0xff]
    %v2567 = vld [vmem:[%s2540 + $0xd0] sm:$0xff]
    %v2568 = vld [vmem:[%s2540 + $0xd8] sm:$0xff]
    %v2569 = vld [vmem:[%s2540 + $0xe0] sm:$0xff]
    %v2570 = vld [vmem:[%s2540 + $0xe8] sm:$0xff]
    %v2571 = vld [vmem:[%s2540 + $0xf0] sm:$0xff]
    %v2572 = vld [vmem:[%s2540 + $0xf8] sm:$0xff]
    %v2573 = vld [vmem:[%s2540 + $0x100] sm:$0xff]
    %v2574 = vld [vmem:[%s2540 + $0x108] sm:$0xff]
    %v2575 = vld [vmem:[%s2540 + $0x110] sm:$0xff]
    %v2576 = vld [vmem:[%s2540 + $0x118] sm:$0xff]
    %v2577 = vld [vmem:[%s2540 + $0x120] sm:$0xff]
    %v2578 = vld [vmem:[%s2540 + $0x128] sm:$0xff]
    %v2579 = vld [vmem:[%s2540 + $0x130] sm:$0xff]
    %v2580 = vld [vmem:[%s2540 + $0x138] sm:$0xff]
    %v2581 = vld [vmem:[%s2540 + $0x140] sm:$0xff]
    %v2582 = vld [vmem:[%s2540 + $0x148] sm:$0xff]
    %v2583 = vld [vmem:[%s2540 + $0x150] sm:$0xff]
    %v2584 = vld [vmem:[%s2540 + $0x158] sm:$0xff]
    %v2585 = vld [vmem:[%s2540 + $0x160] sm:$0xff]
    %v2586 = vld [vmem:[%s2540 + $0x168] sm:$0xff]
    %v2587 = vld [vmem:[%s2540 + $0x170] sm:$0xff]
    %v2588 = vld [vmem:[%s2540 + $0x178] sm:$0xff]
    %v2589 = vpack.c.bf16 %v2544, %v2541
    %v2590 = vpack.c.bf16 %v2545, %v2542
    %v2591 = vpack.c.bf16 %v2546, %v2543
    %v2592 = vpack.c.bf16 %v2550, %v2547
    %v2593 = vpack.c.bf16 %v2551, %v2548
    %v2594 = vpack.c.bf16 %v2552, %v2549
    %v2595 = vpack.c.bf16 %v2556, %v2553
    %v2596 = vpack.c.bf16 %v2557, %v2554
    %v2597 = vpack.c.bf16 %v2558, %v2555
    %v2598 = vpack.c.bf16 %v2562, %v2559
    %v2599 = vpack.c.bf16 %v2563, %v2560
    %v2600 = vpack.c.bf16 %v2564, %v2561
    %v2601 = vpack.c.bf16 %v2568, %v2565
    %v2602 = vpack.c.bf16 %v2569, %v2566
    %v2603 = vpack.c.bf16 %v2570, %v2567
    %v2604 = vpack.c.bf16 %v2574, %v2571
    %v2605 = vpack.c.bf16 %v2575, %v2572
    %v2606 = vpack.c.bf16 %v2576, %v2573
    %v2607 = vpack.c.bf16 %v2580, %v2577
    %v2608 = vpack.c.bf16 %v2581, %v2578
    %v2609 = vpack.c.bf16 %v2582, %v2579
    %v2610 = vpack.c.bf16 %v2586, %v2583
    %v2611 = vpack.c.bf16 %v2587, %v2584
    %v2612 = vpack.c.bf16 %v2588, %v2585
    %s2613 = scalar_lea.vmem %s7, 3
    %v2614 = vld [vmem:[%s2613] sm:$0x7]
    %v2616 = vlaneseq
    %v2617 = vshrl.u32 %v2616, 7
    %v2618 = vsub.s32 0, %v2617
    %v2619 = vrot.slane %v2614, %v2618
    %v2620 = vlaneseq
    %v2621 = vshrl.u32 %v2620, 7
    %v2622 = vsub.s32 1, %v2621
    %v2623 = vrot.slane %v2614, %v2622
    %v2624 = vlaneseq
    %v2625 = vshrl.u32 %v2624, 7
    %v2626 = vsub.s32 2, %v2625
    %v2627 = vrot.slane %v2614, %v2626
    %2631 = vmatprep.subr.bf16.mxu0 %v2590
    %2632 = vmatpush1.bf16.msra.mxu0 %v2589
    %2633 = vmatprep.subr.bf16.mxu0 %v2593
    %2634 = vmatpush1.bf16.msra.mxu0 %v2592
    %2635 = vmatprep.subr.bf16.mxu0 %v2596
    %2636 = vmatpush1.bf16.msra.mxu0 %v2595
    %2637 = vmatprep.subr.bf16.mxu0 %v2599
    %2638 = vmatpush1.bf16.msra.mxu0 %v2598
    %2639 = vmatprep.subr.bf16.mxu0 %v2602
    %2640 = vmatpush1.bf16.msra.mxu0 %v2601
    %2641 = vmatprep.subr.bf16.mxu0 %v2605
    %2642 = vmatpush1.bf16.msra.mxu0 %v2604
    %2643 = vmatprep.subr.bf16.mxu0 %v2608
    %2644 = vmatpush1.bf16.msra.mxu0 %v2607
    %2645 = vmatprep.subr.bf16.mxu0 %v2611
    %2646 = vmatpush1.bf16.msra.mxu0 %v2610
    %2647 = vmatprep.subr.bf16.mxu0 0
    %2648 = vmatpush1.bf16.msra.mxu0 0
    %2649 = vmatprep.subr.bf16.mxu0 0
    %2650 = vmatpush1.bf16.msra.mxu0 0
    %2651 = vmatprep.subr.bf16.mxu0 0
    %2652 = vmatpush1.bf16.msra.mxu0 0
    %2653 = vmatprep.subr.bf16.mxu0 0
    %2654 = vmatpush1.bf16.msra.mxu0 0
    %2655 = vmatprep.subr.bf16.mxu0 0
    %2656 = vmatpush1.bf16.msra.mxu0 0
    %2657 = vmatprep.subr.bf16.mxu0 0
    %2658 = vmatpush1.bf16.msra.mxu0 0
    %2659 = vmatprep.subr.bf16.mxu0 0
    %2660 = vmatpush1.bf16.msra.mxu0 0
    %2661 = vmatprep.subr.bf16.mxu0 0
    %2662 = vmatpush1.bf16.msra.mxu0 0
    %2663 = vmatprep.mubr.bf16.mxu0 0
    %2664 = vmatmul.mubr.bf16.gmra.mrb[0].mxu0 %v2532
    %v2665 = vpop.f32.mrb[0].mxu0
    %v2666 = vadd.f32 %v2619, %v2665
    %v2667 = vpop.f32.mrb[0].mxu0
    %v2668 = vadd.f32 %v2623, %v2667
    %v2669 = vpop.f32.mrb[0].mxu0
    %v2670 = vadd.f32 %v2619, %v2669
    %v2671 = vpop.f32.mrb[0].mxu0
    %v2672 = vadd.f32 %v2623, %v2671
    %2673 = vmatprep.mubr.bf16.mxu0 0
    %2674 = vmatmul.mubr.bf16.gmra.mrb[0].mxu0 %v2533
    %v2675 = vpop.f32.mrb[0].mxu0
    %v2676 = vadd.f32 %v2619, %v2675
    %v2677 = vpop.f32.mrb[0].mxu0
    %v2678 = vadd.f32 %v2623, %v2677
    %v2679 = vpop.f32.mrb[0].mxu0
    %v2680 = vadd.f32 %v2619, %v2679
    %v2681 = vpop.f32.mrb[0].mxu0
    %v2682 = vadd.f32 %v2623, %v2681
    %2683 = vmatprep.mubr.bf16.mxu0 0
    %2684 = vmatmul.mubr.bf16.gmra.mrb[0].mxu0 %v2534
    %v2685 = vpop.f32.mrb[0].mxu0
    %v2686 = vadd.f32 %v2619, %v2685
    %v2687 = vpop.f32.mrb[0].mxu0
    %v2688 = vadd.f32 %v2623, %v2687
    %v2689 = vpop.f32.mrb[0].mxu0
    %v2690 = vadd.f32 %v2619, %v2689
    %v2691 = vpop.f32.mrb[0].mxu0
    %v2692 = vadd.f32 %v2623, %v2691
    %2693 = vmatprep.mubr.bf16.mxu0 0
    %2694 = vmatmul.mubr.bf16.gmra.mrb[0].mxu0 %v2535
    %v2695 = vpop.f32.mrb[0].mxu0
    %v2696 = vadd.f32 %v2619, %v2695
    %v2697 = vpop.f32.mrb[0].mxu0
    %v2698 = vadd.f32 %v2623, %v2697
    %v2699 = vpop.f32.mrb[0].mxu0
    %v2700 = vadd.f32 %v2619, %v2699
    %v2701 = vpop.f32.mrb[0].mxu0
    %v2702 = vadd.f32 %v2623, %v2701
    %2703 = vmatprep.mubr.bf16.mxu0 0
    %2704 = vmatmul.mubr.bf16.gmra.mrb[0].mxu0 %v2536
    %v2705 = vpop.f32.mrb[0].mxu0
    %v2706 = vadd.f32 %v2619, %v2705
    %v2707 = vpop.f32.mrb[0].mxu0
    %v2708 = vadd.f32 %v2623, %v2707
    %v2709 = vpop.f32.mrb[0].mxu0
    %v2710 = vadd.f32 %v2619, %v2709
    %v2711 = vpop.f32.mrb[0].mxu0
    %v2712 = vadd.f32 %v2623, %v2711
    %2713 = vmatprep.mubr.bf16.mxu0 0
    %2714 = vmatmul.mubr.bf16.gmra.mrb[0].mxu0 %v2537
    %v2715 = vpop.f32.mrb[0].mxu0
    %v2716 = vadd.f32 %v2619, %v2715
    %v2717 = vpop.f32.mrb[0].mxu0
    %v2718 = vadd.f32 %v2623, %v2717
    %v2719 = vpop.f32.mrb[0].mxu0
    %v2720 = vadd.f32 %v2619, %v2719
    %v2721 = vpop.f32.mrb[0].mxu0
    %v2722 = vadd.f32 %v2623, %v2721
    %2723 = vmatprep.mubr.bf16.mxu0 0
    %2724 = vmatmul.mubr.bf16.gmra.mrb[0].mxu0 %v2538
    %v2725 = vpop.f32.mrb[0].mxu0
    %v2726 = vadd.f32 %v2619, %v2725
    %v2727 = vpop.f32.mrb[0].mxu0
    %v2728 = vadd.f32 %v2623, %v2727
    %v2729 = vpop.f32.mrb[0].mxu0
    %v2730 = vadd.f32 %v2619, %v2729
    %v2731 = vpop.f32.mrb[0].mxu0
    %v2732 = vadd.f32 %v2623, %v2731
    %2733 = vmatprep.mubr.bf16.mxu0 0
    %2734 = vmatmul.mubr.bf16.gmra.mrb[0].mxu0 %v2539
    %v2735 = vpop.f32.mrb[0].mxu0
    %v2736 = vadd.f32 %v2619, %v2735
    %v2737 = vpop.f32.mrb[0].mxu0
    %v2738 = vadd.f32 %v2623, %v2737
    %v2739 = vpop.f32.mrb[0].mxu0
    %v2740 = vadd.f32 %v2619, %v2739
    %v2741 = vpop.f32.mrb[0].mxu0
    %v2742 = vadd.f32 %v2623, %v2741
    %2743 = vdwg.mxu0
    %2744 = vmatprep.subr.bf16.mxu0 0
    %2745 = vmatpush1.bf16.msra.mxu0 %v2591
    %2746 = vmatprep.subr.bf16.mxu0 0
    %2747 = vmatpush1.bf16.msra.mxu0 %v2594
    %2748 = vmatprep.subr.bf16.mxu0 0
    %2749 = vmatpush1.bf16.msra.mxu0 %v2597
    %2750 = vmatprep.subr.bf16.mxu0 0
    %2751 = vmatpush1.bf16.msra.mxu0 %v2600
    %2752 = vmatprep.subr.bf16.mxu0 0
    %2753 = vmatpush1.bf16.msra.mxu0 %v2603
    %2754 = vmatprep.subr.bf16.mxu0 0
    %2755 = vmatpush1.bf16.msra.mxu0 %v2606
    %2756 = vmatprep.subr.bf16.mxu0 0
    %2757 = vmatpush1.bf16.msra.mxu0 %v2609
    %2758 = vmatprep.subr.bf16.mxu0 0
    %2759 = vmatpush1.bf16.msra.mxu0 %v2612
    %2760 = vmatprep.subr.bf16.mxu0 0
    %2761 = vmatpush1.bf16.msra.mxu0 0
    %2762 = vmatprep.subr.bf16.mxu0 0
    %2763 = vmatpush1.bf16.msra.mxu0 0
    %2764 = vmatprep.subr.bf16.mxu0 0
    %2765 = vmatpush1.bf16.msra.mxu0 0
    %2766 = vmatprep.subr.bf16.mxu0 0
    %2767 = vmatpush1.bf16.msra.mxu0 0
    %2768 = vmatprep.subr.bf16.mxu0 0
    %2769 = vmatpush1.bf16.msra.mxu0 0
    %2770 = vmatprep.subr.bf16.mxu0 0
    %2771 = vmatpush1.bf16.msra.mxu0 0
    %2772 = vmatprep.subr.bf16.mxu0 0
    %2773 = vmatpush1.bf16.msra.mxu0 0
    %2774 = vmatprep.subr.bf16.mxu0 0
    %2775 = vmatpush1.bf16.msra.mxu0 0
    %2776 = vmatprep.mubr.bf16.mxu0 0
    %2777 = vmatmul.mubr.bf16.gmra.mrb[0].mxu0 %v2532
    %v2778 = vpop.f32.mrb[0].mxu0
    %v2779 = vadd.f32 %v2627, %v2778
    %v2780 = vpop.f32.mrb[0].mxu0
    %v2781 = vpop.f32.mrb[0].mxu0
    %v2782 = vadd.f32 %v2627, %v2781
    %v2783 = vpop.f32.mrb[0].mxu0
    %2784 = vmatprep.mubr.bf16.mxu0 0
    %2785 = vmatmul.mubr.bf16.gmra.mrb[0].mxu0 %v2533
    %v2786 = vpop.f32.mrb[0].mxu0
    %v2787 = vadd.f32 %v2627, %v2786
    %v2788 = vpop.f32.mrb[0].mxu0
    %v2789 = vpop.f32.mrb[0].mxu0
    %v2790 = vadd.f32 %v2627, %v2789
    %v2791 = vpop.f32.mrb[0].mxu0
    %2792 = vmatprep.mubr.bf16.mxu0 0
    %2793 = vmatmul.mubr.bf16.gmra.mrb[0].mxu0 %v2534
    %v2794 = vpop.f32.mrb[0].mxu0
    %v2795 = vadd.f32 %v2627, %v2794
    %v2796 = vpop.f32.mrb[0].mxu0
    %v2797 = vpop.f32.mrb[0].mxu0
    %v2798 = vadd.f32 %v2627, %v2797
    %v2799 = vpop.f32.mrb[0].mxu0
    %2800 = vmatprep.mubr.bf16.mxu0 0
    %2801 = vmatmul.mubr.bf16.gmra.mrb[0].mxu0 %v2535
    %v2802 = vpop.f32.mrb[0].mxu0
    %v2803 = vadd.f32 %v2627, %v2802
    %v2804 = vpop.f32.mrb[0].mxu0
    %v2805 = vpop.f32.mrb[0].mxu0
    %v2806 = vadd.f32 %v2627, %v2805
    %v2807 = vpop.f32.mrb[0].mxu0
    %2808 = vmatprep.mubr.bf16.mxu0 0
    %2809 = vmatmul.mubr.bf16.gmra.mrb[0].mxu0 %v2536
    %v2810 = vpop.f32.mrb[0].mxu0
    %v2811 = vadd.f32 %v2627, %v2810
    %v2812 = vpop.f32.mrb[0].mxu0
    %v2813 = vpop.f32.mrb[0].mxu0
    %v2814 = vadd.f32 %v2627, %v2813
    %v2815 = vpop.f32.mrb[0].mxu0
    %2816 = vmatprep.mubr.bf16.mxu0 0
    %2817 = vmatmul.mubr.bf16.gmra.mrb[0].mxu0 %v2537
    %v2818 = vpop.f32.mrb[0].mxu0
    %v2819 = vadd.f32 %v2627, %v2818
    %v2820 = vpop.f32.mrb[0].mxu0
    %v2821 = vpop.f32.mrb[0].mxu0
    %v2822 = vadd.f32 %v2627, %v2821
    %v2823 = vpop.f32.mrb[0].mxu0
    %2824 = vmatprep.mubr.bf16.mxu0 0
    %2825 = vmatmul.mubr.bf16.gmra.mrb[0].mxu0 %v2538
    %v2826 = vpop.f32.mrb[0].mxu0
    %v2827 = vadd.f32 %v2627, %v2826
    %v2828 = vpop.f32.mrb[0].mxu0
    %v2829 = vpop.f32.mrb[0].mxu0
    %v2830 = vadd.f32 %v2627, %v2829
    %v2831 = vpop.f32.mrb[0].mxu0
    %2832 = vmatprep.mubr.bf16.mxu0 0
    %2833 = vmatmul.mubr.bf16.gmra.mrb[0].mxu0 %v2539
    %v2834 = vpop.f32.mrb[0].mxu0
    %v2835 = vadd.f32 %v2627, %v2834
    %v2836 = vpop.f32.mrb[0].mxu0
    %v2837 = vpop.f32.mrb[0].mxu0
    %v2838 = vadd.f32 %v2627, %v2837
    %v2839 = vpop.f32.mrb[0].mxu0
    %2840 = vdwg.mxu0
    %2841 = vst [vmem:[#allocation3] sm:$0xff] %v2666
    %2842 = vst [vmem:[#allocation3 + $0x8] sm:$0xff] %v2668
    %2843 = vst [vmem:[#allocation3 + $0x10] sm:$0xff] %v2779
    %2844 = vst [vmem:[#allocation3 + $0x18] sm:$0xff] %v2670
    %2845 = vst [vmem:[#allocation3 + $0x20] sm:$0xff] %v2672
    %2846 = vst [vmem:[#allocation3 + $0x28] sm:$0xff] %v2782
    %2847 = vst [vmem:[#allocation3 + $0x30] sm:$0xff] %v2676
    %2848 = vst [vmem:[#allocation3 + $0x38] sm:$0xff] %v2678
    %2849 = vst [vmem:[#allocation3 + $0x40] sm:$0xff] %v2787
    %2850 = vst [vmem:[#allocation3 + $0x48] sm:$0xff] %v2680
    %2851 = vst [vmem:[#allocation3 + $0x50] sm:$0xff] %v2682
    %2852 = vst [vmem:[#allocation3 + $0x58] sm:$0xff] %v2790
    %2853 = vst [vmem:[#allocation3 + $0x60] sm:$0xff] %v2686
    %2854 = vst [vmem:[#allocation3 + $0x68] sm:$0xff] %v2688
    %2855 = vst [vmem:[#allocation3 + $0x70] sm:$0xff] %v2795
    %2856 = vst [vmem:[#allocation3 + $0x78] sm:$0xff] %v2690
    %2857 = vst [vmem:[#allocation3 + $0x80] sm:$0xff] %v2692
    %2858 = vst [vmem:[#allocation3 + $0x88] sm:$0xff] %v2798
    %2859 = vst [vmem:[#allocation3 + $0x90] sm:$0xff] %v2696
    %2860 = vst [vmem:[#allocation3 + $0x98] sm:$0xff] %v2698
    %2861 = vst [vmem:[#allocation3 + $0xa0] sm:$0xff] %v2803
    %2862 = vst [vmem:[#allocation3 + $0xa8] sm:$0xff] %v2700
    %2863 = vst [vmem:[#allocation3 + $0xb0] sm:$0xff] %v2702
    %2864 = vst [vmem:[#allocation3 + $0xb8] sm:$0xff] %v2806
    %2865 = vst [vmem:[#allocation3 + $0xc0] sm:$0xff] %v2706
    %2866 = vst [vmem:[#allocation3 + $0xc8] sm:$0xff] %v2708
    %2867 = vst [vmem:[#allocation3 + $0xd0] sm:$0xff] %v2811
    %2868 = vst [vmem:[#allocation3 + $0xd8] sm:$0xff] %v2710
    %2869 = vst [vmem:[#allocation3 + $0xe0] sm:$0xff] %v2712
    %2870 = vst [vmem:[#allocation3 + $0xe8] sm:$0xff] %v2814
    %2871 = vst [vmem:[#allocation3 + $0xf0] sm:$0xff] %v2716
    %2872 = vst [vmem:[#allocation3 + $0xf8] sm:$0xff] %v2718
    %2873 = vst [vmem:[#allocation3 + $0x100] sm:$0xff] %v2819
    %2874 = vst [vmem:[#allocation3 + $0x108] sm:$0xff] %v2720
    %2875 = vst [vmem:[#allocation3 + $0x110] sm:$0xff] %v2722
    %2876 = vst [vmem:[#allocation3 + $0x118] sm:$0xff] %v2822
    %2877 = vst [vmem:[#allocation3 + $0x120] sm:$0xff] %v2726
    %2878 = vst [vmem:[#allocation3 + $0x128] sm:$0xff] %v2728
    %2879 = vst [vmem:[#allocation3 + $0x130] sm:$0xff] %v2827
    %2880 = vst [vmem:[#allocation3 + $0x138] sm:$0xff] %v2730
    %2881 = vst [vmem:[#allocation3 + $0x140] sm:$0xff] %v2732
    %2882 = vst [vmem:[#allocation3 + $0x148] sm:$0xff] %v2830
    %2883 = vst [vmem:[#allocation3 + $0x150] sm:$0xff] %v2736
    %2884 = vst [vmem:[#allocation3 + $0x158] sm:$0xff] %v2738
    %2885 = vst [vmem:[#allocation3 + $0x160] sm:$0xff] %v2835
    %2886 = vst [vmem:[#allocation3 + $0x168] sm:$0xff] %v2740
    %2887 = vst [vmem:[#allocation3 + $0x170] sm:$0xff] %v2742
    %2888 = vst [vmem:[#allocation3 + $0x178] sm:$0xff] %v2838
    %s2889 = scalar_lea.vmem [#allocation7], 384
    %v2890 = vld [vmem:[%s2889] sm:$0xff]
    %v2891 = vld [vmem:[%s2889 + $0x8] sm:$0xff]
    %v2892 = vld [vmem:[%s2889 + $0x10] sm:$0xff]
    %v2893 = vld [vmem:[%s2889 + $0x18] sm:$0xff]
    %v2894 = vld [vmem:[%s2889 + $0x20] sm:$0xff]
    %v2895 = vld [vmem:[%s2889 + $0x28] sm:$0xff]
    %v2896 = vld [vmem:[%s2889 + $0x30] sm:$0xff]
    %v2897 = vld [vmem:[%s2889 + $0x38] sm:$0xff]
    %v2898 = vld [vmem:[%s2889 + $0x40] sm:$0xff]
    %v2899 = vld [vmem:[%s2889 + $0x48] sm:$0xff]
    %v2900 = vld [vmem:[%s2889 + $0x50] sm:$0xff]
    %v2901 = vld [vmem:[%s2889 + $0x58] sm:$0xff]
    %v2902 = vld [vmem:[%s2889 + $0x60] sm:$0xff]
    %v2903 = vld [vmem:[%s2889 + $0x68] sm:$0xff]
    %v2904 = vld [vmem:[%s2889 + $0x70] sm:$0xff]
    %v2905 = vld [vmem:[%s2889 + $0x78] sm:$0xff]
    %v2906 = vld [vmem:[%s2889 + $0x80] sm:$0xff]
    %v2907 = vld [vmem:[%s2889 + $0x88] sm:$0xff]
    %v2908 = vld [vmem:[%s2889 + $0x90] sm:$0xff]
    %v2909 = vld [vmem:[%s2889 + $0x98] sm:$0xff]
    %v2910 = vld [vmem:[%s2889 + $0xa0] sm:$0xff]
    %v2911 = vld [vmem:[%s2889 + $0xa8] sm:$0xff]
    %v2912 = vld [vmem:[%s2889 + $0xb0] sm:$0xff]
    %v2913 = vld [vmem:[%s2889 + $0xb8] sm:$0xff]
    %v2914 = vld [vmem:[%s2889 + $0xc0] sm:$0xff]
    %v2915 = vld [vmem:[%s2889 + $0xc8] sm:$0xff]
    %v2916 = vld [vmem:[%s2889 + $0xd0] sm:$0xff]
    %v2917 = vld [vmem:[%s2889 + $0xd8] sm:$0xff]
    %v2918 = vld [vmem:[%s2889 + $0xe0] sm:$0xff]
    %v2919 = vld [vmem:[%s2889 + $0xe8] sm:$0xff]
    %v2920 = vld [vmem:[%s2889 + $0xf0] sm:$0xff]
    %v2921 = vld [vmem:[%s2889 + $0xf8] sm:$0xff]
    %v2922 = vld [vmem:[%s2889 + $0x100] sm:$0xff]
    %v2923 = vld [vmem:[%s2889 + $0x108] sm:$0xff]
    %v2924 = vld [vmem:[%s2889 + $0x110] sm:$0xff]
    %v2925 = vld [vmem:[%s2889 + $0x118] sm:$0xff]
    %v2926 = vld [vmem:[%s2889 + $0x120] sm:$0xff]
    %v2927 = vld [vmem:[%s2889 + $0x128] sm:$0xff]
    %v2928 = vld [vmem:[%s2889 + $0x130] sm:$0xff]
    %v2929 = vld [vmem:[%s2889 + $0x138] sm:$0xff]
    %v2930 = vld [vmem:[%s2889 + $0x140] sm:$0xff]
    %v2931 = vld [vmem:[%s2889 + $0x148] sm:$0xff]
    %v2932 = vld [vmem:[%s2889 + $0x150] sm:$0xff]
    %v2933 = vld [vmem:[%s2889 + $0x158] sm:$0xff]
    %v2934 = vld [vmem:[%s2889 + $0x160] sm:$0xff]
    %v2935 = vld [vmem:[%s2889 + $0x168] sm:$0xff]
    %v2936 = vld [vmem:[%s2889 + $0x170] sm:$0xff]
    %v2937 = vld [vmem:[%s2889 + $0x178] sm:$0xff]
    %s2938 = scalar_lea.vmem %s8, 3
    %v2939 = vld [vmem:[%s2938] sm:$0x7]
    %s2940 = scalar_lea.vmem %s3, 16
    %v2941 = vld [vmem:[%s2940] sm:$0xff]
    %v2942 = vld [vmem:[%s2940 + $0x8] sm:$0xff]
    %v2943 = vld [vmem:[#allocation3] sm:$0xff]
    %v2944 = vld [vmem:[#allocation3 + $0x8] sm:$0xff]
    %v2945 = vld [vmem:[#allocation3 + $0x10] sm:$0xff]
    %v2946 = vld [vmem:[#allocation3 + $0x18] sm:$0xff]
    %v2947 = vld [vmem:[#allocation3 + $0x20] sm:$0xff]
    %v2948 = vld [vmem:[#allocation3 + $0x28] sm:$0xff]
    %v2950 = vlaneseq
    %v2951 = vshrl.u32 %v2950, 7
    %v2952 = vsub.s32 0, %v2951
    %v2953 = vrot.slane %v2939, %v2952
    %v2954 = vlaneseq
    %v2955 = vshrl.u32 %v2954, 7
    %v2956 = vsub.s32 1, %v2955
    %v2957 = vrot.slane %v2939, %v2956
    %v2958 = vlaneseq
    %v2959 = vshrl.u32 %v2958, 7
    %v2960 = vsub.s32 2, %v2959
    %v2961 = vrot.slane %v2939, %v2960
    %2965 = vmatprep.subr.mxu0 %v2891
    %2966 = vmatpush1.msra.mxu0 %v2890
    %2967 = vmatprep.subr.mxu0 %v2894
    %2968 = vmatpush1.msra.mxu0 %v2893
    %2969 = vmatprep.subr.mxu0 %v2897
    %2970 = vmatpush1.msra.mxu0 %v2896
    %2971 = vmatprep.subr.mxu0 %v2900
    %2972 = vmatpush1.msra.mxu0 %v2899
    %2973 = vmatprep.subr.mxu0 %v2903
    %2974 = vmatpush1.msra.mxu0 %v2902
    %2975 = vmatprep.subr.mxu0 %v2906
    %2976 = vmatpush1.msra.mxu0 %v2905
    %2977 = vmatprep.subr.mxu0 %v2909
    %2978 = vmatpush1.msra.mxu0 %v2908
    %2979 = vmatprep.subr.mxu0 %v2912
    %2980 = vmatpush1.msra.mxu0 %v2911
    %2981 = vmatprep.subr.mxu0 %v2915
    %2982 = vmatpush1.msra.mxu0 %v2914
    %2983 = vmatprep.subr.mxu0 %v2918
    %2984 = vmatpush1.msra.mxu0 %v2917
    %2985 = vmatprep.subr.mxu0 %v2921
    %2986 = vmatpush1.msra.mxu0 %v2920
    %2987 = vmatprep.subr.mxu0 %v2924
    %2988 = vmatpush1.msra.mxu0 %v2923
    %2989 = vmatprep.subr.mxu0 %v2927
    %2990 = vmatpush1.msra.mxu0 %v2926
    %2991 = vmatprep.subr.mxu0 %v2930
    %2992 = vmatpush1.msra.mxu0 %v2929
    %2993 = vmatprep.subr.mxu0 %v2933
    %2994 = vmatpush1.msra.mxu0 %v2932
    %2995 = vmatprep.subr.mxu0 %v2936
    %2996 = vmatpush1.msra.mxu0 %v2935
    %2997 = vmatprep.subr.mxu0 0.0
    %2998 = vmatpush1.msra.mxu0 0.0
    %2999 = vmatprep.subr.mxu0 0.0
    %3000 = vmatpush1.msra.mxu0 0.0
    %3001 = vmatprep.subr.mxu0 0.0
    %3002 = vmatpush1.msra.mxu0 0.0
    %3003 = vmatprep.subr.mxu0 0.0
    %3004 = vmatpush1.msra.mxu0 0.0
    %3005 = vmatprep.subr.mxu0 0.0
    %3006 = vmatpush1.msra.mxu0 0.0
    %3007 = vmatprep.subr.mxu0 0.0
    %3008 = vmatpush1.msra.mxu0 0.0
    %3009 = vmatprep.subr.mxu0 0.0
    %3010 = vmatpush1.msra.mxu0 0.0
    %3011 = vmatprep.subr.mxu0 0.0
    %3012 = vmatpush1.msra.mxu0 0.0
    %3013 = vmatprep.subr.mxu0 0.0
    %3014 = vmatpush1.msra.mxu0 0.0
    %3015 = vmatprep.subr.mxu0 0.0
    %3016 = vmatpush1.msra.mxu0 0.0
    %3017 = vmatprep.subr.mxu0 0.0
    %3018 = vmatpush1.msra.mxu0 0.0
    %3019 = vmatprep.subr.mxu0 0.0
    %3020 = vmatpush1.msra.mxu0 0.0
    %3021 = vmatprep.subr.mxu0 0.0
    %3022 = vmatpush1.msra.mxu0 0.0
    %3023 = vmatprep.subr.mxu0 0.0
    %3024 = vmatpush1.msra.mxu0 0.0
    %3025 = vmatprep.subr.mxu0 0.0
    %3026 = vmatpush1.msra.mxu0 0.0
    %3027 = vmatprep.subr.mxu0 0.0
    %3028 = vmatpush1.msra.mxu0 0.0
    %3029 = vmatprep.mubr.f32.mxu0 0.0
    %3030 = vmatmul.mubr.f32.gmra.mrb[0].mxu0 %v2941
    %v3031 = vpop.f32.mrb[0].mxu0
    %v3032 = vadd.f32 %v2953, %v3031
    %v3033 = vpop.f32.mrb[0].mxu0
    %v3034 = vadd.f32 %v2957, %v3033
    %3035 = vmatprep.mubr.f32.mxu0 0.0
    %3036 = vmatmul.mubr.f32.gmra.mrb[0].mxu0 %v2942
    %v3037 = vpop.f32.mrb[0].mxu0
    %v3038 = vadd.f32 %v2953, %v3037
    %v3039 = vpop.f32.mrb[0].mxu0
    %v3040 = vadd.f32 %v2957, %v3039
    %3041 = vdwg.mxu0
    %3042 = vmatprep.subr.mxu0 0.0
    %3043 = vmatpush1.msra.mxu0 %v2892
    %3044 = vmatprep.subr.mxu0 0.0
    %3045 = vmatpush1.msra.mxu0 %v2895
    %3046 = vmatprep.subr.mxu0 0.0
    %3047 = vmatpush1.msra.mxu0 %v2898
    %3048 = vmatprep.subr.mxu0 0.0
    %3049 = vmatpush1.msra.mxu0 %v2901
    %3050 = vmatprep.subr.mxu0 0.0
    %3051 = vmatpush1.msra.mxu0 %v2904
    %3052 = vmatprep.subr.mxu0 0.0
    %3053 = vmatpush1.msra.mxu0 %v2907
    %3054 = vmatprep.subr.mxu0 0.0
    %3055 = vmatpush1.msra.mxu0 %v2910
    %3056 = vmatprep.subr.mxu0 0.0
    %3057 = vmatpush1.msra.mxu0 %v2913
    %3058 = vmatprep.subr.mxu0 0.0
    %3059 = vmatpush1.msra.mxu0 %v2916
    %3060 = vmatprep.subr.mxu0 0.0
    %3061 = vmatpush1.msra.mxu0 %v2919
    %3062 = vmatprep.subr.mxu0 0.0
    %3063 = vmatpush1.msra.mxu0 %v2922
    %3064 = vmatprep.subr.mxu0 0.0
    %3065 = vmatpush1.msra.mxu0 %v2925
    %3066 = vmatprep.subr.mxu0 0.0
    %3067 = vmatpush1.msra.mxu0 %v2928
    %3068 = vmatprep.subr.mxu0 0.0
    %3069 = vmatpush1.msra.mxu0 %v2931
    %3070 = vmatprep.subr.mxu0 0.0
    %3071 = vmatpush1.msra.mxu0 %v2934
    %3072 = vmatprep.subr.mxu0 0.0
    %3073 = vmatpush1.msra.mxu0 %v2937
    %3074 = vmatprep.subr.mxu0 0.0
    %3075 = vmatpush1.msra.mxu0 0.0
    %3076 = vmatprep.subr.mxu0 0.0
    %3077 = vmatpush1.msra.mxu0 0.0
    %3078 = vmatprep.subr.mxu0 0.0
    %3079 = vmatpush1.msra.mxu0 0.0
    %3080 = vmatprep.subr.mxu0 0.0
    %3081 = vmatpush1.msra.mxu0 0.0
    %3082 = vmatprep.subr.mxu0 0.0
    %3083 = vmatpush1.msra.mxu0 0.0
    %3084 = vmatprep.subr.mxu0 0.0
    %3085 = vmatpush1.msra.mxu0 0.0
    %3086 = vmatprep.subr.mxu0 0.0
    %3087 = vmatpush1.msra.mxu0 0.0
    %3088 = vmatprep.subr.mxu0 0.0
    %3089 = vmatpush1.msra.mxu0 0.0
    %3090 = vmatprep.subr.mxu0 0.0
    %3091 = vmatpush1.msra.mxu0 0.0
    %3092 = vmatprep.subr.mxu0 0.0
    %3093 = vmatpush1.msra.mxu0 0.0
    %3094 = vmatprep.subr.mxu0 0.0
    %3095 = vmatpush1.msra.mxu0 0.0
    %3096 = vmatprep.subr.mxu0 0.0
    %3097 = vmatpush1.msra.mxu0 0.0
    %3098 = vmatprep.subr.mxu0 0.0
    %3099 = vmatpush1.msra.mxu0 0.0
    %3100 = vmatprep.subr.mxu0 0.0
    %3101 = vmatpush1.msra.mxu0 0.0
    %3102 = vmatprep.subr.mxu0 0.0
    %3103 = vmatpush1.msra.mxu0 0.0
    %3104 = vmatprep.subr.mxu0 0.0
    %3105 = vmatpush1.msra.mxu0 0.0
    %3106 = vmatprep.mubr.f32.mxu0 0.0
    %3107 = vmatmul.mubr.f32.gmra.mrb[0].mxu0 %v2941
    %v3108 = vpop.f32.mrb[0].mxu0
    %v3109 = vadd.f32 %v2961, %v3108
    %v3110 = vpop.f32.mrb[0].mxu0
    %3111 = vmatprep.mubr.f32.mxu0 0.0
    %3112 = vmatmul.mubr.f32.gmra.mrb[0].mxu0 %v2942
    %v3113 = vpop.f32.mrb[0].mxu0
    %v3114 = vadd.f32 %v2961, %v3113
    %v3115 = vpop.f32.mrb[0].mxu0
    %3116 = vdwg.mxu0
    %v3117 = vadd.f32 %v2943, %v3032
    %v3118 = vadd.f32 %v2946, %v3038
    %v3119 = vxor.u32 %v3117, 2147483648
    %v3120 = vxor.u32 %v3118, 2147483648
    %v3121 = vmul.f32 %v3119, 1.442695
    %v3122 = vpow.pop %v3121
    %v3123 = vmul.f32 %v3120, 1.442695
    %v3124 = vpow.pop %v3123
    %v3125 = vadd.f32 %v3122, 1.0
    %v3126 = vadd.f32 %v3124, 1.0
    %v3127 = vrcp.pop %v3125
    %v3128 = vmul.f32 1.0, %v3127
    %v3129 = vrcp.pop %v3126
    %v3130 = vmul.f32 1.0, %v3129
    %v3131 = vadd.f32 %v2944, %v3034
    %v3132 = vadd.f32 %v2947, %v3040
    %v3133 = vxor.u32 %v3131, 2147483648
    %v3134 = vxor.u32 %v3132, 2147483648
    %v3135 = vmul.f32 %v3133, 1.442695
    %v3136 = vpow.pop %v3135
    %v3137 = vmul.f32 %v3134, 1.442695
    %v3138 = vpow.pop %v3137
    %v3139 = vadd.f32 %v3136, 1.0
    %v3140 = vadd.f32 %v3138, 1.0
    %v3141 = vrcp.pop %v3139
    %v3142 = vmul.f32 1.0, %v3141
    %v3143 = vrcp.pop %v3140
    %v3144 = vmul.f32 1.0, %v3143
    %v3145 = vmul.f32 %v3128, %v3109
    %v3146 = vmul.f32 %v3130, %v3114
    %v3147 = vadd.f32 %v2945, %v3145
    %v3148 = vadd.f32 %v2948, %v3146
    %v3149 = vtanh.pop %v3147
    %v3150 = vtanh.pop %v3148
    %v3151 = vsub.f32 1.0, %v3142
    %v3152 = vsub.f32 1.0, %v3144
    %v3153 = vmul.f32 %v3151, %v3149
    %v3154 = vmul.f32 %v3152, %v3150
    %v3155 = vmul.f32 %v3142, %v2941
    %v3156 = vmul.f32 %v3144, %v2942
    %v3157 = vadd.f32 %v3153, %v3155
    %v3158 = vadd.f32 %v3154, %v3156
    %3159 = vst [vmem:[#allocation2] sm:$0xff] %v3157
    %3160 = vst [vmem:[#allocation2 + $0x8] sm:$0xff] %v3158
    %v3161 = vld [vmem:[#allocation3 + $0x30] sm:$0xff]
    %v3162 = vld [vmem:[#allocation3 + $0x38] sm:$0xff]
    %v3163 = vld [vmem:[#allocation3 + $0x40] sm:$0xff]
    %v3164 = vld [vmem:[#allocation3 + $0x48] sm:$0xff]
    %v3165 = vld [vmem:[#allocation3 + $0x50] sm:$0xff]
    %v3166 = vld [vmem:[#allocation3 + $0x58] sm:$0xff]
    %3167 = vmatprep.subr.mxu0 %v2891
    %3168 = vmatpush1.msra.mxu0 %v2890
    %3169 = vmatprep.subr.mxu0 %v2894
    %3170 = vmatpush1.msra.mxu0 %v2893
    %3171 = vmatprep.subr.mxu0 %v2897
    %3172 = vmatpush1.msra.mxu0 %v2896
    %3173 = vmatprep.subr.mxu0 %v2900
    %3174 = vmatpush1.msra.mxu0 %v2899
    %3175 = vmatprep.subr.mxu0 %v2903
    %3176 = vmatpush1.msra.mxu0 %v2902
    %3177 = vmatprep.subr.mxu0 %v2906
    %3178 = vmatpush1.msra.mxu0 %v2905
    %3179 = vmatprep.subr.mxu0 %v2909
    %3180 = vmatpush1.msra.mxu0 %v2908
    %3181 = vmatprep.subr.mxu0 %v2912
    %3182 = vmatpush1.msra.mxu0 %v2911
    %3183 = vmatprep.subr.mxu0 %v2915
    %3184 = vmatpush1.msra.mxu0 %v2914
    %3185 = vmatprep.subr.mxu0 %v2918
    %3186 = vmatpush1.msra.mxu0 %v2917
    %3187 = vmatprep.subr.mxu0 %v2921
    %3188 = vmatpush1.msra.mxu0 %v2920
    %3189 = vmatprep.subr.mxu0 %v2924
    %3190 = vmatpush1.msra.mxu0 %v2923
    %3191 = vmatprep.subr.mxu0 %v2927
    %3192 = vmatpush1.msra.mxu0 %v2926
    %3193 = vmatprep.subr.mxu0 %v2930
    %3194 = vmatpush1.msra.mxu0 %v2929
    %3195 = vmatprep.subr.mxu0 %v2933
    %3196 = vmatpush1.msra.mxu0 %v2932
    %3197 = vmatprep.subr.mxu0 %v2936
    %3198 = vmatpush1.msra.mxu0 %v2935
    %3199 = vmatprep.subr.mxu0 0.0
    %3200 = vmatpush1.msra.mxu0 0.0
    %3201 = vmatprep.subr.mxu0 0.0
    %3202 = vmatpush1.msra.mxu0 0.0
    %3203 = vmatprep.subr.mxu0 0.0
    %3204 = vmatpush1.msra.mxu0 0.0
    %3205 = vmatprep.subr.mxu0 0.0
    %3206 = vmatpush1.msra.mxu0 0.0
    %3207 = vmatprep.subr.mxu0 0.0
    %3208 = vmatpush1.msra.mxu0 0.0
    %3209 = vmatprep.subr.mxu0 0.0
    %3210 = vmatpush1.msra.mxu0 0.0
    %3211 = vmatprep.subr.mxu0 0.0
    %3212 = vmatpush1.msra.mxu0 0.0
    %3213 = vmatprep.subr.mxu0 0.0
    %3214 = vmatpush1.msra.mxu0 0.0
    %3215 = vmatprep.subr.mxu0 0.0
    %3216 = vmatpush1.msra.mxu0 0.0
    %3217 = vmatprep.subr.mxu0 0.0
    %3218 = vmatpush1.msra.mxu0 0.0
    %3219 = vmatprep.subr.mxu0 0.0
    %3220 = vmatpush1.msra.mxu0 0.0
    %3221 = vmatprep.subr.mxu0 0.0
    %3222 = vmatpush1.msra.mxu0 0.0
    %3223 = vmatprep.subr.mxu0 0.0
    %3224 = vmatpush1.msra.mxu0 0.0
    %3225 = vmatprep.subr.mxu0 0.0
    %3226 = vmatpush1.msra.mxu0 0.0
    %3227 = vmatprep.subr.mxu0 0.0
    %3228 = vmatpush1.msra.mxu0 0.0
    %3229 = vmatprep.subr.mxu0 0.0
    %3230 = vmatpush1.msra.mxu0 0.0
    %3231 = vmatprep.mubr.f32.mxu0 0.0
    %3232 = vmatmul.mubr.f32.gmra.mrb[0].mxu0 %v3157
    %v3233 = vpop.f32.mrb[0].mxu0
    %v3234 = vadd.f32 %v2953, %v3233
    %v3235 = vpop.f32.mrb[0].mxu0
    %v3236 = vadd.f32 %v2957, %v3235
    %3237 = vmatprep.mubr.f32.mxu0 0.0
    %3238 = vmatmul.mubr.f32.gmra.mrb[0].mxu0 %v3158
    %v3239 = vpop.f32.mrb[0].mxu0
    %v3240 = vadd.f32 %v2953, %v3239
    %v3241 = vpop.f32.mrb[0].mxu0
    %v3242 = vadd.f32 %v2957, %v3241
    %3243 = vdwg.mxu0
    %3244 = vmatprep.subr.mxu0 0.0
    %3245 = vmatpush1.msra.mxu0 %v2892
    %3246 = vmatprep.subr.mxu0 0.0
    %3247 = vmatpush1.msra.mxu0 %v2895
    %3248 = vmatprep.subr.mxu0 0.0
    %3249 = vmatpush1.msra.mxu0 %v2898
    %3250 = vmatprep.subr.mxu0 0.0
    %3251 = vmatpush1.msra.mxu0 %v2901
    %3252 = vmatprep.subr.mxu0 0.0
    %3253 = vmatpush1.msra.mxu0 %v2904
    %3254 = vmatprep.subr.mxu0 0.0
    %3255 = vmatpush1.msra.mxu0 %v2907
    %3256 = vmatprep.subr.mxu0 0.0
    %3257 = vmatpush1.msra.mxu0 %v2910
    %3258 = vmatprep.subr.mxu0 0.0
    %3259 = vmatpush1.msra.mxu0 %v2913
    %3260 = vmatprep.subr.mxu0 0.0
    %3261 = vmatpush1.msra.mxu0 %v2916
    %3262 = vmatprep.subr.mxu0 0.0
    %3263 = vmatpush1.msra.mxu0 %v2919
    %3264 = vmatprep.subr.mxu0 0.0
    %3265 = vmatpush1.msra.mxu0 %v2922
    %3266 = vmatprep.subr.mxu0 0.0
    %3267 = vmatpush1.msra.mxu0 %v2925
    %3268 = vmatprep.subr.mxu0 0.0
    %3269 = vmatpush1.msra.mxu0 %v2928
    %3270 = vmatprep.subr.mxu0 0.0
    %3271 = vmatpush1.msra.mxu0 %v2931
    %3272 = vmatprep.subr.mxu0 0.0
    %3273 = vmatpush1.msra.mxu0 %v2934
    %3274 = vmatprep.subr.mxu0 0.0
    %3275 = vmatpush1.msra.mxu0 %v2937
    %3276 = vmatprep.subr.mxu0 0.0
    %3277 = vmatpush1.msra.mxu0 0.0
    %3278 = vmatprep.subr.mxu0 0.0
    %3279 = vmatpush1.msra.mxu0 0.0
    %3280 = vmatprep.subr.mxu0 0.0
    %3281 = vmatpush1.msra.mxu0 0.0
    %3282 = vmatprep.subr.mxu0 0.0
    %3283 = vmatpush1.msra.mxu0 0.0
    %3284 = vmatprep.subr.mxu0 0.0
    %3285 = vmatpush1.msra.mxu0 0.0
    %3286 = vmatprep.subr.mxu0 0.0
    %3287 = vmatpush1.msra.mxu0 0.0
    %3288 = vmatprep.subr.mxu0 0.0
    %3289 = vmatpush1.msra.mxu0 0.0
    %3290 = vmatprep.subr.mxu0 0.0
    %3291 = vmatpush1.msra.mxu0 0.0
    %3292 = vmatprep.subr.mxu0 0.0
    %3293 = vmatpush1.msra.mxu0 0.0
    %3294 = vmatprep.subr.mxu0 0.0
    %3295 = vmatpush1.msra.mxu0 0.0
    %3296 = vmatprep.subr.mxu0 0.0
    %3297 = vmatpush1.msra.mxu0 0.0
    %3298 = vmatprep.subr.mxu0 0.0
    %3299 = vmatpush1.msra.mxu0 0.0
    %3300 = vmatprep.subr.mxu0 0.0
    %3301 = vmatpush1.msra.mxu0 0.0
    %3302 = vmatprep.subr.mxu0 0.0
    %3303 = vmatpush1.msra.mxu0 0.0
    %3304 = vmatprep.subr.mxu0 0.0
    %3305 = vmatpush1.msra.mxu0 0.0
    %3306 = vmatprep.subr.mxu0 0.0
    %3307 = vmatpush1.msra.mxu0 0.0
    %3308 = vmatprep.mubr.f32.mxu0 0.0
    %3309 = vmatmul.mubr.f32.gmra.mrb[0].mxu0 %v3157
    %v3310 = vpop.f32.mrb[0].mxu0
    %v3311 = vadd.f32 %v2961, %v3310
    %v3312 = vpop.f32.mrb[0].mxu0
    %3313 = vmatprep.mubr.f32.mxu0 0.0
    %3314 = vmatmul.mubr.f32.gmra.mrb[0].mxu0 %v3158
    %v3315 = vpop.f32.mrb[0].mxu0
    %v3316 = vadd.f32 %v2961, %v3315
    %v3317 = vpop.f32.mrb[0].mxu0
    %3318 = vdwg.mxu0
    %v3319 = vadd.f32 %v3161, %v3234
    %v3320 = vadd.f32 %v3164, %v3240
    %v3321 = vxor.u32 %v3319, 2147483648
    %v3322 = vxor.u32 %v3320, 2147483648
    %v3323 = vmul.f32 %v3321, 1.442695
    %v3324 = vpow.pop %v3323
    %v3325 = vmul.f32 %v3322, 1.442695
    %v3326 = vpow.pop %v3325
    %v3327 = vadd.f32 %v3324, 1.0
    %v3328 = vadd.f32 %v3326, 1.0
    %v3329 = vrcp.pop %v3327
    %v3330 = vmul.f32 1.0, %v3329
    %v3331 = vrcp.pop %v3328
    %v3332 = vmul.f32 1.0, %v3331
    %v3333 = vadd.f32 %v3162, %v3236
    %v3334 = vadd.f32 %v3165, %v3242
    %v3335 = vxor.u32 %v3333, 2147483648
    %v3336 = vxor.u32 %v3334, 2147483648
    %v3337 = vmul.f32 %v3335, 1.442695
    %v3338 = vpow.pop %v3337
    %v3339 = vmul.f32 %v3336, 1.442695
    %v3340 = vpow.pop %v3339
    %v3341 = vadd.f32 %v3338, 1.0
    %v3342 = vadd.f32 %v3340, 1.0
    %v3343 = vrcp.pop %v3341
    %v3344 = vmul.f32 1.0, %v3343
    %v3345 = vrcp.pop %v3342
    %v3346 = vmul.f32 1.0, %v3345
    %v3347 = vmul.f32 %v3330, %v3311
    %v3348 = vmul.f32 %v3332, %v3316
    %v3349 = vadd.f32 %v3163, %v3347
    %v3350 = vadd.f32 %v3166, %v3348
    %v3351 = vtanh.pop %v3349
    %v3352 = vtanh.pop %v3350
    %v3353 = vsub.f32 1.0, %v3344
    %v3354 = vsub.f32 1.0, %v3346
    %v3355 = vmul.f32 %v3353, %v3351
    %v3356 = vmul.f32 %v3354, %v3352
    %v3357 = vmul.f32 %v3344, %v3157
    %v3358 = vmul.f32 %v3346, %v3158
    %v3359 = vadd.f32 %v3355, %v3357
    %v3360 = vadd.f32 %v3356, %v3358
    %3361 = vst [vmem:[#allocation2 + $0x10] sm:$0xff] %v3359
    %3362 = vst [vmem:[#allocation2 + $0x18] sm:$0xff] %v3360
    %v3363 = vld [vmem:[#allocation3 + $0x60] sm:$0xff]
    %v3364 = vld [vmem:[#allocation3 + $0x68] sm:$0xff]
    %v3365 = vld [vmem:[#allocation3 + $0x70] sm:$0xff]
    %v3366 = vld [vmem:[#allocation3 + $0x78] sm:$0xff]
    %v3367 = vld [vmem:[#allocation3 + $0x80] sm:$0xff]
    %v3368 = vld [vmem:[#allocation3 + $0x88] sm:$0xff]
    %3369 = vmatprep.subr.mxu0 %v2891
    %3370 = vmatpush1.msra.mxu0 %v2890
    %3371 = vmatprep.subr.mxu0 %v2894
    %3372 = vmatpush1.msra.mxu0 %v2893
    %3373 = vmatprep.subr.mxu0 %v2897
    %3374 = vmatpush1.msra.mxu0 %v2896
    %3375 = vmatprep.subr.mxu0 %v2900
    %3376 = vmatpush1.msra.mxu0 %v2899
    %3377 = vmatprep.subr.mxu0 %v2903
    %3378 = vmatpush1.msra.mxu0 %v2902
    %3379 = vmatprep.subr.mxu0 %v2906
    %3380 = vmatpush1.msra.mxu0 %v2905
    %3381 = vmatprep.subr.mxu0 %v2909
    %3382 = vmatpush1.msra.mxu0 %v2908
    %3383 = vmatprep.subr.mxu0 %v2912
    %3384 = vmatpush1.msra.mxu0 %v2911
    %3385 = vmatprep.subr.mxu0 %v2915
    %3386 = vmatpush1.msra.mxu0 %v2914
    %3387 = vmatprep.subr.mxu0 %v2918
    %3388 = vmatpush1.msra.mxu0 %v2917
    %3389 = vmatprep.subr.mxu0 %v2921
    %3390 = vmatpush1.msra.mxu0 %v2920
    %3391 = vmatprep.subr.mxu0 %v2924
    %3392 = vmatpush1.msra.mxu0 %v2923
    %3393 = vmatprep.subr.mxu0 %v2927
    %3394 = vmatpush1.msra.mxu0 %v2926
    %3395 = vmatprep.subr.mxu0 %v2930
    %3396 = vmatpush1.msra.mxu0 %v2929
    %3397 = vmatprep.subr.mxu0 %v2933
    %3398 = vmatpush1.msra.mxu0 %v2932
    %3399 = vmatprep.subr.mxu0 %v2936
    %3400 = vmatpush1.msra.mxu0 %v2935
    %3401 = vmatprep.subr.mxu0 0.0
    %3402 = vmatpush1.msra.mxu0 0.0
    %3403 = vmatprep.subr.mxu0 0.0
    %3404 = vmatpush1.msra.mxu0 0.0
    %3405 = vmatprep.subr.mxu0 0.0
    %3406 = vmatpush1.msra.mxu0 0.0
    %3407 = vmatprep.subr.mxu0 0.0
    %3408 = vmatpush1.msra.mxu0 0.0
    %3409 = vmatprep.subr.mxu0 0.0
    %3410 = vmatpush1.msra.mxu0 0.0
    %3411 = vmatprep.subr.mxu0 0.0
    %3412 = vmatpush1.msra.mxu0 0.0
    %3413 = vmatprep.subr.mxu0 0.0
    %3414 = vmatpush1.msra.mxu0 0.0
    %3415 = vmatprep.subr.mxu0 0.0
    %3416 = vmatpush1.msra.mxu0 0.0
    %3417 = vmatprep.subr.mxu0 0.0
    %3418 = vmatpush1.msra.mxu0 0.0
    %3419 = vmatprep.subr.mxu0 0.0
    %3420 = vmatpush1.msra.mxu0 0.0
    %3421 = vmatprep.subr.mxu0 0.0
    %3422 = vmatpush1.msra.mxu0 0.0
    %3423 = vmatprep.subr.mxu0 0.0
    %3424 = vmatpush1.msra.mxu0 0.0
    %3425 = vmatprep.subr.mxu0 0.0
    %3426 = vmatpush1.msra.mxu0 0.0
    %3427 = vmatprep.subr.mxu0 0.0
    %3428 = vmatpush1.msra.mxu0 0.0
    %3429 = vmatprep.subr.mxu0 0.0
    %3430 = vmatpush1.msra.mxu0 0.0
    %3431 = vmatprep.subr.mxu0 0.0
    %3432 = vmatpush1.msra.mxu0 0.0
    %3433 = vmatprep.mubr.f32.mxu0 0.0
    %3434 = vmatmul.mubr.f32.gmra.mrb[0].mxu0 %v3359
    %v3435 = vpop.f32.mrb[0].mxu0
    %v3436 = vadd.f32 %v2953, %v3435
    %v3437 = vpop.f32.mrb[0].mxu0
    %v3438 = vadd.f32 %v2957, %v3437
    %3439 = vmatprep.mubr.f32.mxu0 0.0
    %3440 = vmatmul.mubr.f32.gmra.mrb[0].mxu0 %v3360
    %v3441 = vpop.f32.mrb[0].mxu0
    %v3442 = vadd.f32 %v2953, %v3441
    %v3443 = vpop.f32.mrb[0].mxu0
    %v3444 = vadd.f32 %v2957, %v3443
    %3445 = vdwg.mxu0
    %3446 = vmatprep.subr.mxu0 0.0
    %3447 = vmatpush1.msra.mxu0 %v2892
    %3448 = vmatprep.subr.mxu0 0.0
    %3449 = vmatpush1.msra.mxu0 %v2895
    %3450 = vmatprep.subr.mxu0 0.0
    %3451 = vmatpush1.msra.mxu0 %v2898
    %3452 = vmatprep.subr.mxu0 0.0
    %3453 = vmatpush1.msra.mxu0 %v2901
    %3454 = vmatprep.subr.mxu0 0.0
    %3455 = vmatpush1.msra.mxu0 %v2904
    %3456 = vmatprep.subr.mxu0 0.0
    %3457 = vmatpush1.msra.mxu0 %v2907
    %3458 = vmatprep.subr.mxu0 0.0
    %3459 = vmatpush1.msra.mxu0 %v2910
    %3460 = vmatprep.subr.mxu0 0.0
    %3461 = vmatpush1.msra.mxu0 %v2913
    %3462 = vmatprep.subr.mxu0 0.0
    %3463 = vmatpush1.msra.mxu0 %v2916
    %3464 = vmatprep.subr.mxu0 0.0
    %3465 = vmatpush1.msra.mxu0 %v2919
    %3466 = vmatprep.subr.mxu0 0.0
    %3467 = vmatpush1.msra.mxu0 %v2922
    %3468 = vmatprep.subr.mxu0 0.0
    %3469 = vmatpush1.msra.mxu0 %v2925
    %3470 = vmatprep.subr.mxu0 0.0
    %3471 = vmatpush1.msra.mxu0 %v2928
    %3472 = vmatprep.subr.mxu0 0.0
    %3473 = vmatpush1.msra.mxu0 %v2931
    %3474 = vmatprep.subr.mxu0 0.0
    %3475 = vmatpush1.msra.mxu0 %v2934
    %3476 = vmatprep.subr.mxu0 0.0
    %3477 = vmatpush1.msra.mxu0 %v2937
    %3478 = vmatprep.subr.mxu0 0.0
    %3479 = vmatpush1.msra.mxu0 0.0
    %3480 = vmatprep.subr.mxu0 0.0
    %3481 = vmatpush1.msra.mxu0 0.0
    %3482 = vmatprep.subr.mxu0 0.0
    %3483 = vmatpush1.msra.mxu0 0.0
    %3484 = vmatprep.subr.mxu0 0.0
    %3485 = vmatpush1.msra.mxu0 0.0
    %3486 = vmatprep.subr.mxu0 0.0
    %3487 = vmatpush1.msra.mxu0 0.0
    %3488 = vmatprep.subr.mxu0 0.0
    %3489 = vmatpush1.msra.mxu0 0.0
    %3490 = vmatprep.subr.mxu0 0.0
    %3491 = vmatpush1.msra.mxu0 0.0
    %3492 = vmatprep.subr.mxu0 0.0
    %3493 = vmatpush1.msra.mxu0 0.0
    %3494 = vmatprep.subr.mxu0 0.0
    %3495 = vmatpush1.msra.mxu0 0.0
    %3496 = vmatprep.subr.mxu0 0.0
    %3497 = vmatpush1.msra.mxu0 0.0
    %3498 = vmatprep.subr.mxu0 0.0
    %3499 = vmatpush1.msra.mxu0 0.0
    %3500 = vmatprep.subr.mxu0 0.0
    %3501 = vmatpush1.msra.mxu0 0.0
    %3502 = vmatprep.subr.mxu0 0.0
    %3503 = vmatpush1.msra.mxu0 0.0
    %3504 = vmatprep.subr.mxu0 0.0
    %3505 = vmatpush1.msra.mxu0 0.0
    %3506 = vmatprep.subr.mxu0 0.0
    %3507 = vmatpush1.msra.mxu0 0.0
    %3508 = vmatprep.subr.mxu0 0.0
    %3509 = vmatpush1.msra.mxu0 0.0
    %3510 = vmatprep.mubr.f32.mxu0 0.0
    %3511 = vmatmul.mubr.f32.gmra.mrb[0].mxu0 %v3359
    %v3512 = vpop.f32.mrb[0].mxu0
    %v3513 = vadd.f32 %v2961, %v3512
    %v3514 = vpop.f32.mrb[0].mxu0
    %3515 = vmatprep.mubr.f32.mxu0 0.0
    %3516 = vmatmul.mubr.f32.gmra.mrb[0].mxu0 %v3360
    %v3517 = vpop.f32.mrb[0].mxu0
    %v3518 = vadd.f32 %v2961, %v3517
    %v3519 = vpop.f32.mrb[0].mxu0
    %3520 = vdwg.mxu0
    %v3521 = vadd.f32 %v3363, %v3436
    %v3522 = vadd.f32 %v3366, %v3442
    %v3523 = vxor.u32 %v3521, 2147483648
    %v3524 = vxor.u32 %v3522, 2147483648
    %v3525 = vmul.f32 %v3523, 1.442695
    %v3526 = vpow.pop %v3525
    %v3527 = vmul.f32 %v3524, 1.442695
    %v3528 = vpow.pop %v3527
    %v3529 = vadd.f32 %v3526, 1.0
    %v3530 = vadd.f32 %v3528, 1.0
    %v3531 = vrcp.pop %v3529
    %v3532 = vmul.f32 1.0, %v3531
    %v3533 = vrcp.pop %v3530
    %v3534 = vmul.f32 1.0, %v3533
    %v3535 = vadd.f32 %v3364, %v3438
    %v3536 = vadd.f32 %v3367, %v3444
    %v3537 = vxor.u32 %v3535, 2147483648
    %v3538 = vxor.u32 %v3536, 2147483648
    %v3539 = vmul.f32 %v3537, 1.442695
    %v3540 = vpow.pop %v3539
    %v3541 = vmul.f32 %v3538, 1.442695
    %v3542 = vpow.pop %v3541
    %v3543 = vadd.f32 %v3540, 1.0
    %v3544 = vadd.f32 %v3542, 1.0
    %v3545 = vrcp.pop %v3543
    %v3546 = vmul.f32 1.0, %v3545
    %v3547 = vrcp.pop %v3544
    %v3548 = vmul.f32 1.0, %v3547
    %v3549 = vmul.f32 %v3532, %v3513
    %v3550 = vmul.f32 %v3534, %v3518
    %v3551 = vadd.f32 %v3365, %v3549
    %v3552 = vadd.f32 %v3368, %v3550
    %v3553 = vtanh.pop %v3551
    %v3554 = vtanh.pop %v3552
    %v3555 = vsub.f32 1.0, %v3546
    %v3556 = vsub.f32 1.0, %v3548
    %v3557 = vmul.f32 %v3555, %v3553
    %v3558 = vmul.f32 %v3556, %v3554
    %v3559 = vmul.f32 %v3546, %v3359
    %v3560 = vmul.f32 %v3548, %v3360
    %v3561 = vadd.f32 %v3557, %v3559
    %v3562 = vadd.f32 %v3558, %v3560
    %3563 = vst [vmem:[#allocation2 + $0x20] sm:$0xff] %v3561
    %3564 = vst [vmem:[#allocation2 + $0x28] sm:$0xff] %v3562
    %v3565 = vld [vmem:[#allocation3 + $0x90] sm:$0xff]
    %v3566 = vld [vmem:[#allocation3 + $0x98] sm:$0xff]
    %v3567 = vld [vmem:[#allocation3 + $0xa0] sm:$0xff]
    %v3568 = vld [vmem:[#allocation3 + $0xa8] sm:$0xff]
    %v3569 = vld [vmem:[#allocation3 + $0xb0] sm:$0xff]
    %v3570 = vld [vmem:[#allocation3 + $0xb8] sm:$0xff]
    %3571 = vmatprep.subr.mxu0 %v2891
    %3572 = vmatpush1.msra.mxu0 %v2890
    %3573 = vmatprep.subr.mxu0 %v2894
    %3574 = vmatpush1.msra.mxu0 %v2893
    %3575 = vmatprep.subr.mxu0 %v2897
    %3576 = vmatpush1.msra.mxu0 %v2896
    %3577 = vmatprep.subr.mxu0 %v2900
    %3578 = vmatpush1.msra.mxu0 %v2899
    %3579 = vmatprep.subr.mxu0 %v2903
    %3580 = vmatpush1.msra.mxu0 %v2902
    %3581 = vmatprep.subr.mxu0 %v2906
    %3582 = vmatpush1.msra.mxu0 %v2905
    %3583 = vmatprep.subr.mxu0 %v2909
    %3584 = vmatpush1.msra.mxu0 %v2908
    %3585 = vmatprep.subr.mxu0 %v2912
    %3586 = vmatpush1.msra.mxu0 %v2911
    %3587 = vmatprep.subr.mxu0 %v2915
    %3588 = vmatpush1.msra.mxu0 %v2914
    %3589 = vmatprep.subr.mxu0 %v2918
    %3590 = vmatpush1.msra.mxu0 %v2917
    %3591 = vmatprep.subr.mxu0 %v2921
    %3592 = vmatpush1.msra.mxu0 %v2920
    %3593 = vmatprep.subr.mxu0 %v2924
    %3594 = vmatpush1.msra.mxu0 %v2923
    %3595 = vmatprep.subr.mxu0 %v2927
    %3596 = vmatpush1.msra.mxu0 %v2926
    %3597 = vmatprep.subr.mxu0 %v2930
    %3598 = vmatpush1.msra.mxu0 %v2929
    %3599 = vmatprep.subr.mxu0 %v2933
    %3600 = vmatpush1.msra.mxu0 %v2932
    %3601 = vmatprep.subr.mxu0 %v2936
    %3602 = vmatpush1.msra.mxu0 %v2935
    %3603 = vmatprep.subr.mxu0 0.0
    %3604 = vmatpush1.msra.mxu0 0.0
    %3605 = vmatprep.subr.mxu0 0.0
    %3606 = vmatpush1.msra.mxu0 0.0
    %3607 = vmatprep.subr.mxu0 0.0
    %3608 = vmatpush1.msra.mxu0 0.0
    %3609 = vmatprep.subr.mxu0 0.0
    %3610 = vmatpush1.msra.mxu0 0.0
    %3611 = vmatprep.subr.mxu0 0.0
    %3612 = vmatpush1.msra.mxu0 0.0
    %3613 = vmatprep.subr.mxu0 0.0
    %3614 = vmatpush1.msra.mxu0 0.0
    %3615 = vmatprep.subr.mxu0 0.0
    %3616 = vmatpush1.msra.mxu0 0.0
    %3617 = vmatprep.subr.mxu0 0.0
    %3618 = vmatpush1.msra.mxu0 0.0
    %3619 = vmatprep.subr.mxu0 0.0
    %3620 = vmatpush1.msra.mxu0 0.0
    %3621 = vmatprep.subr.mxu0 0.0
    %3622 = vmatpush1.msra.mxu0 0.0
    %3623 = vmatprep.subr.mxu0 0.0
    %3624 = vmatpush1.msra.mxu0 0.0
    %3625 = vmatprep.subr.mxu0 0.0
    %3626 = vmatpush1.msra.mxu0 0.0
    %3627 = vmatprep.subr.mxu0 0.0
    %3628 = vmatpush1.msra.mxu0 0.0
    %3629 = vmatprep.subr.mxu0 0.0
    %3630 = vmatpush1.msra.mxu0 0.0
    %3631 = vmatprep.subr.mxu0 0.0
    %3632 = vmatpush1.msra.mxu0 0.0
    %3633 = vmatprep.subr.mxu0 0.0
    %3634 = vmatpush1.msra.mxu0 0.0
    %3635 = vmatprep.mubr.f32.mxu0 0.0
    %3636 = vmatmul.mubr.f32.gmra.mrb[0].mxu0 %v3561
    %v3637 = vpop.f32.mrb[0].mxu0
    %v3638 = vadd.f32 %v2953, %v3637
    %v3639 = vpop.f32.mrb[0].mxu0
    %v3640 = vadd.f32 %v2957, %v3639
    %3641 = vmatprep.mubr.f32.mxu0 0.0
    %3642 = vmatmul.mubr.f32.gmra.mrb[0].mxu0 %v3562
    %v3643 = vpop.f32.mrb[0].mxu0
    %v3644 = vadd.f32 %v2953, %v3643
    %v3645 = vpop.f32.mrb[0].mxu0
    %v3646 = vadd.f32 %v2957, %v3645
    %3647 = vdwg.mxu0
    %3648 = vmatprep.subr.mxu0 0.0
    %3649 = vmatpush1.msra.mxu0 %v2892
    %3650 = vmatprep.subr.mxu0 0.0
    %3651 = vmatpush1.msra.mxu0 %v2895
    %3652 = vmatprep.subr.mxu0 0.0
    %3653 = vmatpush1.msra.mxu0 %v2898
    %3654 = vmatprep.subr.mxu0 0.0
    %3655 = vmatpush1.msra.mxu0 %v2901
    %3656 = vmatprep.subr.mxu0 0.0
    %3657 = vmatpush1.msra.mxu0 %v2904
    %3658 = vmatprep.subr.mxu0 0.0
    %3659 = vmatpush1.msra.mxu0 %v2907
    %3660 = vmatprep.subr.mxu0 0.0
    %3661 = vmatpush1.msra.mxu0 %v2910
    %3662 = vmatprep.subr.mxu0 0.0
    %3663 = vmatpush1.msra.mxu0 %v2913
    %3664 = vmatprep.subr.mxu0 0.0
    %3665 = vmatpush1.msra.mxu0 %v2916
    %3666 = vmatprep.subr.mxu0 0.0
    %3667 = vmatpush1.msra.mxu0 %v2919
    %3668 = vmatprep.subr.mxu0 0.0
    %3669 = vmatpush1.msra.mxu0 %v2922
    %3670 = vmatprep.subr.mxu0 0.0
    %3671 = vmatpush1.msra.mxu0 %v2925
    %3672 = vmatprep.subr.mxu0 0.0
    %3673 = vmatpush1.msra.mxu0 %v2928
    %3674 = vmatprep.subr.mxu0 0.0
    %3675 = vmatpush1.msra.mxu0 %v2931
    %3676 = vmatprep.subr.mxu0 0.0
    %3677 = vmatpush1.msra.mxu0 %v2934
    %3678 = vmatprep.subr.mxu0 0.0
    %3679 = vmatpush1.msra.mxu0 %v2937
    %3680 = vmatprep.subr.mxu0 0.0
    %3681 = vmatpush1.msra.mxu0 0.0
    %3682 = vmatprep.subr.mxu0 0.0
    %3683 = vmatpush1.msra.mxu0 0.0
    %3684 = vmatprep.subr.mxu0 0.0
    %3685 = vmatpush1.msra.mxu0 0.0
    %3686 = vmatprep.subr.mxu0 0.0
    %3687 = vmatpush1.msra.mxu0 0.0
    %3688 = vmatprep.subr.mxu0 0.0
    %3689 = vmatpush1.msra.mxu0 0.0
    %3690 = vmatprep.subr.mxu0 0.0
    %3691 = vmatpush1.msra.mxu0 0.0
    %3692 = vmatprep.subr.mxu0 0.0
    %3693 = vmatpush1.msra.mxu0 0.0
    %3694 = vmatprep.subr.mxu0 0.0
    %3695 = vmatpush1.msra.mxu0 0.0
    %3696 = vmatprep.subr.mxu0 0.0
    %3697 = vmatpush1.msra.mxu0 0.0
    %3698 = vmatprep.subr.mxu0 0.0
    %3699 = vmatpush1.msra.mxu0 0.0
    %3700 = vmatprep.subr.mxu0 0.0
    %3701 = vmatpush1.msra.mxu0 0.0
    %3702 = vmatprep.subr.mxu0 0.0
    %3703 = vmatpush1.msra.mxu0 0.0
    %3704 = vmatprep.subr.mxu0 0.0
    %3705 = vmatpush1.msra.mxu0 0.0
    %3706 = vmatprep.subr.mxu0 0.0
    %3707 = vmatpush1.msra.mxu0 0.0
    %3708 = vmatprep.subr.mxu0 0.0
    %3709 = vmatpush1.msra.mxu0 0.0
    %3710 = vmatprep.subr.mxu0 0.0
    %3711 = vmatpush1.msra.mxu0 0.0
    %3712 = vmatprep.mubr.f32.mxu0 0.0
    %3713 = vmatmul.mubr.f32.gmra.mrb[0].mxu0 %v3561
    %v3714 = vpop.f32.mrb[0].mxu0
    %v3715 = vadd.f32 %v2961, %v3714
    %v3716 = vpop.f32.mrb[0].mxu0
    %3717 = vmatprep.mubr.f32.mxu0 0.0
    %3718 = vmatmul.mubr.f32.gmra.mrb[0].mxu0 %v3562
    %v3719 = vpop.f32.mrb[0].mxu0
    %v3720 = vadd.f32 %v2961, %v3719
    %v3721 = vpop.f32.mrb[0].mxu0
    %3722 = vdwg.mxu0
    %v3723 = vadd.f32 %v3565, %v3638
    %v3724 = vadd.f32 %v3568, %v3644
    %v3725 = vxor.u32 %v3723, 2147483648
    %v3726 = vxor.u32 %v3724, 2147483648
    %v3727 = vmul.f32 %v3725, 1.442695
    %v3728 = vpow.pop %v3727
    %v3729 = vmul.f32 %v3726, 1.442695
    %v3730 = vpow.pop %v3729
    %v3731 = vadd.f32 %v3728, 1.0
    %v3732 = vadd.f32 %v3730, 1.0
    %v3733 = vrcp.pop %v3731
    %v3734 = vmul.f32 1.0, %v3733
    %v3735 = vrcp.pop %v3732
    %v3736 = vmul.f32 1.0, %v3735
    %v3737 = vadd.f32 %v3566, %v3640
    %v3738 = vadd.f32 %v3569, %v3646
    %v3739 = vxor.u32 %v3737, 2147483648
    %v3740 = vxor.u32 %v3738, 2147483648
    %v3741 = vmul.f32 %v3739, 1.442695
    %v3742 = vpow.pop %v3741
    %v3743 = vmul.f32 %v3740, 1.442695
    %v3744 = vpow.pop %v3743
    %v3745 = vadd.f32 %v3742, 1.0
    %v3746 = vadd.f32 %v3744, 1.0
    %v3747 = vrcp.pop %v3745
    %v3748 = vmul.f32 1.0, %v3747
    %v3749 = vrcp.pop %v3746
    %v3750 = vmul.f32 1.0, %v3749
    %v3751 = vmul.f32 %v3734, %v3715
    %v3752 = vmul.f32 %v3736, %v3720
    %v3753 = vadd.f32 %v3567, %v3751
    %v3754 = vadd.f32 %v3570, %v3752
    %v3755 = vtanh.pop %v3753
    %v3756 = vtanh.pop %v3754
    %v3757 = vsub.f32 1.0, %v3748
    %v3758 = vsub.f32 1.0, %v3750
    %v3759 = vmul.f32 %v3757, %v3755
    %v3760 = vmul.f32 %v3758, %v3756
    %v3761 = vmul.f32 %v3748, %v3561
    %v3762 = vmul.f32 %v3750, %v3562
    %v3763 = vadd.f32 %v3759, %v3761
    %v3764 = vadd.f32 %v3760, %v3762
    %3765 = vst [vmem:[#allocation2 + $0x30] sm:$0xff] %v3763
    %3766 = vst [vmem:[#allocation2 + $0x38] sm:$0xff] %v3764
    %v3767 = vld [vmem:[#allocation3 + $0xc0] sm:$0xff]
    %v3768 = vld [vmem:[#allocation3 + $0xc8] sm:$0xff]
    %v3769 = vld [vmem:[#allocation3 + $0xd0] sm:$0xff]
    %v3770 = vld [vmem:[#allocation3 + $0xd8] sm:$0xff]
    %v3771 = vld [vmem:[#allocation3 + $0xe0] sm:$0xff]
    %v3772 = vld [vmem:[#allocation3 + $0xe8] sm:$0xff]
    %3773 = vmatprep.subr.mxu0 %v2891
    %3774 = vmatpush1.msra.mxu0 %v2890
    %3775 = vmatprep.subr.mxu0 %v2894
    %3776 = vmatpush1.msra.mxu0 %v2893
    %3777 = vmatprep.subr.mxu0 %v2897
    %3778 = vmatpush1.msra.mxu0 %v2896
    %3779 = vmatprep.subr.mxu0 %v2900
    %3780 = vmatpush1.msra.mxu0 %v2899
    %3781 = vmatprep.subr.mxu0 %v2903
    %3782 = vmatpush1.msra.mxu0 %v2902
    %3783 = vmatprep.subr.mxu0 %v2906
    %3784 = vmatpush1.msra.mxu0 %v2905
    %3785 = vmatprep.subr.mxu0 %v2909
    %3786 = vmatpush1.msra.mxu0 %v2908
    %3787 = vmatprep.subr.mxu0 %v2912
    %3788 = vmatpush1.msra.mxu0 %v2911
    %3789 = vmatprep.subr.mxu0 %v2915
    %3790 = vmatpush1.msra.mxu0 %v2914
    %3791 = vmatprep.subr.mxu0 %v2918
    %3792 = vmatpush1.msra.mxu0 %v2917
    %3793 = vmatprep.subr.mxu0 %v2921
    %3794 = vmatpush1.msra.mxu0 %v2920
    %3795 = vmatprep.subr.mxu0 %v2924
    %3796 = vmatpush1.msra.mxu0 %v2923
    %3797 = vmatprep.subr.mxu0 %v2927
    %3798 = vmatpush1.msra.mxu0 %v2926
    %3799 = vmatprep.subr.mxu0 %v2930
    %3800 = vmatpush1.msra.mxu0 %v2929
    %3801 = vmatprep.subr.mxu0 %v2933
    %3802 = vmatpush1.msra.mxu0 %v2932
    %3803 = vmatprep.subr.mxu0 %v2936
    %3804 = vmatpush1.msra.mxu0 %v2935
    %3805 = vmatprep.subr.mxu0 0.0
    %3806 = vmatpush1.msra.mxu0 0.0
    %3807 = vmatprep.subr.mxu0 0.0
    %3808 = vmatpush1.msra.mxu0 0.0
    %3809 = vmatprep.subr.mxu0 0.0
    %3810 = vmatpush1.msra.mxu0 0.0
    %3811 = vmatprep.subr.mxu0 0.0
    %3812 = vmatpush1.msra.mxu0 0.0
    %3813 = vmatprep.subr.mxu0 0.0
    %3814 = vmatpush1.msra.mxu0 0.0
    %3815 = vmatprep.subr.mxu0 0.0
    %3816 = vmatpush1.msra.mxu0 0.0
    %3817 = vmatprep.subr.mxu0 0.0
    %3818 = vmatpush1.msra.mxu0 0.0
    %3819 = vmatprep.subr.mxu0 0.0
    %3820 = vmatpush1.msra.mxu0 0.0
    %3821 = vmatprep.subr.mxu0 0.0
    %3822 = vmatpush1.msra.mxu0 0.0
    %3823 = vmatprep.subr.mxu0 0.0
    %3824 = vmatpush1.msra.mxu0 0.0
    %3825 = vmatprep.subr.mxu0 0.0
    %3826 = vmatpush1.msra.mxu0 0.0
    %3827 = vmatprep.subr.mxu0 0.0
    %3828 = vmatpush1.msra.mxu0 0.0
    %3829 = vmatprep.subr.mxu0 0.0
    %3830 = vmatpush1.msra.mxu0 0.0
    %3831 = vmatprep.subr.mxu0 0.0
    %3832 = vmatpush1.msra.mxu0 0.0
    %3833 = vmatprep.subr.mxu0 0.0
    %3834 = vmatpush1.msra.mxu0 0.0
    %3835 = vmatprep.subr.mxu0 0.0
    %3836 = vmatpush1.msra.mxu0 0.0
    %3837 = vmatprep.mubr.f32.mxu0 0.0
    %3838 = vmatmul.mubr.f32.gmra.mrb[0].mxu0 %v3763
    %v3839 = vpop.f32.mrb[0].mxu0
    %v3840 = vadd.f32 %v2953, %v3839
    %v3841 = vpop.f32.mrb[0].mxu0
    %v3842 = vadd.f32 %v2957, %v3841
    %3843 = vmatprep.mubr.f32.mxu0 0.0
    %3844 = vmatmul.mubr.f32.gmra.mrb[0].mxu0 %v3764
    %v3845 = vpop.f32.mrb[0].mxu0
    %v3846 = vadd.f32 %v2953, %v3845
    %v3847 = vpop.f32.mrb[0].mxu0
    %v3848 = vadd.f32 %v2957, %v3847
    %3849 = vdwg.mxu0
    %3850 = vmatprep.subr.mxu0 0.0
    %3851 = vmatpush1.msra.mxu0 %v2892
    %3852 = vmatprep.subr.mxu0 0.0
    %3853 = vmatpush1.msra.mxu0 %v2895
    %3854 = vmatprep.subr.mxu0 0.0
    %3855 = vmatpush1.msra.mxu0 %v2898
    %3856 = vmatprep.subr.mxu0 0.0
    %3857 = vmatpush1.msra.mxu0 %v2901
    %3858 = vmatprep.subr.mxu0 0.0
    %3859 = vmatpush1.msra.mxu0 %v2904
    %3860 = vmatprep.subr.mxu0 0.0
    %3861 = vmatpush1.msra.mxu0 %v2907
    %3862 = vmatprep.subr.mxu0 0.0
    %3863 = vmatpush1.msra.mxu0 %v2910
    %3864 = vmatprep.subr.mxu0 0.0
    %3865 = vmatpush1.msra.mxu0 %v2913
    %3866 = vmatprep.subr.mxu0 0.0
    %3867 = vmatpush1.msra.mxu0 %v2916
    %3868 = vmatprep.subr.mxu0 0.0
    %3869 = vmatpush1.msra.mxu0 %v2919
    %3870 = vmatprep.subr.mxu0 0.0
    %3871 = vmatpush1.msra.mxu0 %v2922
    %3872 = vmatprep.subr.mxu0 0.0
    %3873 = vmatpush1.msra.mxu0 %v2925
    %3874 = vmatprep.subr.mxu0 0.0
    %3875 = vmatpush1.msra.mxu0 %v2928
    %3876 = vmatprep.subr.mxu0 0.0
    %3877 = vmatpush1.msra.mxu0 %v2931
    %3878 = vmatprep.subr.mxu0 0.0
    %3879 = vmatpush1.msra.mxu0 %v2934
    %3880 = vmatprep.subr.mxu0 0.0
    %3881 = vmatpush1.msra.mxu0 %v2937
    %3882 = vmatprep.subr.mxu0 0.0
    %3883 = vmatpush1.msra.mxu0 0.0
    %3884 = vmatprep.subr.mxu0 0.0
    %3885 = vmatpush1.msra.mxu0 0.0
    %3886 = vmatprep.subr.mxu0 0.0
    %3887 = vmatpush1.msra.mxu0 0.0
    %3888 = vmatprep.subr.mxu0 0.0
    %3889 = vmatpush1.msra.mxu0 0.0
    %3890 = vmatprep.subr.mxu0 0.0
    %3891 = vmatpush1.msra.mxu0 0.0
    %3892 = vmatprep.subr.mxu0 0.0
    %3893 = vmatpush1.msra.mxu0 0.0
    %3894 = vmatprep.subr.mxu0 0.0
    %3895 = vmatpush1.msra.mxu0 0.0
    %3896 = vmatprep.subr.mxu0 0.0
    %3897 = vmatpush1.msra.mxu0 0.0
    %3898 = vmatprep.subr.mxu0 0.0
    %3899 = vmatpush1.msra.mxu0 0.0
    %3900 = vmatprep.subr.mxu0 0.0
    %3901 = vmatpush1.msra.mxu0 0.0
    %3902 = vmatprep.subr.mxu0 0.0
    %3903 = vmatpush1.msra.mxu0 0.0
    %3904 = vmatprep.subr.mxu0 0.0
    %3905 = vmatpush1.msra.mxu0 0.0
    %3906 = vmatprep.subr.mxu0 0.0
    %3907 = vmatpush1.msra.mxu0 0.0
    %3908 = vmatprep.subr.mxu0 0.0
    %3909 = vmatpush1.msra.mxu0 0.0
    %3910 = vmatprep.subr.mxu0 0.0
    %3911 = vmatpush1.msra.mxu0 0.0
    %3912 = vmatprep.subr.mxu0 0.0
    %3913 = vmatpush1.msra.mxu0 0.0
    %3914 = vmatprep.mubr.f32.mxu0 0.0
    %3915 = vmatmul.mubr.f32.gmra.mrb[0].mxu0 %v3763
    %v3916 = vpop.f32.mrb[0].mxu0
    %v3917 = vadd.f32 %v2961, %v3916
    %v3918 = vpop.f32.mrb[0].mxu0
    %3919 = vmatprep.mubr.f32.mxu0 0.0
    %3920 = vmatmul.mubr.f32.gmra.mrb[0].mxu0 %v3764
    %v3921 = vpop.f32.mrb[0].mxu0
    %v3922 = vadd.f32 %v2961, %v3921
    %v3923 = vpop.f32.mrb[0].mxu0
    %3924 = vdwg.mxu0
    %v3925 = vadd.f32 %v3767, %v3840
    %v3926 = vadd.f32 %v3770, %v3846
    %v3927 = vxor.u32 %v3925, 2147483648
    %v3928 = vxor.u32 %v3926, 2147483648
    %v3929 = vmul.f32 %v3927, 1.442695
    %v3930 = vpow.pop %v3929
    %v3931 = vmul.f32 %v3928, 1.442695
    %v3932 = vpow.pop %v3931
    %v3933 = vadd.f32 %v3930, 1.0
    %v3934 = vadd.f32 %v3932, 1.0
    %v3935 = vrcp.pop %v3933
    %v3936 = vmul.f32 1.0, %v3935
    %v3937 = vrcp.pop %v3934
    %v3938 = vmul.f32 1.0, %v3937
    %v3939 = vadd.f32 %v3768, %v3842
    %v3940 = vadd.f32 %v3771, %v3848
    %v3941 = vxor.u32 %v3939, 2147483648
    %v3942 = vxor.u32 %v3940, 2147483648
    %v3943 = vmul.f32 %v3941, 1.442695
    %v3944 = vpow.pop %v3943
    %v3945 = vmul.f32 %v3942, 1.442695
    %v3946 = vpow.pop %v3945
    %v3947 = vadd.f32 %v3944, 1.0
    %v3948 = vadd.f32 %v3946, 1.0
    %v3949 = vrcp.pop %v3947
    %v3950 = vmul.f32 1.0, %v3949
    %v3951 = vrcp.pop %v3948
    %v3952 = vmul.f32 1.0, %v3951
    %v3953 = vmul.f32 %v3936, %v3917
    %v3954 = vmul.f32 %v3938, %v3922
    %v3955 = vadd.f32 %v3769, %v3953
    %v3956 = vadd.f32 %v3772, %v3954
    %v3957 = vtanh.pop %v3955
    %v3958 = vtanh.pop %v3956
    %v3959 = vsub.f32 1.0, %v3950
    %v3960 = vsub.f32 1.0, %v3952
    %v3961 = vmul.f32 %v3959, %v3957
    %v3962 = vmul.f32 %v3960, %v3958
    %v3963 = vmul.f32 %v3950, %v3763
    %v3964 = vmul.f32 %v3952, %v3764
    %v3965 = vadd.f32 %v3961, %v3963
    %v3966 = vadd.f32 %v3962, %v3964
    %3967 = vst [vmem:[#allocation2 + $0x40] sm:$0xff] %v3965
    %3968 = vst [vmem:[#allocation2 + $0x48] sm:$0xff] %v3966
    %v3969 = vld [vmem:[#allocation3 + $0xf0] sm:$0xff]
    %v3970 = vld [vmem:[#allocation3 + $0xf8] sm:$0xff]
    %v3971 = vld [vmem:[#allocation3 + $0x100] sm:$0xff]
    %v3972 = vld [vmem:[#allocation3 + $0x108] sm:$0xff]
    %v3973 = vld [vmem:[#allocation3 + $0x110] sm:$0xff]
    %v3974 = vld [vmem:[#allocation3 + $0x118] sm:$0xff]
    %3975 = vmatprep.subr.mxu0 %v2891
    %3976 = vmatpush1.msra.mxu0 %v2890
    %3977 = vmatprep.subr.mxu0 %v2894
    %3978 = vmatpush1.msra.mxu0 %v2893
    %3979 = vmatprep.subr.mxu0 %v2897
    %3980 = vmatpush1.msra.mxu0 %v2896
    %3981 = vmatprep.subr.mxu0 %v2900
    %3982 = vmatpush1.msra.mxu0 %v2899
    %3983 = vmatprep.subr.mxu0 %v2903
    %3984 = vmatpush1.msra.mxu0 %v2902
    %3985 = vmatprep.subr.mxu0 %v2906
    %3986 = vmatpush1.msra.mxu0 %v2905
    %3987 = vmatprep.subr.mxu0 %v2909
    %3988 = vmatpush1.msra.mxu0 %v2908
    %3989 = vmatprep.subr.mxu0 %v2912
    %3990 = vmatpush1.msra.mxu0 %v2911
    %3991 = vmatprep.subr.mxu0 %v2915
    %3992 = vmatpush1.msra.mxu0 %v2914
    %3993 = vmatprep.subr.mxu0 %v2918
    %3994 = vmatpush1.msra.mxu0 %v2917
    %3995 = vmatprep.subr.mxu0 %v2921
    %3996 = vmatpush1.msra.mxu0 %v2920
    %3997 = vmatprep.subr.mxu0 %v2924
    %3998 = vmatpush1.msra.mxu0 %v2923
    %3999 = vmatprep.subr.mxu0 %v2927
    %4000 = vmatpush1.msra.mxu0 %v2926
    %4001 = vmatprep.subr.mxu0 %v2930
    %4002 = vmatpush1.msra.mxu0 %v2929
    %4003 = vmatprep.subr.mxu0 %v2933
    %4004 = vmatpush1.msra.mxu0 %v2932
    %4005 = vmatprep.subr.mxu0 %v2936
    %4006 = vmatpush1.msra.mxu0 %v2935
    %4007 = vmatprep.subr.mxu0 0.0
    %4008 = vmatpush1.msra.mxu0 0.0
    %4009 = vmatprep.subr.mxu0 0.0
    %4010 = vmatpush1.msra.mxu0 0.0
    %4011 = vmatprep.subr.mxu0 0.0
    %4012 = vmatpush1.msra.mxu0 0.0
    %4013 = vmatprep.subr.mxu0 0.0
    %4014 = vmatpush1.msra.mxu0 0.0
    %4015 = vmatprep.subr.mxu0 0.0
    %4016 = vmatpush1.msra.mxu0 0.0
    %4017 = vmatprep.subr.mxu0 0.0
    %4018 = vmatpush1.msra.mxu0 0.0
    %4019 = vmatprep.subr.mxu0 0.0
    %4020 = vmatpush1.msra.mxu0 0.0
    %4021 = vmatprep.subr.mxu0 0.0
    %4022 = vmatpush1.msra.mxu0 0.0
    %4023 = vmatprep.subr.mxu0 0.0
    %4024 = vmatpush1.msra.mxu0 0.0
    %4025 = vmatprep.subr.mxu0 0.0
    %4026 = vmatpush1.msra.mxu0 0.0
    %4027 = vmatprep.subr.mxu0 0.0
    %4028 = vmatpush1.msra.mxu0 0.0
    %4029 = vmatprep.subr.mxu0 0.0
    %4030 = vmatpush1.msra.mxu0 0.0
    %4031 = vmatprep.subr.mxu0 0.0
    %4032 = vmatpush1.msra.mxu0 0.0
    %4033 = vmatprep.subr.mxu0 0.0
    %4034 = vmatpush1.msra.mxu0 0.0
    %4035 = vmatprep.subr.mxu0 0.0
    %4036 = vmatpush1.msra.mxu0 0.0
    %4037 = vmatprep.subr.mxu0 0.0
    %4038 = vmatpush1.msra.mxu0 0.0
    %4039 = vmatprep.mubr.f32.mxu0 0.0
    %4040 = vmatmul.mubr.f32.gmra.mrb[0].mxu0 %v3965
    %v4041 = vpop.f32.mrb[0].mxu0
    %v4042 = vadd.f32 %v2953, %v4041
    %v4043 = vpop.f32.mrb[0].mxu0
    %v4044 = vadd.f32 %v2957, %v4043
    %4045 = vmatprep.mubr.f32.mxu0 0.0
    %4046 = vmatmul.mubr.f32.gmra.mrb[0].mxu0 %v3966
    %v4047 = vpop.f32.mrb[0].mxu0
    %v4048 = vadd.f32 %v2953, %v4047
    %v4049 = vpop.f32.mrb[0].mxu0
    %v4050 = vadd.f32 %v2957, %v4049
    %4051 = vdwg.mxu0
    %4052 = vmatprep.subr.mxu0 0.0
    %4053 = vmatpush1.msra.mxu0 %v2892
    %4054 = vmatprep.subr.mxu0 0.0
    %4055 = vmatpush1.msra.mxu0 %v2895
    %4056 = vmatprep.subr.mxu0 0.0
    %4057 = vmatpush1.msra.mxu0 %v2898
    %4058 = vmatprep.subr.mxu0 0.0
    %4059 = vmatpush1.msra.mxu0 %v2901
    %4060 = vmatprep.subr.mxu0 0.0
    %4061 = vmatpush1.msra.mxu0 %v2904
    %4062 = vmatprep.subr.mxu0 0.0
    %4063 = vmatpush1.msra.mxu0 %v2907
    %4064 = vmatprep.subr.mxu0 0.0
    %4065 = vmatpush1.msra.mxu0 %v2910
    %4066 = vmatprep.subr.mxu0 0.0
    %4067 = vmatpush1.msra.mxu0 %v2913
    %4068 = vmatprep.subr.mxu0 0.0
    %4069 = vmatpush1.msra.mxu0 %v2916
    %4070 = vmatprep.subr.mxu0 0.0
    %4071 = vmatpush1.msra.mxu0 %v2919
    %4072 = vmatprep.subr.mxu0 0.0
    %4073 = vmatpush1.msra.mxu0 %v2922
    %4074 = vmatprep.subr.mxu0 0.0
    %4075 = vmatpush1.msra.mxu0 %v2925
    %4076 = vmatprep.subr.mxu0 0.0
    %4077 = vmatpush1.msra.mxu0 %v2928
    %4078 = vmatprep.subr.mxu0 0.0
    %4079 = vmatpush1.msra.mxu0 %v2931
    %4080 = vmatprep.subr.mxu0 0.0
    %4081 = vmatpush1.msra.mxu0 %v2934
    %4082 = vmatprep.subr.mxu0 0.0
    %4083 = vmatpush1.msra.mxu0 %v2937
    %4084 = vmatprep.subr.mxu0 0.0
    %4085 = vmatpush1.msra.mxu0 0.0
    %4086 = vmatprep.subr.mxu0 0.0
    %4087 = vmatpush1.msra.mxu0 0.0
    %4088 = vmatprep.subr.mxu0 0.0
    %4089 = vmatpush1.msra.mxu0 0.0
    %4090 = vmatprep.subr.mxu0 0.0
    %4091 = vmatpush1.msra.mxu0 0.0
    %4092 = vmatprep.subr.mxu0 0.0
    %4093 = vmatpush1.msra.mxu0 0.0
    %4094 = vmatprep.subr.mxu0 0.0
    %4095 = vmatpush1.msra.mxu0 0.0
    %4096 = vmatprep.subr.mxu0 0.0
    %4097 = vmatpush1.msra.mxu0 0.0
    %4098 = vmatprep.subr.mxu0 0.0
    %4099 = vmatpush1.msra.mxu0 0.0
    %4100 = vmatprep.subr.mxu0 0.0
    %4101 = vmatpush1.msra.mxu0 0.0
    %4102 = vmatprep.subr.mxu0 0.0
    %4103 = vmatpush1.msra.mxu0 0.0
    %4104 = vmatprep.subr.mxu0 0.0
    %4105 = vmatpush1.msra.mxu0 0.0
    %4106 = vmatprep.subr.mxu0 0.0
    %4107 = vmatpush1.msra.mxu0 0.0
    %4108 = vmatprep.subr.mxu0 0.0
    %4109 = vmatpush1.msra.mxu0 0.0
    %4110 = vmatprep.subr.mxu0 0.0
    %4111 = vmatpush1.msra.mxu0 0.0
    %4112 = vmatprep.subr.mxu0 0.0
    %4113 = vmatpush1.msra.mxu0 0.0
    %4114 = vmatprep.subr.mxu0 0.0
    %4115 = vmatpush1.msra.mxu0 0.0
    %4116 = vmatprep.mubr.f32.mxu0 0.0
    %4117 = vmatmul.mubr.f32.gmra.mrb[0].mxu0 %v3965
    %v4118 = vpop.f32.mrb[0].mxu0
    %v4119 = vadd.f32 %v2961, %v4118
    %v4120 = vpop.f32.mrb[0].mxu0
    %4121 = vmatprep.mubr.f32.mxu0 0.0
    %4122 = vmatmul.mubr.f32.gmra.mrb[0].mxu0 %v3966
    %v4123 = vpop.f32.mrb[0].mxu0
    %v4124 = vadd.f32 %v2961, %v4123
    %v4125 = vpop.f32.mrb[0].mxu0
    %4126 = vdwg.mxu0
    %v4127 = vadd.f32 %v3969, %v4042
    %v4128 = vadd.f32 %v3972, %v4048
    %v4129 = vxor.u32 %v4127, 2147483648
    %v4130 = vxor.u32 %v4128, 2147483648
    %v4131 = vmul.f32 %v4129, 1.442695
    %v4132 = vpow.pop %v4131
    %v4133 = vmul.f32 %v4130, 1.442695
    %v4134 = vpow.pop %v4133
    %v4135 = vadd.f32 %v4132, 1.0
    %v4136 = vadd.f32 %v4134, 1.0
    %v4137 = vrcp.pop %v4135
    %v4138 = vmul.f32 1.0, %v4137
    %v4139 = vrcp.pop %v4136
    %v4140 = vmul.f32 1.0, %v4139
    %v4141 = vadd.f32 %v3970, %v4044
    %v4142 = vadd.f32 %v3973, %v4050
    %v4143 = vxor.u32 %v4141, 2147483648
    %v4144 = vxor.u32 %v4142, 2147483648
    %v4145 = vmul.f32 %v4143, 1.442695
    %v4146 = vpow.pop %v4145
    %v4147 = vmul.f32 %v4144, 1.442695
    %v4148 = vpow.pop %v4147
    %v4149 = vadd.f32 %v4146, 1.0
    %v4150 = vadd.f32 %v4148, 1.0
    %v4151 = vrcp.pop %v4149
    %v4152 = vmul.f32 1.0, %v4151
    %v4153 = vrcp.pop %v4150
    %v4154 = vmul.f32 1.0, %v4153
    %v4155 = vmul.f32 %v4138, %v4119
    %v4156 = vmul.f32 %v4140, %v4124
    %v4157 = vadd.f32 %v3971, %v4155
    %v4158 = vadd.f32 %v3974, %v4156
    %v4159 = vtanh.pop %v4157
    %v4160 = vtanh.pop %v4158
    %v4161 = vsub.f32 1.0, %v4152
    %v4162 = vsub.f32 1.0, %v4154
    %v4163 = vmul.f32 %v4161, %v4159
    %v4164 = vmul.f32 %v4162, %v4160
    %v4165 = vmul.f32 %v4152, %v3965
    %v4166 = vmul.f32 %v4154, %v3966
    %v4167 = vadd.f32 %v4163, %v4165
    %v4168 = vadd.f32 %v4164, %v4166
    %4169 = vst [vmem:[#allocation2 + $0x50] sm:$0xff] %v4167
    %4170 = vst [vmem:[#allocation2 + $0x58] sm:$0xff] %v4168
    %v4171 = vld [vmem:[#allocation3 + $0x120] sm:$0xff]
    %v4172 = vld [vmem:[#allocation3 + $0x128] sm:$0xff]
    %v4173 = vld [vmem:[#allocation3 + $0x130] sm:$0xff]
    %v4174 = vld [vmem:[#allocation3 + $0x138] sm:$0xff]
    %v4175 = vld [vmem:[#allocation3 + $0x140] sm:$0xff]
    %v4176 = vld [vmem:[#allocation3 + $0x148] sm:$0xff]
    %4177 = vmatprep.subr.mxu0 %v2891
    %4178 = vmatpush1.msra.mxu0 %v2890
    %4179 = vmatprep.subr.mxu0 %v2894
    %4180 = vmatpush1.msra.mxu0 %v2893
    %4181 = vmatprep.subr.mxu0 %v2897
    %4182 = vmatpush1.msra.mxu0 %v2896
    %4183 = vmatprep.subr.mxu0 %v2900
    %4184 = vmatpush1.msra.mxu0 %v2899
    %4185 = vmatprep.subr.mxu0 %v2903
    %4186 = vmatpush1.msra.mxu0 %v2902
    %4187 = vmatprep.subr.mxu0 %v2906
    %4188 = vmatpush1.msra.mxu0 %v2905
    %4189 = vmatprep.subr.mxu0 %v2909
    %4190 = vmatpush1.msra.mxu0 %v2908
    %4191 = vmatprep.subr.mxu0 %v2912
    %4192 = vmatpush1.msra.mxu0 %v2911
    %4193 = vmatprep.subr.mxu0 %v2915
    %4194 = vmatpush1.msra.mxu0 %v2914
    %4195 = vmatprep.subr.mxu0 %v2918
    %4196 = vmatpush1.msra.mxu0 %v2917
    %4197 = vmatprep.subr.mxu0 %v2921
    %4198 = vmatpush1.msra.mxu0 %v2920
    %4199 = vmatprep.subr.mxu0 %v2924
    %4200 = vmatpush1.msra.mxu0 %v2923
    %4201 = vmatprep.subr.mxu0 %v2927
    %4202 = vmatpush1.msra.mxu0 %v2926
    %4203 = vmatprep.subr.mxu0 %v2930
    %4204 = vmatpush1.msra.mxu0 %v2929
    %4205 = vmatprep.subr.mxu0 %v2933
    %4206 = vmatpush1.msra.mxu0 %v2932
    %4207 = vmatprep.subr.mxu0 %v2936
    %4208 = vmatpush1.msra.mxu0 %v2935
    %4209 = vmatprep.subr.mxu0 0.0
    %4210 = vmatpush1.msra.mxu0 0.0
    %4211 = vmatprep.subr.mxu0 0.0
    %4212 = vmatpush1.msra.mxu0 0.0
    %4213 = vmatprep.subr.mxu0 0.0
    %4214 = vmatpush1.msra.mxu0 0.0
    %4215 = vmatprep.subr.mxu0 0.0
    %4216 = vmatpush1.msra.mxu0 0.0
    %4217 = vmatprep.subr.mxu0 0.0
    %4218 = vmatpush1.msra.mxu0 0.0
    %4219 = vmatprep.subr.mxu0 0.0
    %4220 = vmatpush1.msra.mxu0 0.0
    %4221 = vmatprep.subr.mxu0 0.0
    %4222 = vmatpush1.msra.mxu0 0.0
    %4223 = vmatprep.subr.mxu0 0.0
    %4224 = vmatpush1.msra.mxu0 0.0
    %4225 = vmatprep.subr.mxu0 0.0
    %4226 = vmatpush1.msra.mxu0 0.0
    %4227 = vmatprep.subr.mxu0 0.0
    %4228 = vmatpush1.msra.mxu0 0.0
    %4229 = vmatprep.subr.mxu0 0.0
    %4230 = vmatpush1.msra.mxu0 0.0
    %4231 = vmatprep.subr.mxu0 0.0
    %4232 = vmatpush1.msra.mxu0 0.0
    %4233 = vmatprep.subr.mxu0 0.0
    %4234 = vmatpush1.msra.mxu0 0.0
    %4235 = vmatprep.subr.mxu0 0.0
    %4236 = vmatpush1.msra.mxu0 0.0
    %4237 = vmatprep.subr.mxu0 0.0
    %4238 = vmatpush1.msra.mxu0 0.0
    %4239 = vmatprep.subr.mxu0 0.0
    %4240 = vmatpush1.msra.mxu0 0.0
    %4241 = vmatprep.mubr.f32.mxu0 0.0
    %4242 = vmatmul.mubr.f32.gmra.mrb[0].mxu0 %v4167
    %v4243 = vpop.f32.mrb[0].mxu0
    %v4244 = vadd.f32 %v2953, %v4243
    %v4245 = vpop.f32.mrb[0].mxu0
    %v4246 = vadd.f32 %v2957, %v4245
    %4247 = vmatprep.mubr.f32.mxu0 0.0
    %4248 = vmatmul.mubr.f32.gmra.mrb[0].mxu0 %v4168
    %v4249 = vpop.f32.mrb[0].mxu0
    %v4250 = vadd.f32 %v2953, %v4249
    %v4251 = vpop.f32.mrb[0].mxu0
    %v4252 = vadd.f32 %v2957, %v4251
    %4253 = vdwg.mxu0
    %4254 = vmatprep.subr.mxu0 0.0
    %4255 = vmatpush1.msra.mxu0 %v2892
    %4256 = vmatprep.subr.mxu0 0.0
    %4257 = vmatpush1.msra.mxu0 %v2895
    %4258 = vmatprep.subr.mxu0 0.0
    %4259 = vmatpush1.msra.mxu0 %v2898
    %4260 = vmatprep.subr.mxu0 0.0
    %4261 = vmatpush1.msra.mxu0 %v2901
    %4262 = vmatprep.subr.mxu0 0.0
    %4263 = vmatpush1.msra.mxu0 %v2904
    %4264 = vmatprep.subr.mxu0 0.0
    %4265 = vmatpush1.msra.mxu0 %v2907
    %4266 = vmatprep.subr.mxu0 0.0
    %4267 = vmatpush1.msra.mxu0 %v2910
    %4268 = vmatprep.subr.mxu0 0.0
    %4269 = vmatpush1.msra.mxu0 %v2913
    %4270 = vmatprep.subr.mxu0 0.0
    %4271 = vmatpush1.msra.mxu0 %v2916
    %4272 = vmatprep.subr.mxu0 0.0
    %4273 = vmatpush1.msra.mxu0 %v2919
    %4274 = vmatprep.subr.mxu0 0.0
    %4275 = vmatpush1.msra.mxu0 %v2922
    %4276 = vmatprep.subr.mxu0 0.0
    %4277 = vmatpush1.msra.mxu0 %v2925
    %4278 = vmatprep.subr.mxu0 0.0
    %4279 = vmatpush1.msra.mxu0 %v2928
    %4280 = vmatprep.subr.mxu0 0.0
    %4281 = vmatpush1.msra.mxu0 %v2931
    %4282 = vmatprep.subr.mxu0 0.0
    %4283 = vmatpush1.msra.mxu0 %v2934
    %4284 = vmatprep.subr.mxu0 0.0
    %4285 = vmatpush1.msra.mxu0 %v2937
    %4286 = vmatprep.subr.mxu0 0.0
    %4287 = vmatpush1.msra.mxu0 0.0
    %4288 = vmatprep.subr.mxu0 0.0
    %4289 = vmatpush1.msra.mxu0 0.0
    %4290 = vmatprep.subr.mxu0 0.0
    %4291 = vmatpush1.msra.mxu0 0.0
    %4292 = vmatprep.subr.mxu0 0.0
    %4293 = vmatpush1.msra.mxu0 0.0
    %4294 = vmatprep.subr.mxu0 0.0
    %4295 = vmatpush1.msra.mxu0 0.0
    %4296 = vmatprep.subr.mxu0 0.0
    %4297 = vmatpush1.msra.mxu0 0.0
    %4298 = vmatprep.subr.mxu0 0.0
    %4299 = vmatpush1.msra.mxu0 0.0
    %4300 = vmatprep.subr.mxu0 0.0
    %4301 = vmatpush1.msra.mxu0 0.0
    %4302 = vmatprep.subr.mxu0 0.0
    %4303 = vmatpush1.msra.mxu0 0.0
    %4304 = vmatprep.subr.mxu0 0.0
    %4305 = vmatpush1.msra.mxu0 0.0
    %4306 = vmatprep.subr.mxu0 0.0
    %4307 = vmatpush1.msra.mxu0 0.0
    %4308 = vmatprep.subr.mxu0 0.0
    %4309 = vmatpush1.msra.mxu0 0.0
    %4310 = vmatprep.subr.mxu0 0.0
    %4311 = vmatpush1.msra.mxu0 0.0
    %4312 = vmatprep.subr.mxu0 0.0
    %4313 = vmatpush1.msra.mxu0 0.0
    %4314 = vmatprep.subr.mxu0 0.0
    %4315 = vmatpush1.msra.mxu0 0.0
    %4316 = vmatprep.subr.mxu0 0.0
    %4317 = vmatpush1.msra.mxu0 0.0
    %4318 = vmatprep.mubr.f32.mxu0 0.0
    %4319 = vmatmul.mubr.f32.gmra.mrb[0].mxu0 %v4167
    %v4320 = vpop.f32.mrb[0].mxu0
    %v4321 = vadd.f32 %v2961, %v4320
    %v4322 = vpop.f32.mrb[0].mxu0
    %4323 = vmatprep.mubr.f32.mxu0 0.0
    %4324 = vmatmul.mubr.f32.gmra.mrb[0].mxu0 %v4168
    %v4325 = vpop.f32.mrb[0].mxu0
    %v4326 = vadd.f32 %v2961, %v4325
    %v4327 = vpop.f32.mrb[0].mxu0
    %4328 = vdwg.mxu0
    %v4329 = vadd.f32 %v4171, %v4244
    %v4330 = vadd.f32 %v4174, %v4250
    %v4331 = vxor.u32 %v4329, 2147483648
    %v4332 = vxor.u32 %v4330, 2147483648
    %v4333 = vmul.f32 %v4331, 1.442695
    %v4334 = vpow.pop %v4333
    %v4335 = vmul.f32 %v4332, 1.442695
    %v4336 = vpow.pop %v4335
    %v4337 = vadd.f32 %v4334, 1.0
    %v4338 = vadd.f32 %v4336, 1.0
    %v4339 = vrcp.pop %v4337
    %v4340 = vmul.f32 1.0, %v4339
    %v4341 = vrcp.pop %v4338
    %v4342 = vmul.f32 1.0, %v4341
    %v4343 = vadd.f32 %v4172, %v4246
    %v4344 = vadd.f32 %v4175, %v4252
    %v4345 = vxor.u32 %v4343, 2147483648
    %v4346 = vxor.u32 %v4344, 2147483648
    %v4347 = vmul.f32 %v4345, 1.442695
    %v4348 = vpow.pop %v4347
    %v4349 = vmul.f32 %v4346, 1.442695
    %v4350 = vpow.pop %v4349
    %v4351 = vadd.f32 %v4348, 1.0
    %v4352 = vadd.f32 %v4350, 1.0
    %v4353 = vrcp.pop %v4351
    %v4354 = vmul.f32 1.0, %v4353
    %v4355 = vrcp.pop %v4352
    %v4356 = vmul.f32 1.0, %v4355
    %v4357 = vmul.f32 %v4340, %v4321
    %v4358 = vmul.f32 %v4342, %v4326
    %v4359 = vadd.f32 %v4173, %v4357
    %v4360 = vadd.f32 %v4176, %v4358
    %v4361 = vtanh.pop %v4359
    %v4362 = vtanh.pop %v4360
    %v4363 = vsub.f32 1.0, %v4354
    %v4364 = vsub.f32 1.0, %v4356
    %v4365 = vmul.f32 %v4363, %v4361
    %v4366 = vmul.f32 %v4364, %v4362
    %v4367 = vmul.f32 %v4354, %v4167
    %v4368 = vmul.f32 %v4356, %v4168
    %v4369 = vadd.f32 %v4365, %v4367
    %v4370 = vadd.f32 %v4366, %v4368
    %4371 = vst [vmem:[#allocation2 + $0x60] sm:$0xff] %v4369
    %4372 = vst [vmem:[#allocation2 + $0x68] sm:$0xff] %v4370
    %v4373 = vld [vmem:[#allocation3 + $0x150] sm:$0xff]
    %v4374 = vld [vmem:[#allocation3 + $0x158] sm:$0xff]
    %v4375 = vld [vmem:[#allocation3 + $0x160] sm:$0xff]
    %v4376 = vld [vmem:[#allocation3 + $0x168] sm:$0xff]
    %v4377 = vld [vmem:[#allocation3 + $0x170] sm:$0xff]
    %v4378 = vld [vmem:[#allocation3 + $0x178] sm:$0xff]
    %4379 = vmatprep.subr.mxu0 %v2891
    %4380 = vmatpush1.msra.mxu0 %v2890
    %4381 = vmatprep.subr.mxu0 %v2894
    %4382 = vmatpush1.msra.mxu0 %v2893
    %4383 = vmatprep.subr.mxu0 %v2897
    %4384 = vmatpush1.msra.mxu0 %v2896
    %4385 = vmatprep.subr.mxu0 %v2900
    %4386 = vmatpush1.msra.mxu0 %v2899
    %4387 = vmatprep.subr.mxu0 %v2903
    %4388 = vmatpush1.msra.mxu0 %v2902
    %4389 = vmatprep.subr.mxu0 %v2906
    %4390 = vmatpush1.msra.mxu0 %v2905
    %4391 = vmatprep.subr.mxu0 %v2909
    %4392 = vmatpush1.msra.mxu0 %v2908
    %4393 = vmatprep.subr.mxu0 %v2912
    %4394 = vmatpush1.msra.mxu0 %v2911
    %4395 = vmatprep.subr.mxu0 %v2915
    %4396 = vmatpush1.msra.mxu0 %v2914
    %4397 = vmatprep.subr.mxu0 %v2918
    %4398 = vmatpush1.msra.mxu0 %v2917
    %4399 = vmatprep.subr.mxu0 %v2921
    %4400 = vmatpush1.msra.mxu0 %v2920
    %4401 = vmatprep.subr.mxu0 %v2924
    %4402 = vmatpush1.msra.mxu0 %v2923
    %4403 = vmatprep.subr.mxu0 %v2927
    %4404 = vmatpush1.msra.mxu0 %v2926
    %4405 = vmatprep.subr.mxu0 %v2930
    %4406 = vmatpush1.msra.mxu0 %v2929
    %4407 = vmatprep.subr.mxu0 %v2933
    %4408 = vmatpush1.msra.mxu0 %v2932
    %4409 = vmatprep.subr.mxu0 %v2936
    %4410 = vmatpush1.msra.mxu0 %v2935
    %4411 = vmatprep.subr.mxu0 0.0
    %4412 = vmatpush1.msra.mxu0 0.0
    %4413 = vmatprep.subr.mxu0 0.0
    %4414 = vmatpush1.msra.mxu0 0.0
    %4415 = vmatprep.subr.mxu0 0.0
    %4416 = vmatpush1.msra.mxu0 0.0
    %4417 = vmatprep.subr.mxu0 0.0
    %4418 = vmatpush1.msra.mxu0 0.0
    %4419 = vmatprep.subr.mxu0 0.0
    %4420 = vmatpush1.msra.mxu0 0.0
    %4421 = vmatprep.subr.mxu0 0.0
    %4422 = vmatpush1.msra.mxu0 0.0
    %4423 = vmatprep.subr.mxu0 0.0
    %4424 = vmatpush1.msra.mxu0 0.0
    %4425 = vmatprep.subr.mxu0 0.0
    %4426 = vmatpush1.msra.mxu0 0.0
    %4427 = vmatprep.subr.mxu0 0.0
    %4428 = vmatpush1.msra.mxu0 0.0
    %4429 = vmatprep.subr.mxu0 0.0
    %4430 = vmatpush1.msra.mxu0 0.0
    %4431 = vmatprep.subr.mxu0 0.0
    %4432 = vmatpush1.msra.mxu0 0.0
    %4433 = vmatprep.subr.mxu0 0.0
    %4434 = vmatpush1.msra.mxu0 0.0
    %4435 = vmatprep.subr.mxu0 0.0
    %4436 = vmatpush1.msra.mxu0 0.0
    %4437 = vmatprep.subr.mxu0 0.0
    %4438 = vmatpush1.msra.mxu0 0.0
    %4439 = vmatprep.subr.mxu0 0.0
    %4440 = vmatpush1.msra.mxu0 0.0
    %4441 = vmatprep.subr.mxu0 0.0
    %4442 = vmatpush1.msra.mxu0 0.0
    %4443 = vmatprep.mubr.f32.mxu0 0.0
    %4444 = vmatmul.mubr.f32.gmra.mrb[0].mxu0 %v4369
    %v4445 = vpop.f32.mrb[0].mxu0
    %v4446 = vadd.f32 %v2953, %v4445
    %v4447 = vpop.f32.mrb[0].mxu0
    %v4448 = vadd.f32 %v2957, %v4447
    %4449 = vmatprep.mubr.f32.mxu0 0.0
    %4450 = vmatmul.mubr.f32.gmra.mrb[0].mxu0 %v4370
    %v4451 = vpop.f32.mrb[0].mxu0
    %v4452 = vadd.f32 %v2953, %v4451
    %v4453 = vpop.f32.mrb[0].mxu0
    %v4454 = vadd.f32 %v2957, %v4453
    %4455 = vdwg.mxu0
    %4456 = vmatprep.subr.mxu0 0.0
    %4457 = vmatpush1.msra.mxu0 %v2892
    %4458 = vmatprep.subr.mxu0 0.0
    %4459 = vmatpush1.msra.mxu0 %v2895
    %4460 = vmatprep.subr.mxu0 0.0
    %4461 = vmatpush1.msra.mxu0 %v2898
    %4462 = vmatprep.subr.mxu0 0.0
    %4463 = vmatpush1.msra.mxu0 %v2901
    %4464 = vmatprep.subr.mxu0 0.0
    %4465 = vmatpush1.msra.mxu0 %v2904
    %4466 = vmatprep.subr.mxu0 0.0
    %4467 = vmatpush1.msra.mxu0 %v2907
    %4468 = vmatprep.subr.mxu0 0.0
    %4469 = vmatpush1.msra.mxu0 %v2910
    %4470 = vmatprep.subr.mxu0 0.0
    %4471 = vmatpush1.msra.mxu0 %v2913
    %4472 = vmatprep.subr.mxu0 0.0
    %4473 = vmatpush1.msra.mxu0 %v2916
    %4474 = vmatprep.subr.mxu0 0.0
    %4475 = vmatpush1.msra.mxu0 %v2919
    %4476 = vmatprep.subr.mxu0 0.0
    %4477 = vmatpush1.msra.mxu0 %v2922
    %4478 = vmatprep.subr.mxu0 0.0
    %4479 = vmatpush1.msra.mxu0 %v2925
    %4480 = vmatprep.subr.mxu0 0.0
    %4481 = vmatpush1.msra.mxu0 %v2928
    %4482 = vmatprep.subr.mxu0 0.0
    %4483 = vmatpush1.msra.mxu0 %v2931
    %4484 = vmatprep.subr.mxu0 0.0
    %4485 = vmatpush1.msra.mxu0 %v2934
    %4486 = vmatprep.subr.mxu0 0.0
    %4487 = vmatpush1.msra.mxu0 %v2937
    %4488 = vmatprep.subr.mxu0 0.0
    %4489 = vmatpush1.msra.mxu0 0.0
    %4490 = vmatprep.subr.mxu0 0.0
    %4491 = vmatpush1.msra.mxu0 0.0
    %4492 = vmatprep.subr.mxu0 0.0
    %4493 = vmatpush1.msra.mxu0 0.0
    %4494 = vmatprep.subr.mxu0 0.0
    %4495 = vmatpush1.msra.mxu0 0.0
    %4496 = vmatprep.subr.mxu0 0.0
    %4497 = vmatpush1.msra.mxu0 0.0
    %4498 = vmatprep.subr.mxu0 0.0
    %4499 = vmatpush1.msra.mxu0 0.0
    %4500 = vmatprep.subr.mxu0 0.0
    %4501 = vmatpush1.msra.mxu0 0.0
    %4502 = vmatprep.subr.mxu0 0.0
    %4503 = vmatpush1.msra.mxu0 0.0
    %4504 = vmatprep.subr.mxu0 0.0
    %4505 = vmatpush1.msra.mxu0 0.0
    %4506 = vmatprep.subr.mxu0 0.0
    %4507 = vmatpush1.msra.mxu0 0.0
    %4508 = vmatprep.subr.mxu0 0.0
    %4509 = vmatpush1.msra.mxu0 0.0
    %4510 = vmatprep.subr.mxu0 0.0
    %4511 = vmatpush1.msra.mxu0 0.0
    %4512 = vmatprep.subr.mxu0 0.0
    %4513 = vmatpush1.msra.mxu0 0.0
    %4514 = vmatprep.subr.mxu0 0.0
    %4515 = vmatpush1.msra.mxu0 0.0
    %4516 = vmatprep.subr.mxu0 0.0
    %4517 = vmatpush1.msra.mxu0 0.0
    %4518 = vmatprep.subr.mxu0 0.0
    %4519 = vmatpush1.msra.mxu0 0.0
    %4520 = vmatprep.mubr.f32.mxu0 0.0
    %4521 = vmatmul.mubr.f32.gmra.mrb[0].mxu0 %v4369
    %v4522 = vpop.f32.mrb[0].mxu0
    %v4523 = vadd.f32 %v2961, %v4522
    %v4524 = vpop.f32.mrb[0].mxu0
    %4525 = vmatprep.mubr.f32.mxu0 0.0
    %4526 = vmatmul.mubr.f32.gmra.mrb[0].mxu0 %v4370
    %v4527 = vpop.f32.mrb[0].mxu0
    %v4528 = vadd.f32 %v2961, %v4527
    %v4529 = vpop.f32.mrb[0].mxu0
    %4530 = vdwg.mxu0
    %v4531 = vadd.f32 %v4373, %v4446
    %v4532 = vadd.f32 %v4376, %v4452
    %v4533 = vxor.u32 %v4531, 2147483648
    %v4534 = vxor.u32 %v4532, 2147483648
    %v4535 = vmul.f32 %v4533, 1.442695
    %v4536 = vpow.pop %v4535
    %v4537 = vmul.f32 %v4534, 1.442695
    %v4538 = vpow.pop %v4537
    %v4539 = vadd.f32 %v4536, 1.0
    %v4540 = vadd.f32 %v4538, 1.0
    %v4541 = vrcp.pop %v4539
    %v4542 = vmul.f32 1.0, %v4541
    %v4543 = vrcp.pop %v4540
    %v4544 = vmul.f32 1.0, %v4543
    %v4545 = vadd.f32 %v4374, %v4448
    %v4546 = vadd.f32 %v4377, %v4454
    %v4547 = vxor.u32 %v4545, 2147483648
    %v4548 = vxor.u32 %v4546, 2147483648
    %v4549 = vmul.f32 %v4547, 1.442695
    %v4550 = vpow.pop %v4549
    %v4551 = vmul.f32 %v4548, 1.442695
    %v4552 = vpow.pop %v4551
    %v4553 = vadd.f32 %v4550, 1.0
    %v4554 = vadd.f32 %v4552, 1.0
    %v4555 = vrcp.pop %v4553
    %v4556 = vmul.f32 1.0, %v4555
    %v4557 = vrcp.pop %v4554
    %v4558 = vmul.f32 1.0, %v4557
    %v4559 = vmul.f32 %v4542, %v4523
    %v4560 = vmul.f32 %v4544, %v4528
    %v4561 = vadd.f32 %v4375, %v4559
    %v4562 = vadd.f32 %v4378, %v4560
    %v4563 = vtanh.pop %v4561
    %v4564 = vtanh.pop %v4562
    %v4565 = vsub.f32 1.0, %v4556
    %v4566 = vsub.f32 1.0, %v4558
    %v4567 = vmul.f32 %v4565, %v4563
    %v4568 = vmul.f32 %v4566, %v4564
    %v4569 = vmul.f32 %v4556, %v4369
    %v4570 = vmul.f32 %v4558, %v4370
    %v4571 = vadd.f32 %v4567, %v4569
    %v4572 = vadd.f32 %v4568, %v4570
    %4573 = vst [vmem:[#allocation2 + $0x70] sm:$0xff] %v4571
    %4574 = vst [vmem:[#allocation2 + $0x78] sm:$0xff] %v4572
    %s4575 = scalar_lea.vmem [#allocation13], 16
    %4576 = vst [vmem:[%s4575] sm:$0xff] %v4571
    %4577 = vst [vmem:[%s4575 + $0x8] sm:$0xff] %v4572
    %v4578 = vld [vmem:[#allocation2] sm:$0xff]
    %v4579 = vld [vmem:[#allocation2 + $0x8] sm:$0xff]
    %v4580 = vld [vmem:[#allocation2 + $0x10] sm:$0xff]
    %v4581 = vld [vmem:[#allocation2 + $0x18] sm:$0xff]
    %v4582 = vld [vmem:[#allocation2 + $0x20] sm:$0xff]
    %v4583 = vld [vmem:[#allocation2 + $0x28] sm:$0xff]
    %v4584 = vld [vmem:[#allocation2 + $0x30] sm:$0xff]
    %v4585 = vld [vmem:[#allocation2 + $0x38] sm:$0xff]
    %v4586 = vld [vmem:[#allocation2 + $0x40] sm:$0xff]
    %v4587 = vld [vmem:[#allocation2 + $0x48] sm:$0xff]
    %v4588 = vld [vmem:[#allocation2 + $0x50] sm:$0xff]
    %v4589 = vld [vmem:[#allocation2 + $0x58] sm:$0xff]
    %v4590 = vld [vmem:[#allocation2 + $0x60] sm:$0xff]
    %v4591 = vld [vmem:[#allocation2 + $0x68] sm:$0xff]
    %v4592 = vld [vmem:[#allocation2 + $0x70] sm:$0xff]
    %v4593 = vld [vmem:[#allocation2 + $0x78] sm:$0xff]
    %v4594 = vpack.c.bf16 %v4579, %v4578
    %v4595 = vpack.c.bf16 %v4581, %v4580
    %v4596 = vpack.c.bf16 %v4583, %v4582
    %v4597 = vpack.c.bf16 %v4585, %v4584
    %v4598 = vpack.c.bf16 %v4587, %v4586
    %v4599 = vpack.c.bf16 %v4589, %v4588
    %v4600 = vpack.c.bf16 %v4591, %v4590
    %v4601 = vpack.c.bf16 %v4593, %v4592
    %v4602 = vld [vmem:[%s4] sm:$0xff]
    %v4603 = vld [vmem:[%s4 + $0x8] sm:$0xff]
    %v4604 = vld [vmem:[%s4 + $0x10] sm:$0xff]
    %v4605 = vld [vmem:[%s4 + $0x18] sm:$0xff]
    %v4606 = vld [vmem:[%s4 + $0x20] sm:$0xff]
    %v4607 = vld [vmem:[%s4 + $0x28] sm:$0xff]
    %v4608 = vld [vmem:[%s4 + $0x30] sm:$0xff]
    %v4609 = vld [vmem:[%s4 + $0x38] sm:$0xff]
    %v4610 = vld [vmem:[%s4 + $0x40] sm:$0xff]
    %v4611 = vld [vmem:[%s4 + $0x48] sm:$0xff]
    %v4612 = vld [vmem:[%s4 + $0x50] sm:$0xff]
    %v4613 = vld [vmem:[%s4 + $0x58] sm:$0xff]
    %v4614 = vld [vmem:[%s4 + $0x60] sm:$0xff]
    %v4615 = vld [vmem:[%s4 + $0x68] sm:$0xff]
    %v4616 = vld [vmem:[%s4 + $0x70] sm:$0xff]
    %v4617 = vld [vmem:[%s4 + $0x78] sm:$0xff]
    %v4618 = vld [vmem:[%s4 + $0x80] sm:$0xff]
    %v4619 = vld [vmem:[%s4 + $0x88] sm:$0xff]
    %v4620 = vld [vmem:[%s4 + $0x90] sm:$0xff]
    %v4621 = vld [vmem:[%s4 + $0x98] sm:$0xff]
    %v4622 = vld [vmem:[%s4 + $0xa0] sm:$0xff]
    %v4623 = vld [vmem:[%s4 + $0xa8] sm:$0xff]
    %v4624 = vld [vmem:[%s4 + $0xb0] sm:$0xff]
    %v4625 = vld [vmem:[%s4 + $0xb8] sm:$0xff]
    %v4626 = vld [vmem:[%s4 + $0xc0] sm:$0xff]
    %v4627 = vld [vmem:[%s4 + $0xc8] sm:$0xff]
    %v4628 = vld [vmem:[%s4 + $0xd0] sm:$0xff]
    %v4629 = vld [vmem:[%s4 + $0xd8] sm:$0xff]
    %v4630 = vld [vmem:[%s4 + $0xe0] sm:$0xff]
    %v4631 = vld [vmem:[%s4 + $0xe8] sm:$0xff]
    %v4632 = vld [vmem:[%s4 + $0xf0] sm:$0xff]
    %v4633 = vld [vmem:[%s4 + $0xf8] sm:$0xff]
    %v4634 = vpack.c.bf16 %v4603, %v4602
    %v4635 = vpack.c.bf16 %v4605, %v4604
    %v4636 = vpack.c.bf16 %v4607, %v4606
    %v4637 = vpack.c.bf16 %v4609, %v4608
    %v4638 = vpack.c.bf16 %v4611, %v4610
    %v4639 = vpack.c.bf16 %v4613, %v4612
    %v4640 = vpack.c.bf16 %v4615, %v4614
    %v4641 = vpack.c.bf16 %v4617, %v4616
    %v4642 = vpack.c.bf16 %v4619, %v4618
    %v4643 = vpack.c.bf16 %v4621, %v4620
    %v4644 = vpack.c.bf16 %v4623, %v4622
    %v4645 = vpack.c.bf16 %v4625, %v4624
    %v4646 = vpack.c.bf16 %v4627, %v4626
    %v4647 = vpack.c.bf16 %v4629, %v4628
    %v4648 = vpack.c.bf16 %v4631, %v4630
    %v4649 = vpack.c.bf16 %v4633, %v4632
    %v4650 = vld [vmem:[%s1] sm:$0xff]
    %v4651 = vld [vmem:[%s1 + $0x8] sm:$0xff]
    %v4652 = vld [vmem:[%s1 + $0x10] sm:$0xff]
    %v4653 = vld [vmem:[%s1 + $0x18] sm:$0xff]
    %v4654 = vld [vmem:[%s1 + $0x20] sm:$0xff]
    %v4655 = vld [vmem:[%s1 + $0x28] sm:$0xff]
    %v4656 = vld [vmem:[%s1 + $0x30] sm:$0xff]
    %v4657 = vld [vmem:[%s1 + $0x38] sm:$0xff]
    %v4658 = vld [vmem:[%s1 + $0x40] sm:$0xff]
    %v4659 = vld [vmem:[%s1 + $0x48] sm:$0xff]
    %v4660 = vld [vmem:[%s1 + $0x50] sm:$0xff]
    %v4661 = vld [vmem:[%s1 + $0x58] sm:$0xff]
    %v4662 = vld [vmem:[%s1 + $0x60] sm:$0xff]
    %v4663 = vld [vmem:[%s1 + $0x68] sm:$0xff]
    %v4664 = vld [vmem:[%s1 + $0x70] sm:$0xff]
    %v4665 = vld [vmem:[%s1 + $0x78] sm:$0xff]
    %v4666 = vld [vmem:[%s1 + $0x80] sm:$0xff]
    %v4667 = vld [vmem:[%s1 + $0x88] sm:$0xff]
    %v4668 = vld [vmem:[%s1 + $0x90] sm:$0xff]
    %v4669 = vld [vmem:[%s1 + $0x98] sm:$0xff]
    %v4670 = vld [vmem:[%s1 + $0xa0] sm:$0xff]
    %v4671 = vld [vmem:[%s1 + $0xa8] sm:$0xff]
    %v4672 = vld [vmem:[%s1 + $0xb0] sm:$0xff]
    %v4673 = vld [vmem:[%s1 + $0xb8] sm:$0xff]
    %v4674 = vld [vmem:[%s1 + $0xc0] sm:$0xff]
    %v4675 = vld [vmem:[%s1 + $0xc8] sm:$0xff]
    %v4676 = vld [vmem:[%s1 + $0xd0] sm:$0xff]
    %v4677 = vld [vmem:[%s1 + $0xd8] sm:$0xff]
    %v4678 = vld [vmem:[%s1 + $0xe0] sm:$0xff]
    %v4679 = vld [vmem:[%s1 + $0xe8] sm:$0xff]
    %v4680 = vld [vmem:[%s1 + $0xf0] sm:$0xff]
    %v4681 = vld [vmem:[%s1 + $0xf8] sm:$0xff]
    %4682 = vmatprep.subr.bf16.mxu0 0
    %4683 = vmatpush1.bf16.xpose.msra.mxu0 %v4634
    %4684 = vmatprep.subr.bf16.mxu0 0
    %4685 = vmatpush1.bf16.xpose.msra.mxu0 %v4635
    %4686 = vmatprep.subr.bf16.mxu0 0
    %4687 = vmatpush1.bf16.xpose.msra.mxu0 %v4636
    %4688 = vmatprep.subr.bf16.mxu0 0
    %4689 = vmatpush1.bf16.xpose.msra.mxu0 %v4637
    %4690 = vmatprep.subr.bf16.mxu0 0
    %4691 = vmatpush1.bf16.xpose.msra.mxu0 %v4638
    %4692 = vmatprep.subr.bf16.mxu0 0
    %4693 = vmatpush1.bf16.xpose.msra.mxu0 %v4639
    %4694 = vmatprep.subr.bf16.mxu0 0
    %4695 = vmatpush1.bf16.xpose.msra.mxu0 %v4640
    %4696 = vmatprep.subr.bf16.mxu0 0
    %4697 = vmatpush1.bf16.xpose.msra.mxu0 %v4641
    %4698 = vmatprep.subr.bf16.mxu0 0
    %4699 = vmatpush1.bf16.xpose.msra.mxu0 %v4642
    %4700 = vmatprep.subr.bf16.mxu0 0
    %4701 = vmatpush1.bf16.xpose.msra.mxu0 %v4643
    %4702 = vmatprep.subr.bf16.mxu0 0
    %4703 = vmatpush1.bf16.xpose.msra.mxu0 %v4644
    %4704 = vmatprep.subr.bf16.mxu0 0
    %4705 = vmatpush1.bf16.xpose.msra.mxu0 %v4645
    %4706 = vmatprep.subr.bf16.mxu0 0
    %4707 = vmatpush1.bf16.xpose.msra.mxu0 %v4646
    %4708 = vmatprep.subr.bf16.mxu0 0
    %4709 = vmatpush1.bf16.xpose.msra.mxu0 %v4647
    %4710 = vmatprep.subr.bf16.mxu0 0
    %4711 = vmatpush1.bf16.xpose.msra.mxu0 %v4648
    %4712 = vmatprep.subr.bf16.mxu0 0
    %4713 = vmatpush1.bf16.xpose.msra.mxu0 %v4649
    %4714 = vmatprep.mubr.bf16.mxu0 0
    %4715 = vmatmul.mubr.bf16.gmra.mrb[0].mxu0 %v4594
    %v4716 = vpop.f32.mrb[0].mxu0
    %v4717 = vadd.f32 %v4650, %v4716
    %v4718 = vpop.f32.mrb[0].mxu0
    %v4719 = vadd.f32 %v4651, %v4718
    %v4720 = vpop.f32.mrb[0].mxu0
    %v4721 = vadd.f32 %v4652, %v4720
    %v4722 = vpop.f32.mrb[0].mxu0
    %v4723 = vadd.f32 %v4653, %v4722
    %4724 = vmatprep.mubr.bf16.mxu0 0
    %4725 = vmatmul.mubr.bf16.gmra.mrb[0].mxu0 %v4595
    %v4726 = vpop.f32.mrb[0].mxu0
    %v4727 = vadd.f32 %v4654, %v4726
    %v4728 = vpop.f32.mrb[0].mxu0
    %v4729 = vadd.f32 %v4655, %v4728
    %v4730 = vpop.f32.mrb[0].mxu0
    %v4731 = vadd.f32 %v4656, %v4730
    %v4732 = vpop.f32.mrb[0].mxu0
    %v4733 = vadd.f32 %v4657, %v4732
    %4734 = vmatprep.mubr.bf16.mxu0 0
    %4735 = vmatmul.mubr.bf16.gmra.mrb[0].mxu0 %v4596
    %v4736 = vpop.f32.mrb[0].mxu0
    %v4737 = vadd.f32 %v4658, %v4736
    %v4738 = vpop.f32.mrb[0].mxu0
    %v4739 = vadd.f32 %v4659, %v4738
    %v4740 = vpop.f32.mrb[0].mxu0
    %v4741 = vadd.f32 %v4660, %v4740
    %v4742 = vpop.f32.mrb[0].mxu0
    %v4743 = vadd.f32 %v4661, %v4742
    %4744 = vmatprep.mubr.bf16.mxu0 0
    %4745 = vmatmul.mubr.bf16.gmra.mrb[0].mxu0 %v4597
    %v4746 = vpop.f32.mrb[0].mxu0
    %v4747 = vadd.f32 %v4662, %v4746
    %v4748 = vpop.f32.mrb[0].mxu0
    %v4749 = vadd.f32 %v4663, %v4748
    %v4750 = vpop.f32.mrb[0].mxu0
    %v4751 = vadd.f32 %v4664, %v4750
    %v4752 = vpop.f32.mrb[0].mxu0
    %v4753 = vadd.f32 %v4665, %v4752
    %4754 = vmatprep.mubr.bf16.mxu0 0
    %4755 = vmatmul.mubr.bf16.gmra.mrb[0].mxu0 %v4598
    %v4756 = vpop.f32.mrb[0].mxu0
    %v4757 = vadd.f32 %v4666, %v4756
    %v4758 = vpop.f32.mrb[0].mxu0
    %v4759 = vadd.f32 %v4667, %v4758
    %v4760 = vpop.f32.mrb[0].mxu0
    %v4761 = vadd.f32 %v4668, %v4760
    %v4762 = vpop.f32.mrb[0].mxu0
    %v4763 = vadd.f32 %v4669, %v4762
    %4764 = vmatprep.mubr.bf16.mxu0 0
    %4765 = vmatmul.mubr.bf16.gmra.mrb[0].mxu0 %v4599
    %v4766 = vpop.f32.mrb[0].mxu0
    %v4767 = vadd.f32 %v4670, %v4766
    %v4768 = vpop.f32.mrb[0].mxu0
    %v4769 = vadd.f32 %v4671, %v4768
    %v4770 = vpop.f32.mrb[0].mxu0
    %v4771 = vadd.f32 %v4672, %v4770
    %v4772 = vpop.f32.mrb[0].mxu0
    %v4773 = vadd.f32 %v4673, %v4772
    %4774 = vmatprep.mubr.bf16.mxu0 0
    %4775 = vmatmul.mubr.bf16.gmra.mrb[0].mxu0 %v4600
    %v4776 = vpop.f32.mrb[0].mxu0
    %v4777 = vadd.f32 %v4674, %v4776
    %v4778 = vpop.f32.mrb[0].mxu0
    %v4779 = vadd.f32 %v4675, %v4778
    %v4780 = vpop.f32.mrb[0].mxu0
    %v4781 = vadd.f32 %v4676, %v4780
    %v4782 = vpop.f32.mrb[0].mxu0
    %v4783 = vadd.f32 %v4677, %v4782
    %4784 = vmatprep.mubr.bf16.mxu0 0
    %4785 = vmatmul.mubr.bf16.gmra.mrb[0].mxu0 %v4601
    %v4786 = vpop.f32.mrb[0].mxu0
    %v4787 = vadd.f32 %v4678, %v4786
    %v4788 = vpop.f32.mrb[0].mxu0
    %v4789 = vadd.f32 %v4679, %v4788
    %v4790 = vpop.f32.mrb[0].mxu0
    %v4791 = vadd.f32 %v4680, %v4790
    %v4792 = vpop.f32.mrb[0].mxu0
    %v4793 = vadd.f32 %v4681, %v4792
    %4794 = vdwg.mxu0
    %v4795 = vmax.f32 %v4717, %v4719
    %4796 = vmax.xlane.f32.xlu0 %v4795
    %v4797 = vpop.xlane.xlu0 %4796
    %v4798 = vmax.f32 %v4721, %v4723
    %4799 = vmax.xlane.f32.xlu0 %v4798
    %v4800 = vpop.xlane.xlu0 %4799
    %v4801 = vmax.f32 %v4727, %v4729
    %4802 = vmax.xlane.f32.xlu0 %v4801
    %v4803 = vpop.xlane.xlu0 %4802
    %v4804 = vmax.f32 %v4731, %v4733
    %4805 = vmax.xlane.f32.xlu0 %v4804
    %v4806 = vpop.xlane.xlu0 %4805
    %v4807 = vmax.f32 %v4737, %v4739
    %4808 = vmax.xlane.f32.xlu0 %v4807
    %v4809 = vpop.xlane.xlu0 %4808
    %v4810 = vmax.f32 %v4741, %v4743
    %4811 = vmax.xlane.f32.xlu0 %v4810
    %v4812 = vpop.xlane.xlu0 %4811
    %v4813 = vmax.f32 %v4747, %v4749
    %4814 = vmax.xlane.f32.xlu0 %v4813
    %v4815 = vpop.xlane.xlu0 %4814
    %v4816 = vmax.f32 %v4751, %v4753
    %4817 = vmax.xlane.f32.xlu0 %v4816
    %v4818 = vpop.xlane.xlu0 %4817
    %v4819 = vmax.f32 %v4757, %v4759
    %4820 = vmax.xlane.f32.xlu0 %v4819
    %v4821 = vpop.xlane.xlu0 %4820
    %v4822 = vmax.f32 %v4761, %v4763
    %4823 = vmax.xlane.f32.xlu0 %v4822
    %v4824 = vpop.xlane.xlu0 %4823
    %v4825 = vmax.f32 %v4767, %v4769
    %4826 = vmax.xlane.f32.xlu0 %v4825
    %v4827 = vpop.xlane.xlu0 %4826
    %v4828 = vmax.f32 %v4771, %v4773
    %4829 = vmax.xlane.f32.xlu0 %v4828
    %v4830 = vpop.xlane.xlu0 %4829
    %v4831 = vmax.f32 %v4777, %v4779
    %4832 = vmax.xlane.f32.xlu0 %v4831
    %v4833 = vpop.xlane.xlu0 %4832
    %v4834 = vmax.f32 %v4781, %v4783
    %4835 = vmax.xlane.f32.xlu0 %v4834
    %v4836 = vpop.xlane.xlu0 %4835
    %v4837 = vmax.f32 %v4787, %v4789
    %4838 = vmax.xlane.f32.xlu0 %v4837
    %v4839 = vpop.xlane.xlu0 %4838
    %v4840 = vmax.f32 %v4791, %v4793
    %4841 = vmax.xlane.f32.xlu0 %v4840
    %v4842 = vpop.xlane.xlu0 %4841
    %v4843 = vsub.f32 %v4717, %v4797
    %v4844 = vsub.f32 %v4719, %v4797
    %v4845 = vsub.f32 %v4721, %v4800
    %v4846 = vsub.f32 %v4723, %v4800
    %v4847 = vsub.f32 %v4727, %v4803
    %v4848 = vsub.f32 %v4729, %v4803
    %v4849 = vsub.f32 %v4731, %v4806
    %v4850 = vsub.f32 %v4733, %v4806
    %v4851 = vsub.f32 %v4737, %v4809
    %v4852 = vsub.f32 %v4739, %v4809
    %v4853 = vsub.f32 %v4741, %v4812
    %v4854 = vsub.f32 %v4743, %v4812
    %v4855 = vsub.f32 %v4747, %v4815
    %v4856 = vsub.f32 %v4749, %v4815
    %v4857 = vsub.f32 %v4751, %v4818
    %v4858 = vsub.f32 %v4753, %v4818
    %v4859 = vsub.f32 %v4757, %v4821
    %v4860 = vsub.f32 %v4759, %v4821
    %v4861 = vsub.f32 %v4761, %v4824
    %v4862 = vsub.f32 %v4763, %v4824
    %v4863 = vsub.f32 %v4767, %v4827
    %v4864 = vsub.f32 %v4769, %v4827
    %v4865 = vsub.f32 %v4771, %v4830
    %v4866 = vsub.f32 %v4773, %v4830
    %v4867 = vsub.f32 %v4777, %v4833
    %v4868 = vsub.f32 %v4779, %v4833
    %v4869 = vsub.f32 %v4781, %v4836
    %v4870 = vsub.f32 %v4783, %v4836
    %v4871 = vsub.f32 %v4787, %v4839
    %v4872 = vsub.f32 %v4789, %v4839
    %v4873 = vsub.f32 %v4791, %v4842
    %v4874 = vsub.f32 %v4793, %v4842
    %v4875 = vmul.f32 %v4843, 1.442695
    %v4876 = vpow.pop %v4875
    %v4877 = vmul.f32 %v4844, 1.442695
    %v4878 = vpow.pop %v4877
    %v4879 = vmul.f32 %v4845, 1.442695
    %v4880 = vpow.pop %v4879
    %v4881 = vmul.f32 %v4846, 1.442695
    %v4882 = vpow.pop %v4881
    %v4883 = vmul.f32 %v4847, 1.442695
    %v4884 = vpow.pop %v4883
    %v4885 = vmul.f32 %v4848, 1.442695
    %v4886 = vpow.pop %v4885
    %v4887 = vmul.f32 %v4849, 1.442695
    %v4888 = vpow.pop %v4887
    %v4889 = vmul.f32 %v4850, 1.442695
    %v4890 = vpow.pop %v4889
    %v4891 = vmul.f32 %v4851, 1.442695
    %v4892 = vpow.pop %v4891
    %v4893 = vmul.f32 %v4852, 1.442695
    %v4894 = vpow.pop %v4893
    %v4895 = vmul.f32 %v4853, 1.442695
    %v4896 = vpow.pop %v4895
    %v4897 = vmul.f32 %v4854, 1.442695
    %v4898 = vpow.pop %v4897
    %v4899 = vmul.f32 %v4855, 1.442695
    %v4900 = vpow.pop %v4899
    %v4901 = vmul.f32 %v4856, 1.442695
    %v4902 = vpow.pop %v4901
    %v4903 = vmul.f32 %v4857, 1.442695
    %v4904 = vpow.pop %v4903
    %v4905 = vmul.f32 %v4858, 1.442695
    %v4906 = vpow.pop %v4905
    %v4907 = vmul.f32 %v4859, 1.442695
    %v4908 = vpow.pop %v4907
    %v4909 = vmul.f32 %v4860, 1.442695
    %v4910 = vpow.pop %v4909
    %v4911 = vmul.f32 %v4861, 1.442695
    %v4912 = vpow.pop %v4911
    %v4913 = vmul.f32 %v4862, 1.442695
    %v4914 = vpow.pop %v4913
    %v4915 = vmul.f32 %v4863, 1.442695
    %v4916 = vpow.pop %v4915
    %v4917 = vmul.f32 %v4864, 1.442695
    %v4918 = vpow.pop %v4917
    %v4919 = vmul.f32 %v4865, 1.442695
    %v4920 = vpow.pop %v4919
    %v4921 = vmul.f32 %v4866, 1.442695
    %v4922 = vpow.pop %v4921
    %v4923 = vmul.f32 %v4867, 1.442695
    %v4924 = vpow.pop %v4923
    %v4925 = vmul.f32 %v4868, 1.442695
    %v4926 = vpow.pop %v4925
    %v4927 = vmul.f32 %v4869, 1.442695
    %v4928 = vpow.pop %v4927
    %v4929 = vmul.f32 %v4870, 1.442695
    %v4930 = vpow.pop %v4929
    %v4931 = vmul.f32 %v4871, 1.442695
    %v4932 = vpow.pop %v4931
    %v4933 = vmul.f32 %v4872, 1.442695
    %v4934 = vpow.pop %v4933
    %v4935 = vmul.f32 %v4873, 1.442695
    %v4936 = vpow.pop %v4935
    %v4937 = vmul.f32 %v4874, 1.442695
    %v4938 = vpow.pop %v4937
    %v4939 = vadd.f32 %v4876, %v4878
    %4940 = vadd.xlane.f32.xlu0 %v4939
    %v4941 = vpop.xlane.xlu0 %4940
    %v4942 = vadd.f32 %v4880, %v4882
    %4943 = vadd.xlane.f32.xlu0 %v4942
    %v4944 = vpop.xlane.xlu0 %4943
    %v4945 = vadd.f32 %v4884, %v4886
    %4946 = vadd.xlane.f32.xlu0 %v4945
    %v4947 = vpop.xlane.xlu0 %4946
    %v4948 = vadd.f32 %v4888, %v4890
    %4949 = vadd.xlane.f32.xlu0 %v4948
    %v4950 = vpop.xlane.xlu0 %4949
    %v4951 = vadd.f32 %v4892, %v4894
    %4952 = vadd.xlane.f32.xlu0 %v4951
    %v4953 = vpop.xlane.xlu0 %4952
    %v4954 = vadd.f32 %v4896, %v4898
    %4955 = vadd.xlane.f32.xlu0 %v4954
    %v4956 = vpop.xlane.xlu0 %4955
    %v4957 = vadd.f32 %v4900, %v4902
    %4958 = vadd.xlane.f32.xlu0 %v4957
    %v4959 = vpop.xlane.xlu0 %4958
    %v4960 = vadd.f32 %v4904, %v4906
    %4961 = vadd.xlane.f32.xlu0 %v4960
    %v4962 = vpop.xlane.xlu0 %4961
    %v4963 = vadd.f32 %v4908, %v4910
    %4964 = vadd.xlane.f32.xlu0 %v4963
    %v4965 = vpop.xlane.xlu0 %4964
    %v4966 = vadd.f32 %v4912, %v4914
    %4967 = vadd.xlane.f32.xlu0 %v4966
    %v4968 = vpop.xlane.xlu0 %4967
    %v4969 = vadd.f32 %v4916, %v4918
    %4970 = vadd.xlane.f32.xlu0 %v4969
    %v4971 = vpop.xlane.xlu0 %4970
    %v4972 = vadd.f32 %v4920, %v4922
    %4973 = vadd.xlane.f32.xlu0 %v4972
    %v4974 = vpop.xlane.xlu0 %4973
    %v4975 = vadd.f32 %v4924, %v4926
    %4976 = vadd.xlane.f32.xlu0 %v4975
    %v4977 = vpop.xlane.xlu0 %4976
    %v4978 = vadd.f32 %v4928, %v4930
    %4979 = vadd.xlane.f32.xlu0 %v4978
    %v4980 = vpop.xlane.xlu0 %4979
    %v4981 = vadd.f32 %v4932, %v4934
    %4982 = vadd.xlane.f32.xlu0 %v4981
    %v4983 = vpop.xlane.xlu0 %4982
    %v4984 = vadd.f32 %v4936, %v4938
    %4985 = vadd.xlane.f32.xlu0 %v4984
    %v4986 = vpop.xlane.xlu0 %4985
    %v4987 = vrcp.pop %v4941
    %v4988 = vrcp.pop %v4944
    %v4989 = vrcp.pop %v4947
    %v4990 = vrcp.pop %v4950
    %v4991 = vrcp.pop %v4953
    %v4992 = vrcp.pop %v4956
    %v4993 = vrcp.pop %v4959
    %v4994 = vrcp.pop %v4962
    %v4995 = vrcp.pop %v4965
    %v4996 = vrcp.pop %v4968
    %v4997 = vrcp.pop %v4971
    %v4998 = vrcp.pop %v4974
    %v4999 = vrcp.pop %v4977
    %v5000 = vrcp.pop %v4980
    %v5001 = vrcp.pop %v4983
    %v5002 = vrcp.pop %v4986
    %v5003 = vmul.f32 %v4876, %v4987
    %v5004 = vmul.f32 %v4878, %v4987
    %v5005 = vmul.f32 %v4880, %v4988
    %v5006 = vmul.f32 %v4882, %v4988
    %v5007 = vmul.f32 %v4884, %v4989
    %v5008 = vmul.f32 %v4886, %v4989
    %v5009 = vmul.f32 %v4888, %v4990
    %v5010 = vmul.f32 %v4890, %v4990
    %v5011 = vmul.f32 %v4892, %v4991
    %v5012 = vmul.f32 %v4894, %v4991
    %v5013 = vmul.f32 %v4896, %v4992
    %v5014 = vmul.f32 %v4898, %v4992
    %v5015 = vmul.f32 %v4900, %v4993
    %v5016 = vmul.f32 %v4902, %v4993
    %v5017 = vmul.f32 %v4904, %v4994
    %v5018 = vmul.f32 %v4906, %v4994
    %v5019 = vmul.f32 %v4908, %v4995
    %v5020 = vmul.f32 %v4910, %v4995
    %v5021 = vmul.f32 %v4912, %v4996
    %v5022 = vmul.f32 %v4914, %v4996
    %v5023 = vmul.f32 %v4916, %v4997
    %v5024 = vmul.f32 %v4918, %v4997
    %v5025 = vmul.f32 %v4920, %v4998
    %v5026 = vmul.f32 %v4922, %v4998
    %v5027 = vmul.f32 %v4924, %v4999
    %v5028 = vmul.f32 %v4926, %v4999
    %v5029 = vmul.f32 %v4928, %v5000
    %v5030 = vmul.f32 %v4930, %v5000
    %v5031 = vmul.f32 %v4932, %v5001
    %v5032 = vmul.f32 %v4934, %v5001
    %v5033 = vmul.f32 %v4936, %v5002
    %v5034 = vmul.f32 %v4938, %v5002
    %v5035 = vpack.c.bf16 %v5005, %v5003
    %v5036 = vpack.c.bf16 %v5006, %v5004
    %v5037 = vpack.c.bf16 %v5009, %v5007
    %v5038 = vpack.c.bf16 %v5010, %v5008
    %v5039 = vpack.c.bf16 %v5013, %v5011
    %v5040 = vpack.c.bf16 %v5014, %v5012
    %v5041 = vpack.c.bf16 %v5017, %v5015
    %v5042 = vpack.c.bf16 %v5018, %v5016
    %v5043 = vpack.c.bf16 %v5021, %v5019
    %v5044 = vpack.c.bf16 %v5022, %v5020
    %v5045 = vpack.c.bf16 %v5025, %v5023
    %v5046 = vpack.c.bf16 %v5026, %v5024
    %v5047 = vpack.c.bf16 %v5029, %v5027
    %v5048 = vpack.c.bf16 %v5030, %v5028
    %v5049 = vpack.c.bf16 %v5033, %v5031
    %v5050 = vpack.c.bf16 %v5034, %v5032
    %5051 = vmatprep.subr.bf16.mxu0 0
    %5052 = vmatpush1.bf16.msra.mxu0 %v4634
    %5053 = vmatprep.subr.bf16.mxu0 0
    %5054 = vmatpush1.bf16.msra.mxu0 %v4635
    %5055 = vmatprep.subr.bf16.mxu0 0
    %5056 = vmatpush1.bf16.msra.mxu0 %v4636
    %5057 = vmatprep.subr.bf16.mxu0 0
    %5058 = vmatpush1.bf16.msra.mxu0 %v4637
    %5059 = vmatprep.subr.bf16.mxu0 0
    %5060 = vmatpush1.bf16.msra.mxu0 %v4638
    %5061 = vmatprep.subr.bf16.mxu0 0
    %5062 = vmatpush1.bf16.msra.mxu0 %v4639
    %5063 = vmatprep.subr.bf16.mxu0 0
    %5064 = vmatpush1.bf16.msra.mxu0 %v4640
    %5065 = vmatprep.subr.bf16.mxu0 0
    %5066 = vmatpush1.bf16.msra.mxu0 %v4641
    %5067 = vmatprep.subr.bf16.mxu0 0
    %5068 = vmatpush1.bf16.msra.mxu0 %v4642
    %5069 = vmatprep.subr.bf16.mxu0 0
    %5070 = vmatpush1.bf16.msra.mxu0 %v4643
    %5071 = vmatprep.subr.bf16.mxu0 0
    %5072 = vmatpush1.bf16.msra.mxu0 %v4644
    %5073 = vmatprep.subr.bf16.mxu0 0
    %5074 = vmatpush1.bf16.msra.mxu0 %v4645
    %5075 = vmatprep.subr.bf16.mxu0 0
    %5076 = vmatpush1.bf16.msra.mxu0 %v4646
    %5077 = vmatprep.subr.bf16.mxu0 0
    %5078 = vmatpush1.bf16.msra.mxu0 %v4647
    %5079 = vmatprep.subr.bf16.mxu0 0
    %5080 = vmatpush1.bf16.msra.mxu0 %v4648
    %5081 = vmatprep.subr.bf16.mxu0 0
    %5082 = vmatpush1.bf16.msra.mxu0 %v4649
    %5083 = vmatprep.mubr.bf16.mxu0 %v5036
    %5084 = vmatmul.mubr.bf16.gmra.mrb[0].mxu0 %v5035
    %v5085 = vpop.f32.mrb[0].mxu0
    %v5086 = vadd.f32 0.0, %v5085
    %v5087 = vpop.f32.mrb[0].mxu0
    %v5088 = vpop.f32.mrb[0].mxu0
    %v5089 = vadd.f32 0.0, %v5088
    %v5090 = vpop.f32.mrb[0].mxu0
    %5091 = vmatprep.mubr.bf16.mxu0 %v5038
    %5092 = vmatmul.mubr.bf16.gmra.mrb[0].mxu0 %v5037
    %v5093 = vpop.f32.mrb[0].mxu0
    %v5094 = vadd.f32 0.0, %v5093
    %v5095 = vpop.f32.mrb[0].mxu0
    %v5096 = vpop.f32.mrb[0].mxu0
    %v5097 = vadd.f32 0.0, %v5096
    %v5098 = vpop.f32.mrb[0].mxu0
    %5099 = vmatprep.mubr.bf16.mxu0 %v5040
    %5100 = vmatmul.mubr.bf16.gmra.mrb[0].mxu0 %v5039
    %v5101 = vpop.f32.mrb[0].mxu0
    %v5102 = vadd.f32 0.0, %v5101
    %v5103 = vpop.f32.mrb[0].mxu0
    %v5104 = vpop.f32.mrb[0].mxu0
    %v5105 = vadd.f32 0.0, %v5104
    %v5106 = vpop.f32.mrb[0].mxu0
    %5107 = vmatprep.mubr.bf16.mxu0 %v5042
    %5108 = vmatmul.mubr.bf16.gmra.mrb[0].mxu0 %v5041
    %v5109 = vpop.f32.mrb[0].mxu0
    %v5110 = vadd.f32 0.0, %v5109
    %v5111 = vpop.f32.mrb[0].mxu0
    %v5112 = vpop.f32.mrb[0].mxu0
    %v5113 = vadd.f32 0.0, %v5112
    %v5114 = vpop.f32.mrb[0].mxu0
    %5115 = vmatprep.mubr.bf16.mxu0 %v5044
    %5116 = vmatmul.mubr.bf16.gmra.mrb[0].mxu0 %v5043
    %v5117 = vpop.f32.mrb[0].mxu0
    %v5118 = vadd.f32 0.0, %v5117
    %v5119 = vpop.f32.mrb[0].mxu0
    %v5120 = vpop.f32.mrb[0].mxu0
    %v5121 = vadd.f32 0.0, %v5120
    %v5122 = vpop.f32.mrb[0].mxu0
    %5123 = vmatprep.mubr.bf16.mxu0 %v5046
    %5124 = vmatmul.mubr.bf16.gmra.mrb[0].mxu0 %v5045
    %v5125 = vpop.f32.mrb[0].mxu0
    %v5126 = vadd.f32 0.0, %v5125
    %v5127 = vpop.f32.mrb[0].mxu0
    %v5128 = vpop.f32.mrb[0].mxu0
    %v5129 = vadd.f32 0.0, %v5128
    %v5130 = vpop.f32.mrb[0].mxu0
    %5131 = vmatprep.mubr.bf16.mxu0 %v5048
    %5132 = vmatmul.mubr.bf16.gmra.mrb[0].mxu0 %v5047
    %v5133 = vpop.f32.mrb[0].mxu0
    %v5134 = vadd.f32 0.0, %v5133
    %v5135 = vpop.f32.mrb[0].mxu0
    %v5136 = vpop.f32.mrb[0].mxu0
    %v5137 = vadd.f32 0.0, %v5136
    %v5138 = vpop.f32.mrb[0].mxu0
    %5139 = vmatprep.mubr.bf16.mxu0 %v5050
    %5140 = vmatmul.mubr.bf16.gmra.mrb[0].mxu0 %v5049
    %v5141 = vpop.f32.mrb[0].mxu0
    %v5142 = vadd.f32 0.0, %v5141
    %v5143 = vpop.f32.mrb[0].mxu0
    %v5144 = vpop.f32.mrb[0].mxu0
    %v5145 = vadd.f32 0.0, %v5144
    %v5146 = vpop.f32.mrb[0].mxu0
    %5147 = vdwg.mxu0
    %v5148 = vld [vmem:[#allocation9] sm:$0xff]
    %v5149 = vld [vmem:[#allocation9 + $0x8] sm:$0xff]
    %v5150 = vld [vmem:[#allocation9 + $0x10] sm:$0xff]
    %v5151 = vld [vmem:[#allocation9 + $0x18] sm:$0xff]
    %v5152 = vld [vmem:[#allocation9 + $0x20] sm:$0xff]
    %v5153 = vld [vmem:[#allocation9 + $0x28] sm:$0xff]
    %v5154 = vld [vmem:[#allocation9 + $0x30] sm:$0xff]
    %v5155 = vld [vmem:[#allocation9 + $0x38] sm:$0xff]
    %v5156 = vld [vmem:[#allocation9 + $0x40] sm:$0xff]
    %v5157 = vld [vmem:[#allocation9 + $0x48] sm:$0xff]
    %v5158 = vld [vmem:[#allocation9 + $0x50] sm:$0xff]
    %v5159 = vld [vmem:[#allocation9 + $0x58] sm:$0xff]
    %v5160 = vld [vmem:[#allocation9 + $0x60] sm:$0xff]
    %v5161 = vld [vmem:[#allocation9 + $0x68] sm:$0xff]
    %v5162 = vld [vmem:[#allocation9 + $0x70] sm:$0xff]
    %v5163 = vld [vmem:[#allocation9 + $0x78] sm:$0xff]
    %v5164 = vld [vmem:[#allocation9 + $0x80] sm:$0xff]
    %v5165 = vld [vmem:[#allocation9 + $0x88] sm:$0xff]
    %v5166 = vld [vmem:[#allocation9 + $0x90] sm:$0xff]
    %v5167 = vld [vmem:[#allocation9 + $0x98] sm:$0xff]
    %v5168 = vld [vmem:[#allocation9 + $0xa0] sm:$0xff]
    %v5169 = vld [vmem:[#allocation9 + $0xa8] sm:$0xff]
    %v5170 = vld [vmem:[#allocation9 + $0xb0] sm:$0xff]
    %v5171 = vld [vmem:[#allocation9 + $0xb8] sm:$0xff]
    %v5172 = vld [vmem:[#allocation9 + $0xc0] sm:$0xff]
    %v5173 = vld [vmem:[#allocation9 + $0xc8] sm:$0xff]
    %v5174 = vld [vmem:[#allocation9 + $0xd0] sm:$0xff]
    %v5175 = vld [vmem:[#allocation9 + $0xd8] sm:$0xff]
    %v5176 = vld [vmem:[#allocation9 + $0xe0] sm:$0xff]
    %v5177 = vld [vmem:[#allocation9 + $0xe8] sm:$0xff]
    %v5178 = vld [vmem:[#allocation9 + $0xf0] sm:$0xff]
    %v5179 = vld [vmem:[#allocation9 + $0xf8] sm:$0xff]
    %v5180 = vpack.c.bf16 %v5149, %v5148
    %v5181 = vpack.c.bf16 %v5151, %v5150
    %v5182 = vpack.c.bf16 %v5153, %v5152
    %v5183 = vpack.c.bf16 %v5155, %v5154
    %v5184 = vpack.c.bf16 %v5157, %v5156
    %v5185 = vpack.c.bf16 %v5159, %v5158
    %v5186 = vpack.c.bf16 %v5161, %v5160
    %v5187 = vpack.c.bf16 %v5163, %v5162
    %v5188 = vpack.c.bf16 %v5089, %v5086
    %v5189 = vpack.c.bf16 %v5097, %v5094
    %v5190 = vpack.c.bf16 %v5105, %v5102
    %v5191 = vpack.c.bf16 %v5113, %v5110
    %v5192 = vpack.c.bf16 %v5121, %v5118
    %v5193 = vpack.c.bf16 %v5129, %v5126
    %v5194 = vpack.c.bf16 %v5137, %v5134
    %v5195 = vpack.c.bf16 %v5145, %v5142
    %v5196 = vpack.c.bf16 %v5165, %v5164
    %v5197 = vpack.c.bf16 %v5167, %v5166
    %v5198 = vpack.c.bf16 %v5169, %v5168
    %v5199 = vpack.c.bf16 %v5171, %v5170
    %v5200 = vpack.c.bf16 %v5173, %v5172
    %v5201 = vpack.c.bf16 %v5175, %v5174
    %v5202 = vpack.c.bf16 %v5177, %v5176
    %v5203 = vpack.c.bf16 %v5179, %v5178
    %5204 = vmatprep.subr.bf16.mxu0 0
    %5205 = vmatpush1.bf16.msra.mxu0 %v5196
    %5206 = vmatprep.subr.bf16.mxu0 0
    %5207 = vmatpush1.bf16.msra.mxu0 %v5197
    %5208 = vmatprep.subr.bf16.mxu0 0
    %5209 = vmatpush1.bf16.msra.mxu0 %v5198
    %5210 = vmatprep.subr.bf16.mxu0 0
    %5211 = vmatpush1.bf16.msra.mxu0 %v5199
    %5212 = vmatprep.subr.bf16.mxu0 0
    %5213 = vmatpush1.bf16.msra.mxu0 %v5200
    %5214 = vmatprep.subr.bf16.mxu0 0
    %5215 = vmatpush1.bf16.msra.mxu0 %v5201
    %5216 = vmatprep.subr.bf16.mxu0 0
    %5217 = vmatpush1.bf16.msra.mxu0 %v5202
    %5218 = vmatprep.subr.bf16.mxu0 0
    %5219 = vmatpush1.bf16.msra.mxu0 %v5203
    %5220 = vmatprep.subr.bf16.mxu0 0
    %5221 = vmatpush1.bf16.msra.mxu0 0
    %5222 = vmatprep.subr.bf16.mxu0 0
    %5223 = vmatpush1.bf16.msra.mxu0 0
    %5224 = vmatprep.subr.bf16.mxu0 0
    %5225 = vmatpush1.bf16.msra.mxu0 0
    %5226 = vmatprep.subr.bf16.mxu0 0
    %5227 = vmatpush1.bf16.msra.mxu0 0
    %5228 = vmatprep.subr.bf16.mxu0 0
    %5229 = vmatpush1.bf16.msra.mxu0 0
    %5230 = vmatprep.subr.bf16.mxu0 0
    %5231 = vmatpush1.bf16.msra.mxu0 0
    %5232 = vmatprep.subr.bf16.mxu0 0
    %5233 = vmatpush1.bf16.msra.mxu0 0
    %5234 = vmatprep.subr.bf16.mxu0 0
    %5235 = vmatpush1.bf16.msra.mxu0 0
    %5236 = vmatprep.mubr.bf16.mxu0 0
    %5237 = vmatmul.mubr.bf16.gmra.mrb[0].mxu0 %v5188
    %v5238 = vpop.f32.mrb[0].mxu0
    %v5239 = vadd.f32 0.0, %v5238
    %v5240 = vpop.f32.mrb[0].mxu0
    %v5241 = vpop.f32.mrb[0].mxu0
    %v5242 = vadd.f32 0.0, %v5241
    %v5243 = vpop.f32.mrb[0].mxu0
    %5244 = vmatprep.mubr.bf16.mxu0 0
    %5245 = vmatmul.mubr.bf16.gmra.mrb[0].mxu0 %v5189
    %v5246 = vpop.f32.mrb[0].mxu0
    %v5247 = vadd.f32 0.0, %v5246
    %v5248 = vpop.f32.mrb[0].mxu0
    %v5249 = vpop.f32.mrb[0].mxu0
    %v5250 = vadd.f32 0.0, %v5249
    %v5251 = vpop.f32.mrb[0].mxu0
    %5252 = vmatprep.mubr.bf16.mxu0 0
    %5253 = vmatmul.mubr.bf16.gmra.mrb[0].mxu0 %v5190
    %v5254 = vpop.f32.mrb[0].mxu0
    %v5255 = vadd.f32 0.0, %v5254
    %v5256 = vpop.f32.mrb[0].mxu0
    %v5257 = vpop.f32.mrb[0].mxu0
    %v5258 = vadd.f32 0.0, %v5257
    %v5259 = vpop.f32.mrb[0].mxu0
    %5260 = vmatprep.mubr.bf16.mxu0 0
    %5261 = vmatmul.mubr.bf16.gmra.mrb[0].mxu0 %v5191
    %v5262 = vpop.f32.mrb[0].mxu0
    %v5263 = vadd.f32 0.0, %v5262
    %v5264 = vpop.f32.mrb[0].mxu0
    %v5265 = vpop.f32.mrb[0].mxu0
    %v5266 = vadd.f32 0.0, %v5265
    %v5267 = vpop.f32.mrb[0].mxu0
    %5268 = vmatprep.mubr.bf16.mxu0 0
    %5269 = vmatmul.mubr.bf16.gmra.mrb[0].mxu0 %v5192
    %v5270 = vpop.f32.mrb[0].mxu0
    %v5271 = vadd.f32 0.0, %v5270
    %v5272 = vpop.f32.mrb[0].mxu0
    %v5273 = vpop.f32.mrb[0].mxu0
    %v5274 = vadd.f32 0.0, %v5273
    %v5275 = vpop.f32.mrb[0].mxu0
    %5276 = vmatprep.mubr.bf16.mxu0 0
    %5277 = vmatmul.mubr.bf16.gmra.mrb[0].mxu0 %v5193
    %v5278 = vpop.f32.mrb[0].mxu0
    %v5279 = vadd.f32 0.0, %v5278
    %v5280 = vpop.f32.mrb[0].mxu0
    %v5281 = vpop.f32.mrb[0].mxu0
    %v5282 = vadd.f32 0.0, %v5281
    %v5283 = vpop.f32.mrb[0].mxu0
    %5284 = vmatprep.mubr.bf16.mxu0 0
    %5285 = vmatmul.mubr.bf16.gmra.mrb[0].mxu0 %v5194
    %v5286 = vpop.f32.mrb[0].mxu0
    %v5287 = vadd.f32 0.0, %v5286
    %v5288 = vpop.f32.mrb[0].mxu0
    %v5289 = vpop.f32.mrb[0].mxu0
    %v5290 = vadd.f32 0.0, %v5289
    %v5291 = vpop.f32.mrb[0].mxu0
    %5292 = vmatprep.mubr.bf16.mxu0 0
    %5293 = vmatmul.mubr.bf16.gmra.mrb[0].mxu0 %v5195
    %v5294 = vpop.f32.mrb[0].mxu0
    %v5295 = vadd.f32 0.0, %v5294
    %v5296 = vpop.f32.mrb[0].mxu0
    %v5297 = vpop.f32.mrb[0].mxu0
    %v5298 = vadd.f32 0.0, %v5297
    %v5299 = vpop.f32.mrb[0].mxu0
    %5300 = vdwg.mxu0
    %5301 = vmatprep.subr.bf16.mxu0 0
    %5302 = vmatpush1.bf16.msra.mxu0 %v5180
    %5303 = vmatprep.subr.bf16.mxu0 0
    %5304 = vmatpush1.bf16.msra.mxu0 %v5181
    %5305 = vmatprep.subr.bf16.mxu0 0
    %5306 = vmatpush1.bf16.msra.mxu0 %v5182
    %5307 = vmatprep.subr.bf16.mxu0 0
    %5308 = vmatpush1.bf16.msra.mxu0 %v5183
    %5309 = vmatprep.subr.bf16.mxu0 0
    %5310 = vmatpush1.bf16.msra.mxu0 %v5184
    %5311 = vmatprep.subr.bf16.mxu0 0
    %5312 = vmatpush1.bf16.msra.mxu0 %v5185
    %5313 = vmatprep.subr.bf16.mxu0 0
    %5314 = vmatpush1.bf16.msra.mxu0 %v5186
    %5315 = vmatprep.subr.bf16.mxu0 0
    %5316 = vmatpush1.bf16.msra.mxu0 %v5187
    %5317 = vmatprep.subr.bf16.mxu0 0
    %5318 = vmatpush1.bf16.msra.mxu0 0
    %5319 = vmatprep.subr.bf16.mxu0 0
    %5320 = vmatpush1.bf16.msra.mxu0 0
    %5321 = vmatprep.subr.bf16.mxu0 0
    %5322 = vmatpush1.bf16.msra.mxu0 0
    %5323 = vmatprep.subr.bf16.mxu0 0
    %5324 = vmatpush1.bf16.msra.mxu0 0
    %5325 = vmatprep.subr.bf16.mxu0 0
    %5326 = vmatpush1.bf16.msra.mxu0 0
    %5327 = vmatprep.subr.bf16.mxu0 0
    %5328 = vmatpush1.bf16.msra.mxu0 0
    %5329 = vmatprep.subr.bf16.mxu0 0
    %5330 = vmatpush1.bf16.msra.mxu0 0
    %5331 = vmatprep.subr.bf16.mxu0 0
    %5332 = vmatpush1.bf16.msra.mxu0 0
    %5333 = vmatprep.mubr.bf16.mxu0 0
    %5334 = vmatmul.mubr.bf16.gmra.mrb[0].mxu0 %v4594
    %v5335 = vpop.f32.mrb[0].mxu0
    %v5336 = vadd.f32 %v5239, %v5335
    %v5337 = vpop.f32.mrb[0].mxu0
    %v5338 = vpop.f32.mrb[0].mxu0
    %v5339 = vadd.f32 %v5242, %v5338
    %v5340 = vpop.f32.mrb[0].mxu0
    %5341 = vmatprep.mubr.bf16.mxu0 0
    %5342 = vmatmul.mubr.bf16.gmra.mrb[0].mxu0 %v4595
    %v5343 = vpop.f32.mrb[0].mxu0
    %v5344 = vadd.f32 %v5247, %v5343
    %v5345 = vpop.f32.mrb[0].mxu0
    %v5346 = vpop.f32.mrb[0].mxu0
    %v5347 = vadd.f32 %v5250, %v5346
    %v5348 = vpop.f32.mrb[0].mxu0
    %5349 = vmatprep.mubr.bf16.mxu0 0
    %5350 = vmatmul.mubr.bf16.gmra.mrb[0].mxu0 %v4596
    %v5351 = vpop.f32.mrb[0].mxu0
    %v5352 = vadd.f32 %v5255, %v5351
    %v5353 = vpop.f32.mrb[0].mxu0
    %v5354 = vpop.f32.mrb[0].mxu0
    %v5355 = vadd.f32 %v5258, %v5354
    %v5356 = vpop.f32.mrb[0].mxu0
    %5357 = vmatprep.mubr.bf16.mxu0 0
    %5358 = vmatmul.mubr.bf16.gmra.mrb[0].mxu0 %v4597
    %v5359 = vpop.f32.mrb[0].mxu0
    %v5360 = vadd.f32 %v5263, %v5359
    %v5361 = vpop.f32.mrb[0].mxu0
    %v5362 = vpop.f32.mrb[0].mxu0
    %v5363 = vadd.f32 %v5266, %v5362
    %v5364 = vpop.f32.mrb[0].mxu0
    %5365 = vmatprep.mubr.bf16.mxu0 0
    %5366 = vmatmul.mubr.bf16.gmra.mrb[0].mxu0 %v4598
    %v5367 = vpop.f32.mrb[0].mxu0
    %v5368 = vadd.f32 %v5271, %v5367
    %v5369 = vpop.f32.mrb[0].mxu0
    %v5370 = vpop.f32.mrb[0].mxu0
    %v5371 = vadd.f32 %v5274, %v5370
    %v5372 = vpop.f32.mrb[0].mxu0
    %5373 = vmatprep.mubr.bf16.mxu0 0
    %5374 = vmatmul.mubr.bf16.gmra.mrb[0].mxu0 %v4599
    %v5375 = vpop.f32.mrb[0].mxu0
    %v5376 = vadd.f32 %v5279, %v5375
    %v5377 = vpop.f32.mrb[0].mxu0
    %v5378 = vpop.f32.mrb[0].mxu0
    %v5379 = vadd.f32 %v5282, %v5378
    %v5380 = vpop.f32.mrb[0].mxu0
    %5381 = vmatprep.mubr.bf16.mxu0 0
    %5382 = vmatmul.mubr.bf16.gmra.mrb[0].mxu0 %v4600
    %v5383 = vpop.f32.mrb[0].mxu0
    %v5384 = vadd.f32 %v5287, %v5383
    %v5385 = vpop.f32.mrb[0].mxu0
    %v5386 = vpop.f32.mrb[0].mxu0
    %v5387 = vadd.f32 %v5290, %v5386
    %v5388 = vpop.f32.mrb[0].mxu0
    %5389 = vmatprep.mubr.bf16.mxu0 0
    %5390 = vmatmul.mubr.bf16.gmra.mrb[0].mxu0 %v4601
    %v5391 = vpop.f32.mrb[0].mxu0
    %v5392 = vadd.f32 %v5295, %v5391
    %v5393 = vpop.f32.mrb[0].mxu0
    %v5394 = vpop.f32.mrb[0].mxu0
    %v5395 = vadd.f32 %v5298, %v5394
    %v5396 = vpop.f32.mrb[0].mxu0
    %5397 = vdwg.mxu0
    %v5398 = vld [vmem:[%s10] sm:$0x1]
    %v5400 = vlaneseq
    %v5401 = vshrl.u32 %v5400, 7
    %v5402 = vsub.s32 0, %v5401
    %v5403 = vrot.slane %v5398, %v5402
    %v5405 = vadd.f32 %v5336, %v5403
    %v5406 = vadd.f32 %v5339, %v5403
    %v5407 = vadd.f32 %v5344, %v5403
    %v5408 = vadd.f32 %v5347, %v5403
    %v5409 = vadd.f32 %v5352, %v5403
    %v5410 = vadd.f32 %v5355, %v5403
    %v5411 = vadd.f32 %v5360, %v5403
    %v5412 = vadd.f32 %v5363, %v5403
    %v5413 = vadd.f32 %v5368, %v5403
    %v5414 = vadd.f32 %v5371, %v5403
    %v5415 = vadd.f32 %v5376, %v5403
    %v5416 = vadd.f32 %v5379, %v5403
    %v5417 = vadd.f32 %v5384, %v5403
    %v5418 = vadd.f32 %v5387, %v5403
    %v5419 = vadd.f32 %v5392, %v5403
    %v5420 = vadd.f32 %v5395, %v5403
    %v5421 = vtanh.pop %v5405
    %v5422 = vtanh.pop %v5406
    %v5423 = vtanh.pop %v5407
    %v5424 = vtanh.pop %v5408
    %v5425 = vtanh.pop %v5409
    %v5426 = vtanh.pop %v5410
    %v5427 = vtanh.pop %v5411
    %v5428 = vtanh.pop %v5412
    %v5429 = vtanh.pop %v5413
    %v5430 = vtanh.pop %v5414
    %v5431 = vtanh.pop %v5415
    %v5432 = vtanh.pop %v5416
    %v5433 = vtanh.pop %v5417
    %v5434 = vtanh.pop %v5418
    %v5435 = vtanh.pop %v5419
    %v5436 = vtanh.pop %v5420
    %v5437 = vpack.c.bf16 %v5422, %v5421
    %v5438 = vpack.c.bf16 %v5424, %v5423
    %v5439 = vpack.c.bf16 %v5426, %v5425
    %v5440 = vpack.c.bf16 %v5428, %v5427
    %v5441 = vpack.c.bf16 %v5430, %v5429
    %v5442 = vpack.c.bf16 %v5432, %v5431
    %v5443 = vpack.c.bf16 %v5434, %v5433
    %v5444 = vpack.c.bf16 %v5436, %v5435
    %v5445 = vld [vmem:[#allocation10] sm:$0xff]
    %v5446 = vld [vmem:[#allocation10 + $0x8] sm:$0xff]
    %v5447 = vld [vmem:[#allocation10 + $0x10] sm:$0xff]
    %v5448 = vld [vmem:[#allocation10 + $0x18] sm:$0xff]
    %v5449 = vld [vmem:[#allocation10 + $0x20] sm:$0xff]
    %v5450 = vld [vmem:[#allocation10 + $0x28] sm:$0xff]
    %v5451 = vld [vmem:[#allocation10 + $0x30] sm:$0xff]
    %v5452 = vld [vmem:[#allocation10 + $0x38] sm:$0xff]
    %v5453 = vld [vmem:[#allocation10 + $0x40] sm:$0xff]
    %v5454 = vld [vmem:[#allocation10 + $0x48] sm:$0xff]
    %v5455 = vld [vmem:[#allocation10 + $0x50] sm:$0xff]
    %v5456 = vld [vmem:[#allocation10 + $0x58] sm:$0xff]
    %v5457 = vld [vmem:[#allocation10 + $0x60] sm:$0xff]
    %v5458 = vld [vmem:[#allocation10 + $0x68] sm:$0xff]
    %v5459 = vld [vmem:[#allocation10 + $0x70] sm:$0xff]
    %v5460 = vld [vmem:[#allocation10 + $0x78] sm:$0xff]
    %v5461 = vld [vmem:[#allocation10 + $0x80] sm:$0xff]
    %v5462 = vld [vmem:[#allocation10 + $0x88] sm:$0xff]
    %v5463 = vld [vmem:[#allocation10 + $0x90] sm:$0xff]
    %v5464 = vld [vmem:[#allocation10 + $0x98] sm:$0xff]
    %v5465 = vld [vmem:[#allocation10 + $0xa0] sm:$0xff]
    %v5466 = vld [vmem:[#allocation10 + $0xa8] sm:$0xff]
    %v5467 = vld [vmem:[#allocation10 + $0xb0] sm:$0xff]
    %v5468 = vld [vmem:[#allocation10 + $0xb8] sm:$0xff]
    %v5469 = vld [vmem:[#allocation10 + $0xc0] sm:$0xff]
    %v5470 = vld [vmem:[#allocation10 + $0xc8] sm:$0xff]
    %v5471 = vld [vmem:[#allocation10 + $0xd0] sm:$0xff]
    %v5472 = vld [vmem:[#allocation10 + $0xd8] sm:$0xff]
    %v5473 = vld [vmem:[#allocation10 + $0xe0] sm:$0xff]
    %v5474 = vld [vmem:[#allocation10 + $0xe8] sm:$0xff]
    %v5475 = vld [vmem:[#allocation10 + $0xf0] sm:$0xff]
    %v5476 = vld [vmem:[#allocation10 + $0xf8] sm:$0xff]
    %v5477 = vpack.c.bf16 %v5447, %v5445
    %v5478 = vpack.c.bf16 %v5448, %v5446
    %v5479 = vpack.c.bf16 %v5451, %v5449
    %v5480 = vpack.c.bf16 %v5452, %v5450
    %v5481 = vpack.c.bf16 %v5455, %v5453
    %v5482 = vpack.c.bf16 %v5456, %v5454
    %v5483 = vpack.c.bf16 %v5459, %v5457
    %v5484 = vpack.c.bf16 %v5460, %v5458
    %v5485 = vpack.c.bf16 %v5463, %v5461
    %v5486 = vpack.c.bf16 %v5464, %v5462
    %v5487 = vpack.c.bf16 %v5467, %v5465
    %v5488 = vpack.c.bf16 %v5468, %v5466
    %v5489 = vpack.c.bf16 %v5471, %v5469
    %v5490 = vpack.c.bf16 %v5472, %v5470
    %v5491 = vpack.c.bf16 %v5475, %v5473
    %v5492 = vpack.c.bf16 %v5476, %v5474
    %v5493 = vld [vmem:[%s12] sm:$0x3]
    %v5495 = vlaneseq
    %v5496 = vshrl.u32 %v5495, 7
    %v5497 = vsub.s32 0, %v5496
    %v5498 = vrot.slane %v5493, %v5497
    %v5499 = vlaneseq
    %v5500 = vshrl.u32 %v5499, 7
    %v5501 = vsub.s32 1, %v5500
    %v5502 = vrot.slane %v5493, %v5501
    %5505 = vmatprep.subr.bf16.mxu0 %v5478
    %5506 = vmatpush1.bf16.msra.mxu0 %v5477
    %5507 = vmatprep.subr.bf16.mxu0 %v5480
    %5508 = vmatpush1.bf16.msra.mxu0 %v5479
    %5509 = vmatprep.subr.bf16.mxu0 %v5482
    %5510 = vmatpush1.bf16.msra.mxu0 %v5481
    %5511 = vmatprep.subr.bf16.mxu0 %v5484
    %5512 = vmatpush1.bf16.msra.mxu0 %v5483
    %5513 = vmatprep.subr.bf16.mxu0 %v5486
    %5514 = vmatpush1.bf16.msra.mxu0 %v5485
    %5515 = vmatprep.subr.bf16.mxu0 %v5488
    %5516 = vmatpush1.bf16.msra.mxu0 %v5487
    %5517 = vmatprep.subr.bf16.mxu0 %v5490
    %5518 = vmatpush1.bf16.msra.mxu0 %v5489
    %5519 = vmatprep.subr.bf16.mxu0 %v5492
    %5520 = vmatpush1.bf16.msra.mxu0 %v5491
    %5521 = vmatprep.subr.bf16.mxu0 0
    %5522 = vmatpush1.bf16.msra.mxu0 0
    %5523 = vmatprep.subr.bf16.mxu0 0
    %5524 = vmatpush1.bf16.msra.mxu0 0
    %5525 = vmatprep.subr.bf16.mxu0 0
    %5526 = vmatpush1.bf16.msra.mxu0 0
    %5527 = vmatprep.subr.bf16.mxu0 0
    %5528 = vmatpush1.bf16.msra.mxu0 0
    %5529 = vmatprep.subr.bf16.mxu0 0
    %5530 = vmatpush1.bf16.msra.mxu0 0
    %5531 = vmatprep.subr.bf16.mxu0 0
    %5532 = vmatpush1.bf16.msra.mxu0 0
    %5533 = vmatprep.subr.bf16.mxu0 0
    %5534 = vmatpush1.bf16.msra.mxu0 0
    %5535 = vmatprep.subr.bf16.mxu0 0
    %5536 = vmatpush1.bf16.msra.mxu0 0
    %5537 = vmatprep.mubr.bf16.mxu0 0
    %5538 = vmatmul.mubr.bf16.gmra.mrb[0].mxu0 %v5437
    %v5539 = vpop.f32.mrb[0].mxu0
    %v5540 = vadd.f32 %v5498, %v5539
    %v5541 = vpop.f32.mrb[0].mxu0
    %v5542 = vadd.f32 %v5502, %v5541
    %v5543 = vpop.f32.mrb[0].mxu0
    %v5544 = vadd.f32 %v5498, %v5543
    %v5545 = vpop.f32.mrb[0].mxu0
    %v5546 = vadd.f32 %v5502, %v5545
    %5547 = vmatprep.mubr.bf16.mxu0 0
    %5548 = vmatmul.mubr.bf16.gmra.mrb[0].mxu0 %v5438
    %v5549 = vpop.f32.mrb[0].mxu0
    %v5550 = vadd.f32 %v5498, %v5549
    %v5551 = vpop.f32.mrb[0].mxu0
    %v5552 = vadd.f32 %v5502, %v5551
    %v5553 = vpop.f32.mrb[0].mxu0
    %v5554 = vadd.f32 %v5498, %v5553
    %v5555 = vpop.f32.mrb[0].mxu0
    %v5556 = vadd.f32 %v5502, %v5555
    %5557 = vmatprep.mubr.bf16.mxu0 0
    %5558 = vmatmul.mubr.bf16.gmra.mrb[0].mxu0 %v5439
    %v5559 = vpop.f32.mrb[0].mxu0
    %v5560 = vadd.f32 %v5498, %v5559
    %v5561 = vpop.f32.mrb[0].mxu0
    %v5562 = vadd.f32 %v5502, %v5561
    %v5563 = vpop.f32.mrb[0].mxu0
    %v5564 = vadd.f32 %v5498, %v5563
    %v5565 = vpop.f32.mrb[0].mxu0
    %v5566 = vadd.f32 %v5502, %v5565
    %5567 = vmatprep.mubr.bf16.mxu0 0
    %5568 = vmatmul.mubr.bf16.gmra.mrb[0].mxu0 %v5440
    %v5569 = vpop.f32.mrb[0].mxu0
    %v5570 = vadd.f32 %v5498, %v5569
    %v5571 = vpop.f32.mrb[0].mxu0
    %v5572 = vadd.f32 %v5502, %v5571
    %v5573 = vpop.f32.mrb[0].mxu0
    %v5574 = vadd.f32 %v5498, %v5573
    %v5575 = vpop.f32.mrb[0].mxu0
    %v5576 = vadd.f32 %v5502, %v5575
    %5577 = vmatprep.mubr.bf16.mxu0 0
    %5578 = vmatmul.mubr.bf16.gmra.mrb[0].mxu0 %v5441
    %v5579 = vpop.f32.mrb[0].mxu0
    %v5580 = vadd.f32 %v5498, %v5579
    %v5581 = vpop.f32.mrb[0].mxu0
    %v5582 = vadd.f32 %v5502, %v5581
    %v5583 = vpop.f32.mrb[0].mxu0
    %v5584 = vadd.f32 %v5498, %v5583
    %v5585 = vpop.f32.mrb[0].mxu0
    %v5586 = vadd.f32 %v5502, %v5585
    %5587 = vmatprep.mubr.bf16.mxu0 0
    %5588 = vmatmul.mubr.bf16.gmra.mrb[0].mxu0 %v5442
    %v5589 = vpop.f32.mrb[0].mxu0
    %v5590 = vadd.f32 %v5498, %v5589
    %v5591 = vpop.f32.mrb[0].mxu0
    %v5592 = vadd.f32 %v5502, %v5591
    %v5593 = vpop.f32.mrb[0].mxu0
    %v5594 = vadd.f32 %v5498, %v5593
    %v5595 = vpop.f32.mrb[0].mxu0
    %v5596 = vadd.f32 %v5502, %v5595
    %5597 = vmatprep.mubr.bf16.mxu0 0
    %5598 = vmatmul.mubr.bf16.gmra.mrb[0].mxu0 %v5443
    %v5599 = vpop.f32.mrb[0].mxu0
    %v5600 = vadd.f32 %v5498, %v5599
    %v5601 = vpop.f32.mrb[0].mxu0
    %v5602 = vadd.f32 %v5502, %v5601
    %v5603 = vpop.f32.mrb[0].mxu0
    %v5604 = vadd.f32 %v5498, %v5603
    %v5605 = vpop.f32.mrb[0].mxu0
    %v5606 = vadd.f32 %v5502, %v5605
    %5607 = vmatprep.mubr.bf16.mxu0 0
    %5608 = vmatmul.mubr.bf16.gmra.mrb[0].mxu0 %v5444
    %v5609 = vpop.f32.mrb[0].mxu0
    %v5610 = vadd.f32 %v5498, %v5609
    %v5611 = vpop.f32.mrb[0].mxu0
    %v5612 = vadd.f32 %v5502, %v5611
    %v5613 = vpop.f32.mrb[0].mxu0
    %v5614 = vadd.f32 %v5498, %v5613
    %v5615 = vpop.f32.mrb[0].mxu0
    %v5616 = vadd.f32 %v5502, %v5615
    %5617 = vdwg.mxu0
    %5618 = vst [vmem:[#allocation12] sm:$0xff] %v5540
    %5619 = vst [vmem:[#allocation12 + $0x8] sm:$0xff] %v5542
    %5620 = vst [vmem:[#allocation12 + $0x10] sm:$0xff] %v5544
    %5621 = vst [vmem:[#allocation12 + $0x18] sm:$0xff] %v5546
    %5622 = vst [vmem:[#allocation12 + $0x20] sm:$0xff] %v5550
    %5623 = vst [vmem:[#allocation12 + $0x28] sm:$0xff] %v5552
    %5624 = vst [vmem:[#allocation12 + $0x30] sm:$0xff] %v5554
    %5625 = vst [vmem:[#allocation12 + $0x38] sm:$0xff] %v5556
    %5626 = vst [vmem:[#allocation12 + $0x40] sm:$0xff] %v5560
    %5627 = vst [vmem:[#allocation12 + $0x48] sm:$0xff] %v5562
    %5628 = vst [vmem:[#allocation12 + $0x50] sm:$0xff] %v5564
    %5629 = vst [vmem:[#allocation12 + $0x58] sm:$0xff] %v5566
    %5630 = vst [vmem:[#allocation12 + $0x60] sm:$0xff] %v5570
    %5631 = vst [vmem:[#allocation12 + $0x68] sm:$0xff] %v5572
    %5632 = vst [vmem:[#allocation12 + $0x70] sm:$0xff] %v5574
    %5633 = vst [vmem:[#allocation12 + $0x78] sm:$0xff] %v5576
    %5634 = vst [vmem:[#allocation12 + $0x80] sm:$0xff] %v5580
    %5635 = vst [vmem:[#allocation12 + $0x88] sm:$0xff] %v5582
    %5636 = vst [vmem:[#allocation12 + $0x90] sm:$0xff] %v5584
    %5637 = vst [vmem:[#allocation12 + $0x98] sm:$0xff] %v5586
    %5638 = vst [vmem:[#allocation12 + $0xa0] sm:$0xff] %v5590
    %5639 = vst [vmem:[#allocation12 + $0xa8] sm:$0xff] %v5592
    %5640 = vst [vmem:[#allocation12 + $0xb0] sm:$0xff] %v5594
    %5641 = vst [vmem:[#allocation12 + $0xb8] sm:$0xff] %v5596
    %5642 = vst [vmem:[#allocation12 + $0xc0] sm:$0xff] %v5600
    %5643 = vst [vmem:[#allocation12 + $0xc8] sm:$0xff] %v5602
    %5644 = vst [vmem:[#allocation12 + $0xd0] sm:$0xff] %v5604
    %5645 = vst [vmem:[#allocation12 + $0xd8] sm:$0xff] %v5606
    %5646 = vst [vmem:[#allocation12 + $0xe0] sm:$0xff] %v5610
    %5647 = vst [vmem:[#allocation12 + $0xe8] sm:$0xff] %v5612
    %5648 = vst [vmem:[#allocation12 + $0xf0] sm:$0xff] %v5614
    %5649 = vst [vmem:[#allocation12 + $0xf8] sm:$0xff] %v5616
    // Predicated region
    $region70: #{rnn_decoder_forward_impl.1} parent=1 // pred_check
      _
    $region71: #{rnn_decoder_forward_impl.1} parent=1 // pred_check_branch
      %5651 = sbr.rel (0) target = $region73
    $region72: #{rnn_decoder_forward_impl.1} parent=1 // pred_region
      %s5653 = ssub.s32 4096, 4096
      %5654 = vsyncadd [#allocation6], %s5653
      %s5655 = sshll.u32 [#allocation12], 4
      %s5656 = int_to_ptr.vmem [resolvable:$true] %s5655
      %5661 = dma.vmem_to_hbm [thread:$0]  %s5656, 4096, %s13, [#allocation6], 256, 256, 16
    $region73: #{rnn_decoder_forward_impl.1} parent=1 // pred_fallthru
      _
    // Predicated region
    $region74: #{rnn_decoder_forward_impl.1} parent=1 // pred_check
      _
    $region75: #{rnn_decoder_forward_impl.1} parent=1 // pred_check_branch
      %5663 = sbr.rel (0) target = $region77
    $region76: #{rnn_decoder_forward_impl.1} parent=1 // pred_region
      %s5665 = ssub.s32 512, 512
      %5666 = vsyncadd [#allocation14], %s5665
      %s5667 = sshll.u32 [#allocation13], 4
      %s5668 = int_to_ptr.vmem [resolvable:$true] %s5667
      %5673 = dma.vmem_to_hbm [thread:$0]  %s5668, 512, %s14, [#allocation14], 128, 128, 8
    $region77: #{rnn_decoder_forward_impl.1} parent=1 // pred_fallthru
      _
    // Predicated region
    $region78: #{rnn_decoder_forward_impl.1} parent=1 // pred_check
      _
    $region79: #{rnn_decoder_forward_impl.1} parent=1 // pred_check_branch
      %5675 = sbr.rel (0) target = $region81
    $region80: #{rnn_decoder_forward_impl.1} parent=1 // pred_region
      %5676 = dma.done [#allocation6], 4096
    $region81: #{rnn_decoder_forward_impl.1} parent=1 // pred_fallthru
      _
    // Predicated region
    $region82: #{rnn_decoder_forward_impl.1} parent=1 // pred_check
      _
    $region83: #{rnn_decoder_forward_impl.1} parent=1 // pred_check_branch
      %5678 = sbr.rel (0) target = $region85
    $region84: #{rnn_decoder_forward_impl.1} parent=1 // pred_region
      %5679 = dma.done [#allocation14], 512
    $region85: #{rnn_decoder_forward_impl.1} parent=1 // pred_fallthru
      _
    %5680 = vsyncpa [#allocation5], 1
    %5681 = vsyncpa [#allocation8], 1
    %5682 = vsyncpa [#allocation11], 1
    %5683 = vsyncpa [#allocation6], 1
    %5684 = vsyncpa [#allocation14], 1

</llo_original>
